<compile_context>
chip_gen: v7x
topology: tpu7x:2x2x1
jax: 0.10.0
libtpu: 0.0.40
codegen_flags: <defaults>
</compile_context>

<pallas_src>
import jax
import jax.numpy as jnp
from jax.experimental import pallas as pl
from jax.experimental.pallas import tpu as pltpu

LANES = 128


def _round_up(a, m):
    return (a + m - 1) // m * m


def mlp_kernel(x_ref, w1e_ref, b1e_ref, w2e_ref, b2e_ref, o_ref):
    """One lane-dense row tile of  y = tanh(x @ W1 + b1) @ W2 + b2.

    x_ref : (tile_r, 128)  -- G = 128 // C original rows packed per lane-row
    w1e   : (128,  G*H)    -- kron(I_G, W1), block-diagonal (VMEM-resident)
    b1e   : (1,    G*H)    -- tile(b1, G)
    w2e   : (G*H,  128)    -- kron(I_G, W2), block-diagonal (VMEM-resident)
    b2e   : (1,    128)    -- tile(b2, G)
    o_ref : (tile_r, 128)  -- y packed exactly like x
    """
    # Layer 1 on the MXU (extended slot, otherwise idle), f32 accumulate.
    h = jnp.dot(x_ref[...], w1e_ref[...], preferred_element_type=jnp.float32)
    # Bias add (VPU) + tanh (EUP) on fully lane-dense vregs.
    # (Optional v6e/v7x lever: h.astype(bf16) here doubles EUP/VPU throughput,
    #  but is a precision change — kept f32 for exactness and v5e safety.)
    h = jnp.tanh(h + b1e_ref[...])
    # Layer 2 on the MXU; output is written back lane-dense (no vst.msk).
    y = jnp.dot(h, w2e_ref[...], preferred_element_type=jnp.float32)
    o_ref[...] = (y + b2e_ref[...]).astype(o_ref.dtype)


def mlp_forward(x, w1, b1, w2, b2, *, tile_r_max=1024, target_min_steps=4):
    """y = tanh(x @ w1 + b1) @ w2 + b2  (same math as the PyTorch MLP.forward).

    x : (N, C) float32;  w1 : (C, H);  b1 : (H,);  w2 : (H, C);  b2 : (C,)
    """
    n, c = x.shape
    hid = w1.shape[1]
    dtype = x.dtype

    # --- channel padding (no-op for C in {1,2,4,...,128}) --------------------
    c_pad = 1 if c == 1 else (1 << (c - 1).bit_length())   # next pow2 >= C
    assert c_pad <= LANES, "state_c > 128 not supported by the packed layout"
    if c_pad != c:
        x = jnp.pad(x, ((0, 0), (0, c_pad - c)))
        w1 = jnp.pad(w1, ((0, c_pad - c), (0, 0)))
        w2 = jnp.pad(w2, ((0, 0), (0, c_pad - c)))
        b2 = jnp.pad(b2, (0, c_pad - c))
    g = LANES // c_pad              # original rows packed per lane-dense row
    gh = g * hid

    # --- pack rows: (N, C) -> (R, 128) via a FREE row-major reshape ----------
    n_pad = _round_up(n, g)         # pad only to a multiple of G (usually free)
    r = n_pad // g
    if r < 8:                       # keep at least one full (8, 128) f32 tile
        r = 8
        n_pad = 8 * g
    xp = x if n_pad == n else jnp.pad(x, ((0, n_pad - n), (0, 0)))
    x2 = xp.reshape(r, LANES)       # contiguous reshape: no data movement

    # --- expanded block-diagonal weights (small, built once, VMEM-resident) --
    eye_g = jnp.eye(g, dtype=dtype)
    w1e = jnp.kron(eye_g, w1.astype(dtype))                  # (128,  G*H)
    w2e = jnp.kron(eye_g, w2.astype(dtype))                  # (G*H,  128)
    b1e = jnp.tile(b1.astype(dtype), g).reshape(1, gh)       # (1,    G*H)
    b2e = jnp.tile(b2.astype(dtype), g).reshape(1, LANES)    # (1,    128)

    # --- row tiling -----------------------------------------------------------
    # Big tiles amortise the ~0.35 us per-grid-step overhead: tile_r_max=1024
    # packed rows = 32768 original rows = ~1 MiB of x+y HBM traffic per step.
    # Keep >= target_min_steps steps when possible so the "parallel" row axis
    # can feed both v7x TensorCores; small problems collapse to grid=(1,).
    tile_r = min(tile_r_max, _round_up(pl.cdiv(r, target_min_steps), 8))
    if tile_r >= r:
        tile_r = r                  # single block covering the whole problem
    grid_r = pl.cdiv(r, tile_r)     # ragged last block; OOB rows are dropped

    # Worst-case VMEM: x/y tiles 2*(2*0.5 MiB) + W1e/W2e 2*(2*0.5 MiB)
    # + h temporaries ~8 MiB  ≈ 13 MiB  (fits every generation).
    cost = pl.CostEstimate(
        flops=4 * r * LANES * gh,          # two (tile,128)x(128,G*H)-class matmuls
        transcendentals=n_pad * hid,       # tanh
        bytes_accessed=4 * (2 * r * LANES + 2 * LANES * gh + gh + LANES),
    )

    y2 = pl.pallas_call(
        mlp_kernel,
        out_shape=jax.ShapeDtypeStruct((r, LANES), dtype),
        grid=(grid_r,),
        in_specs=[
            pl.BlockSpec((tile_r, LANES), lambda i: (i, 0)),   # x tile (streamed)
            pl.BlockSpec((LANES, gh), lambda i: (0, 0)),       # W1e  (resident)
            pl.BlockSpec((1, gh), lambda i: (0, 0)),           # b1e  (resident)
            pl.BlockSpec((gh, LANES), lambda i: (0, 0)),       # W2e  (resident)
            pl.BlockSpec((1, LANES), lambda i: (0, 0)),        # b2e  (resident)
        ],
        out_specs=pl.BlockSpec((tile_r, LANES), lambda i: (i, 0)),  # lane-dense y
        compiler_params=pltpu.CompilerParams(
            dimension_semantics=("parallel",),     # 2 TCs on v7x; no-op v5e/v6e
            vmem_limit_bytes=32 * 1024 * 1024,     # explicit (v5e default 16 MiB)
        ),
        cost_estimate=cost,
    )(x2, w1e, b1e, w2e, b2e)

    # Free reshape back + cheap slice of the (rare) padded rows / channels.
    return y2.reshape(n_pad, c_pad)[:n, :c]


def reference_mlp(x, w1, b1, w2, b2):
    return jnp.tanh(x @ w1 + b1) @ w2 + b2


if __name__ == "__main__":
    # Full f32-accurate matmuls on both the reference and kernel side.
    jax.config.update("jax_default_matmul_precision", "highest")

    state_c = 4
    hidden = 32
    batch = 2
    T = 8
    N = batch * T   # MLP.forward / get_derivatives see (batch*T, state_c) rows

    key = jax.random.PRNGKey(0)
    kx, k1, kb1, k2, kb2 = jax.random.split(key, 5)

    # Deterministic synthetic parameters (shapes implied by nn.Linear).
    x = jax.random.normal(kx, (N, state_c), dtype=jnp.float32)
    w1 = jax.random.normal(k1, (state_c, hidden), dtype=jnp.float32) * 0.1
    b1 = jax.random.normal(kb1, (hidden,), dtype=jnp.float32) * 0.1
    w2 = jax.random.normal(k2, (hidden, state_c), dtype=jnp.float32) * 0.1
    b2 = jax.random.normal(kb2, (state_c,), dtype=jnp.float32) * 0.1

    # Native (tiny) size: collapses to a single packed block, grid=(1,).
    y = mlp_forward(x, w1, b1, w2, b2)
    jax.block_until_ready(y)
    y_ref = reference_mlp(x, w1, b1, w2, b2)
    assert y.shape == (N, state_c)
    assert jnp.allclose(y, y_ref, atol=2e-5, rtol=2e-5), "small-N mismatch"

    # Non-multiple-of-32 batch: exercises the small row pad, a multi-step
    # grid (>= target_min_steps) and the ragged last block.
    N2 = 4096 + 37
    x2 = jax.random.normal(jax.random.PRNGKey(1), (N2, state_c), jnp.float32)
    y2 = mlp_forward(x2, w1, b1, w2, b2)
    jax.block_until_ready(y2)
    assert y2.shape == (N2, state_c)
    assert jnp.allclose(y2, reference_mlp(x2, w1, b1, w2, b2),
                        atol=2e-5, rtol=2e-5), "medium-N mismatch"

    # Large batch: exercises the 1024-packed-row (32768 original rows,
    # ~1 MiB/step) tile cap and a long "parallel" grid with a ragged tail.
    N3 = 150_013
    x3 = jax.random.normal(jax.random.PRNGKey(2), (N3, state_c), jnp.float32)
    y3 = mlp_forward(x3, w1, b1, w2, b2)
    jax.block_until_ready(y3)
    assert y3.shape == (N3, state_c)
    assert jnp.allclose(y3, reference_mlp(x3, w1, b1, w2, b2),
                        atol=2e-5, rtol=2e-5), "large-N mismatch"

    print("KERNEL_OK")
</pallas_src>

<mosaic_0001>
module attributes {stable_mosaic.version = 11 : i64} {
  func.func @mlp_kernel(%arg0: i32, %arg1: memref<8x128xf32, #tpu.memory_space<vmem>>, %arg2: memref<128x1024xf32, #tpu.memory_space<vmem>>, %arg3: memref<1x1024xf32, #tpu.memory_space<vmem>>, %arg4: memref<1024x128xf32, #tpu.memory_space<vmem>>, %arg5: memref<1x128xf32, #tpu.memory_space<vmem>>, %arg6: memref<8x128xf32, #tpu.memory_space<vmem>>) attributes {dimension_semantics = [#tpu.dimension_semantics<parallel>], iteration_bounds = array<i64: 1>, scalar_prefetch = 0 : i64, scratch_operands = 0 : i64, tpu.core_type = #tpu.core_type<tc>, window_params = [{transform_indices = @transform_0, window_bounds = array<i64: 8, 128>}, {pipeline_mode = #tpu.pipeline_mode<synchronous>, transform_indices = @transform_1, window_bounds = array<i64: 128, 1024>}, {pipeline_mode = #tpu.pipeline_mode<synchronous>, transform_indices = @transform_2, window_bounds = array<i64: 1, 1024>}, {pipeline_mode = #tpu.pipeline_mode<synchronous>, transform_indices = @transform_3, window_bounds = array<i64: 1024, 128>}, {pipeline_mode = #tpu.pipeline_mode<synchronous>, transform_indices = @transform_4, window_bounds = array<i64: 1, 128>}, {transform_indices = @transform_5, window_bounds = array<i64: 8, 128>}]} {
    %c0 = arith.constant 0 : index
    %c0_0 = arith.constant 0 : index
    %0 = vector.load %arg1[%c0, %c0_0] : memref<8x128xf32, #tpu.memory_space<vmem>>, vector<8x128xf32>
    %c0_1 = arith.constant 0 : index
    %c0_2 = arith.constant 0 : index
    %1 = vector.load %arg2[%c0_1, %c0_2] : memref<128x1024xf32, #tpu.memory_space<vmem>>, vector<128x1024xf32>
    %cst = arith.constant dense<0.000000e+00> : vector<8x1024xf32>
    %2 = tpu.matmul %0, %1, %cst {dimension_numbers = #tpu.dot_dimension_numbers<[1], [0], [0], [1], [0, 0, 1, 1], [], []>, precision = #tpu.contract_precision<fp32>} : vector<8x128xf32>, vector<128x1024xf32>, vector<8x1024xf32> -> vector<8x1024xf32>
    %c0_3 = arith.constant 0 : index
    %c0_4 = arith.constant 0 : index
    %3 = vector.load %arg3[%c0_3, %c0_4] : memref<1x1024xf32, #tpu.memory_space<vmem>>, vector<1x1024xf32>
    %4 = vector.broadcast %3 : vector<1x1024xf32> to vector<8x1024xf32>
    %5 = arith.addf %2, %4 : vector<8x1024xf32>
    %6 = math.tanh %5 : vector<8x1024xf32>
    %c0_5 = arith.constant 0 : index
    %c0_6 = arith.constant 0 : index
    %7 = vector.load %arg4[%c0_5, %c0_6] : memref<1024x128xf32, #tpu.memory_space<vmem>>, vector<1024x128xf32>
    %cst_7 = arith.constant dense<0.000000e+00> : vector<8x128xf32>
    %8 = tpu.matmul %6, %7, %cst_7 {dimension_numbers = #tpu.dot_dimension_numbers<[1], [0], [0], [1], [0, 0, 1, 1], [], []>, precision = #tpu.contract_precision<fp32>} : vector<8x1024xf32>, vector<1024x128xf32>, vector<8x128xf32> -> vector<8x128xf32>
    %c0_8 = arith.constant 0 : index
    %c0_9 = arith.constant 0 : index
    %9 = vector.load %arg5[%c0_8, %c0_9] : memref<1x128xf32, #tpu.memory_space<vmem>>, vector<1x128xf32>
    %10 = vector.broadcast %9 : vector<1x128xf32> to vector<8x128xf32>
    %11 = arith.addf %8, %10 : vector<8x128xf32>
    %c0_10 = arith.constant 0 : index
    %c0_11 = arith.constant 0 : index
    %12 = vector.load %arg6[%c0_10, %c0_11] : memref<8x128xf32, #tpu.memory_space<vmem>>, vector<8x128xf32>
    tpu.vector_store %arg6[%c0_10, %c0_11], %11 {strides = array<i32>} : memref<8x128xf32, #tpu.memory_space<vmem>>, vector<8x128xf32>,
    return
  }
  func.func @transform_0(%arg0: i32) -> (i32, i32) {
    %c0_i32 = arith.constant 0 : i32
    %c0_i32_0 = arith.constant 0 : i32
    return %arg0, %c0_i32 : i32, i32
  }
  func.func @transform_1(%arg0: i32) -> (i32, i32) {
    %c0_i32 = arith.constant 0 : i32
    %c0_i32_0 = arith.constant 0 : i32
    %c0_i32_1 = arith.constant 0 : i32
    return %c0_i32, %c0_i32_0 : i32, i32
  }
  func.func @transform_2(%arg0: i32) -> (i32, i32) {
    %c0_i32 = arith.constant 0 : i32
    %c0_i32_0 = arith.constant 0 : i32
    %c0_i32_1 = arith.constant 0 : i32
    return %c0_i32, %c0_i32_0 : i32, i32
  }
  func.func @transform_3(%arg0: i32) -> (i32, i32) {
    %c0_i32 = arith.constant 0 : i32
    %c0_i32_0 = arith.constant 0 : i32
    %c0_i32_1 = arith.constant 0 : i32
    return %c0_i32, %c0_i32_0 : i32, i32
  }
  func.func @transform_4(%arg0: i32) -> (i32, i32) {
    %c0_i32 = arith.constant 0 : i32
    %c0_i32_0 = arith.constant 0 : i32
    %c0_i32_1 = arith.constant 0 : i32
    return %c0_i32, %c0_i32_0 : i32, i32
  }
  func.func @transform_5(%arg0: i32) -> (i32, i32) {
    %c0_i32 = arith.constant 0 : i32
    %c0_i32_0 = arith.constant 0 : i32
    return %arg0, %c0_i32 : i32, i32
  }
}

</mosaic_0001>

<llo_original>
// kernel: tpu_custom_call.1
$region0: #{tpu_custom_call.1}
  #allocation0 [shape = 'u32[]', space=smem, size = 0x4, offset = 0x4, fixed_abs, tag = 'smem constant byte address 0x4 - core index']
  #allocation1 [shape = 'u32[144,128]{1,0:T(1,128)}', space=vmem, size = 0x12000, scoped, tag = 'internal scratch']
  %s0 = inlined_call_operand.hbm [shape: f32[8,128], index: 0, kind: input, shape index: {}]
  %s1 = inlined_call_operand.hbm [shape: f32[128,1024], index: 1, kind: input, shape index: {}]
  %s2 = inlined_call_operand.hbm [shape: f32[1,1024], index: 2, kind: input, shape index: {}]
  %s3 = inlined_call_operand.hbm [shape: f32[1024,128], index: 3, kind: input, shape index: {}]
  %s4 = inlined_call_operand.vmem [shape: f32[1,128], index: 4, kind: input, shape index: {}]
  %s5 = inlined_call_operand.hbm [shape: f32[8,128], index: 5, kind: output, shape index: {}]
  %s6 = sld [smem:[#allocation0]]
  $region46: #{tpu_custom_call.1} parent=0
    _
  %s8 = ssub.s32 1, %s6
  %s9 = scalar_select 0, %s8, %s6
  $region1: #{tpu_custom_call.1} parent=0
    #allocation2 [shape = 'u8[4096]{0}', space=vmem, size = 0x1000, scoped, tag = 'input window, operand 0, single buffered']
    #allocation3 [shape = 's32[1]{0}', space=sflag, size = 0x4, scoped, tag = 'scoped memory for tpu_custom_call.1']
    #allocation4 [shape = 's32[1]{0}', space=sflag, size = 0x4, scoped, tag = 'scoped memory for tpu_custom_call.1']
    #allocation5 [shape = 'u8[524288]{0}', space=vmem, size = 0x80000, scoped, tag = 'input window, operand 1, single buffered']
    #allocation6 [shape = 's32[1]{0}', space=sflag, size = 0x4, scoped, tag = 'scoped memory for tpu_custom_call.1']
    #allocation7 [shape = 'u8[4096]{0}', space=vmem, size = 0x1000, scoped, tag = 'input window, operand 2, single buffered']
    #allocation8 [shape = 'u8[524288]{0}', space=vmem, size = 0x80000, scoped, tag = 'input window, operand 3, single buffered']
    #allocation9 [shape = 's32[1]{0}', space=sflag, size = 0x4, scoped, tag = 'scoped memory for tpu_custom_call.1']
    #allocation10 [shape = 'u8[4096]{0}', space=vmem, size = 0x1000, scoped, tag = 'output window, operand 0, single buffered']
    %10 = vsyncpa [#allocation3], 0
    %11 = vsyncpa [#allocation6], 0
    %12 = vsyncpa [#allocation9], 0
    %13 = vsyncpa [#allocation4], 0
    // Predicated region
    $region2: #{tpu_custom_call.1} parent=1 // pred_check
      _
    $region3: #{tpu_custom_call.1} parent=1 // pred_check_branch
      %15 = sbr.rel (0) target = $region5
    $region4: #{tpu_custom_call.1} parent=1 // pred_region
      %s17 = ssub.s32 128, 128
      %18 = vsyncadd [#allocation3], %s17
      %s20 = sshll.u32 [#allocation2], 4
      %s21 = int_to_ptr.vmem [resolvable:$true] %s20
      %23 = dma.hbm_to_vmem [thread:$0]  %s0, 128, %s21, [#allocation3]
    $region5: #{tpu_custom_call.1} parent=1 // pred_fallthru
      _
    // Predicated region
    $region6: #{tpu_custom_call.1} parent=1 // pred_check
      _
    $region7: #{tpu_custom_call.1} parent=1 // pred_check_branch
      %25 = sbr.rel (0) target = $region9
    $region8: #{tpu_custom_call.1} parent=1 // pred_region
      %s27 = ssub.s32 16384, 16384
      %28 = vsyncadd [#allocation6], %s27
      %s29 = sshll.u32 [#allocation5], 4
      %s30 = int_to_ptr.vmem [resolvable:$true] %s29
      %35 = dma.hbm_to_vmem [thread:$0]  %s1, 16384, %s30, [#allocation6], 1024, 1024, 64
    $region9: #{tpu_custom_call.1} parent=1 // pred_fallthru
      _
    // Predicated region
    $region10: #{tpu_custom_call.1} parent=1 // pred_check
      _
    $region11: #{tpu_custom_call.1} parent=1 // pred_check_branch
      %37 = sbr.rel (0) target = $region13
    $region12: #{tpu_custom_call.1} parent=1 // pred_region
      %s39 = ssub.s32 128, 128
      %40 = vsyncadd [#allocation6], %s39
      %s42 = sshll.u32 [#allocation7], 4
      %s43 = int_to_ptr.vmem [resolvable:$true] %s42
      %45 = dma.hbm_to_vmem [thread:$0]  %s2, 128, %s43, [#allocation6]
    $region13: #{tpu_custom_call.1} parent=1 // pred_fallthru
      _
    // Predicated region
    $region14: #{tpu_custom_call.1} parent=1 // pred_check
      _
    $region15: #{tpu_custom_call.1} parent=1 // pred_check_branch
      %47 = sbr.rel (0) target = $region17
    $region16: #{tpu_custom_call.1} parent=1 // pred_region
      %s49 = ssub.s32 16384, 16384
      %50 = vsyncadd [#allocation9], %s49
      %s51 = sshll.u32 [#allocation8], 4
      %s52 = int_to_ptr.vmem [resolvable:$true] %s51
      %57 = dma.hbm_to_vmem [thread:$0]  %s3, 16384, %s52, [#allocation9], 128, 128, 8
    $region17: #{tpu_custom_call.1} parent=1 // pred_fallthru
      _
    // Predicated region
    $region18: #{tpu_custom_call.1} parent=1 // pred_check
      _
    $region19: #{tpu_custom_call.1} parent=1 // pred_check_branch
      %59 = sbr.rel (0) target = $region21
    $region20: #{tpu_custom_call.1} parent=1 // pred_region
      _
    $region21: #{tpu_custom_call.1} parent=1 // pred_fallthru
      _
    // Predicated region
    $region22: #{tpu_custom_call.1} parent=1 // pred_check
      _
    $region23: #{tpu_custom_call.1} parent=1 // pred_check_branch
      %61 = sbr.rel (0) target = $region25
    $region24: #{tpu_custom_call.1} parent=1 // pred_region
      %62 = dma.done [#allocation3], 128
    $region25: #{tpu_custom_call.1} parent=1 // pred_fallthru
      _
    // Predicated region
    $region26: #{tpu_custom_call.1} parent=1 // pred_check
      _
    $region27: #{tpu_custom_call.1} parent=1 // pred_check_branch
      %64 = sbr.rel (0) target = $region29
    $region28: #{tpu_custom_call.1} parent=1 // pred_region
      %65 = dma.done [#allocation6], 16384
    $region29: #{tpu_custom_call.1} parent=1 // pred_fallthru
      _
    // Predicated region
    $region30: #{tpu_custom_call.1} parent=1 // pred_check
      _
    $region31: #{tpu_custom_call.1} parent=1 // pred_check_branch
      %67 = sbr.rel (0) target = $region33
    $region32: #{tpu_custom_call.1} parent=1 // pred_region
      %68 = dma.done [#allocation6], 128
    $region33: #{tpu_custom_call.1} parent=1 // pred_fallthru
      _
    // Predicated region
    $region34: #{tpu_custom_call.1} parent=1 // pred_check
      _
    $region35: #{tpu_custom_call.1} parent=1 // pred_check_branch
      %70 = sbr.rel (0) target = $region37
    $region36: #{tpu_custom_call.1} parent=1 // pred_region
      %71 = dma.done [#allocation9], 16384
    $region37: #{tpu_custom_call.1} parent=1 // pred_fallthru
      _
    %v72 = vld [vmem:[#allocation2] sm:$0xff]
    %v73 = vld [vmem:[#allocation5] sm:$0xff]
    %v74 = vld [vmem:[#allocation5 + $0x8] sm:$0xff]
    %v75 = vld [vmem:[#allocation5 + $0x10] sm:$0xff]
    %v76 = vld [vmem:[#allocation5 + $0x18] sm:$0xff]
    %v77 = vld [vmem:[#allocation5 + $0x20] sm:$0xff]
    %v78 = vld [vmem:[#allocation5 + $0x28] sm:$0xff]
    %v79 = vld [vmem:[#allocation5 + $0x30] sm:$0xff]
    %v80 = vld [vmem:[#allocation5 + $0x38] sm:$0xff]
    %v81 = vld [vmem:[#allocation5 + $0x40] sm:$0xff]
    %v82 = vld [vmem:[#allocation5 + $0x48] sm:$0xff]
    %v83 = vld [vmem:[#allocation5 + $0x50] sm:$0xff]
    %v84 = vld [vmem:[#allocation5 + $0x58] sm:$0xff]
    %v85 = vld [vmem:[#allocation5 + $0x60] sm:$0xff]
    %v86 = vld [vmem:[#allocation5 + $0x68] sm:$0xff]
    %v87 = vld [vmem:[#allocation5 + $0x70] sm:$0xff]
    %v88 = vld [vmem:[#allocation5 + $0x78] sm:$0xff]
    %v89 = vld [vmem:[#allocation5 + $0x80] sm:$0xff]
    %v90 = vld [vmem:[#allocation5 + $0x88] sm:$0xff]
    %v91 = vld [vmem:[#allocation5 + $0x90] sm:$0xff]
    %v92 = vld [vmem:[#allocation5 + $0x98] sm:$0xff]
    %v93 = vld [vmem:[#allocation5 + $0xa0] sm:$0xff]
    %v94 = vld [vmem:[#allocation5 + $0xa8] sm:$0xff]
    %v95 = vld [vmem:[#allocation5 + $0xb0] sm:$0xff]
    %v96 = vld [vmem:[#allocation5 + $0xb8] sm:$0xff]
    %v97 = vld [vmem:[#allocation5 + $0xc0] sm:$0xff]
    %v98 = vld [vmem:[#allocation5 + $0xc8] sm:$0xff]
    %v99 = vld [vmem:[#allocation5 + $0xd0] sm:$0xff]
    %v100 = vld [vmem:[#allocation5 + $0xd8] sm:$0xff]
    %v101 = vld [vmem:[#allocation5 + $0xe0] sm:$0xff]
    %v102 = vld [vmem:[#allocation5 + $0xe8] sm:$0xff]
    %v103 = vld [vmem:[#allocation5 + $0xf0] sm:$0xff]
    %v104 = vld [vmem:[#allocation5 + $0xf8] sm:$0xff]
    %v105 = vld [vmem:[#allocation5 + $0x100] sm:$0xff]
    %v106 = vld [vmem:[#allocation5 + $0x108] sm:$0xff]
    %v107 = vld [vmem:[#allocation5 + $0x110] sm:$0xff]
    %v108 = vld [vmem:[#allocation5 + $0x118] sm:$0xff]
    %v109 = vld [vmem:[#allocation5 + $0x120] sm:$0xff]
    %v110 = vld [vmem:[#allocation5 + $0x128] sm:$0xff]
    %v111 = vld [vmem:[#allocation5 + $0x130] sm:$0xff]
    %v112 = vld [vmem:[#allocation5 + $0x138] sm:$0xff]
    %v113 = vld [vmem:[#allocation5 + $0x140] sm:$0xff]
    %v114 = vld [vmem:[#allocation5 + $0x148] sm:$0xff]
    %v115 = vld [vmem:[#allocation5 + $0x150] sm:$0xff]
    %v116 = vld [vmem:[#allocation5 + $0x158] sm:$0xff]
    %v117 = vld [vmem:[#allocation5 + $0x160] sm:$0xff]
    %v118 = vld [vmem:[#allocation5 + $0x168] sm:$0xff]
    %v119 = vld [vmem:[#allocation5 + $0x170] sm:$0xff]
    %v120 = vld [vmem:[#allocation5 + $0x178] sm:$0xff]
    %v121 = vld [vmem:[#allocation5 + $0x180] sm:$0xff]
    %v122 = vld [vmem:[#allocation5 + $0x188] sm:$0xff]
    %v123 = vld [vmem:[#allocation5 + $0x190] sm:$0xff]
    %v124 = vld [vmem:[#allocation5 + $0x198] sm:$0xff]
    %v125 = vld [vmem:[#allocation5 + $0x1a0] sm:$0xff]
    %v126 = vld [vmem:[#allocation5 + $0x1a8] sm:$0xff]
    %v127 = vld [vmem:[#allocation5 + $0x1b0] sm:$0xff]
    %v128 = vld [vmem:[#allocation5 + $0x1b8] sm:$0xff]
    %v129 = vld [vmem:[#allocation5 + $0x1c0] sm:$0xff]
    %v130 = vld [vmem:[#allocation5 + $0x1c8] sm:$0xff]
    %v131 = vld [vmem:[#allocation5 + $0x1d0] sm:$0xff]
    %v132 = vld [vmem:[#allocation5 + $0x1d8] sm:$0xff]
    %v133 = vld [vmem:[#allocation5 + $0x1e0] sm:$0xff]
    %v134 = vld [vmem:[#allocation5 + $0x1e8] sm:$0xff]
    %v135 = vld [vmem:[#allocation5 + $0x1f0] sm:$0xff]
    %v136 = vld [vmem:[#allocation5 + $0x1f8] sm:$0xff]
    %v137 = vld [vmem:[#allocation5 + $0x200] sm:$0xff]
    %v138 = vld [vmem:[#allocation5 + $0x208] sm:$0xff]
    %v139 = vld [vmem:[#allocation5 + $0x210] sm:$0xff]
    %v140 = vld [vmem:[#allocation5 + $0x218] sm:$0xff]
    %v141 = vld [vmem:[#allocation5 + $0x220] sm:$0xff]
    %v142 = vld [vmem:[#allocation5 + $0x228] sm:$0xff]
    %v143 = vld [vmem:[#allocation5 + $0x230] sm:$0xff]
    %v144 = vld [vmem:[#allocation5 + $0x238] sm:$0xff]
    %v145 = vld [vmem:[#allocation5 + $0x240] sm:$0xff]
    %v146 = vld [vmem:[#allocation5 + $0x248] sm:$0xff]
    %v147 = vld [vmem:[#allocation5 + $0x250] sm:$0xff]
    %v148 = vld [vmem:[#allocation5 + $0x258] sm:$0xff]
    %v149 = vld [vmem:[#allocation5 + $0x260] sm:$0xff]
    %v150 = vld [vmem:[#allocation5 + $0x268] sm:$0xff]
    %v151 = vld [vmem:[#allocation5 + $0x270] sm:$0xff]
    %v152 = vld [vmem:[#allocation5 + $0x278] sm:$0xff]
    %v153 = vld [vmem:[#allocation5 + $0x280] sm:$0xff]
    %v154 = vld [vmem:[#allocation5 + $0x288] sm:$0xff]
    %v155 = vld [vmem:[#allocation5 + $0x290] sm:$0xff]
    %v156 = vld [vmem:[#allocation5 + $0x298] sm:$0xff]
    %v157 = vld [vmem:[#allocation5 + $0x2a0] sm:$0xff]
    %v158 = vld [vmem:[#allocation5 + $0x2a8] sm:$0xff]
    %v159 = vld [vmem:[#allocation5 + $0x2b0] sm:$0xff]
    %v160 = vld [vmem:[#allocation5 + $0x2b8] sm:$0xff]
    %v161 = vld [vmem:[#allocation5 + $0x2c0] sm:$0xff]
    %v162 = vld [vmem:[#allocation5 + $0x2c8] sm:$0xff]
    %v163 = vld [vmem:[#allocation5 + $0x2d0] sm:$0xff]
    %v164 = vld [vmem:[#allocation5 + $0x2d8] sm:$0xff]
    %v165 = vld [vmem:[#allocation5 + $0x2e0] sm:$0xff]
    %v166 = vld [vmem:[#allocation5 + $0x2e8] sm:$0xff]
    %v167 = vld [vmem:[#allocation5 + $0x2f0] sm:$0xff]
    %v168 = vld [vmem:[#allocation5 + $0x2f8] sm:$0xff]
    %v169 = vld [vmem:[#allocation5 + $0x300] sm:$0xff]
    %v170 = vld [vmem:[#allocation5 + $0x308] sm:$0xff]
    %v171 = vld [vmem:[#allocation5 + $0x310] sm:$0xff]
    %v172 = vld [vmem:[#allocation5 + $0x318] sm:$0xff]
    %v173 = vld [vmem:[#allocation5 + $0x320] sm:$0xff]
    %v174 = vld [vmem:[#allocation5 + $0x328] sm:$0xff]
    %v175 = vld [vmem:[#allocation5 + $0x330] sm:$0xff]
    %v176 = vld [vmem:[#allocation5 + $0x338] sm:$0xff]
    %v177 = vld [vmem:[#allocation5 + $0x340] sm:$0xff]
    %v178 = vld [vmem:[#allocation5 + $0x348] sm:$0xff]
    %v179 = vld [vmem:[#allocation5 + $0x350] sm:$0xff]
    %v180 = vld [vmem:[#allocation5 + $0x358] sm:$0xff]
    %v181 = vld [vmem:[#allocation5 + $0x360] sm:$0xff]
    %v182 = vld [vmem:[#allocation5 + $0x368] sm:$0xff]
    %v183 = vld [vmem:[#allocation5 + $0x370] sm:$0xff]
    %v184 = vld [vmem:[#allocation5 + $0x378] sm:$0xff]
    %v185 = vld [vmem:[#allocation5 + $0x380] sm:$0xff]
    %v186 = vld [vmem:[#allocation5 + $0x388] sm:$0xff]
    %v187 = vld [vmem:[#allocation5 + $0x390] sm:$0xff]
    %v188 = vld [vmem:[#allocation5 + $0x398] sm:$0xff]
    %v189 = vld [vmem:[#allocation5 + $0x3a0] sm:$0xff]
    %v190 = vld [vmem:[#allocation5 + $0x3a8] sm:$0xff]
    %v191 = vld [vmem:[#allocation5 + $0x3b0] sm:$0xff]
    %v192 = vld [vmem:[#allocation5 + $0x3b8] sm:$0xff]
    %v193 = vld [vmem:[#allocation5 + $0x3c0] sm:$0xff]
    %v194 = vld [vmem:[#allocation5 + $0x3c8] sm:$0xff]
    %v195 = vld [vmem:[#allocation5 + $0x3d0] sm:$0xff]
    %v196 = vld [vmem:[#allocation5 + $0x3d8] sm:$0xff]
    %v197 = vld [vmem:[#allocation5 + $0x3e0] sm:$0xff]
    %v198 = vld [vmem:[#allocation5 + $0x3e8] sm:$0xff]
    %v199 = vld [vmem:[#allocation5 + $0x3f0] sm:$0xff]
    %v200 = vld [vmem:[#allocation5 + $0x3f8] sm:$0xff]
    %v201 = vld [vmem:[#allocation7] sm:$0xff]
    %v203 = vlaneseq
    %v204 = vshrl.u32 %v203, 7
    %v205 = vsub.s32 0, %v204
    %v206 = vrot.slane %v201, %v205
    %v207 = vlaneseq
    %v208 = vshrl.u32 %v207, 7
    %v209 = vsub.s32 1, %v208
    %v210 = vrot.slane %v201, %v209
    %v211 = vlaneseq
    %v212 = vshrl.u32 %v211, 7
    %v213 = vsub.s32 2, %v212
    %v214 = vrot.slane %v201, %v213
    %v215 = vlaneseq
    %v216 = vshrl.u32 %v215, 7
    %v217 = vsub.s32 3, %v216
    %v218 = vrot.slane %v201, %v217
    %v219 = vlaneseq
    %v220 = vshrl.u32 %v219, 7
    %v221 = vsub.s32 4, %v220
    %v222 = vrot.slane %v201, %v221
    %v223 = vlaneseq
    %v224 = vshrl.u32 %v223, 7
    %v225 = vsub.s32 5, %v224
    %v226 = vrot.slane %v201, %v225
    %v227 = vlaneseq
    %v228 = vshrl.u32 %v227, 7
    %v229 = vsub.s32 6, %v228
    %v230 = vrot.slane %v201, %v229
    %v231 = vlaneseq
    %v232 = vshrl.u32 %v231, 7
    %v233 = vsub.s32 7, %v232
    %v234 = vrot.slane %v201, %v233
    %v243 = vand.u32 %v74, 4294901760
    %244 = vmatprep.subr.mxu0 %v243
    %v245 = vand.u32 %v73, 4294901760
    %246 = vmatpush1.msra.mxu0 %v245
    %v247 = vand.u32 %v82, 4294901760
    %248 = vmatprep.subr.mxu0 %v247
    %v249 = vand.u32 %v81, 4294901760
    %250 = vmatpush1.msra.mxu0 %v249
    %v251 = vand.u32 %v90, 4294901760
    %252 = vmatprep.subr.mxu0 %v251
    %v253 = vand.u32 %v89, 4294901760
    %254 = vmatpush1.msra.mxu0 %v253
    %v255 = vand.u32 %v98, 4294901760
    %256 = vmatprep.subr.mxu0 %v255
    %v257 = vand.u32 %v97, 4294901760
    %258 = vmatpush1.msra.mxu0 %v257
    %v259 = vand.u32 %v106, 4294901760
    %260 = vmatprep.subr.mxu0 %v259
    %v261 = vand.u32 %v105, 4294901760
    %262 = vmatpush1.msra.mxu0 %v261
    %v263 = vand.u32 %v114, 4294901760
    %264 = vmatprep.subr.mxu0 %v263
    %v265 = vand.u32 %v113, 4294901760
    %266 = vmatpush1.msra.mxu0 %v265
    %v267 = vand.u32 %v122, 4294901760
    %268 = vmatprep.subr.mxu0 %v267
    %v269 = vand.u32 %v121, 4294901760
    %270 = vmatpush1.msra.mxu0 %v269
    %v271 = vand.u32 %v130, 4294901760
    %272 = vmatprep.subr.mxu0 %v271
    %v273 = vand.u32 %v129, 4294901760
    %274 = vmatpush1.msra.mxu0 %v273
    %v275 = vand.u32 %v138, 4294901760
    %276 = vmatprep.subr.mxu0 %v275
    %v277 = vand.u32 %v137, 4294901760
    %278 = vmatpush1.msra.mxu0 %v277
    %v279 = vand.u32 %v146, 4294901760
    %280 = vmatprep.subr.mxu0 %v279
    %v281 = vand.u32 %v145, 4294901760
    %282 = vmatpush1.msra.mxu0 %v281
    %v283 = vand.u32 %v154, 4294901760
    %284 = vmatprep.subr.mxu0 %v283
    %v285 = vand.u32 %v153, 4294901760
    %286 = vmatpush1.msra.mxu0 %v285
    %v287 = vand.u32 %v162, 4294901760
    %288 = vmatprep.subr.mxu0 %v287
    %v289 = vand.u32 %v161, 4294901760
    %290 = vmatpush1.msra.mxu0 %v289
    %v291 = vand.u32 %v170, 4294901760
    %292 = vmatprep.subr.mxu0 %v291
    %v293 = vand.u32 %v169, 4294901760
    %294 = vmatpush1.msra.mxu0 %v293
    %v295 = vand.u32 %v178, 4294901760
    %296 = vmatprep.subr.mxu0 %v295
    %v297 = vand.u32 %v177, 4294901760
    %298 = vmatpush1.msra.mxu0 %v297
    %v299 = vand.u32 %v186, 4294901760
    %300 = vmatprep.subr.mxu0 %v299
    %v301 = vand.u32 %v185, 4294901760
    %302 = vmatpush1.msra.mxu0 %v301
    %v303 = vand.u32 %v194, 4294901760
    %304 = vmatprep.subr.mxu0 %v303
    %v305 = vand.u32 %v193, 4294901760
    %306 = vmatpush1.msra.mxu0 %v305
    %307 = vmatprep.subr.mxu0 0.0
    %308 = vmatpush1.msra.mxu0 0.0
    %309 = vmatprep.subr.mxu0 0.0
    %310 = vmatpush1.msra.mxu0 0.0
    %311 = vmatprep.subr.mxu0 0.0
    %312 = vmatpush1.msra.mxu0 0.0
    %313 = vmatprep.subr.mxu0 0.0
    %314 = vmatpush1.msra.mxu0 0.0
    %315 = vmatprep.subr.mxu0 0.0
    %316 = vmatpush1.msra.mxu0 0.0
    %317 = vmatprep.subr.mxu0 0.0
    %318 = vmatpush1.msra.mxu0 0.0
    %319 = vmatprep.subr.mxu0 0.0
    %320 = vmatpush1.msra.mxu0 0.0
    %321 = vmatprep.subr.mxu0 0.0
    %322 = vmatpush1.msra.mxu0 0.0
    %323 = vmatprep.subr.mxu0 0.0
    %324 = vmatpush1.msra.mxu0 0.0
    %325 = vmatprep.subr.mxu0 0.0
    %326 = vmatpush1.msra.mxu0 0.0
    %327 = vmatprep.subr.mxu0 0.0
    %328 = vmatpush1.msra.mxu0 0.0
    %329 = vmatprep.subr.mxu0 0.0
    %330 = vmatpush1.msra.mxu0 0.0
    %331 = vmatprep.subr.mxu0 0.0
    %332 = vmatpush1.msra.mxu0 0.0
    %333 = vmatprep.subr.mxu0 0.0
    %334 = vmatpush1.msra.mxu0 0.0
    %335 = vmatprep.subr.mxu0 0.0
    %336 = vmatpush1.msra.mxu0 0.0
    %337 = vmatprep.subr.mxu0 0.0
    %338 = vmatpush1.msra.mxu0 0.0
    %339 = vmatprep.mubr.f32.mxu0 0.0
    %v340 = vand.u32 %v72, 4294901760
    %v341 = vsub.f32 %v72, %v340
    %v342 = vand.u32 %v341, 4294901760
    %v343 = vsub.f32 %v341, %v342
    %v344 = vand.u32 %v343, 4294901760
    %345 = vmatmul.mubr.f32.gmra.mrb[0].mxu0 %v344
    %v346 = vpop.f32.mrb[0].mxu0
    %v347 = vadd.f32 %v206, %v346
    %v348 = vpop.f32.mrb[0].mxu0
    %v349 = vadd.f32 %v210, %v348
    %350 = vdwg.mxu0
    %v351 = vand.u32 %v74, 4294901760
    %v352 = vsub.f32 %v74, %v351
    %v353 = vand.u32 %v352, 4294901760
    %v354 = vsub.f32 %v352, %v353
    %v355 = vand.u32 %v354, 4294901760
    %356 = vmatprep.subr.mxu0 %v355
    %v357 = vand.u32 %v73, 4294901760
    %v358 = vsub.f32 %v73, %v357
    %v359 = vand.u32 %v358, 4294901760
    %v360 = vsub.f32 %v358, %v359
    %v361 = vand.u32 %v360, 4294901760
    %362 = vmatpush1.msra.mxu0 %v361
    %v363 = vand.u32 %v82, 4294901760
    %v364 = vsub.f32 %v82, %v363
    %v365 = vand.u32 %v364, 4294901760
    %v366 = vsub.f32 %v364, %v365
    %v367 = vand.u32 %v366, 4294901760
    %368 = vmatprep.subr.mxu0 %v367
    %v369 = vand.u32 %v81, 4294901760
    %v370 = vsub.f32 %v81, %v369
    %v371 = vand.u32 %v370, 4294901760
    %v372 = vsub.f32 %v370, %v371
    %v373 = vand.u32 %v372, 4294901760
    %374 = vmatpush1.msra.mxu0 %v373
    %v375 = vand.u32 %v90, 4294901760
    %v376 = vsub.f32 %v90, %v375
    %v377 = vand.u32 %v376, 4294901760
    %v378 = vsub.f32 %v376, %v377
    %v379 = vand.u32 %v378, 4294901760
    %380 = vmatprep.subr.mxu0 %v379
    %v381 = vand.u32 %v89, 4294901760
    %v382 = vsub.f32 %v89, %v381
    %v383 = vand.u32 %v382, 4294901760
    %v384 = vsub.f32 %v382, %v383
    %v385 = vand.u32 %v384, 4294901760
    %386 = vmatpush1.msra.mxu0 %v385
    %v387 = vand.u32 %v98, 4294901760
    %v388 = vsub.f32 %v98, %v387
    %v389 = vand.u32 %v388, 4294901760
    %v390 = vsub.f32 %v388, %v389
    %v391 = vand.u32 %v390, 4294901760
    %392 = vmatprep.subr.mxu0 %v391
    %v393 = vand.u32 %v97, 4294901760
    %v394 = vsub.f32 %v97, %v393
    %v395 = vand.u32 %v394, 4294901760
    %v396 = vsub.f32 %v394, %v395
    %v397 = vand.u32 %v396, 4294901760
    %398 = vmatpush1.msra.mxu0 %v397
    %v399 = vand.u32 %v106, 4294901760
    %v400 = vsub.f32 %v106, %v399
    %v401 = vand.u32 %v400, 4294901760
    %v402 = vsub.f32 %v400, %v401
    %v403 = vand.u32 %v402, 4294901760
    %404 = vmatprep.subr.mxu0 %v403
    %v405 = vand.u32 %v105, 4294901760
    %v406 = vsub.f32 %v105, %v405
    %v407 = vand.u32 %v406, 4294901760
    %v408 = vsub.f32 %v406, %v407
    %v409 = vand.u32 %v408, 4294901760
    %410 = vmatpush1.msra.mxu0 %v409
    %v411 = vand.u32 %v114, 4294901760
    %v412 = vsub.f32 %v114, %v411
    %v413 = vand.u32 %v412, 4294901760
    %v414 = vsub.f32 %v412, %v413
    %v415 = vand.u32 %v414, 4294901760
    %416 = vmatprep.subr.mxu0 %v415
    %v417 = vand.u32 %v113, 4294901760
    %v418 = vsub.f32 %v113, %v417
    %v419 = vand.u32 %v418, 4294901760
    %v420 = vsub.f32 %v418, %v419
    %v421 = vand.u32 %v420, 4294901760
    %422 = vmatpush1.msra.mxu0 %v421
    %v423 = vand.u32 %v122, 4294901760
    %v424 = vsub.f32 %v122, %v423
    %v425 = vand.u32 %v424, 4294901760
    %v426 = vsub.f32 %v424, %v425
    %v427 = vand.u32 %v426, 4294901760
    %428 = vmatprep.subr.mxu0 %v427
    %v429 = vand.u32 %v121, 4294901760
    %v430 = vsub.f32 %v121, %v429
    %v431 = vand.u32 %v430, 4294901760
    %v432 = vsub.f32 %v430, %v431
    %v433 = vand.u32 %v432, 4294901760
    %434 = vmatpush1.msra.mxu0 %v433
    %v435 = vand.u32 %v130, 4294901760
    %v436 = vsub.f32 %v130, %v435
    %v437 = vand.u32 %v436, 4294901760
    %v438 = vsub.f32 %v436, %v437
    %v439 = vand.u32 %v438, 4294901760
    %440 = vmatprep.subr.mxu0 %v439
    %v441 = vand.u32 %v129, 4294901760
    %v442 = vsub.f32 %v129, %v441
    %v443 = vand.u32 %v442, 4294901760
    %v444 = vsub.f32 %v442, %v443
    %v445 = vand.u32 %v444, 4294901760
    %446 = vmatpush1.msra.mxu0 %v445
    %v447 = vand.u32 %v138, 4294901760
    %v448 = vsub.f32 %v138, %v447
    %v449 = vand.u32 %v448, 4294901760
    %v450 = vsub.f32 %v448, %v449
    %v451 = vand.u32 %v450, 4294901760
    %452 = vmatprep.subr.mxu0 %v451
    %v453 = vand.u32 %v137, 4294901760
    %v454 = vsub.f32 %v137, %v453
    %v455 = vand.u32 %v454, 4294901760
    %v456 = vsub.f32 %v454, %v455
    %v457 = vand.u32 %v456, 4294901760
    %458 = vmatpush1.msra.mxu0 %v457
    %v459 = vand.u32 %v146, 4294901760
    %v460 = vsub.f32 %v146, %v459
    %v461 = vand.u32 %v460, 4294901760
    %v462 = vsub.f32 %v460, %v461
    %v463 = vand.u32 %v462, 4294901760
    %464 = vmatprep.subr.mxu0 %v463
    %v465 = vand.u32 %v145, 4294901760
    %v466 = vsub.f32 %v145, %v465
    %v467 = vand.u32 %v466, 4294901760
    %v468 = vsub.f32 %v466, %v467
    %v469 = vand.u32 %v468, 4294901760
    %470 = vmatpush1.msra.mxu0 %v469
    %v471 = vand.u32 %v154, 4294901760
    %v472 = vsub.f32 %v154, %v471
    %v473 = vand.u32 %v472, 4294901760
    %v474 = vsub.f32 %v472, %v473
    %v475 = vand.u32 %v474, 4294901760
    %476 = vmatprep.subr.mxu0 %v475
    %v477 = vand.u32 %v153, 4294901760
    %v478 = vsub.f32 %v153, %v477
    %v479 = vand.u32 %v478, 4294901760
    %v480 = vsub.f32 %v478, %v479
    %v481 = vand.u32 %v480, 4294901760
    %482 = vmatpush1.msra.mxu0 %v481
    %v483 = vand.u32 %v162, 4294901760
    %v484 = vsub.f32 %v162, %v483
    %v485 = vand.u32 %v484, 4294901760
    %v486 = vsub.f32 %v484, %v485
    %v487 = vand.u32 %v486, 4294901760
    %488 = vmatprep.subr.mxu0 %v487
    %v489 = vand.u32 %v161, 4294901760
    %v490 = vsub.f32 %v161, %v489
    %v491 = vand.u32 %v490, 4294901760
    %v492 = vsub.f32 %v490, %v491
    %v493 = vand.u32 %v492, 4294901760
    %494 = vmatpush1.msra.mxu0 %v493
    %v495 = vand.u32 %v170, 4294901760
    %v496 = vsub.f32 %v170, %v495
    %v497 = vand.u32 %v496, 4294901760
    %v498 = vsub.f32 %v496, %v497
    %v499 = vand.u32 %v498, 4294901760
    %500 = vmatprep.subr.mxu0 %v499
    %v501 = vand.u32 %v169, 4294901760
    %v502 = vsub.f32 %v169, %v501
    %v503 = vand.u32 %v502, 4294901760
    %v504 = vsub.f32 %v502, %v503
    %v505 = vand.u32 %v504, 4294901760
    %506 = vmatpush1.msra.mxu0 %v505
    %v507 = vand.u32 %v178, 4294901760
    %v508 = vsub.f32 %v178, %v507
    %v509 = vand.u32 %v508, 4294901760
    %v510 = vsub.f32 %v508, %v509
    %v511 = vand.u32 %v510, 4294901760
    %512 = vmatprep.subr.mxu0 %v511
    %v513 = vand.u32 %v177, 4294901760
    %v514 = vsub.f32 %v177, %v513
    %v515 = vand.u32 %v514, 4294901760
    %v516 = vsub.f32 %v514, %v515
    %v517 = vand.u32 %v516, 4294901760
    %518 = vmatpush1.msra.mxu0 %v517
    %v519 = vand.u32 %v186, 4294901760
    %v520 = vsub.f32 %v186, %v519
    %v521 = vand.u32 %v520, 4294901760
    %v522 = vsub.f32 %v520, %v521
    %v523 = vand.u32 %v522, 4294901760
    %524 = vmatprep.subr.mxu0 %v523
    %v525 = vand.u32 %v185, 4294901760
    %v526 = vsub.f32 %v185, %v525
    %v527 = vand.u32 %v526, 4294901760
    %v528 = vsub.f32 %v526, %v527
    %v529 = vand.u32 %v528, 4294901760
    %530 = vmatpush1.msra.mxu0 %v529
    %v531 = vand.u32 %v194, 4294901760
    %v532 = vsub.f32 %v194, %v531
    %v533 = vand.u32 %v532, 4294901760
    %v534 = vsub.f32 %v532, %v533
    %v535 = vand.u32 %v534, 4294901760
    %536 = vmatprep.subr.mxu0 %v535
    %v537 = vand.u32 %v193, 4294901760
    %v538 = vsub.f32 %v193, %v537
    %v539 = vand.u32 %v538, 4294901760
    %v540 = vsub.f32 %v538, %v539
    %v541 = vand.u32 %v540, 4294901760
    %542 = vmatpush1.msra.mxu0 %v541
    %543 = vmatprep.subr.mxu0 0.0
    %544 = vmatpush1.msra.mxu0 0.0
    %545 = vmatprep.subr.mxu0 0.0
    %546 = vmatpush1.msra.mxu0 0.0
    %547 = vmatprep.subr.mxu0 0.0
    %548 = vmatpush1.msra.mxu0 0.0
    %549 = vmatprep.subr.mxu0 0.0
    %550 = vmatpush1.msra.mxu0 0.0
    %551 = vmatprep.subr.mxu0 0.0
    %552 = vmatpush1.msra.mxu0 0.0
    %553 = vmatprep.subr.mxu0 0.0
    %554 = vmatpush1.msra.mxu0 0.0
    %555 = vmatprep.subr.mxu0 0.0
    %556 = vmatpush1.msra.mxu0 0.0
    %557 = vmatprep.subr.mxu0 0.0
    %558 = vmatpush1.msra.mxu0 0.0
    %559 = vmatprep.subr.mxu0 0.0
    %560 = vmatpush1.msra.mxu0 0.0
    %561 = vmatprep.subr.mxu0 0.0
    %562 = vmatpush1.msra.mxu0 0.0
    %563 = vmatprep.subr.mxu0 0.0
    %564 = vmatpush1.msra.mxu0 0.0
    %565 = vmatprep.subr.mxu0 0.0
    %566 = vmatpush1.msra.mxu0 0.0
    %567 = vmatprep.subr.mxu0 0.0
    %568 = vmatpush1.msra.mxu0 0.0
    %569 = vmatprep.subr.mxu0 0.0
    %570 = vmatpush1.msra.mxu0 0.0
    %571 = vmatprep.subr.mxu0 0.0
    %572 = vmatpush1.msra.mxu0 0.0
    %573 = vmatprep.subr.mxu0 0.0
    %574 = vmatpush1.msra.mxu0 0.0
    %575 = vmatprep.mubr.f32.mxu0 0.0
    %v576 = vand.u32 %v72, 4294901760
    %577 = vmatmul.mubr.f32.gmra.mrb[0].mxu0 %v576
    %v578 = vpop.f32.mrb[0].mxu0
    %v579 = vadd.f32 %v347, %v578
    %v580 = vpop.f32.mrb[0].mxu0
    %v581 = vadd.f32 %v349, %v580
    %582 = vdwg.mxu0
    %v583 = vand.u32 %v74, 4294901760
    %v584 = vsub.f32 %v74, %v583
    %585 = vmatprep.subr.mxu0 %v584
    %v586 = vand.u32 %v73, 4294901760
    %v587 = vsub.f32 %v73, %v586
    %588 = vmatpush1.msra.mxu0 %v587
    %v589 = vand.u32 %v82, 4294901760
    %v590 = vsub.f32 %v82, %v589
    %591 = vmatprep.subr.mxu0 %v590
    %v592 = vand.u32 %v81, 4294901760
    %v593 = vsub.f32 %v81, %v592
    %594 = vmatpush1.msra.mxu0 %v593
    %v595 = vand.u32 %v90, 4294901760
    %v596 = vsub.f32 %v90, %v595
    %597 = vmatprep.subr.mxu0 %v596
    %v598 = vand.u32 %v89, 4294901760
    %v599 = vsub.f32 %v89, %v598
    %600 = vmatpush1.msra.mxu0 %v599
    %v601 = vand.u32 %v98, 4294901760
    %v602 = vsub.f32 %v98, %v601
    %603 = vmatprep.subr.mxu0 %v602
    %v604 = vand.u32 %v97, 4294901760
    %v605 = vsub.f32 %v97, %v604
    %606 = vmatpush1.msra.mxu0 %v605
    %v607 = vand.u32 %v106, 4294901760
    %v608 = vsub.f32 %v106, %v607
    %609 = vmatprep.subr.mxu0 %v608
    %v610 = vand.u32 %v105, 4294901760
    %v611 = vsub.f32 %v105, %v610
    %612 = vmatpush1.msra.mxu0 %v611
    %v613 = vand.u32 %v114, 4294901760
    %v614 = vsub.f32 %v114, %v613
    %615 = vmatprep.subr.mxu0 %v614
    %v616 = vand.u32 %v113, 4294901760
    %v617 = vsub.f32 %v113, %v616
    %618 = vmatpush1.msra.mxu0 %v617
    %v619 = vand.u32 %v122, 4294901760
    %v620 = vsub.f32 %v122, %v619
    %621 = vmatprep.subr.mxu0 %v620
    %v622 = vand.u32 %v121, 4294901760
    %v623 = vsub.f32 %v121, %v622
    %624 = vmatpush1.msra.mxu0 %v623
    %v625 = vand.u32 %v130, 4294901760
    %v626 = vsub.f32 %v130, %v625
    %627 = vmatprep.subr.mxu0 %v626
    %v628 = vand.u32 %v129, 4294901760
    %v629 = vsub.f32 %v129, %v628
    %630 = vmatpush1.msra.mxu0 %v629
    %v631 = vand.u32 %v138, 4294901760
    %v632 = vsub.f32 %v138, %v631
    %633 = vmatprep.subr.mxu0 %v632
    %v634 = vand.u32 %v137, 4294901760
    %v635 = vsub.f32 %v137, %v634
    %636 = vmatpush1.msra.mxu0 %v635
    %v637 = vand.u32 %v146, 4294901760
    %v638 = vsub.f32 %v146, %v637
    %639 = vmatprep.subr.mxu0 %v638
    %v640 = vand.u32 %v145, 4294901760
    %v641 = vsub.f32 %v145, %v640
    %642 = vmatpush1.msra.mxu0 %v641
    %v643 = vand.u32 %v154, 4294901760
    %v644 = vsub.f32 %v154, %v643
    %645 = vmatprep.subr.mxu0 %v644
    %v646 = vand.u32 %v153, 4294901760
    %v647 = vsub.f32 %v153, %v646
    %648 = vmatpush1.msra.mxu0 %v647
    %v649 = vand.u32 %v162, 4294901760
    %v650 = vsub.f32 %v162, %v649
    %651 = vmatprep.subr.mxu0 %v650
    %v652 = vand.u32 %v161, 4294901760
    %v653 = vsub.f32 %v161, %v652
    %654 = vmatpush1.msra.mxu0 %v653
    %v655 = vand.u32 %v170, 4294901760
    %v656 = vsub.f32 %v170, %v655
    %657 = vmatprep.subr.mxu0 %v656
    %v658 = vand.u32 %v169, 4294901760
    %v659 = vsub.f32 %v169, %v658
    %660 = vmatpush1.msra.mxu0 %v659
    %v661 = vand.u32 %v178, 4294901760
    %v662 = vsub.f32 %v178, %v661
    %663 = vmatprep.subr.mxu0 %v662
    %v664 = vand.u32 %v177, 4294901760
    %v665 = vsub.f32 %v177, %v664
    %666 = vmatpush1.msra.mxu0 %v665
    %v667 = vand.u32 %v186, 4294901760
    %v668 = vsub.f32 %v186, %v667
    %669 = vmatprep.subr.mxu0 %v668
    %v670 = vand.u32 %v185, 4294901760
    %v671 = vsub.f32 %v185, %v670
    %672 = vmatpush1.msra.mxu0 %v671
    %v673 = vand.u32 %v194, 4294901760
    %v674 = vsub.f32 %v194, %v673
    %675 = vmatprep.subr.mxu0 %v674
    %v676 = vand.u32 %v193, 4294901760
    %v677 = vsub.f32 %v193, %v676
    %678 = vmatpush1.msra.mxu0 %v677
    %679 = vmatprep.subr.mxu0 0.0
    %680 = vmatpush1.msra.mxu0 0.0
    %681 = vmatprep.subr.mxu0 0.0
    %682 = vmatpush1.msra.mxu0 0.0
    %683 = vmatprep.subr.mxu0 0.0
    %684 = vmatpush1.msra.mxu0 0.0
    %685 = vmatprep.subr.mxu0 0.0
    %686 = vmatpush1.msra.mxu0 0.0
    %687 = vmatprep.subr.mxu0 0.0
    %688 = vmatpush1.msra.mxu0 0.0
    %689 = vmatprep.subr.mxu0 0.0
    %690 = vmatpush1.msra.mxu0 0.0
    %691 = vmatprep.subr.mxu0 0.0
    %692 = vmatpush1.msra.mxu0 0.0
    %693 = vmatprep.subr.mxu0 0.0
    %694 = vmatpush1.msra.mxu0 0.0
    %695 = vmatprep.subr.mxu0 0.0
    %696 = vmatpush1.msra.mxu0 0.0
    %697 = vmatprep.subr.mxu0 0.0
    %698 = vmatpush1.msra.mxu0 0.0
    %699 = vmatprep.subr.mxu0 0.0
    %700 = vmatpush1.msra.mxu0 0.0
    %701 = vmatprep.subr.mxu0 0.0
    %702 = vmatpush1.msra.mxu0 0.0
    %703 = vmatprep.subr.mxu0 0.0
    %704 = vmatpush1.msra.mxu0 0.0
    %705 = vmatprep.subr.mxu0 0.0
    %706 = vmatpush1.msra.mxu0 0.0
    %707 = vmatprep.subr.mxu0 0.0
    %708 = vmatpush1.msra.mxu0 0.0
    %709 = vmatprep.subr.mxu0 0.0
    %710 = vmatpush1.msra.mxu0 0.0
    %711 = vmatprep.mubr.f32.mxu0 0.0
    %v712 = vand.u32 %v72, 4294901760
    %v713 = vsub.f32 %v72, %v712
    %714 = vmatmul.mubr.f32.gmra.mrb[0].mxu0 %v713
    %v715 = vpop.f32.mrb[0].mxu0
    %v716 = vadd.f32 %v579, %v715
    %v717 = vpop.f32.mrb[0].mxu0
    %v718 = vadd.f32 %v581, %v717
    %719 = vdwg.mxu0
    %v720 = vand.u32 %v74, 4294901760
    %721 = vmatprep.subr.mxu0 %v720
    %v722 = vand.u32 %v73, 4294901760
    %723 = vmatpush1.msra.mxu0 %v722
    %v724 = vand.u32 %v82, 4294901760
    %725 = vmatprep.subr.mxu0 %v724
    %v726 = vand.u32 %v81, 4294901760
    %727 = vmatpush1.msra.mxu0 %v726
    %v728 = vand.u32 %v90, 4294901760
    %729 = vmatprep.subr.mxu0 %v728
    %v730 = vand.u32 %v89, 4294901760
    %731 = vmatpush1.msra.mxu0 %v730
    %v732 = vand.u32 %v98, 4294901760
    %733 = vmatprep.subr.mxu0 %v732
    %v734 = vand.u32 %v97, 4294901760
    %735 = vmatpush1.msra.mxu0 %v734
    %v736 = vand.u32 %v106, 4294901760
    %737 = vmatprep.subr.mxu0 %v736
    %v738 = vand.u32 %v105, 4294901760
    %739 = vmatpush1.msra.mxu0 %v738
    %v740 = vand.u32 %v114, 4294901760
    %741 = vmatprep.subr.mxu0 %v740
    %v742 = vand.u32 %v113, 4294901760
    %743 = vmatpush1.msra.mxu0 %v742
    %v744 = vand.u32 %v122, 4294901760
    %745 = vmatprep.subr.mxu0 %v744
    %v746 = vand.u32 %v121, 4294901760
    %747 = vmatpush1.msra.mxu0 %v746
    %v748 = vand.u32 %v130, 4294901760
    %749 = vmatprep.subr.mxu0 %v748
    %v750 = vand.u32 %v129, 4294901760
    %751 = vmatpush1.msra.mxu0 %v750
    %v752 = vand.u32 %v138, 4294901760
    %753 = vmatprep.subr.mxu0 %v752
    %v754 = vand.u32 %v137, 4294901760
    %755 = vmatpush1.msra.mxu0 %v754
    %v756 = vand.u32 %v146, 4294901760
    %757 = vmatprep.subr.mxu0 %v756
    %v758 = vand.u32 %v145, 4294901760
    %759 = vmatpush1.msra.mxu0 %v758
    %v760 = vand.u32 %v154, 4294901760
    %761 = vmatprep.subr.mxu0 %v760
    %v762 = vand.u32 %v153, 4294901760
    %763 = vmatpush1.msra.mxu0 %v762
    %v764 = vand.u32 %v162, 4294901760
    %765 = vmatprep.subr.mxu0 %v764
    %v766 = vand.u32 %v161, 4294901760
    %767 = vmatpush1.msra.mxu0 %v766
    %v768 = vand.u32 %v170, 4294901760
    %769 = vmatprep.subr.mxu0 %v768
    %v770 = vand.u32 %v169, 4294901760
    %771 = vmatpush1.msra.mxu0 %v770
    %v772 = vand.u32 %v178, 4294901760
    %773 = vmatprep.subr.mxu0 %v772
    %v774 = vand.u32 %v177, 4294901760
    %775 = vmatpush1.msra.mxu0 %v774
    %v776 = vand.u32 %v186, 4294901760
    %777 = vmatprep.subr.mxu0 %v776
    %v778 = vand.u32 %v185, 4294901760
    %779 = vmatpush1.msra.mxu0 %v778
    %v780 = vand.u32 %v194, 4294901760
    %781 = vmatprep.subr.mxu0 %v780
    %v782 = vand.u32 %v193, 4294901760
    %783 = vmatpush1.msra.mxu0 %v782
    %784 = vmatprep.subr.mxu0 0.0
    %785 = vmatpush1.msra.mxu0 0.0
    %786 = vmatprep.subr.mxu0 0.0
    %787 = vmatpush1.msra.mxu0 0.0
    %788 = vmatprep.subr.mxu0 0.0
    %789 = vmatpush1.msra.mxu0 0.0
    %790 = vmatprep.subr.mxu0 0.0
    %791 = vmatpush1.msra.mxu0 0.0
    %792 = vmatprep.subr.mxu0 0.0
    %793 = vmatpush1.msra.mxu0 0.0
    %794 = vmatprep.subr.mxu0 0.0
    %795 = vmatpush1.msra.mxu0 0.0
    %796 = vmatprep.subr.mxu0 0.0
    %797 = vmatpush1.msra.mxu0 0.0
    %798 = vmatprep.subr.mxu0 0.0
    %799 = vmatpush1.msra.mxu0 0.0
    %800 = vmatprep.subr.mxu0 0.0
    %801 = vmatpush1.msra.mxu0 0.0
    %802 = vmatprep.subr.mxu0 0.0
    %803 = vmatpush1.msra.mxu0 0.0
    %804 = vmatprep.subr.mxu0 0.0
    %805 = vmatpush1.msra.mxu0 0.0
    %806 = vmatprep.subr.mxu0 0.0
    %807 = vmatpush1.msra.mxu0 0.0
    %808 = vmatprep.subr.mxu0 0.0
    %809 = vmatpush1.msra.mxu0 0.0
    %810 = vmatprep.subr.mxu0 0.0
    %811 = vmatpush1.msra.mxu0 0.0
    %812 = vmatprep.subr.mxu0 0.0
    %813 = vmatpush1.msra.mxu0 0.0
    %814 = vmatprep.subr.mxu0 0.0
    %815 = vmatpush1.msra.mxu0 0.0
    %816 = vmatprep.mubr.f32.mxu0 0.0
    %v817 = vand.u32 %v72, 4294901760
    %v818 = vsub.f32 %v72, %v817
    %v819 = vand.u32 %v818, 4294901760
    %820 = vmatmul.mubr.f32.gmra.mrb[0].mxu0 %v819
    %v821 = vpop.f32.mrb[0].mxu0
    %v822 = vadd.f32 %v716, %v821
    %v823 = vpop.f32.mrb[0].mxu0
    %v824 = vadd.f32 %v718, %v823
    %825 = vdwg.mxu0
    %v826 = vand.u32 %v74, 4294901760
    %v827 = vsub.f32 %v74, %v826
    %v828 = vand.u32 %v827, 4294901760
    %829 = vmatprep.subr.mxu0 %v828
    %v830 = vand.u32 %v73, 4294901760
    %v831 = vsub.f32 %v73, %v830
    %v832 = vand.u32 %v831, 4294901760
    %833 = vmatpush1.msra.mxu0 %v832
    %v834 = vand.u32 %v82, 4294901760
    %v835 = vsub.f32 %v82, %v834
    %v836 = vand.u32 %v835, 4294901760
    %837 = vmatprep.subr.mxu0 %v836
    %v838 = vand.u32 %v81, 4294901760
    %v839 = vsub.f32 %v81, %v838
    %v840 = vand.u32 %v839, 4294901760
    %841 = vmatpush1.msra.mxu0 %v840
    %v842 = vand.u32 %v90, 4294901760
    %v843 = vsub.f32 %v90, %v842
    %v844 = vand.u32 %v843, 4294901760
    %845 = vmatprep.subr.mxu0 %v844
    %v846 = vand.u32 %v89, 4294901760
    %v847 = vsub.f32 %v89, %v846
    %v848 = vand.u32 %v847, 4294901760
    %849 = vmatpush1.msra.mxu0 %v848
    %v850 = vand.u32 %v98, 4294901760
    %v851 = vsub.f32 %v98, %v850
    %v852 = vand.u32 %v851, 4294901760
    %853 = vmatprep.subr.mxu0 %v852
    %v854 = vand.u32 %v97, 4294901760
    %v855 = vsub.f32 %v97, %v854
    %v856 = vand.u32 %v855, 4294901760
    %857 = vmatpush1.msra.mxu0 %v856
    %v858 = vand.u32 %v106, 4294901760
    %v859 = vsub.f32 %v106, %v858
    %v860 = vand.u32 %v859, 4294901760
    %861 = vmatprep.subr.mxu0 %v860
    %v862 = vand.u32 %v105, 4294901760
    %v863 = vsub.f32 %v105, %v862
    %v864 = vand.u32 %v863, 4294901760
    %865 = vmatpush1.msra.mxu0 %v864
    %v866 = vand.u32 %v114, 4294901760
    %v867 = vsub.f32 %v114, %v866
    %v868 = vand.u32 %v867, 4294901760
    %869 = vmatprep.subr.mxu0 %v868
    %v870 = vand.u32 %v113, 4294901760
    %v871 = vsub.f32 %v113, %v870
    %v872 = vand.u32 %v871, 4294901760
    %873 = vmatpush1.msra.mxu0 %v872
    %v874 = vand.u32 %v122, 4294901760
    %v875 = vsub.f32 %v122, %v874
    %v876 = vand.u32 %v875, 4294901760
    %877 = vmatprep.subr.mxu0 %v876
    %v878 = vand.u32 %v121, 4294901760
    %v879 = vsub.f32 %v121, %v878
    %v880 = vand.u32 %v879, 4294901760
    %881 = vmatpush1.msra.mxu0 %v880
    %v882 = vand.u32 %v130, 4294901760
    %v883 = vsub.f32 %v130, %v882
    %v884 = vand.u32 %v883, 4294901760
    %885 = vmatprep.subr.mxu0 %v884
    %v886 = vand.u32 %v129, 4294901760
    %v887 = vsub.f32 %v129, %v886
    %v888 = vand.u32 %v887, 4294901760
    %889 = vmatpush1.msra.mxu0 %v888
    %v890 = vand.u32 %v138, 4294901760
    %v891 = vsub.f32 %v138, %v890
    %v892 = vand.u32 %v891, 4294901760
    %893 = vmatprep.subr.mxu0 %v892
    %v894 = vand.u32 %v137, 4294901760
    %v895 = vsub.f32 %v137, %v894
    %v896 = vand.u32 %v895, 4294901760
    %897 = vmatpush1.msra.mxu0 %v896
    %v898 = vand.u32 %v146, 4294901760
    %v899 = vsub.f32 %v146, %v898
    %v900 = vand.u32 %v899, 4294901760
    %901 = vmatprep.subr.mxu0 %v900
    %v902 = vand.u32 %v145, 4294901760
    %v903 = vsub.f32 %v145, %v902
    %v904 = vand.u32 %v903, 4294901760
    %905 = vmatpush1.msra.mxu0 %v904
    %v906 = vand.u32 %v154, 4294901760
    %v907 = vsub.f32 %v154, %v906
    %v908 = vand.u32 %v907, 4294901760
    %909 = vmatprep.subr.mxu0 %v908
    %v910 = vand.u32 %v153, 4294901760
    %v911 = vsub.f32 %v153, %v910
    %v912 = vand.u32 %v911, 4294901760
    %913 = vmatpush1.msra.mxu0 %v912
    %v914 = vand.u32 %v162, 4294901760
    %v915 = vsub.f32 %v162, %v914
    %v916 = vand.u32 %v915, 4294901760
    %917 = vmatprep.subr.mxu0 %v916
    %v918 = vand.u32 %v161, 4294901760
    %v919 = vsub.f32 %v161, %v918
    %v920 = vand.u32 %v919, 4294901760
    %921 = vmatpush1.msra.mxu0 %v920
    %v922 = vand.u32 %v170, 4294901760
    %v923 = vsub.f32 %v170, %v922
    %v924 = vand.u32 %v923, 4294901760
    %925 = vmatprep.subr.mxu0 %v924
    %v926 = vand.u32 %v169, 4294901760
    %v927 = vsub.f32 %v169, %v926
    %v928 = vand.u32 %v927, 4294901760
    %929 = vmatpush1.msra.mxu0 %v928
    %v930 = vand.u32 %v178, 4294901760
    %v931 = vsub.f32 %v178, %v930
    %v932 = vand.u32 %v931, 4294901760
    %933 = vmatprep.subr.mxu0 %v932
    %v934 = vand.u32 %v177, 4294901760
    %v935 = vsub.f32 %v177, %v934
    %v936 = vand.u32 %v935, 4294901760
    %937 = vmatpush1.msra.mxu0 %v936
    %v938 = vand.u32 %v186, 4294901760
    %v939 = vsub.f32 %v186, %v938
    %v940 = vand.u32 %v939, 4294901760
    %941 = vmatprep.subr.mxu0 %v940
    %v942 = vand.u32 %v185, 4294901760
    %v943 = vsub.f32 %v185, %v942
    %v944 = vand.u32 %v943, 4294901760
    %945 = vmatpush1.msra.mxu0 %v944
    %v946 = vand.u32 %v194, 4294901760
    %v947 = vsub.f32 %v194, %v946
    %v948 = vand.u32 %v947, 4294901760
    %949 = vmatprep.subr.mxu0 %v948
    %v950 = vand.u32 %v193, 4294901760
    %v951 = vsub.f32 %v193, %v950
    %v952 = vand.u32 %v951, 4294901760
    %953 = vmatpush1.msra.mxu0 %v952
    %954 = vmatprep.subr.mxu0 0.0
    %955 = vmatpush1.msra.mxu0 0.0
    %956 = vmatprep.subr.mxu0 0.0
    %957 = vmatpush1.msra.mxu0 0.0
    %958 = vmatprep.subr.mxu0 0.0
    %959 = vmatpush1.msra.mxu0 0.0
    %960 = vmatprep.subr.mxu0 0.0
    %961 = vmatpush1.msra.mxu0 0.0
    %962 = vmatprep.subr.mxu0 0.0
    %963 = vmatpush1.msra.mxu0 0.0
    %964 = vmatprep.subr.mxu0 0.0
    %965 = vmatpush1.msra.mxu0 0.0
    %966 = vmatprep.subr.mxu0 0.0
    %967 = vmatpush1.msra.mxu0 0.0
    %968 = vmatprep.subr.mxu0 0.0
    %969 = vmatpush1.msra.mxu0 0.0
    %970 = vmatprep.subr.mxu0 0.0
    %971 = vmatpush1.msra.mxu0 0.0
    %972 = vmatprep.subr.mxu0 0.0
    %973 = vmatpush1.msra.mxu0 0.0
    %974 = vmatprep.subr.mxu0 0.0
    %975 = vmatpush1.msra.mxu0 0.0
    %976 = vmatprep.subr.mxu0 0.0
    %977 = vmatpush1.msra.mxu0 0.0
    %978 = vmatprep.subr.mxu0 0.0
    %979 = vmatpush1.msra.mxu0 0.0
    %980 = vmatprep.subr.mxu0 0.0
    %981 = vmatpush1.msra.mxu0 0.0
    %982 = vmatprep.subr.mxu0 0.0
    %983 = vmatpush1.msra.mxu0 0.0
    %984 = vmatprep.subr.mxu0 0.0
    %985 = vmatpush1.msra.mxu0 0.0
    %986 = vmatprep.mubr.f32.mxu0 0.0
    %v987 = vand.u32 %v72, 4294901760
    %988 = vmatmul.mubr.f32.gmra.mrb[0].mxu0 %v987
    %v989 = vpop.f32.mrb[0].mxu0
    %v990 = vadd.f32 %v822, %v989
    %v991 = vpop.f32.mrb[0].mxu0
    %v992 = vadd.f32 %v824, %v991
    %993 = vdwg.mxu0
    %v994 = vand.u32 %v74, 4294901760
    %995 = vmatprep.subr.mxu0 %v994
    %v996 = vand.u32 %v73, 4294901760
    %997 = vmatpush1.msra.mxu0 %v996
    %v998 = vand.u32 %v82, 4294901760
    %999 = vmatprep.subr.mxu0 %v998
    %v1000 = vand.u32 %v81, 4294901760
    %1001 = vmatpush1.msra.mxu0 %v1000
    %v1002 = vand.u32 %v90, 4294901760
    %1003 = vmatprep.subr.mxu0 %v1002
    %v1004 = vand.u32 %v89, 4294901760
    %1005 = vmatpush1.msra.mxu0 %v1004
    %v1006 = vand.u32 %v98, 4294901760
    %1007 = vmatprep.subr.mxu0 %v1006
    %v1008 = vand.u32 %v97, 4294901760
    %1009 = vmatpush1.msra.mxu0 %v1008
    %v1010 = vand.u32 %v106, 4294901760
    %1011 = vmatprep.subr.mxu0 %v1010
    %v1012 = vand.u32 %v105, 4294901760
    %1013 = vmatpush1.msra.mxu0 %v1012
    %v1014 = vand.u32 %v114, 4294901760
    %1015 = vmatprep.subr.mxu0 %v1014
    %v1016 = vand.u32 %v113, 4294901760
    %1017 = vmatpush1.msra.mxu0 %v1016
    %v1018 = vand.u32 %v122, 4294901760
    %1019 = vmatprep.subr.mxu0 %v1018
    %v1020 = vand.u32 %v121, 4294901760
    %1021 = vmatpush1.msra.mxu0 %v1020
    %v1022 = vand.u32 %v130, 4294901760
    %1023 = vmatprep.subr.mxu0 %v1022
    %v1024 = vand.u32 %v129, 4294901760
    %1025 = vmatpush1.msra.mxu0 %v1024
    %v1026 = vand.u32 %v138, 4294901760
    %1027 = vmatprep.subr.mxu0 %v1026
    %v1028 = vand.u32 %v137, 4294901760
    %1029 = vmatpush1.msra.mxu0 %v1028
    %v1030 = vand.u32 %v146, 4294901760
    %1031 = vmatprep.subr.mxu0 %v1030
    %v1032 = vand.u32 %v145, 4294901760
    %1033 = vmatpush1.msra.mxu0 %v1032
    %v1034 = vand.u32 %v154, 4294901760
    %1035 = vmatprep.subr.mxu0 %v1034
    %v1036 = vand.u32 %v153, 4294901760
    %1037 = vmatpush1.msra.mxu0 %v1036
    %v1038 = vand.u32 %v162, 4294901760
    %1039 = vmatprep.subr.mxu0 %v1038
    %v1040 = vand.u32 %v161, 4294901760
    %1041 = vmatpush1.msra.mxu0 %v1040
    %v1042 = vand.u32 %v170, 4294901760
    %1043 = vmatprep.subr.mxu0 %v1042
    %v1044 = vand.u32 %v169, 4294901760
    %1045 = vmatpush1.msra.mxu0 %v1044
    %v1046 = vand.u32 %v178, 4294901760
    %1047 = vmatprep.subr.mxu0 %v1046
    %v1048 = vand.u32 %v177, 4294901760
    %1049 = vmatpush1.msra.mxu0 %v1048
    %v1050 = vand.u32 %v186, 4294901760
    %1051 = vmatprep.subr.mxu0 %v1050
    %v1052 = vand.u32 %v185, 4294901760
    %1053 = vmatpush1.msra.mxu0 %v1052
    %v1054 = vand.u32 %v194, 4294901760
    %1055 = vmatprep.subr.mxu0 %v1054
    %v1056 = vand.u32 %v193, 4294901760
    %1057 = vmatpush1.msra.mxu0 %v1056
    %1058 = vmatprep.subr.mxu0 0.0
    %1059 = vmatpush1.msra.mxu0 0.0
    %1060 = vmatprep.subr.mxu0 0.0
    %1061 = vmatpush1.msra.mxu0 0.0
    %1062 = vmatprep.subr.mxu0 0.0
    %1063 = vmatpush1.msra.mxu0 0.0
    %1064 = vmatprep.subr.mxu0 0.0
    %1065 = vmatpush1.msra.mxu0 0.0
    %1066 = vmatprep.subr.mxu0 0.0
    %1067 = vmatpush1.msra.mxu0 0.0
    %1068 = vmatprep.subr.mxu0 0.0
    %1069 = vmatpush1.msra.mxu0 0.0
    %1070 = vmatprep.subr.mxu0 0.0
    %1071 = vmatpush1.msra.mxu0 0.0
    %1072 = vmatprep.subr.mxu0 0.0
    %1073 = vmatpush1.msra.mxu0 0.0
    %1074 = vmatprep.subr.mxu0 0.0
    %1075 = vmatpush1.msra.mxu0 0.0
    %1076 = vmatprep.subr.mxu0 0.0
    %1077 = vmatpush1.msra.mxu0 0.0
    %1078 = vmatprep.subr.mxu0 0.0
    %1079 = vmatpush1.msra.mxu0 0.0
    %1080 = vmatprep.subr.mxu0 0.0
    %1081 = vmatpush1.msra.mxu0 0.0
    %1082 = vmatprep.subr.mxu0 0.0
    %1083 = vmatpush1.msra.mxu0 0.0
    %1084 = vmatprep.subr.mxu0 0.0
    %1085 = vmatpush1.msra.mxu0 0.0
    %1086 = vmatprep.subr.mxu0 0.0
    %1087 = vmatpush1.msra.mxu0 0.0
    %1088 = vmatprep.subr.mxu0 0.0
    %1089 = vmatpush1.msra.mxu0 0.0
    %1090 = vmatprep.mubr.f32.mxu0 0.0
    %v1091 = vand.u32 %v72, 4294901760
    %1092 = vmatmul.mubr.f32.gmra.mrb[0].mxu0 %v1091
    %v1093 = vpop.f32.mrb[0].mxu0
    %v1094 = vadd.f32 %v990, %v1093
    %v1095 = vpop.f32.mrb[0].mxu0
    %v1096 = vadd.f32 %v992, %v1095
    %1097 = vdwg.mxu0
    %v1098 = vand.u32 %v76, 4294901760
    %1099 = vmatprep.subr.mxu0 %v1098
    %v1100 = vand.u32 %v75, 4294901760
    %1101 = vmatpush1.msra.mxu0 %v1100
    %v1102 = vand.u32 %v84, 4294901760
    %1103 = vmatprep.subr.mxu0 %v1102
    %v1104 = vand.u32 %v83, 4294901760
    %1105 = vmatpush1.msra.mxu0 %v1104
    %v1106 = vand.u32 %v92, 4294901760
    %1107 = vmatprep.subr.mxu0 %v1106
    %v1108 = vand.u32 %v91, 4294901760
    %1109 = vmatpush1.msra.mxu0 %v1108
    %v1110 = vand.u32 %v100, 4294901760
    %1111 = vmatprep.subr.mxu0 %v1110
    %v1112 = vand.u32 %v99, 4294901760
    %1113 = vmatpush1.msra.mxu0 %v1112
    %v1114 = vand.u32 %v108, 4294901760
    %1115 = vmatprep.subr.mxu0 %v1114
    %v1116 = vand.u32 %v107, 4294901760
    %1117 = vmatpush1.msra.mxu0 %v1116
    %v1118 = vand.u32 %v116, 4294901760
    %1119 = vmatprep.subr.mxu0 %v1118
    %v1120 = vand.u32 %v115, 4294901760
    %1121 = vmatpush1.msra.mxu0 %v1120
    %v1122 = vand.u32 %v124, 4294901760
    %1123 = vmatprep.subr.mxu0 %v1122
    %v1124 = vand.u32 %v123, 4294901760
    %1125 = vmatpush1.msra.mxu0 %v1124
    %v1126 = vand.u32 %v132, 4294901760
    %1127 = vmatprep.subr.mxu0 %v1126
    %v1128 = vand.u32 %v131, 4294901760
    %1129 = vmatpush1.msra.mxu0 %v1128
    %v1130 = vand.u32 %v140, 4294901760
    %1131 = vmatprep.subr.mxu0 %v1130
    %v1132 = vand.u32 %v139, 4294901760
    %1133 = vmatpush1.msra.mxu0 %v1132
    %v1134 = vand.u32 %v148, 4294901760
    %1135 = vmatprep.subr.mxu0 %v1134
    %v1136 = vand.u32 %v147, 4294901760
    %1137 = vmatpush1.msra.mxu0 %v1136
    %v1138 = vand.u32 %v156, 4294901760
    %1139 = vmatprep.subr.mxu0 %v1138
    %v1140 = vand.u32 %v155, 4294901760
    %1141 = vmatpush1.msra.mxu0 %v1140
    %v1142 = vand.u32 %v164, 4294901760
    %1143 = vmatprep.subr.mxu0 %v1142
    %v1144 = vand.u32 %v163, 4294901760
    %1145 = vmatpush1.msra.mxu0 %v1144
    %v1146 = vand.u32 %v172, 4294901760
    %1147 = vmatprep.subr.mxu0 %v1146
    %v1148 = vand.u32 %v171, 4294901760
    %1149 = vmatpush1.msra.mxu0 %v1148
    %v1150 = vand.u32 %v180, 4294901760
    %1151 = vmatprep.subr.mxu0 %v1150
    %v1152 = vand.u32 %v179, 4294901760
    %1153 = vmatpush1.msra.mxu0 %v1152
    %v1154 = vand.u32 %v188, 4294901760
    %1155 = vmatprep.subr.mxu0 %v1154
    %v1156 = vand.u32 %v187, 4294901760
    %1157 = vmatpush1.msra.mxu0 %v1156
    %v1158 = vand.u32 %v196, 4294901760
    %1159 = vmatprep.subr.mxu0 %v1158
    %v1160 = vand.u32 %v195, 4294901760
    %1161 = vmatpush1.msra.mxu0 %v1160
    %1162 = vmatprep.subr.mxu0 0.0
    %1163 = vmatpush1.msra.mxu0 0.0
    %1164 = vmatprep.subr.mxu0 0.0
    %1165 = vmatpush1.msra.mxu0 0.0
    %1166 = vmatprep.subr.mxu0 0.0
    %1167 = vmatpush1.msra.mxu0 0.0
    %1168 = vmatprep.subr.mxu0 0.0
    %1169 = vmatpush1.msra.mxu0 0.0
    %1170 = vmatprep.subr.mxu0 0.0
    %1171 = vmatpush1.msra.mxu0 0.0
    %1172 = vmatprep.subr.mxu0 0.0
    %1173 = vmatpush1.msra.mxu0 0.0
    %1174 = vmatprep.subr.mxu0 0.0
    %1175 = vmatpush1.msra.mxu0 0.0
    %1176 = vmatprep.subr.mxu0 0.0
    %1177 = vmatpush1.msra.mxu0 0.0
    %1178 = vmatprep.subr.mxu0 0.0
    %1179 = vmatpush1.msra.mxu0 0.0
    %1180 = vmatprep.subr.mxu0 0.0
    %1181 = vmatpush1.msra.mxu0 0.0
    %1182 = vmatprep.subr.mxu0 0.0
    %1183 = vmatpush1.msra.mxu0 0.0
    %1184 = vmatprep.subr.mxu0 0.0
    %1185 = vmatpush1.msra.mxu0 0.0
    %1186 = vmatprep.subr.mxu0 0.0
    %1187 = vmatpush1.msra.mxu0 0.0
    %1188 = vmatprep.subr.mxu0 0.0
    %1189 = vmatpush1.msra.mxu0 0.0
    %1190 = vmatprep.subr.mxu0 0.0
    %1191 = vmatpush1.msra.mxu0 0.0
    %1192 = vmatprep.subr.mxu0 0.0
    %1193 = vmatpush1.msra.mxu0 0.0
    %1194 = vmatprep.mubr.f32.mxu0 0.0
    %v1195 = vand.u32 %v72, 4294901760
    %v1196 = vsub.f32 %v72, %v1195
    %v1197 = vand.u32 %v1196, 4294901760
    %v1198 = vsub.f32 %v1196, %v1197
    %v1199 = vand.u32 %v1198, 4294901760
    %1200 = vmatmul.mubr.f32.gmra.mrb[0].mxu0 %v1199
    %v1201 = vpop.f32.mrb[0].mxu0
    %v1202 = vadd.f32 %v214, %v1201
    %v1203 = vpop.f32.mrb[0].mxu0
    %v1204 = vadd.f32 %v218, %v1203
    %1205 = vdwg.mxu0
    %v1206 = vand.u32 %v76, 4294901760
    %v1207 = vsub.f32 %v76, %v1206
    %v1208 = vand.u32 %v1207, 4294901760
    %v1209 = vsub.f32 %v1207, %v1208
    %v1210 = vand.u32 %v1209, 4294901760
    %1211 = vmatprep.subr.mxu0 %v1210
    %v1212 = vand.u32 %v75, 4294901760
    %v1213 = vsub.f32 %v75, %v1212
    %v1214 = vand.u32 %v1213, 4294901760
    %v1215 = vsub.f32 %v1213, %v1214
    %v1216 = vand.u32 %v1215, 4294901760
    %1217 = vmatpush1.msra.mxu0 %v1216
    %v1218 = vand.u32 %v84, 4294901760
    %v1219 = vsub.f32 %v84, %v1218
    %v1220 = vand.u32 %v1219, 4294901760
    %v1221 = vsub.f32 %v1219, %v1220
    %v1222 = vand.u32 %v1221, 4294901760
    %1223 = vmatprep.subr.mxu0 %v1222
    %v1224 = vand.u32 %v83, 4294901760
    %v1225 = vsub.f32 %v83, %v1224
    %v1226 = vand.u32 %v1225, 4294901760
    %v1227 = vsub.f32 %v1225, %v1226
    %v1228 = vand.u32 %v1227, 4294901760
    %1229 = vmatpush1.msra.mxu0 %v1228
    %v1230 = vand.u32 %v92, 4294901760
    %v1231 = vsub.f32 %v92, %v1230
    %v1232 = vand.u32 %v1231, 4294901760
    %v1233 = vsub.f32 %v1231, %v1232
    %v1234 = vand.u32 %v1233, 4294901760
    %1235 = vmatprep.subr.mxu0 %v1234
    %v1236 = vand.u32 %v91, 4294901760
    %v1237 = vsub.f32 %v91, %v1236
    %v1238 = vand.u32 %v1237, 4294901760
    %v1239 = vsub.f32 %v1237, %v1238
    %v1240 = vand.u32 %v1239, 4294901760
    %1241 = vmatpush1.msra.mxu0 %v1240
    %v1242 = vand.u32 %v100, 4294901760
    %v1243 = vsub.f32 %v100, %v1242
    %v1244 = vand.u32 %v1243, 4294901760
    %v1245 = vsub.f32 %v1243, %v1244
    %v1246 = vand.u32 %v1245, 4294901760
    %1247 = vmatprep.subr.mxu0 %v1246
    %v1248 = vand.u32 %v99, 4294901760
    %v1249 = vsub.f32 %v99, %v1248
    %v1250 = vand.u32 %v1249, 4294901760
    %v1251 = vsub.f32 %v1249, %v1250
    %v1252 = vand.u32 %v1251, 4294901760
    %1253 = vmatpush1.msra.mxu0 %v1252
    %v1254 = vand.u32 %v108, 4294901760
    %v1255 = vsub.f32 %v108, %v1254
    %v1256 = vand.u32 %v1255, 4294901760
    %v1257 = vsub.f32 %v1255, %v1256
    %v1258 = vand.u32 %v1257, 4294901760
    %1259 = vmatprep.subr.mxu0 %v1258
    %v1260 = vand.u32 %v107, 4294901760
    %v1261 = vsub.f32 %v107, %v1260
    %v1262 = vand.u32 %v1261, 4294901760
    %v1263 = vsub.f32 %v1261, %v1262
    %v1264 = vand.u32 %v1263, 4294901760
    %1265 = vmatpush1.msra.mxu0 %v1264
    %v1266 = vand.u32 %v116, 4294901760
    %v1267 = vsub.f32 %v116, %v1266
    %v1268 = vand.u32 %v1267, 4294901760
    %v1269 = vsub.f32 %v1267, %v1268
    %v1270 = vand.u32 %v1269, 4294901760
    %1271 = vmatprep.subr.mxu0 %v1270
    %v1272 = vand.u32 %v115, 4294901760
    %v1273 = vsub.f32 %v115, %v1272
    %v1274 = vand.u32 %v1273, 4294901760
    %v1275 = vsub.f32 %v1273, %v1274
    %v1276 = vand.u32 %v1275, 4294901760
    %1277 = vmatpush1.msra.mxu0 %v1276
    %v1278 = vand.u32 %v124, 4294901760
    %v1279 = vsub.f32 %v124, %v1278
    %v1280 = vand.u32 %v1279, 4294901760
    %v1281 = vsub.f32 %v1279, %v1280
    %v1282 = vand.u32 %v1281, 4294901760
    %1283 = vmatprep.subr.mxu0 %v1282
    %v1284 = vand.u32 %v123, 4294901760
    %v1285 = vsub.f32 %v123, %v1284
    %v1286 = vand.u32 %v1285, 4294901760
    %v1287 = vsub.f32 %v1285, %v1286
    %v1288 = vand.u32 %v1287, 4294901760
    %1289 = vmatpush1.msra.mxu0 %v1288
    %v1290 = vand.u32 %v132, 4294901760
    %v1291 = vsub.f32 %v132, %v1290
    %v1292 = vand.u32 %v1291, 4294901760
    %v1293 = vsub.f32 %v1291, %v1292
    %v1294 = vand.u32 %v1293, 4294901760
    %1295 = vmatprep.subr.mxu0 %v1294
    %v1296 = vand.u32 %v131, 4294901760
    %v1297 = vsub.f32 %v131, %v1296
    %v1298 = vand.u32 %v1297, 4294901760
    %v1299 = vsub.f32 %v1297, %v1298
    %v1300 = vand.u32 %v1299, 4294901760
    %1301 = vmatpush1.msra.mxu0 %v1300
    %v1302 = vand.u32 %v140, 4294901760
    %v1303 = vsub.f32 %v140, %v1302
    %v1304 = vand.u32 %v1303, 4294901760
    %v1305 = vsub.f32 %v1303, %v1304
    %v1306 = vand.u32 %v1305, 4294901760
    %1307 = vmatprep.subr.mxu0 %v1306
    %v1308 = vand.u32 %v139, 4294901760
    %v1309 = vsub.f32 %v139, %v1308
    %v1310 = vand.u32 %v1309, 4294901760
    %v1311 = vsub.f32 %v1309, %v1310
    %v1312 = vand.u32 %v1311, 4294901760
    %1313 = vmatpush1.msra.mxu0 %v1312
    %v1314 = vand.u32 %v148, 4294901760
    %v1315 = vsub.f32 %v148, %v1314
    %v1316 = vand.u32 %v1315, 4294901760
    %v1317 = vsub.f32 %v1315, %v1316
    %v1318 = vand.u32 %v1317, 4294901760
    %1319 = vmatprep.subr.mxu0 %v1318
    %v1320 = vand.u32 %v147, 4294901760
    %v1321 = vsub.f32 %v147, %v1320
    %v1322 = vand.u32 %v1321, 4294901760
    %v1323 = vsub.f32 %v1321, %v1322
    %v1324 = vand.u32 %v1323, 4294901760
    %1325 = vmatpush1.msra.mxu0 %v1324
    %v1326 = vand.u32 %v156, 4294901760
    %v1327 = vsub.f32 %v156, %v1326
    %v1328 = vand.u32 %v1327, 4294901760
    %v1329 = vsub.f32 %v1327, %v1328
    %v1330 = vand.u32 %v1329, 4294901760
    %1331 = vmatprep.subr.mxu0 %v1330
    %v1332 = vand.u32 %v155, 4294901760
    %v1333 = vsub.f32 %v155, %v1332
    %v1334 = vand.u32 %v1333, 4294901760
    %v1335 = vsub.f32 %v1333, %v1334
    %v1336 = vand.u32 %v1335, 4294901760
    %1337 = vmatpush1.msra.mxu0 %v1336
    %v1338 = vand.u32 %v164, 4294901760
    %v1339 = vsub.f32 %v164, %v1338
    %v1340 = vand.u32 %v1339, 4294901760
    %v1341 = vsub.f32 %v1339, %v1340
    %v1342 = vand.u32 %v1341, 4294901760
    %1343 = vmatprep.subr.mxu0 %v1342
    %v1344 = vand.u32 %v163, 4294901760
    %v1345 = vsub.f32 %v163, %v1344
    %v1346 = vand.u32 %v1345, 4294901760
    %v1347 = vsub.f32 %v1345, %v1346
    %v1348 = vand.u32 %v1347, 4294901760
    %1349 = vmatpush1.msra.mxu0 %v1348
    %v1350 = vand.u32 %v172, 4294901760
    %v1351 = vsub.f32 %v172, %v1350
    %v1352 = vand.u32 %v1351, 4294901760
    %v1353 = vsub.f32 %v1351, %v1352
    %v1354 = vand.u32 %v1353, 4294901760
    %1355 = vmatprep.subr.mxu0 %v1354
    %v1356 = vand.u32 %v171, 4294901760
    %v1357 = vsub.f32 %v171, %v1356
    %v1358 = vand.u32 %v1357, 4294901760
    %v1359 = vsub.f32 %v1357, %v1358
    %v1360 = vand.u32 %v1359, 4294901760
    %1361 = vmatpush1.msra.mxu0 %v1360
    %v1362 = vand.u32 %v180, 4294901760
    %v1363 = vsub.f32 %v180, %v1362
    %v1364 = vand.u32 %v1363, 4294901760
    %v1365 = vsub.f32 %v1363, %v1364
    %v1366 = vand.u32 %v1365, 4294901760
    %1367 = vmatprep.subr.mxu0 %v1366
    %v1368 = vand.u32 %v179, 4294901760
    %v1369 = vsub.f32 %v179, %v1368
    %v1370 = vand.u32 %v1369, 4294901760
    %v1371 = vsub.f32 %v1369, %v1370
    %v1372 = vand.u32 %v1371, 4294901760
    %1373 = vmatpush1.msra.mxu0 %v1372
    %v1374 = vand.u32 %v188, 4294901760
    %v1375 = vsub.f32 %v188, %v1374
    %v1376 = vand.u32 %v1375, 4294901760
    %v1377 = vsub.f32 %v1375, %v1376
    %v1378 = vand.u32 %v1377, 4294901760
    %1379 = vmatprep.subr.mxu0 %v1378
    %v1380 = vand.u32 %v187, 4294901760
    %v1381 = vsub.f32 %v187, %v1380
    %v1382 = vand.u32 %v1381, 4294901760
    %v1383 = vsub.f32 %v1381, %v1382
    %v1384 = vand.u32 %v1383, 4294901760
    %1385 = vmatpush1.msra.mxu0 %v1384
    %v1386 = vand.u32 %v196, 4294901760
    %v1387 = vsub.f32 %v196, %v1386
    %v1388 = vand.u32 %v1387, 4294901760
    %v1389 = vsub.f32 %v1387, %v1388
    %v1390 = vand.u32 %v1389, 4294901760
    %1391 = vmatprep.subr.mxu0 %v1390
    %v1392 = vand.u32 %v195, 4294901760
    %v1393 = vsub.f32 %v195, %v1392
    %v1394 = vand.u32 %v1393, 4294901760
    %v1395 = vsub.f32 %v1393, %v1394
    %v1396 = vand.u32 %v1395, 4294901760
    %1397 = vmatpush1.msra.mxu0 %v1396
    %1398 = vmatprep.subr.mxu0 0.0
    %1399 = vmatpush1.msra.mxu0 0.0
    %1400 = vmatprep.subr.mxu0 0.0
    %1401 = vmatpush1.msra.mxu0 0.0
    %1402 = vmatprep.subr.mxu0 0.0
    %1403 = vmatpush1.msra.mxu0 0.0
    %1404 = vmatprep.subr.mxu0 0.0
    %1405 = vmatpush1.msra.mxu0 0.0
    %1406 = vmatprep.subr.mxu0 0.0
    %1407 = vmatpush1.msra.mxu0 0.0
    %1408 = vmatprep.subr.mxu0 0.0
    %1409 = vmatpush1.msra.mxu0 0.0
    %1410 = vmatprep.subr.mxu0 0.0
    %1411 = vmatpush1.msra.mxu0 0.0
    %1412 = vmatprep.subr.mxu0 0.0
    %1413 = vmatpush1.msra.mxu0 0.0
    %1414 = vmatprep.subr.mxu0 0.0
    %1415 = vmatpush1.msra.mxu0 0.0
    %1416 = vmatprep.subr.mxu0 0.0
    %1417 = vmatpush1.msra.mxu0 0.0
    %1418 = vmatprep.subr.mxu0 0.0
    %1419 = vmatpush1.msra.mxu0 0.0
    %1420 = vmatprep.subr.mxu0 0.0
    %1421 = vmatpush1.msra.mxu0 0.0
    %1422 = vmatprep.subr.mxu0 0.0
    %1423 = vmatpush1.msra.mxu0 0.0
    %1424 = vmatprep.subr.mxu0 0.0
    %1425 = vmatpush1.msra.mxu0 0.0
    %1426 = vmatprep.subr.mxu0 0.0
    %1427 = vmatpush1.msra.mxu0 0.0
    %1428 = vmatprep.subr.mxu0 0.0
    %1429 = vmatpush1.msra.mxu0 0.0
    %1430 = vmatprep.mubr.f32.mxu0 0.0
    %v1431 = vand.u32 %v72, 4294901760
    %1432 = vmatmul.mubr.f32.gmra.mrb[0].mxu0 %v1431
    %v1433 = vpop.f32.mrb[0].mxu0
    %v1434 = vadd.f32 %v1202, %v1433
    %v1435 = vpop.f32.mrb[0].mxu0
    %v1436 = vadd.f32 %v1204, %v1435
    %1437 = vdwg.mxu0
    %v1438 = vand.u32 %v76, 4294901760
    %v1439 = vsub.f32 %v76, %v1438
    %1440 = vmatprep.subr.mxu0 %v1439
    %v1441 = vand.u32 %v75, 4294901760
    %v1442 = vsub.f32 %v75, %v1441
    %1443 = vmatpush1.msra.mxu0 %v1442
    %v1444 = vand.u32 %v84, 4294901760
    %v1445 = vsub.f32 %v84, %v1444
    %1446 = vmatprep.subr.mxu0 %v1445
    %v1447 = vand.u32 %v83, 4294901760
    %v1448 = vsub.f32 %v83, %v1447
    %1449 = vmatpush1.msra.mxu0 %v1448
    %v1450 = vand.u32 %v92, 4294901760
    %v1451 = vsub.f32 %v92, %v1450
    %1452 = vmatprep.subr.mxu0 %v1451
    %v1453 = vand.u32 %v91, 4294901760
    %v1454 = vsub.f32 %v91, %v1453
    %1455 = vmatpush1.msra.mxu0 %v1454
    %v1456 = vand.u32 %v100, 4294901760
    %v1457 = vsub.f32 %v100, %v1456
    %1458 = vmatprep.subr.mxu0 %v1457
    %v1459 = vand.u32 %v99, 4294901760
    %v1460 = vsub.f32 %v99, %v1459
    %1461 = vmatpush1.msra.mxu0 %v1460
    %v1462 = vand.u32 %v108, 4294901760
    %v1463 = vsub.f32 %v108, %v1462
    %1464 = vmatprep.subr.mxu0 %v1463
    %v1465 = vand.u32 %v107, 4294901760
    %v1466 = vsub.f32 %v107, %v1465
    %1467 = vmatpush1.msra.mxu0 %v1466
    %v1468 = vand.u32 %v116, 4294901760
    %v1469 = vsub.f32 %v116, %v1468
    %1470 = vmatprep.subr.mxu0 %v1469
    %v1471 = vand.u32 %v115, 4294901760
    %v1472 = vsub.f32 %v115, %v1471
    %1473 = vmatpush1.msra.mxu0 %v1472
    %v1474 = vand.u32 %v124, 4294901760
    %v1475 = vsub.f32 %v124, %v1474
    %1476 = vmatprep.subr.mxu0 %v1475
    %v1477 = vand.u32 %v123, 4294901760
    %v1478 = vsub.f32 %v123, %v1477
    %1479 = vmatpush1.msra.mxu0 %v1478
    %v1480 = vand.u32 %v132, 4294901760
    %v1481 = vsub.f32 %v132, %v1480
    %1482 = vmatprep.subr.mxu0 %v1481
    %v1483 = vand.u32 %v131, 4294901760
    %v1484 = vsub.f32 %v131, %v1483
    %1485 = vmatpush1.msra.mxu0 %v1484
    %v1486 = vand.u32 %v140, 4294901760
    %v1487 = vsub.f32 %v140, %v1486
    %1488 = vmatprep.subr.mxu0 %v1487
    %v1489 = vand.u32 %v139, 4294901760
    %v1490 = vsub.f32 %v139, %v1489
    %1491 = vmatpush1.msra.mxu0 %v1490
    %v1492 = vand.u32 %v148, 4294901760
    %v1493 = vsub.f32 %v148, %v1492
    %1494 = vmatprep.subr.mxu0 %v1493
    %v1495 = vand.u32 %v147, 4294901760
    %v1496 = vsub.f32 %v147, %v1495
    %1497 = vmatpush1.msra.mxu0 %v1496
    %v1498 = vand.u32 %v156, 4294901760
    %v1499 = vsub.f32 %v156, %v1498
    %1500 = vmatprep.subr.mxu0 %v1499
    %v1501 = vand.u32 %v155, 4294901760
    %v1502 = vsub.f32 %v155, %v1501
    %1503 = vmatpush1.msra.mxu0 %v1502
    %v1504 = vand.u32 %v164, 4294901760
    %v1505 = vsub.f32 %v164, %v1504
    %1506 = vmatprep.subr.mxu0 %v1505
    %v1507 = vand.u32 %v163, 4294901760
    %v1508 = vsub.f32 %v163, %v1507
    %1509 = vmatpush1.msra.mxu0 %v1508
    %v1510 = vand.u32 %v172, 4294901760
    %v1511 = vsub.f32 %v172, %v1510
    %1512 = vmatprep.subr.mxu0 %v1511
    %v1513 = vand.u32 %v171, 4294901760
    %v1514 = vsub.f32 %v171, %v1513
    %1515 = vmatpush1.msra.mxu0 %v1514
    %v1516 = vand.u32 %v180, 4294901760
    %v1517 = vsub.f32 %v180, %v1516
    %1518 = vmatprep.subr.mxu0 %v1517
    %v1519 = vand.u32 %v179, 4294901760
    %v1520 = vsub.f32 %v179, %v1519
    %1521 = vmatpush1.msra.mxu0 %v1520
    %v1522 = vand.u32 %v188, 4294901760
    %v1523 = vsub.f32 %v188, %v1522
    %1524 = vmatprep.subr.mxu0 %v1523
    %v1525 = vand.u32 %v187, 4294901760
    %v1526 = vsub.f32 %v187, %v1525
    %1527 = vmatpush1.msra.mxu0 %v1526
    %v1528 = vand.u32 %v196, 4294901760
    %v1529 = vsub.f32 %v196, %v1528
    %1530 = vmatprep.subr.mxu0 %v1529
    %v1531 = vand.u32 %v195, 4294901760
    %v1532 = vsub.f32 %v195, %v1531
    %1533 = vmatpush1.msra.mxu0 %v1532
    %1534 = vmatprep.subr.mxu0 0.0
    %1535 = vmatpush1.msra.mxu0 0.0
    %1536 = vmatprep.subr.mxu0 0.0
    %1537 = vmatpush1.msra.mxu0 0.0
    %1538 = vmatprep.subr.mxu0 0.0
    %1539 = vmatpush1.msra.mxu0 0.0
    %1540 = vmatprep.subr.mxu0 0.0
    %1541 = vmatpush1.msra.mxu0 0.0
    %1542 = vmatprep.subr.mxu0 0.0
    %1543 = vmatpush1.msra.mxu0 0.0
    %1544 = vmatprep.subr.mxu0 0.0
    %1545 = vmatpush1.msra.mxu0 0.0
    %1546 = vmatprep.subr.mxu0 0.0
    %1547 = vmatpush1.msra.mxu0 0.0
    %1548 = vmatprep.subr.mxu0 0.0
    %1549 = vmatpush1.msra.mxu0 0.0
    %1550 = vmatprep.subr.mxu0 0.0
    %1551 = vmatpush1.msra.mxu0 0.0
    %1552 = vmatprep.subr.mxu0 0.0
    %1553 = vmatpush1.msra.mxu0 0.0
    %1554 = vmatprep.subr.mxu0 0.0
    %1555 = vmatpush1.msra.mxu0 0.0
    %1556 = vmatprep.subr.mxu0 0.0
    %1557 = vmatpush1.msra.mxu0 0.0
    %1558 = vmatprep.subr.mxu0 0.0
    %1559 = vmatpush1.msra.mxu0 0.0
    %1560 = vmatprep.subr.mxu0 0.0
    %1561 = vmatpush1.msra.mxu0 0.0
    %1562 = vmatprep.subr.mxu0 0.0
    %1563 = vmatpush1.msra.mxu0 0.0
    %1564 = vmatprep.subr.mxu0 0.0
    %1565 = vmatpush1.msra.mxu0 0.0
    %1566 = vmatprep.mubr.f32.mxu0 0.0
    %v1567 = vand.u32 %v72, 4294901760
    %v1568 = vsub.f32 %v72, %v1567
    %1569 = vmatmul.mubr.f32.gmra.mrb[0].mxu0 %v1568
    %v1570 = vpop.f32.mrb[0].mxu0
    %v1571 = vadd.f32 %v1434, %v1570
    %v1572 = vpop.f32.mrb[0].mxu0
    %v1573 = vadd.f32 %v1436, %v1572
    %1574 = vdwg.mxu0
    %v1575 = vand.u32 %v76, 4294901760
    %1576 = vmatprep.subr.mxu0 %v1575
    %v1577 = vand.u32 %v75, 4294901760
    %1578 = vmatpush1.msra.mxu0 %v1577
    %v1579 = vand.u32 %v84, 4294901760
    %1580 = vmatprep.subr.mxu0 %v1579
    %v1581 = vand.u32 %v83, 4294901760
    %1582 = vmatpush1.msra.mxu0 %v1581
    %v1583 = vand.u32 %v92, 4294901760
    %1584 = vmatprep.subr.mxu0 %v1583
    %v1585 = vand.u32 %v91, 4294901760
    %1586 = vmatpush1.msra.mxu0 %v1585
    %v1587 = vand.u32 %v100, 4294901760
    %1588 = vmatprep.subr.mxu0 %v1587
    %v1589 = vand.u32 %v99, 4294901760
    %1590 = vmatpush1.msra.mxu0 %v1589
    %v1591 = vand.u32 %v108, 4294901760
    %1592 = vmatprep.subr.mxu0 %v1591
    %v1593 = vand.u32 %v107, 4294901760
    %1594 = vmatpush1.msra.mxu0 %v1593
    %v1595 = vand.u32 %v116, 4294901760
    %1596 = vmatprep.subr.mxu0 %v1595
    %v1597 = vand.u32 %v115, 4294901760
    %1598 = vmatpush1.msra.mxu0 %v1597
    %v1599 = vand.u32 %v124, 4294901760
    %1600 = vmatprep.subr.mxu0 %v1599
    %v1601 = vand.u32 %v123, 4294901760
    %1602 = vmatpush1.msra.mxu0 %v1601
    %v1603 = vand.u32 %v132, 4294901760
    %1604 = vmatprep.subr.mxu0 %v1603
    %v1605 = vand.u32 %v131, 4294901760
    %1606 = vmatpush1.msra.mxu0 %v1605
    %v1607 = vand.u32 %v140, 4294901760
    %1608 = vmatprep.subr.mxu0 %v1607
    %v1609 = vand.u32 %v139, 4294901760
    %1610 = vmatpush1.msra.mxu0 %v1609
    %v1611 = vand.u32 %v148, 4294901760
    %1612 = vmatprep.subr.mxu0 %v1611
    %v1613 = vand.u32 %v147, 4294901760
    %1614 = vmatpush1.msra.mxu0 %v1613
    %v1615 = vand.u32 %v156, 4294901760
    %1616 = vmatprep.subr.mxu0 %v1615
    %v1617 = vand.u32 %v155, 4294901760
    %1618 = vmatpush1.msra.mxu0 %v1617
    %v1619 = vand.u32 %v164, 4294901760
    %1620 = vmatprep.subr.mxu0 %v1619
    %v1621 = vand.u32 %v163, 4294901760
    %1622 = vmatpush1.msra.mxu0 %v1621
    %v1623 = vand.u32 %v172, 4294901760
    %1624 = vmatprep.subr.mxu0 %v1623
    %v1625 = vand.u32 %v171, 4294901760
    %1626 = vmatpush1.msra.mxu0 %v1625
    %v1627 = vand.u32 %v180, 4294901760
    %1628 = vmatprep.subr.mxu0 %v1627
    %v1629 = vand.u32 %v179, 4294901760
    %1630 = vmatpush1.msra.mxu0 %v1629
    %v1631 = vand.u32 %v188, 4294901760
    %1632 = vmatprep.subr.mxu0 %v1631
    %v1633 = vand.u32 %v187, 4294901760
    %1634 = vmatpush1.msra.mxu0 %v1633
    %v1635 = vand.u32 %v196, 4294901760
    %1636 = vmatprep.subr.mxu0 %v1635
    %v1637 = vand.u32 %v195, 4294901760
    %1638 = vmatpush1.msra.mxu0 %v1637
    %1639 = vmatprep.subr.mxu0 0.0
    %1640 = vmatpush1.msra.mxu0 0.0
    %1641 = vmatprep.subr.mxu0 0.0
    %1642 = vmatpush1.msra.mxu0 0.0
    %1643 = vmatprep.subr.mxu0 0.0
    %1644 = vmatpush1.msra.mxu0 0.0
    %1645 = vmatprep.subr.mxu0 0.0
    %1646 = vmatpush1.msra.mxu0 0.0
    %1647 = vmatprep.subr.mxu0 0.0
    %1648 = vmatpush1.msra.mxu0 0.0
    %1649 = vmatprep.subr.mxu0 0.0
    %1650 = vmatpush1.msra.mxu0 0.0
    %1651 = vmatprep.subr.mxu0 0.0
    %1652 = vmatpush1.msra.mxu0 0.0
    %1653 = vmatprep.subr.mxu0 0.0
    %1654 = vmatpush1.msra.mxu0 0.0
    %1655 = vmatprep.subr.mxu0 0.0
    %1656 = vmatpush1.msra.mxu0 0.0
    %1657 = vmatprep.subr.mxu0 0.0
    %1658 = vmatpush1.msra.mxu0 0.0
    %1659 = vmatprep.subr.mxu0 0.0
    %1660 = vmatpush1.msra.mxu0 0.0
    %1661 = vmatprep.subr.mxu0 0.0
    %1662 = vmatpush1.msra.mxu0 0.0
    %1663 = vmatprep.subr.mxu0 0.0
    %1664 = vmatpush1.msra.mxu0 0.0
    %1665 = vmatprep.subr.mxu0 0.0
    %1666 = vmatpush1.msra.mxu0 0.0
    %1667 = vmatprep.subr.mxu0 0.0
    %1668 = vmatpush1.msra.mxu0 0.0
    %1669 = vmatprep.subr.mxu0 0.0
    %1670 = vmatpush1.msra.mxu0 0.0
    %1671 = vmatprep.mubr.f32.mxu0 0.0
    %v1672 = vand.u32 %v72, 4294901760
    %v1673 = vsub.f32 %v72, %v1672
    %v1674 = vand.u32 %v1673, 4294901760
    %1675 = vmatmul.mubr.f32.gmra.mrb[0].mxu0 %v1674
    %v1676 = vpop.f32.mrb[0].mxu0
    %v1677 = vadd.f32 %v1571, %v1676
    %v1678 = vpop.f32.mrb[0].mxu0
    %v1679 = vadd.f32 %v1573, %v1678
    %1680 = vdwg.mxu0
    %v1681 = vand.u32 %v76, 4294901760
    %v1682 = vsub.f32 %v76, %v1681
    %v1683 = vand.u32 %v1682, 4294901760
    %1684 = vmatprep.subr.mxu0 %v1683
    %v1685 = vand.u32 %v75, 4294901760
    %v1686 = vsub.f32 %v75, %v1685
    %v1687 = vand.u32 %v1686, 4294901760
    %1688 = vmatpush1.msra.mxu0 %v1687
    %v1689 = vand.u32 %v84, 4294901760
    %v1690 = vsub.f32 %v84, %v1689
    %v1691 = vand.u32 %v1690, 4294901760
    %1692 = vmatprep.subr.mxu0 %v1691
    %v1693 = vand.u32 %v83, 4294901760
    %v1694 = vsub.f32 %v83, %v1693
    %v1695 = vand.u32 %v1694, 4294901760
    %1696 = vmatpush1.msra.mxu0 %v1695
    %v1697 = vand.u32 %v92, 4294901760
    %v1698 = vsub.f32 %v92, %v1697
    %v1699 = vand.u32 %v1698, 4294901760
    %1700 = vmatprep.subr.mxu0 %v1699
    %v1701 = vand.u32 %v91, 4294901760
    %v1702 = vsub.f32 %v91, %v1701
    %v1703 = vand.u32 %v1702, 4294901760
    %1704 = vmatpush1.msra.mxu0 %v1703
    %v1705 = vand.u32 %v100, 4294901760
    %v1706 = vsub.f32 %v100, %v1705
    %v1707 = vand.u32 %v1706, 4294901760
    %1708 = vmatprep.subr.mxu0 %v1707
    %v1709 = vand.u32 %v99, 4294901760
    %v1710 = vsub.f32 %v99, %v1709
    %v1711 = vand.u32 %v1710, 4294901760
    %1712 = vmatpush1.msra.mxu0 %v1711
    %v1713 = vand.u32 %v108, 4294901760
    %v1714 = vsub.f32 %v108, %v1713
    %v1715 = vand.u32 %v1714, 4294901760
    %1716 = vmatprep.subr.mxu0 %v1715
    %v1717 = vand.u32 %v107, 4294901760
    %v1718 = vsub.f32 %v107, %v1717
    %v1719 = vand.u32 %v1718, 4294901760
    %1720 = vmatpush1.msra.mxu0 %v1719
    %v1721 = vand.u32 %v116, 4294901760
    %v1722 = vsub.f32 %v116, %v1721
    %v1723 = vand.u32 %v1722, 4294901760
    %1724 = vmatprep.subr.mxu0 %v1723
    %v1725 = vand.u32 %v115, 4294901760
    %v1726 = vsub.f32 %v115, %v1725
    %v1727 = vand.u32 %v1726, 4294901760
    %1728 = vmatpush1.msra.mxu0 %v1727
    %v1729 = vand.u32 %v124, 4294901760
    %v1730 = vsub.f32 %v124, %v1729
    %v1731 = vand.u32 %v1730, 4294901760
    %1732 = vmatprep.subr.mxu0 %v1731
    %v1733 = vand.u32 %v123, 4294901760
    %v1734 = vsub.f32 %v123, %v1733
    %v1735 = vand.u32 %v1734, 4294901760
    %1736 = vmatpush1.msra.mxu0 %v1735
    %v1737 = vand.u32 %v132, 4294901760
    %v1738 = vsub.f32 %v132, %v1737
    %v1739 = vand.u32 %v1738, 4294901760
    %1740 = vmatprep.subr.mxu0 %v1739
    %v1741 = vand.u32 %v131, 4294901760
    %v1742 = vsub.f32 %v131, %v1741
    %v1743 = vand.u32 %v1742, 4294901760
    %1744 = vmatpush1.msra.mxu0 %v1743
    %v1745 = vand.u32 %v140, 4294901760
    %v1746 = vsub.f32 %v140, %v1745
    %v1747 = vand.u32 %v1746, 4294901760
    %1748 = vmatprep.subr.mxu0 %v1747
    %v1749 = vand.u32 %v139, 4294901760
    %v1750 = vsub.f32 %v139, %v1749
    %v1751 = vand.u32 %v1750, 4294901760
    %1752 = vmatpush1.msra.mxu0 %v1751
    %v1753 = vand.u32 %v148, 4294901760
    %v1754 = vsub.f32 %v148, %v1753
    %v1755 = vand.u32 %v1754, 4294901760
    %1756 = vmatprep.subr.mxu0 %v1755
    %v1757 = vand.u32 %v147, 4294901760
    %v1758 = vsub.f32 %v147, %v1757
    %v1759 = vand.u32 %v1758, 4294901760
    %1760 = vmatpush1.msra.mxu0 %v1759
    %v1761 = vand.u32 %v156, 4294901760
    %v1762 = vsub.f32 %v156, %v1761
    %v1763 = vand.u32 %v1762, 4294901760
    %1764 = vmatprep.subr.mxu0 %v1763
    %v1765 = vand.u32 %v155, 4294901760
    %v1766 = vsub.f32 %v155, %v1765
    %v1767 = vand.u32 %v1766, 4294901760
    %1768 = vmatpush1.msra.mxu0 %v1767
    %v1769 = vand.u32 %v164, 4294901760
    %v1770 = vsub.f32 %v164, %v1769
    %v1771 = vand.u32 %v1770, 4294901760
    %1772 = vmatprep.subr.mxu0 %v1771
    %v1773 = vand.u32 %v163, 4294901760
    %v1774 = vsub.f32 %v163, %v1773
    %v1775 = vand.u32 %v1774, 4294901760
    %1776 = vmatpush1.msra.mxu0 %v1775
    %v1777 = vand.u32 %v172, 4294901760
    %v1778 = vsub.f32 %v172, %v1777
    %v1779 = vand.u32 %v1778, 4294901760
    %1780 = vmatprep.subr.mxu0 %v1779
    %v1781 = vand.u32 %v171, 4294901760
    %v1782 = vsub.f32 %v171, %v1781
    %v1783 = vand.u32 %v1782, 4294901760
    %1784 = vmatpush1.msra.mxu0 %v1783
    %v1785 = vand.u32 %v180, 4294901760
    %v1786 = vsub.f32 %v180, %v1785
    %v1787 = vand.u32 %v1786, 4294901760
    %1788 = vmatprep.subr.mxu0 %v1787
    %v1789 = vand.u32 %v179, 4294901760
    %v1790 = vsub.f32 %v179, %v1789
    %v1791 = vand.u32 %v1790, 4294901760
    %1792 = vmatpush1.msra.mxu0 %v1791
    %v1793 = vand.u32 %v188, 4294901760
    %v1794 = vsub.f32 %v188, %v1793
    %v1795 = vand.u32 %v1794, 4294901760
    %1796 = vmatprep.subr.mxu0 %v1795
    %v1797 = vand.u32 %v187, 4294901760
    %v1798 = vsub.f32 %v187, %v1797
    %v1799 = vand.u32 %v1798, 4294901760
    %1800 = vmatpush1.msra.mxu0 %v1799
    %v1801 = vand.u32 %v196, 4294901760
    %v1802 = vsub.f32 %v196, %v1801
    %v1803 = vand.u32 %v1802, 4294901760
    %1804 = vmatprep.subr.mxu0 %v1803
    %v1805 = vand.u32 %v195, 4294901760
    %v1806 = vsub.f32 %v195, %v1805
    %v1807 = vand.u32 %v1806, 4294901760
    %1808 = vmatpush1.msra.mxu0 %v1807
    %1809 = vmatprep.subr.mxu0 0.0
    %1810 = vmatpush1.msra.mxu0 0.0
    %1811 = vmatprep.subr.mxu0 0.0
    %1812 = vmatpush1.msra.mxu0 0.0
    %1813 = vmatprep.subr.mxu0 0.0
    %1814 = vmatpush1.msra.mxu0 0.0
    %1815 = vmatprep.subr.mxu0 0.0
    %1816 = vmatpush1.msra.mxu0 0.0
    %1817 = vmatprep.subr.mxu0 0.0
    %1818 = vmatpush1.msra.mxu0 0.0
    %1819 = vmatprep.subr.mxu0 0.0
    %1820 = vmatpush1.msra.mxu0 0.0
    %1821 = vmatprep.subr.mxu0 0.0
    %1822 = vmatpush1.msra.mxu0 0.0
    %1823 = vmatprep.subr.mxu0 0.0
    %1824 = vmatpush1.msra.mxu0 0.0
    %1825 = vmatprep.subr.mxu0 0.0
    %1826 = vmatpush1.msra.mxu0 0.0
    %1827 = vmatprep.subr.mxu0 0.0
    %1828 = vmatpush1.msra.mxu0 0.0
    %1829 = vmatprep.subr.mxu0 0.0
    %1830 = vmatpush1.msra.mxu0 0.0
    %1831 = vmatprep.subr.mxu0 0.0
    %1832 = vmatpush1.msra.mxu0 0.0
    %1833 = vmatprep.subr.mxu0 0.0
    %1834 = vmatpush1.msra.mxu0 0.0
    %1835 = vmatprep.subr.mxu0 0.0
    %1836 = vmatpush1.msra.mxu0 0.0
    %1837 = vmatprep.subr.mxu0 0.0
    %1838 = vmatpush1.msra.mxu0 0.0
    %1839 = vmatprep.subr.mxu0 0.0
    %1840 = vmatpush1.msra.mxu0 0.0
    %1841 = vmatprep.mubr.f32.mxu0 0.0
    %v1842 = vand.u32 %v72, 4294901760
    %1843 = vmatmul.mubr.f32.gmra.mrb[0].mxu0 %v1842
    %v1844 = vpop.f32.mrb[0].mxu0
    %v1845 = vadd.f32 %v1677, %v1844
    %v1846 = vpop.f32.mrb[0].mxu0
    %v1847 = vadd.f32 %v1679, %v1846
    %1848 = vdwg.mxu0
    %v1849 = vand.u32 %v76, 4294901760
    %1850 = vmatprep.subr.mxu0 %v1849
    %v1851 = vand.u32 %v75, 4294901760
    %1852 = vmatpush1.msra.mxu0 %v1851
    %v1853 = vand.u32 %v84, 4294901760
    %1854 = vmatprep.subr.mxu0 %v1853
    %v1855 = vand.u32 %v83, 4294901760
    %1856 = vmatpush1.msra.mxu0 %v1855
    %v1857 = vand.u32 %v92, 4294901760
    %1858 = vmatprep.subr.mxu0 %v1857
    %v1859 = vand.u32 %v91, 4294901760
    %1860 = vmatpush1.msra.mxu0 %v1859
    %v1861 = vand.u32 %v100, 4294901760
    %1862 = vmatprep.subr.mxu0 %v1861
    %v1863 = vand.u32 %v99, 4294901760
    %1864 = vmatpush1.msra.mxu0 %v1863
    %v1865 = vand.u32 %v108, 4294901760
    %1866 = vmatprep.subr.mxu0 %v1865
    %v1867 = vand.u32 %v107, 4294901760
    %1868 = vmatpush1.msra.mxu0 %v1867
    %v1869 = vand.u32 %v116, 4294901760
    %1870 = vmatprep.subr.mxu0 %v1869
    %v1871 = vand.u32 %v115, 4294901760
    %1872 = vmatpush1.msra.mxu0 %v1871
    %v1873 = vand.u32 %v124, 4294901760
    %1874 = vmatprep.subr.mxu0 %v1873
    %v1875 = vand.u32 %v123, 4294901760
    %1876 = vmatpush1.msra.mxu0 %v1875
    %v1877 = vand.u32 %v132, 4294901760
    %1878 = vmatprep.subr.mxu0 %v1877
    %v1879 = vand.u32 %v131, 4294901760
    %1880 = vmatpush1.msra.mxu0 %v1879
    %v1881 = vand.u32 %v140, 4294901760
    %1882 = vmatprep.subr.mxu0 %v1881
    %v1883 = vand.u32 %v139, 4294901760
    %1884 = vmatpush1.msra.mxu0 %v1883
    %v1885 = vand.u32 %v148, 4294901760
    %1886 = vmatprep.subr.mxu0 %v1885
    %v1887 = vand.u32 %v147, 4294901760
    %1888 = vmatpush1.msra.mxu0 %v1887
    %v1889 = vand.u32 %v156, 4294901760
    %1890 = vmatprep.subr.mxu0 %v1889
    %v1891 = vand.u32 %v155, 4294901760
    %1892 = vmatpush1.msra.mxu0 %v1891
    %v1893 = vand.u32 %v164, 4294901760
    %1894 = vmatprep.subr.mxu0 %v1893
    %v1895 = vand.u32 %v163, 4294901760
    %1896 = vmatpush1.msra.mxu0 %v1895
    %v1897 = vand.u32 %v172, 4294901760
    %1898 = vmatprep.subr.mxu0 %v1897
    %v1899 = vand.u32 %v171, 4294901760
    %1900 = vmatpush1.msra.mxu0 %v1899
    %v1901 = vand.u32 %v180, 4294901760
    %1902 = vmatprep.subr.mxu0 %v1901
    %v1903 = vand.u32 %v179, 4294901760
    %1904 = vmatpush1.msra.mxu0 %v1903
    %v1905 = vand.u32 %v188, 4294901760
    %1906 = vmatprep.subr.mxu0 %v1905
    %v1907 = vand.u32 %v187, 4294901760
    %1908 = vmatpush1.msra.mxu0 %v1907
    %v1909 = vand.u32 %v196, 4294901760
    %1910 = vmatprep.subr.mxu0 %v1909
    %v1911 = vand.u32 %v195, 4294901760
    %1912 = vmatpush1.msra.mxu0 %v1911
    %1913 = vmatprep.subr.mxu0 0.0
    %1914 = vmatpush1.msra.mxu0 0.0
    %1915 = vmatprep.subr.mxu0 0.0
    %1916 = vmatpush1.msra.mxu0 0.0
    %1917 = vmatprep.subr.mxu0 0.0
    %1918 = vmatpush1.msra.mxu0 0.0
    %1919 = vmatprep.subr.mxu0 0.0
    %1920 = vmatpush1.msra.mxu0 0.0
    %1921 = vmatprep.subr.mxu0 0.0
    %1922 = vmatpush1.msra.mxu0 0.0
    %1923 = vmatprep.subr.mxu0 0.0
    %1924 = vmatpush1.msra.mxu0 0.0
    %1925 = vmatprep.subr.mxu0 0.0
    %1926 = vmatpush1.msra.mxu0 0.0
    %1927 = vmatprep.subr.mxu0 0.0
    %1928 = vmatpush1.msra.mxu0 0.0
    %1929 = vmatprep.subr.mxu0 0.0
    %1930 = vmatpush1.msra.mxu0 0.0
    %1931 = vmatprep.subr.mxu0 0.0
    %1932 = vmatpush1.msra.mxu0 0.0
    %1933 = vmatprep.subr.mxu0 0.0
    %1934 = vmatpush1.msra.mxu0 0.0
    %1935 = vmatprep.subr.mxu0 0.0
    %1936 = vmatpush1.msra.mxu0 0.0
    %1937 = vmatprep.subr.mxu0 0.0
    %1938 = vmatpush1.msra.mxu0 0.0
    %1939 = vmatprep.subr.mxu0 0.0
    %1940 = vmatpush1.msra.mxu0 0.0
    %1941 = vmatprep.subr.mxu0 0.0
    %1942 = vmatpush1.msra.mxu0 0.0
    %1943 = vmatprep.subr.mxu0 0.0
    %1944 = vmatpush1.msra.mxu0 0.0
    %1945 = vmatprep.mubr.f32.mxu0 0.0
    %v1946 = vand.u32 %v72, 4294901760
    %1947 = vmatmul.mubr.f32.gmra.mrb[0].mxu0 %v1946
    %v1948 = vpop.f32.mrb[0].mxu0
    %v1949 = vadd.f32 %v1845, %v1948
    %v1950 = vpop.f32.mrb[0].mxu0
    %v1951 = vadd.f32 %v1847, %v1950
    %1952 = vdwg.mxu0
    %v1953 = vand.u32 %v78, 4294901760
    %1954 = vmatprep.subr.mxu0 %v1953
    %v1955 = vand.u32 %v77, 4294901760
    %1956 = vmatpush1.msra.mxu0 %v1955
    %v1957 = vand.u32 %v86, 4294901760
    %1958 = vmatprep.subr.mxu0 %v1957
    %v1959 = vand.u32 %v85, 4294901760
    %1960 = vmatpush1.msra.mxu0 %v1959
    %v1961 = vand.u32 %v94, 4294901760
    %1962 = vmatprep.subr.mxu0 %v1961
    %v1963 = vand.u32 %v93, 4294901760
    %1964 = vmatpush1.msra.mxu0 %v1963
    %v1965 = vand.u32 %v102, 4294901760
    %1966 = vmatprep.subr.mxu0 %v1965
    %v1967 = vand.u32 %v101, 4294901760
    %1968 = vmatpush1.msra.mxu0 %v1967
    %v1969 = vand.u32 %v110, 4294901760
    %1970 = vmatprep.subr.mxu0 %v1969
    %v1971 = vand.u32 %v109, 4294901760
    %1972 = vmatpush1.msra.mxu0 %v1971
    %v1973 = vand.u32 %v118, 4294901760
    %1974 = vmatprep.subr.mxu0 %v1973
    %v1975 = vand.u32 %v117, 4294901760
    %1976 = vmatpush1.msra.mxu0 %v1975
    %v1977 = vand.u32 %v126, 4294901760
    %1978 = vmatprep.subr.mxu0 %v1977
    %v1979 = vand.u32 %v125, 4294901760
    %1980 = vmatpush1.msra.mxu0 %v1979
    %v1981 = vand.u32 %v134, 4294901760
    %1982 = vmatprep.subr.mxu0 %v1981
    %v1983 = vand.u32 %v133, 4294901760
    %1984 = vmatpush1.msra.mxu0 %v1983
    %v1985 = vand.u32 %v142, 4294901760
    %1986 = vmatprep.subr.mxu0 %v1985
    %v1987 = vand.u32 %v141, 4294901760
    %1988 = vmatpush1.msra.mxu0 %v1987
    %v1989 = vand.u32 %v150, 4294901760
    %1990 = vmatprep.subr.mxu0 %v1989
    %v1991 = vand.u32 %v149, 4294901760
    %1992 = vmatpush1.msra.mxu0 %v1991
    %v1993 = vand.u32 %v158, 4294901760
    %1994 = vmatprep.subr.mxu0 %v1993
    %v1995 = vand.u32 %v157, 4294901760
    %1996 = vmatpush1.msra.mxu0 %v1995
    %v1997 = vand.u32 %v166, 4294901760
    %1998 = vmatprep.subr.mxu0 %v1997
    %v1999 = vand.u32 %v165, 4294901760
    %2000 = vmatpush1.msra.mxu0 %v1999
    %v2001 = vand.u32 %v174, 4294901760
    %2002 = vmatprep.subr.mxu0 %v2001
    %v2003 = vand.u32 %v173, 4294901760
    %2004 = vmatpush1.msra.mxu0 %v2003
    %v2005 = vand.u32 %v182, 4294901760
    %2006 = vmatprep.subr.mxu0 %v2005
    %v2007 = vand.u32 %v181, 4294901760
    %2008 = vmatpush1.msra.mxu0 %v2007
    %v2009 = vand.u32 %v190, 4294901760
    %2010 = vmatprep.subr.mxu0 %v2009
    %v2011 = vand.u32 %v189, 4294901760
    %2012 = vmatpush1.msra.mxu0 %v2011
    %v2013 = vand.u32 %v198, 4294901760
    %2014 = vmatprep.subr.mxu0 %v2013
    %v2015 = vand.u32 %v197, 4294901760
    %2016 = vmatpush1.msra.mxu0 %v2015
    %2017 = vmatprep.subr.mxu0 0.0
    %2018 = vmatpush1.msra.mxu0 0.0
    %2019 = vmatprep.subr.mxu0 0.0
    %2020 = vmatpush1.msra.mxu0 0.0
    %2021 = vmatprep.subr.mxu0 0.0
    %2022 = vmatpush1.msra.mxu0 0.0
    %2023 = vmatprep.subr.mxu0 0.0
    %2024 = vmatpush1.msra.mxu0 0.0
    %2025 = vmatprep.subr.mxu0 0.0
    %2026 = vmatpush1.msra.mxu0 0.0
    %2027 = vmatprep.subr.mxu0 0.0
    %2028 = vmatpush1.msra.mxu0 0.0
    %2029 = vmatprep.subr.mxu0 0.0
    %2030 = vmatpush1.msra.mxu0 0.0
    %2031 = vmatprep.subr.mxu0 0.0
    %2032 = vmatpush1.msra.mxu0 0.0
    %2033 = vmatprep.subr.mxu0 0.0
    %2034 = vmatpush1.msra.mxu0 0.0
    %2035 = vmatprep.subr.mxu0 0.0
    %2036 = vmatpush1.msra.mxu0 0.0
    %2037 = vmatprep.subr.mxu0 0.0
    %2038 = vmatpush1.msra.mxu0 0.0
    %2039 = vmatprep.subr.mxu0 0.0
    %2040 = vmatpush1.msra.mxu0 0.0
    %2041 = vmatprep.subr.mxu0 0.0
    %2042 = vmatpush1.msra.mxu0 0.0
    %2043 = vmatprep.subr.mxu0 0.0
    %2044 = vmatpush1.msra.mxu0 0.0
    %2045 = vmatprep.subr.mxu0 0.0
    %2046 = vmatpush1.msra.mxu0 0.0
    %2047 = vmatprep.subr.mxu0 0.0
    %2048 = vmatpush1.msra.mxu0 0.0
    %2049 = vmatprep.mubr.f32.mxu0 0.0
    %v2050 = vand.u32 %v72, 4294901760
    %v2051 = vsub.f32 %v72, %v2050
    %v2052 = vand.u32 %v2051, 4294901760
    %v2053 = vsub.f32 %v2051, %v2052
    %v2054 = vand.u32 %v2053, 4294901760
    %2055 = vmatmul.mubr.f32.gmra.mrb[0].mxu0 %v2054
    %v2056 = vpop.f32.mrb[0].mxu0
    %v2057 = vadd.f32 %v222, %v2056
    %v2058 = vpop.f32.mrb[0].mxu0
    %v2059 = vadd.f32 %v226, %v2058
    %2060 = vdwg.mxu0
    %v2061 = vand.u32 %v78, 4294901760
    %v2062 = vsub.f32 %v78, %v2061
    %v2063 = vand.u32 %v2062, 4294901760
    %v2064 = vsub.f32 %v2062, %v2063
    %v2065 = vand.u32 %v2064, 4294901760
    %2066 = vmatprep.subr.mxu0 %v2065
    %v2067 = vand.u32 %v77, 4294901760
    %v2068 = vsub.f32 %v77, %v2067
    %v2069 = vand.u32 %v2068, 4294901760
    %v2070 = vsub.f32 %v2068, %v2069
    %v2071 = vand.u32 %v2070, 4294901760
    %2072 = vmatpush1.msra.mxu0 %v2071
    %v2073 = vand.u32 %v86, 4294901760
    %v2074 = vsub.f32 %v86, %v2073
    %v2075 = vand.u32 %v2074, 4294901760
    %v2076 = vsub.f32 %v2074, %v2075
    %v2077 = vand.u32 %v2076, 4294901760
    %2078 = vmatprep.subr.mxu0 %v2077
    %v2079 = vand.u32 %v85, 4294901760
    %v2080 = vsub.f32 %v85, %v2079
    %v2081 = vand.u32 %v2080, 4294901760
    %v2082 = vsub.f32 %v2080, %v2081
    %v2083 = vand.u32 %v2082, 4294901760
    %2084 = vmatpush1.msra.mxu0 %v2083
    %v2085 = vand.u32 %v94, 4294901760
    %v2086 = vsub.f32 %v94, %v2085
    %v2087 = vand.u32 %v2086, 4294901760
    %v2088 = vsub.f32 %v2086, %v2087
    %v2089 = vand.u32 %v2088, 4294901760
    %2090 = vmatprep.subr.mxu0 %v2089
    %v2091 = vand.u32 %v93, 4294901760
    %v2092 = vsub.f32 %v93, %v2091
    %v2093 = vand.u32 %v2092, 4294901760
    %v2094 = vsub.f32 %v2092, %v2093
    %v2095 = vand.u32 %v2094, 4294901760
    %2096 = vmatpush1.msra.mxu0 %v2095
    %v2097 = vand.u32 %v102, 4294901760
    %v2098 = vsub.f32 %v102, %v2097
    %v2099 = vand.u32 %v2098, 4294901760
    %v2100 = vsub.f32 %v2098, %v2099
    %v2101 = vand.u32 %v2100, 4294901760
    %2102 = vmatprep.subr.mxu0 %v2101
    %v2103 = vand.u32 %v101, 4294901760
    %v2104 = vsub.f32 %v101, %v2103
    %v2105 = vand.u32 %v2104, 4294901760
    %v2106 = vsub.f32 %v2104, %v2105
    %v2107 = vand.u32 %v2106, 4294901760
    %2108 = vmatpush1.msra.mxu0 %v2107
    %v2109 = vand.u32 %v110, 4294901760
    %v2110 = vsub.f32 %v110, %v2109
    %v2111 = vand.u32 %v2110, 4294901760
    %v2112 = vsub.f32 %v2110, %v2111
    %v2113 = vand.u32 %v2112, 4294901760
    %2114 = vmatprep.subr.mxu0 %v2113
    %v2115 = vand.u32 %v109, 4294901760
    %v2116 = vsub.f32 %v109, %v2115
    %v2117 = vand.u32 %v2116, 4294901760
    %v2118 = vsub.f32 %v2116, %v2117
    %v2119 = vand.u32 %v2118, 4294901760
    %2120 = vmatpush1.msra.mxu0 %v2119
    %v2121 = vand.u32 %v118, 4294901760
    %v2122 = vsub.f32 %v118, %v2121
    %v2123 = vand.u32 %v2122, 4294901760
    %v2124 = vsub.f32 %v2122, %v2123
    %v2125 = vand.u32 %v2124, 4294901760
    %2126 = vmatprep.subr.mxu0 %v2125
    %v2127 = vand.u32 %v117, 4294901760
    %v2128 = vsub.f32 %v117, %v2127
    %v2129 = vand.u32 %v2128, 4294901760
    %v2130 = vsub.f32 %v2128, %v2129
    %v2131 = vand.u32 %v2130, 4294901760
    %2132 = vmatpush1.msra.mxu0 %v2131
    %v2133 = vand.u32 %v126, 4294901760
    %v2134 = vsub.f32 %v126, %v2133
    %v2135 = vand.u32 %v2134, 4294901760
    %v2136 = vsub.f32 %v2134, %v2135
    %v2137 = vand.u32 %v2136, 4294901760
    %2138 = vmatprep.subr.mxu0 %v2137
    %v2139 = vand.u32 %v125, 4294901760
    %v2140 = vsub.f32 %v125, %v2139
    %v2141 = vand.u32 %v2140, 4294901760
    %v2142 = vsub.f32 %v2140, %v2141
    %v2143 = vand.u32 %v2142, 4294901760
    %2144 = vmatpush1.msra.mxu0 %v2143
    %v2145 = vand.u32 %v134, 4294901760
    %v2146 = vsub.f32 %v134, %v2145
    %v2147 = vand.u32 %v2146, 4294901760
    %v2148 = vsub.f32 %v2146, %v2147
    %v2149 = vand.u32 %v2148, 4294901760
    %2150 = vmatprep.subr.mxu0 %v2149
    %v2151 = vand.u32 %v133, 4294901760
    %v2152 = vsub.f32 %v133, %v2151
    %v2153 = vand.u32 %v2152, 4294901760
    %v2154 = vsub.f32 %v2152, %v2153
    %v2155 = vand.u32 %v2154, 4294901760
    %2156 = vmatpush1.msra.mxu0 %v2155
    %v2157 = vand.u32 %v142, 4294901760
    %v2158 = vsub.f32 %v142, %v2157
    %v2159 = vand.u32 %v2158, 4294901760
    %v2160 = vsub.f32 %v2158, %v2159
    %v2161 = vand.u32 %v2160, 4294901760
    %2162 = vmatprep.subr.mxu0 %v2161
    %v2163 = vand.u32 %v141, 4294901760
    %v2164 = vsub.f32 %v141, %v2163
    %v2165 = vand.u32 %v2164, 4294901760
    %v2166 = vsub.f32 %v2164, %v2165
    %v2167 = vand.u32 %v2166, 4294901760
    %2168 = vmatpush1.msra.mxu0 %v2167
    %v2169 = vand.u32 %v150, 4294901760
    %v2170 = vsub.f32 %v150, %v2169
    %v2171 = vand.u32 %v2170, 4294901760
    %v2172 = vsub.f32 %v2170, %v2171
    %v2173 = vand.u32 %v2172, 4294901760
    %2174 = vmatprep.subr.mxu0 %v2173
    %v2175 = vand.u32 %v149, 4294901760
    %v2176 = vsub.f32 %v149, %v2175
    %v2177 = vand.u32 %v2176, 4294901760
    %v2178 = vsub.f32 %v2176, %v2177
    %v2179 = vand.u32 %v2178, 4294901760
    %2180 = vmatpush1.msra.mxu0 %v2179
    %v2181 = vand.u32 %v158, 4294901760
    %v2182 = vsub.f32 %v158, %v2181
    %v2183 = vand.u32 %v2182, 4294901760
    %v2184 = vsub.f32 %v2182, %v2183
    %v2185 = vand.u32 %v2184, 4294901760
    %2186 = vmatprep.subr.mxu0 %v2185
    %v2187 = vand.u32 %v157, 4294901760
    %v2188 = vsub.f32 %v157, %v2187
    %v2189 = vand.u32 %v2188, 4294901760
    %v2190 = vsub.f32 %v2188, %v2189
    %v2191 = vand.u32 %v2190, 4294901760
    %2192 = vmatpush1.msra.mxu0 %v2191
    %v2193 = vand.u32 %v166, 4294901760
    %v2194 = vsub.f32 %v166, %v2193
    %v2195 = vand.u32 %v2194, 4294901760
    %v2196 = vsub.f32 %v2194, %v2195
    %v2197 = vand.u32 %v2196, 4294901760
    %2198 = vmatprep.subr.mxu0 %v2197
    %v2199 = vand.u32 %v165, 4294901760
    %v2200 = vsub.f32 %v165, %v2199
    %v2201 = vand.u32 %v2200, 4294901760
    %v2202 = vsub.f32 %v2200, %v2201
    %v2203 = vand.u32 %v2202, 4294901760
    %2204 = vmatpush1.msra.mxu0 %v2203
    %v2205 = vand.u32 %v174, 4294901760
    %v2206 = vsub.f32 %v174, %v2205
    %v2207 = vand.u32 %v2206, 4294901760
    %v2208 = vsub.f32 %v2206, %v2207
    %v2209 = vand.u32 %v2208, 4294901760
    %2210 = vmatprep.subr.mxu0 %v2209
    %v2211 = vand.u32 %v173, 4294901760
    %v2212 = vsub.f32 %v173, %v2211
    %v2213 = vand.u32 %v2212, 4294901760
    %v2214 = vsub.f32 %v2212, %v2213
    %v2215 = vand.u32 %v2214, 4294901760
    %2216 = vmatpush1.msra.mxu0 %v2215
    %v2217 = vand.u32 %v182, 4294901760
    %v2218 = vsub.f32 %v182, %v2217
    %v2219 = vand.u32 %v2218, 4294901760
    %v2220 = vsub.f32 %v2218, %v2219
    %v2221 = vand.u32 %v2220, 4294901760
    %2222 = vmatprep.subr.mxu0 %v2221
    %v2223 = vand.u32 %v181, 4294901760
    %v2224 = vsub.f32 %v181, %v2223
    %v2225 = vand.u32 %v2224, 4294901760
    %v2226 = vsub.f32 %v2224, %v2225
    %v2227 = vand.u32 %v2226, 4294901760
    %2228 = vmatpush1.msra.mxu0 %v2227
    %v2229 = vand.u32 %v190, 4294901760
    %v2230 = vsub.f32 %v190, %v2229
    %v2231 = vand.u32 %v2230, 4294901760
    %v2232 = vsub.f32 %v2230, %v2231
    %v2233 = vand.u32 %v2232, 4294901760
    %2234 = vmatprep.subr.mxu0 %v2233
    %v2235 = vand.u32 %v189, 4294901760
    %v2236 = vsub.f32 %v189, %v2235
    %v2237 = vand.u32 %v2236, 4294901760
    %v2238 = vsub.f32 %v2236, %v2237
    %v2239 = vand.u32 %v2238, 4294901760
    %2240 = vmatpush1.msra.mxu0 %v2239
    %v2241 = vand.u32 %v198, 4294901760
    %v2242 = vsub.f32 %v198, %v2241
    %v2243 = vand.u32 %v2242, 4294901760
    %v2244 = vsub.f32 %v2242, %v2243
    %v2245 = vand.u32 %v2244, 4294901760
    %2246 = vmatprep.subr.mxu0 %v2245
    %v2247 = vand.u32 %v197, 4294901760
    %v2248 = vsub.f32 %v197, %v2247
    %v2249 = vand.u32 %v2248, 4294901760
    %v2250 = vsub.f32 %v2248, %v2249
    %v2251 = vand.u32 %v2250, 4294901760
    %2252 = vmatpush1.msra.mxu0 %v2251
    %2253 = vmatprep.subr.mxu0 0.0
    %2254 = vmatpush1.msra.mxu0 0.0
    %2255 = vmatprep.subr.mxu0 0.0
    %2256 = vmatpush1.msra.mxu0 0.0
    %2257 = vmatprep.subr.mxu0 0.0
    %2258 = vmatpush1.msra.mxu0 0.0
    %2259 = vmatprep.subr.mxu0 0.0
    %2260 = vmatpush1.msra.mxu0 0.0
    %2261 = vmatprep.subr.mxu0 0.0
    %2262 = vmatpush1.msra.mxu0 0.0
    %2263 = vmatprep.subr.mxu0 0.0
    %2264 = vmatpush1.msra.mxu0 0.0
    %2265 = vmatprep.subr.mxu0 0.0
    %2266 = vmatpush1.msra.mxu0 0.0
    %2267 = vmatprep.subr.mxu0 0.0
    %2268 = vmatpush1.msra.mxu0 0.0
    %2269 = vmatprep.subr.mxu0 0.0
    %2270 = vmatpush1.msra.mxu0 0.0
    %2271 = vmatprep.subr.mxu0 0.0
    %2272 = vmatpush1.msra.mxu0 0.0
    %2273 = vmatprep.subr.mxu0 0.0
    %2274 = vmatpush1.msra.mxu0 0.0
    %2275 = vmatprep.subr.mxu0 0.0
    %2276 = vmatpush1.msra.mxu0 0.0
    %2277 = vmatprep.subr.mxu0 0.0
    %2278 = vmatpush1.msra.mxu0 0.0
    %2279 = vmatprep.subr.mxu0 0.0
    %2280 = vmatpush1.msra.mxu0 0.0
    %2281 = vmatprep.subr.mxu0 0.0
    %2282 = vmatpush1.msra.mxu0 0.0
    %2283 = vmatprep.subr.mxu0 0.0
    %2284 = vmatpush1.msra.mxu0 0.0
    %2285 = vmatprep.mubr.f32.mxu0 0.0
    %v2286 = vand.u32 %v72, 4294901760
    %2287 = vmatmul.mubr.f32.gmra.mrb[0].mxu0 %v2286
    %v2288 = vpop.f32.mrb[0].mxu0
    %v2289 = vadd.f32 %v2057, %v2288
    %v2290 = vpop.f32.mrb[0].mxu0
    %v2291 = vadd.f32 %v2059, %v2290
    %2292 = vdwg.mxu0
    %v2293 = vand.u32 %v78, 4294901760
    %v2294 = vsub.f32 %v78, %v2293
    %2295 = vmatprep.subr.mxu0 %v2294
    %v2296 = vand.u32 %v77, 4294901760
    %v2297 = vsub.f32 %v77, %v2296
    %2298 = vmatpush1.msra.mxu0 %v2297
    %v2299 = vand.u32 %v86, 4294901760
    %v2300 = vsub.f32 %v86, %v2299
    %2301 = vmatprep.subr.mxu0 %v2300
    %v2302 = vand.u32 %v85, 4294901760
    %v2303 = vsub.f32 %v85, %v2302
    %2304 = vmatpush1.msra.mxu0 %v2303
    %v2305 = vand.u32 %v94, 4294901760
    %v2306 = vsub.f32 %v94, %v2305
    %2307 = vmatprep.subr.mxu0 %v2306
    %v2308 = vand.u32 %v93, 4294901760
    %v2309 = vsub.f32 %v93, %v2308
    %2310 = vmatpush1.msra.mxu0 %v2309
    %v2311 = vand.u32 %v102, 4294901760
    %v2312 = vsub.f32 %v102, %v2311
    %2313 = vmatprep.subr.mxu0 %v2312
    %v2314 = vand.u32 %v101, 4294901760
    %v2315 = vsub.f32 %v101, %v2314
    %2316 = vmatpush1.msra.mxu0 %v2315
    %v2317 = vand.u32 %v110, 4294901760
    %v2318 = vsub.f32 %v110, %v2317
    %2319 = vmatprep.subr.mxu0 %v2318
    %v2320 = vand.u32 %v109, 4294901760
    %v2321 = vsub.f32 %v109, %v2320
    %2322 = vmatpush1.msra.mxu0 %v2321
    %v2323 = vand.u32 %v118, 4294901760
    %v2324 = vsub.f32 %v118, %v2323
    %2325 = vmatprep.subr.mxu0 %v2324
    %v2326 = vand.u32 %v117, 4294901760
    %v2327 = vsub.f32 %v117, %v2326
    %2328 = vmatpush1.msra.mxu0 %v2327
    %v2329 = vand.u32 %v126, 4294901760
    %v2330 = vsub.f32 %v126, %v2329
    %2331 = vmatprep.subr.mxu0 %v2330
    %v2332 = vand.u32 %v125, 4294901760
    %v2333 = vsub.f32 %v125, %v2332
    %2334 = vmatpush1.msra.mxu0 %v2333
    %v2335 = vand.u32 %v134, 4294901760
    %v2336 = vsub.f32 %v134, %v2335
    %2337 = vmatprep.subr.mxu0 %v2336
    %v2338 = vand.u32 %v133, 4294901760
    %v2339 = vsub.f32 %v133, %v2338
    %2340 = vmatpush1.msra.mxu0 %v2339
    %v2341 = vand.u32 %v142, 4294901760
    %v2342 = vsub.f32 %v142, %v2341
    %2343 = vmatprep.subr.mxu0 %v2342
    %v2344 = vand.u32 %v141, 4294901760
    %v2345 = vsub.f32 %v141, %v2344
    %2346 = vmatpush1.msra.mxu0 %v2345
    %v2347 = vand.u32 %v150, 4294901760
    %v2348 = vsub.f32 %v150, %v2347
    %2349 = vmatprep.subr.mxu0 %v2348
    %v2350 = vand.u32 %v149, 4294901760
    %v2351 = vsub.f32 %v149, %v2350
    %2352 = vmatpush1.msra.mxu0 %v2351
    %v2353 = vand.u32 %v158, 4294901760
    %v2354 = vsub.f32 %v158, %v2353
    %2355 = vmatprep.subr.mxu0 %v2354
    %v2356 = vand.u32 %v157, 4294901760
    %v2357 = vsub.f32 %v157, %v2356
    %2358 = vmatpush1.msra.mxu0 %v2357
    %v2359 = vand.u32 %v166, 4294901760
    %v2360 = vsub.f32 %v166, %v2359
    %2361 = vmatprep.subr.mxu0 %v2360
    %v2362 = vand.u32 %v165, 4294901760
    %v2363 = vsub.f32 %v165, %v2362
    %2364 = vmatpush1.msra.mxu0 %v2363
    %v2365 = vand.u32 %v174, 4294901760
    %v2366 = vsub.f32 %v174, %v2365
    %2367 = vmatprep.subr.mxu0 %v2366
    %v2368 = vand.u32 %v173, 4294901760
    %v2369 = vsub.f32 %v173, %v2368
    %2370 = vmatpush1.msra.mxu0 %v2369
    %v2371 = vand.u32 %v182, 4294901760
    %v2372 = vsub.f32 %v182, %v2371
    %2373 = vmatprep.subr.mxu0 %v2372
    %v2374 = vand.u32 %v181, 4294901760
    %v2375 = vsub.f32 %v181, %v2374
    %2376 = vmatpush1.msra.mxu0 %v2375
    %v2377 = vand.u32 %v190, 4294901760
    %v2378 = vsub.f32 %v190, %v2377
    %2379 = vmatprep.subr.mxu0 %v2378
    %v2380 = vand.u32 %v189, 4294901760
    %v2381 = vsub.f32 %v189, %v2380
    %2382 = vmatpush1.msra.mxu0 %v2381
    %v2383 = vand.u32 %v198, 4294901760
    %v2384 = vsub.f32 %v198, %v2383
    %2385 = vmatprep.subr.mxu0 %v2384
    %v2386 = vand.u32 %v197, 4294901760
    %v2387 = vsub.f32 %v197, %v2386
    %2388 = vmatpush1.msra.mxu0 %v2387
    %2389 = vmatprep.subr.mxu0 0.0
    %2390 = vmatpush1.msra.mxu0 0.0
    %2391 = vmatprep.subr.mxu0 0.0
    %2392 = vmatpush1.msra.mxu0 0.0
    %2393 = vmatprep.subr.mxu0 0.0
    %2394 = vmatpush1.msra.mxu0 0.0
    %2395 = vmatprep.subr.mxu0 0.0
    %2396 = vmatpush1.msra.mxu0 0.0
    %2397 = vmatprep.subr.mxu0 0.0
    %2398 = vmatpush1.msra.mxu0 0.0
    %2399 = vmatprep.subr.mxu0 0.0
    %2400 = vmatpush1.msra.mxu0 0.0
    %2401 = vmatprep.subr.mxu0 0.0
    %2402 = vmatpush1.msra.mxu0 0.0
    %2403 = vmatprep.subr.mxu0 0.0
    %2404 = vmatpush1.msra.mxu0 0.0
    %2405 = vmatprep.subr.mxu0 0.0
    %2406 = vmatpush1.msra.mxu0 0.0
    %2407 = vmatprep.subr.mxu0 0.0
    %2408 = vmatpush1.msra.mxu0 0.0
    %2409 = vmatprep.subr.mxu0 0.0
    %2410 = vmatpush1.msra.mxu0 0.0
    %2411 = vmatprep.subr.mxu0 0.0
    %2412 = vmatpush1.msra.mxu0 0.0
    %2413 = vmatprep.subr.mxu0 0.0
    %2414 = vmatpush1.msra.mxu0 0.0
    %2415 = vmatprep.subr.mxu0 0.0
    %2416 = vmatpush1.msra.mxu0 0.0
    %2417 = vmatprep.subr.mxu0 0.0
    %2418 = vmatpush1.msra.mxu0 0.0
    %2419 = vmatprep.subr.mxu0 0.0
    %2420 = vmatpush1.msra.mxu0 0.0
    %2421 = vmatprep.mubr.f32.mxu0 0.0
    %v2422 = vand.u32 %v72, 4294901760
    %v2423 = vsub.f32 %v72, %v2422
    %2424 = vmatmul.mubr.f32.gmra.mrb[0].mxu0 %v2423
    %v2425 = vpop.f32.mrb[0].mxu0
    %v2426 = vadd.f32 %v2289, %v2425
    %v2427 = vpop.f32.mrb[0].mxu0
    %v2428 = vadd.f32 %v2291, %v2427
    %2429 = vdwg.mxu0
    %v2430 = vand.u32 %v78, 4294901760
    %2431 = vmatprep.subr.mxu0 %v2430
    %v2432 = vand.u32 %v77, 4294901760
    %2433 = vmatpush1.msra.mxu0 %v2432
    %v2434 = vand.u32 %v86, 4294901760
    %2435 = vmatprep.subr.mxu0 %v2434
    %v2436 = vand.u32 %v85, 4294901760
    %2437 = vmatpush1.msra.mxu0 %v2436
    %v2438 = vand.u32 %v94, 4294901760
    %2439 = vmatprep.subr.mxu0 %v2438
    %v2440 = vand.u32 %v93, 4294901760
    %2441 = vmatpush1.msra.mxu0 %v2440
    %v2442 = vand.u32 %v102, 4294901760
    %2443 = vmatprep.subr.mxu0 %v2442
    %v2444 = vand.u32 %v101, 4294901760
    %2445 = vmatpush1.msra.mxu0 %v2444
    %v2446 = vand.u32 %v110, 4294901760
    %2447 = vmatprep.subr.mxu0 %v2446
    %v2448 = vand.u32 %v109, 4294901760
    %2449 = vmatpush1.msra.mxu0 %v2448
    %v2450 = vand.u32 %v118, 4294901760
    %2451 = vmatprep.subr.mxu0 %v2450
    %v2452 = vand.u32 %v117, 4294901760
    %2453 = vmatpush1.msra.mxu0 %v2452
    %v2454 = vand.u32 %v126, 4294901760
    %2455 = vmatprep.subr.mxu0 %v2454
    %v2456 = vand.u32 %v125, 4294901760
    %2457 = vmatpush1.msra.mxu0 %v2456
    %v2458 = vand.u32 %v134, 4294901760
    %2459 = vmatprep.subr.mxu0 %v2458
    %v2460 = vand.u32 %v133, 4294901760
    %2461 = vmatpush1.msra.mxu0 %v2460
    %v2462 = vand.u32 %v142, 4294901760
    %2463 = vmatprep.subr.mxu0 %v2462
    %v2464 = vand.u32 %v141, 4294901760
    %2465 = vmatpush1.msra.mxu0 %v2464
    %v2466 = vand.u32 %v150, 4294901760
    %2467 = vmatprep.subr.mxu0 %v2466
    %v2468 = vand.u32 %v149, 4294901760
    %2469 = vmatpush1.msra.mxu0 %v2468
    %v2470 = vand.u32 %v158, 4294901760
    %2471 = vmatprep.subr.mxu0 %v2470
    %v2472 = vand.u32 %v157, 4294901760
    %2473 = vmatpush1.msra.mxu0 %v2472
    %v2474 = vand.u32 %v166, 4294901760
    %2475 = vmatprep.subr.mxu0 %v2474
    %v2476 = vand.u32 %v165, 4294901760
    %2477 = vmatpush1.msra.mxu0 %v2476
    %v2478 = vand.u32 %v174, 4294901760
    %2479 = vmatprep.subr.mxu0 %v2478
    %v2480 = vand.u32 %v173, 4294901760
    %2481 = vmatpush1.msra.mxu0 %v2480
    %v2482 = vand.u32 %v182, 4294901760
    %2483 = vmatprep.subr.mxu0 %v2482
    %v2484 = vand.u32 %v181, 4294901760
    %2485 = vmatpush1.msra.mxu0 %v2484
    %v2486 = vand.u32 %v190, 4294901760
    %2487 = vmatprep.subr.mxu0 %v2486
    %v2488 = vand.u32 %v189, 4294901760
    %2489 = vmatpush1.msra.mxu0 %v2488
    %v2490 = vand.u32 %v198, 4294901760
    %2491 = vmatprep.subr.mxu0 %v2490
    %v2492 = vand.u32 %v197, 4294901760
    %2493 = vmatpush1.msra.mxu0 %v2492
    %2494 = vmatprep.subr.mxu0 0.0
    %2495 = vmatpush1.msra.mxu0 0.0
    %2496 = vmatprep.subr.mxu0 0.0
    %2497 = vmatpush1.msra.mxu0 0.0
    %2498 = vmatprep.subr.mxu0 0.0
    %2499 = vmatpush1.msra.mxu0 0.0
    %2500 = vmatprep.subr.mxu0 0.0
    %2501 = vmatpush1.msra.mxu0 0.0
    %2502 = vmatprep.subr.mxu0 0.0
    %2503 = vmatpush1.msra.mxu0 0.0
    %2504 = vmatprep.subr.mxu0 0.0
    %2505 = vmatpush1.msra.mxu0 0.0
    %2506 = vmatprep.subr.mxu0 0.0
    %2507 = vmatpush1.msra.mxu0 0.0
    %2508 = vmatprep.subr.mxu0 0.0
    %2509 = vmatpush1.msra.mxu0 0.0
    %2510 = vmatprep.subr.mxu0 0.0
    %2511 = vmatpush1.msra.mxu0 0.0
    %2512 = vmatprep.subr.mxu0 0.0
    %2513 = vmatpush1.msra.mxu0 0.0
    %2514 = vmatprep.subr.mxu0 0.0
    %2515 = vmatpush1.msra.mxu0 0.0
    %2516 = vmatprep.subr.mxu0 0.0
    %2517 = vmatpush1.msra.mxu0 0.0
    %2518 = vmatprep.subr.mxu0 0.0
    %2519 = vmatpush1.msra.mxu0 0.0
    %2520 = vmatprep.subr.mxu0 0.0
    %2521 = vmatpush1.msra.mxu0 0.0
    %2522 = vmatprep.subr.mxu0 0.0
    %2523 = vmatpush1.msra.mxu0 0.0
    %2524 = vmatprep.subr.mxu0 0.0
    %2525 = vmatpush1.msra.mxu0 0.0
    %2526 = vmatprep.mubr.f32.mxu0 0.0
    %v2527 = vand.u32 %v72, 4294901760
    %v2528 = vsub.f32 %v72, %v2527
    %v2529 = vand.u32 %v2528, 4294901760
    %2530 = vmatmul.mubr.f32.gmra.mrb[0].mxu0 %v2529
    %v2531 = vpop.f32.mrb[0].mxu0
    %v2532 = vadd.f32 %v2426, %v2531
    %v2533 = vpop.f32.mrb[0].mxu0
    %v2534 = vadd.f32 %v2428, %v2533
    %2535 = vdwg.mxu0
    %v2536 = vand.u32 %v78, 4294901760
    %v2537 = vsub.f32 %v78, %v2536
    %v2538 = vand.u32 %v2537, 4294901760
    %2539 = vmatprep.subr.mxu0 %v2538
    %v2540 = vand.u32 %v77, 4294901760
    %v2541 = vsub.f32 %v77, %v2540
    %v2542 = vand.u32 %v2541, 4294901760
    %2543 = vmatpush1.msra.mxu0 %v2542
    %v2544 = vand.u32 %v86, 4294901760
    %v2545 = vsub.f32 %v86, %v2544
    %v2546 = vand.u32 %v2545, 4294901760
    %2547 = vmatprep.subr.mxu0 %v2546
    %v2548 = vand.u32 %v85, 4294901760
    %v2549 = vsub.f32 %v85, %v2548
    %v2550 = vand.u32 %v2549, 4294901760
    %2551 = vmatpush1.msra.mxu0 %v2550
    %v2552 = vand.u32 %v94, 4294901760
    %v2553 = vsub.f32 %v94, %v2552
    %v2554 = vand.u32 %v2553, 4294901760
    %2555 = vmatprep.subr.mxu0 %v2554
    %v2556 = vand.u32 %v93, 4294901760
    %v2557 = vsub.f32 %v93, %v2556
    %v2558 = vand.u32 %v2557, 4294901760
    %2559 = vmatpush1.msra.mxu0 %v2558
    %v2560 = vand.u32 %v102, 4294901760
    %v2561 = vsub.f32 %v102, %v2560
    %v2562 = vand.u32 %v2561, 4294901760
    %2563 = vmatprep.subr.mxu0 %v2562
    %v2564 = vand.u32 %v101, 4294901760
    %v2565 = vsub.f32 %v101, %v2564
    %v2566 = vand.u32 %v2565, 4294901760
    %2567 = vmatpush1.msra.mxu0 %v2566
    %v2568 = vand.u32 %v110, 4294901760
    %v2569 = vsub.f32 %v110, %v2568
    %v2570 = vand.u32 %v2569, 4294901760
    %2571 = vmatprep.subr.mxu0 %v2570
    %v2572 = vand.u32 %v109, 4294901760
    %v2573 = vsub.f32 %v109, %v2572
    %v2574 = vand.u32 %v2573, 4294901760
    %2575 = vmatpush1.msra.mxu0 %v2574
    %v2576 = vand.u32 %v118, 4294901760
    %v2577 = vsub.f32 %v118, %v2576
    %v2578 = vand.u32 %v2577, 4294901760
    %2579 = vmatprep.subr.mxu0 %v2578
    %v2580 = vand.u32 %v117, 4294901760
    %v2581 = vsub.f32 %v117, %v2580
    %v2582 = vand.u32 %v2581, 4294901760
    %2583 = vmatpush1.msra.mxu0 %v2582
    %v2584 = vand.u32 %v126, 4294901760
    %v2585 = vsub.f32 %v126, %v2584
    %v2586 = vand.u32 %v2585, 4294901760
    %2587 = vmatprep.subr.mxu0 %v2586
    %v2588 = vand.u32 %v125, 4294901760
    %v2589 = vsub.f32 %v125, %v2588
    %v2590 = vand.u32 %v2589, 4294901760
    %2591 = vmatpush1.msra.mxu0 %v2590
    %v2592 = vand.u32 %v134, 4294901760
    %v2593 = vsub.f32 %v134, %v2592
    %v2594 = vand.u32 %v2593, 4294901760
    %2595 = vmatprep.subr.mxu0 %v2594
    %v2596 = vand.u32 %v133, 4294901760
    %v2597 = vsub.f32 %v133, %v2596
    %v2598 = vand.u32 %v2597, 4294901760
    %2599 = vmatpush1.msra.mxu0 %v2598
    %v2600 = vand.u32 %v142, 4294901760
    %v2601 = vsub.f32 %v142, %v2600
    %v2602 = vand.u32 %v2601, 4294901760
    %2603 = vmatprep.subr.mxu0 %v2602
    %v2604 = vand.u32 %v141, 4294901760
    %v2605 = vsub.f32 %v141, %v2604
    %v2606 = vand.u32 %v2605, 4294901760
    %2607 = vmatpush1.msra.mxu0 %v2606
    %v2608 = vand.u32 %v150, 4294901760
    %v2609 = vsub.f32 %v150, %v2608
    %v2610 = vand.u32 %v2609, 4294901760
    %2611 = vmatprep.subr.mxu0 %v2610
    %v2612 = vand.u32 %v149, 4294901760
    %v2613 = vsub.f32 %v149, %v2612
    %v2614 = vand.u32 %v2613, 4294901760
    %2615 = vmatpush1.msra.mxu0 %v2614
    %v2616 = vand.u32 %v158, 4294901760
    %v2617 = vsub.f32 %v158, %v2616
    %v2618 = vand.u32 %v2617, 4294901760
    %2619 = vmatprep.subr.mxu0 %v2618
    %v2620 = vand.u32 %v157, 4294901760
    %v2621 = vsub.f32 %v157, %v2620
    %v2622 = vand.u32 %v2621, 4294901760
    %2623 = vmatpush1.msra.mxu0 %v2622
    %v2624 = vand.u32 %v166, 4294901760
    %v2625 = vsub.f32 %v166, %v2624
    %v2626 = vand.u32 %v2625, 4294901760
    %2627 = vmatprep.subr.mxu0 %v2626
    %v2628 = vand.u32 %v165, 4294901760
    %v2629 = vsub.f32 %v165, %v2628
    %v2630 = vand.u32 %v2629, 4294901760
    %2631 = vmatpush1.msra.mxu0 %v2630
    %v2632 = vand.u32 %v174, 4294901760
    %v2633 = vsub.f32 %v174, %v2632
    %v2634 = vand.u32 %v2633, 4294901760
    %2635 = vmatprep.subr.mxu0 %v2634
    %v2636 = vand.u32 %v173, 4294901760
    %v2637 = vsub.f32 %v173, %v2636
    %v2638 = vand.u32 %v2637, 4294901760
    %2639 = vmatpush1.msra.mxu0 %v2638
    %v2640 = vand.u32 %v182, 4294901760
    %v2641 = vsub.f32 %v182, %v2640
    %v2642 = vand.u32 %v2641, 4294901760
    %2643 = vmatprep.subr.mxu0 %v2642
    %v2644 = vand.u32 %v181, 4294901760
    %v2645 = vsub.f32 %v181, %v2644
    %v2646 = vand.u32 %v2645, 4294901760
    %2647 = vmatpush1.msra.mxu0 %v2646
    %v2648 = vand.u32 %v190, 4294901760
    %v2649 = vsub.f32 %v190, %v2648
    %v2650 = vand.u32 %v2649, 4294901760
    %2651 = vmatprep.subr.mxu0 %v2650
    %v2652 = vand.u32 %v189, 4294901760
    %v2653 = vsub.f32 %v189, %v2652
    %v2654 = vand.u32 %v2653, 4294901760
    %2655 = vmatpush1.msra.mxu0 %v2654
    %v2656 = vand.u32 %v198, 4294901760
    %v2657 = vsub.f32 %v198, %v2656
    %v2658 = vand.u32 %v2657, 4294901760
    %2659 = vmatprep.subr.mxu0 %v2658
    %v2660 = vand.u32 %v197, 4294901760
    %v2661 = vsub.f32 %v197, %v2660
    %v2662 = vand.u32 %v2661, 4294901760
    %2663 = vmatpush1.msra.mxu0 %v2662
    %2664 = vmatprep.subr.mxu0 0.0
    %2665 = vmatpush1.msra.mxu0 0.0
    %2666 = vmatprep.subr.mxu0 0.0
    %2667 = vmatpush1.msra.mxu0 0.0
    %2668 = vmatprep.subr.mxu0 0.0
    %2669 = vmatpush1.msra.mxu0 0.0
    %2670 = vmatprep.subr.mxu0 0.0
    %2671 = vmatpush1.msra.mxu0 0.0
    %2672 = vmatprep.subr.mxu0 0.0
    %2673 = vmatpush1.msra.mxu0 0.0
    %2674 = vmatprep.subr.mxu0 0.0
    %2675 = vmatpush1.msra.mxu0 0.0
    %2676 = vmatprep.subr.mxu0 0.0
    %2677 = vmatpush1.msra.mxu0 0.0
    %2678 = vmatprep.subr.mxu0 0.0
    %2679 = vmatpush1.msra.mxu0 0.0
    %2680 = vmatprep.subr.mxu0 0.0
    %2681 = vmatpush1.msra.mxu0 0.0
    %2682 = vmatprep.subr.mxu0 0.0
    %2683 = vmatpush1.msra.mxu0 0.0
    %2684 = vmatprep.subr.mxu0 0.0
    %2685 = vmatpush1.msra.mxu0 0.0
    %2686 = vmatprep.subr.mxu0 0.0
    %2687 = vmatpush1.msra.mxu0 0.0
    %2688 = vmatprep.subr.mxu0 0.0
    %2689 = vmatpush1.msra.mxu0 0.0
    %2690 = vmatprep.subr.mxu0 0.0
    %2691 = vmatpush1.msra.mxu0 0.0
    %2692 = vmatprep.subr.mxu0 0.0
    %2693 = vmatpush1.msra.mxu0 0.0
    %2694 = vmatprep.subr.mxu0 0.0
    %2695 = vmatpush1.msra.mxu0 0.0
    %2696 = vmatprep.mubr.f32.mxu0 0.0
    %v2697 = vand.u32 %v72, 4294901760
    %2698 = vmatmul.mubr.f32.gmra.mrb[0].mxu0 %v2697
    %v2699 = vpop.f32.mrb[0].mxu0
    %v2700 = vadd.f32 %v2532, %v2699
    %v2701 = vpop.f32.mrb[0].mxu0
    %v2702 = vadd.f32 %v2534, %v2701
    %2703 = vdwg.mxu0
    %v2704 = vand.u32 %v78, 4294901760
    %2705 = vmatprep.subr.mxu0 %v2704
    %v2706 = vand.u32 %v77, 4294901760
    %2707 = vmatpush1.msra.mxu0 %v2706
    %v2708 = vand.u32 %v86, 4294901760
    %2709 = vmatprep.subr.mxu0 %v2708
    %v2710 = vand.u32 %v85, 4294901760
    %2711 = vmatpush1.msra.mxu0 %v2710
    %v2712 = vand.u32 %v94, 4294901760
    %2713 = vmatprep.subr.mxu0 %v2712
    %v2714 = vand.u32 %v93, 4294901760
    %2715 = vmatpush1.msra.mxu0 %v2714
    %v2716 = vand.u32 %v102, 4294901760
    %2717 = vmatprep.subr.mxu0 %v2716
    %v2718 = vand.u32 %v101, 4294901760
    %2719 = vmatpush1.msra.mxu0 %v2718
    %v2720 = vand.u32 %v110, 4294901760
    %2721 = vmatprep.subr.mxu0 %v2720
    %v2722 = vand.u32 %v109, 4294901760
    %2723 = vmatpush1.msra.mxu0 %v2722
    %v2724 = vand.u32 %v118, 4294901760
    %2725 = vmatprep.subr.mxu0 %v2724
    %v2726 = vand.u32 %v117, 4294901760
    %2727 = vmatpush1.msra.mxu0 %v2726
    %v2728 = vand.u32 %v126, 4294901760
    %2729 = vmatprep.subr.mxu0 %v2728
    %v2730 = vand.u32 %v125, 4294901760
    %2731 = vmatpush1.msra.mxu0 %v2730
    %v2732 = vand.u32 %v134, 4294901760
    %2733 = vmatprep.subr.mxu0 %v2732
    %v2734 = vand.u32 %v133, 4294901760
    %2735 = vmatpush1.msra.mxu0 %v2734
    %v2736 = vand.u32 %v142, 4294901760
    %2737 = vmatprep.subr.mxu0 %v2736
    %v2738 = vand.u32 %v141, 4294901760
    %2739 = vmatpush1.msra.mxu0 %v2738
    %v2740 = vand.u32 %v150, 4294901760
    %2741 = vmatprep.subr.mxu0 %v2740
    %v2742 = vand.u32 %v149, 4294901760
    %2743 = vmatpush1.msra.mxu0 %v2742
    %v2744 = vand.u32 %v158, 4294901760
    %2745 = vmatprep.subr.mxu0 %v2744
    %v2746 = vand.u32 %v157, 4294901760
    %2747 = vmatpush1.msra.mxu0 %v2746
    %v2748 = vand.u32 %v166, 4294901760
    %2749 = vmatprep.subr.mxu0 %v2748
    %v2750 = vand.u32 %v165, 4294901760
    %2751 = vmatpush1.msra.mxu0 %v2750
    %v2752 = vand.u32 %v174, 4294901760
    %2753 = vmatprep.subr.mxu0 %v2752
    %v2754 = vand.u32 %v173, 4294901760
    %2755 = vmatpush1.msra.mxu0 %v2754
    %v2756 = vand.u32 %v182, 4294901760
    %2757 = vmatprep.subr.mxu0 %v2756
    %v2758 = vand.u32 %v181, 4294901760
    %2759 = vmatpush1.msra.mxu0 %v2758
    %v2760 = vand.u32 %v190, 4294901760
    %2761 = vmatprep.subr.mxu0 %v2760
    %v2762 = vand.u32 %v189, 4294901760
    %2763 = vmatpush1.msra.mxu0 %v2762
    %v2764 = vand.u32 %v198, 4294901760
    %2765 = vmatprep.subr.mxu0 %v2764
    %v2766 = vand.u32 %v197, 4294901760
    %2767 = vmatpush1.msra.mxu0 %v2766
    %2768 = vmatprep.subr.mxu0 0.0
    %2769 = vmatpush1.msra.mxu0 0.0
    %2770 = vmatprep.subr.mxu0 0.0
    %2771 = vmatpush1.msra.mxu0 0.0
    %2772 = vmatprep.subr.mxu0 0.0
    %2773 = vmatpush1.msra.mxu0 0.0
    %2774 = vmatprep.subr.mxu0 0.0
    %2775 = vmatpush1.msra.mxu0 0.0
    %2776 = vmatprep.subr.mxu0 0.0
    %2777 = vmatpush1.msra.mxu0 0.0
    %2778 = vmatprep.subr.mxu0 0.0
    %2779 = vmatpush1.msra.mxu0 0.0
    %2780 = vmatprep.subr.mxu0 0.0
    %2781 = vmatpush1.msra.mxu0 0.0
    %2782 = vmatprep.subr.mxu0 0.0
    %2783 = vmatpush1.msra.mxu0 0.0
    %2784 = vmatprep.subr.mxu0 0.0
    %2785 = vmatpush1.msra.mxu0 0.0
    %2786 = vmatprep.subr.mxu0 0.0
    %2787 = vmatpush1.msra.mxu0 0.0
    %2788 = vmatprep.subr.mxu0 0.0
    %2789 = vmatpush1.msra.mxu0 0.0
    %2790 = vmatprep.subr.mxu0 0.0
    %2791 = vmatpush1.msra.mxu0 0.0
    %2792 = vmatprep.subr.mxu0 0.0
    %2793 = vmatpush1.msra.mxu0 0.0
    %2794 = vmatprep.subr.mxu0 0.0
    %2795 = vmatpush1.msra.mxu0 0.0
    %2796 = vmatprep.subr.mxu0 0.0
    %2797 = vmatpush1.msra.mxu0 0.0
    %2798 = vmatprep.subr.mxu0 0.0
    %2799 = vmatpush1.msra.mxu0 0.0
    %2800 = vmatprep.mubr.f32.mxu0 0.0
    %v2801 = vand.u32 %v72, 4294901760
    %2802 = vmatmul.mubr.f32.gmra.mrb[0].mxu0 %v2801
    %v2803 = vpop.f32.mrb[0].mxu0
    %v2804 = vadd.f32 %v2700, %v2803
    %v2805 = vpop.f32.mrb[0].mxu0
    %v2806 = vadd.f32 %v2702, %v2805
    %2807 = vdwg.mxu0
    %v2808 = vand.u32 %v80, 4294901760
    %2809 = vmatprep.subr.mxu0 %v2808
    %v2810 = vand.u32 %v79, 4294901760
    %2811 = vmatpush1.msra.mxu0 %v2810
    %v2812 = vand.u32 %v88, 4294901760
    %2813 = vmatprep.subr.mxu0 %v2812
    %v2814 = vand.u32 %v87, 4294901760
    %2815 = vmatpush1.msra.mxu0 %v2814
    %v2816 = vand.u32 %v96, 4294901760
    %2817 = vmatprep.subr.mxu0 %v2816
    %v2818 = vand.u32 %v95, 4294901760
    %2819 = vmatpush1.msra.mxu0 %v2818
    %v2820 = vand.u32 %v104, 4294901760
    %2821 = vmatprep.subr.mxu0 %v2820
    %v2822 = vand.u32 %v103, 4294901760
    %2823 = vmatpush1.msra.mxu0 %v2822
    %v2824 = vand.u32 %v112, 4294901760
    %2825 = vmatprep.subr.mxu0 %v2824
    %v2826 = vand.u32 %v111, 4294901760
    %2827 = vmatpush1.msra.mxu0 %v2826
    %v2828 = vand.u32 %v120, 4294901760
    %2829 = vmatprep.subr.mxu0 %v2828
    %v2830 = vand.u32 %v119, 4294901760
    %2831 = vmatpush1.msra.mxu0 %v2830
    %v2832 = vand.u32 %v128, 4294901760
    %2833 = vmatprep.subr.mxu0 %v2832
    %v2834 = vand.u32 %v127, 4294901760
    %2835 = vmatpush1.msra.mxu0 %v2834
    %v2836 = vand.u32 %v136, 4294901760
    %2837 = vmatprep.subr.mxu0 %v2836
    %v2838 = vand.u32 %v135, 4294901760
    %2839 = vmatpush1.msra.mxu0 %v2838
    %v2840 = vand.u32 %v144, 4294901760
    %2841 = vmatprep.subr.mxu0 %v2840
    %v2842 = vand.u32 %v143, 4294901760
    %2843 = vmatpush1.msra.mxu0 %v2842
    %v2844 = vand.u32 %v152, 4294901760
    %2845 = vmatprep.subr.mxu0 %v2844
    %v2846 = vand.u32 %v151, 4294901760
    %2847 = vmatpush1.msra.mxu0 %v2846
    %v2848 = vand.u32 %v160, 4294901760
    %2849 = vmatprep.subr.mxu0 %v2848
    %v2850 = vand.u32 %v159, 4294901760
    %2851 = vmatpush1.msra.mxu0 %v2850
    %v2852 = vand.u32 %v168, 4294901760
    %2853 = vmatprep.subr.mxu0 %v2852
    %v2854 = vand.u32 %v167, 4294901760
    %2855 = vmatpush1.msra.mxu0 %v2854
    %v2856 = vand.u32 %v176, 4294901760
    %2857 = vmatprep.subr.mxu0 %v2856
    %v2858 = vand.u32 %v175, 4294901760
    %2859 = vmatpush1.msra.mxu0 %v2858
    %v2860 = vand.u32 %v184, 4294901760
    %2861 = vmatprep.subr.mxu0 %v2860
    %v2862 = vand.u32 %v183, 4294901760
    %2863 = vmatpush1.msra.mxu0 %v2862
    %v2864 = vand.u32 %v192, 4294901760
    %2865 = vmatprep.subr.mxu0 %v2864
    %v2866 = vand.u32 %v191, 4294901760
    %2867 = vmatpush1.msra.mxu0 %v2866
    %v2868 = vand.u32 %v200, 4294901760
    %2869 = vmatprep.subr.mxu0 %v2868
    %v2870 = vand.u32 %v199, 4294901760
    %2871 = vmatpush1.msra.mxu0 %v2870
    %2872 = vmatprep.subr.mxu0 0.0
    %2873 = vmatpush1.msra.mxu0 0.0
    %2874 = vmatprep.subr.mxu0 0.0
    %2875 = vmatpush1.msra.mxu0 0.0
    %2876 = vmatprep.subr.mxu0 0.0
    %2877 = vmatpush1.msra.mxu0 0.0
    %2878 = vmatprep.subr.mxu0 0.0
    %2879 = vmatpush1.msra.mxu0 0.0
    %2880 = vmatprep.subr.mxu0 0.0
    %2881 = vmatpush1.msra.mxu0 0.0
    %2882 = vmatprep.subr.mxu0 0.0
    %2883 = vmatpush1.msra.mxu0 0.0
    %2884 = vmatprep.subr.mxu0 0.0
    %2885 = vmatpush1.msra.mxu0 0.0
    %2886 = vmatprep.subr.mxu0 0.0
    %2887 = vmatpush1.msra.mxu0 0.0
    %2888 = vmatprep.subr.mxu0 0.0
    %2889 = vmatpush1.msra.mxu0 0.0
    %2890 = vmatprep.subr.mxu0 0.0
    %2891 = vmatpush1.msra.mxu0 0.0
    %2892 = vmatprep.subr.mxu0 0.0
    %2893 = vmatpush1.msra.mxu0 0.0
    %2894 = vmatprep.subr.mxu0 0.0
    %2895 = vmatpush1.msra.mxu0 0.0
    %2896 = vmatprep.subr.mxu0 0.0
    %2897 = vmatpush1.msra.mxu0 0.0
    %2898 = vmatprep.subr.mxu0 0.0
    %2899 = vmatpush1.msra.mxu0 0.0
    %2900 = vmatprep.subr.mxu0 0.0
    %2901 = vmatpush1.msra.mxu0 0.0
    %2902 = vmatprep.subr.mxu0 0.0
    %2903 = vmatpush1.msra.mxu0 0.0
    %2904 = vmatprep.mubr.f32.mxu0 0.0
    %v2905 = vand.u32 %v72, 4294901760
    %v2906 = vsub.f32 %v72, %v2905
    %v2907 = vand.u32 %v2906, 4294901760
    %v2908 = vsub.f32 %v2906, %v2907
    %v2909 = vand.u32 %v2908, 4294901760
    %2910 = vmatmul.mubr.f32.gmra.mrb[0].mxu0 %v2909
    %v2911 = vpop.f32.mrb[0].mxu0
    %v2912 = vadd.f32 %v230, %v2911
    %v2913 = vpop.f32.mrb[0].mxu0
    %v2914 = vadd.f32 %v234, %v2913
    %2915 = vdwg.mxu0
    %v2916 = vand.u32 %v80, 4294901760
    %v2917 = vsub.f32 %v80, %v2916
    %v2918 = vand.u32 %v2917, 4294901760
    %v2919 = vsub.f32 %v2917, %v2918
    %v2920 = vand.u32 %v2919, 4294901760
    %2921 = vmatprep.subr.mxu0 %v2920
    %v2922 = vand.u32 %v79, 4294901760
    %v2923 = vsub.f32 %v79, %v2922
    %v2924 = vand.u32 %v2923, 4294901760
    %v2925 = vsub.f32 %v2923, %v2924
    %v2926 = vand.u32 %v2925, 4294901760
    %2927 = vmatpush1.msra.mxu0 %v2926
    %v2928 = vand.u32 %v88, 4294901760
    %v2929 = vsub.f32 %v88, %v2928
    %v2930 = vand.u32 %v2929, 4294901760
    %v2931 = vsub.f32 %v2929, %v2930
    %v2932 = vand.u32 %v2931, 4294901760
    %2933 = vmatprep.subr.mxu0 %v2932
    %v2934 = vand.u32 %v87, 4294901760
    %v2935 = vsub.f32 %v87, %v2934
    %v2936 = vand.u32 %v2935, 4294901760
    %v2937 = vsub.f32 %v2935, %v2936
    %v2938 = vand.u32 %v2937, 4294901760
    %2939 = vmatpush1.msra.mxu0 %v2938
    %v2940 = vand.u32 %v96, 4294901760
    %v2941 = vsub.f32 %v96, %v2940
    %v2942 = vand.u32 %v2941, 4294901760
    %v2943 = vsub.f32 %v2941, %v2942
    %v2944 = vand.u32 %v2943, 4294901760
    %2945 = vmatprep.subr.mxu0 %v2944
    %v2946 = vand.u32 %v95, 4294901760
    %v2947 = vsub.f32 %v95, %v2946
    %v2948 = vand.u32 %v2947, 4294901760
    %v2949 = vsub.f32 %v2947, %v2948
    %v2950 = vand.u32 %v2949, 4294901760
    %2951 = vmatpush1.msra.mxu0 %v2950
    %v2952 = vand.u32 %v104, 4294901760
    %v2953 = vsub.f32 %v104, %v2952
    %v2954 = vand.u32 %v2953, 4294901760
    %v2955 = vsub.f32 %v2953, %v2954
    %v2956 = vand.u32 %v2955, 4294901760
    %2957 = vmatprep.subr.mxu0 %v2956
    %v2958 = vand.u32 %v103, 4294901760
    %v2959 = vsub.f32 %v103, %v2958
    %v2960 = vand.u32 %v2959, 4294901760
    %v2961 = vsub.f32 %v2959, %v2960
    %v2962 = vand.u32 %v2961, 4294901760
    %2963 = vmatpush1.msra.mxu0 %v2962
    %v2964 = vand.u32 %v112, 4294901760
    %v2965 = vsub.f32 %v112, %v2964
    %v2966 = vand.u32 %v2965, 4294901760
    %v2967 = vsub.f32 %v2965, %v2966
    %v2968 = vand.u32 %v2967, 4294901760
    %2969 = vmatprep.subr.mxu0 %v2968
    %v2970 = vand.u32 %v111, 4294901760
    %v2971 = vsub.f32 %v111, %v2970
    %v2972 = vand.u32 %v2971, 4294901760
    %v2973 = vsub.f32 %v2971, %v2972
    %v2974 = vand.u32 %v2973, 4294901760
    %2975 = vmatpush1.msra.mxu0 %v2974
    %v2976 = vand.u32 %v120, 4294901760
    %v2977 = vsub.f32 %v120, %v2976
    %v2978 = vand.u32 %v2977, 4294901760
    %v2979 = vsub.f32 %v2977, %v2978
    %v2980 = vand.u32 %v2979, 4294901760
    %2981 = vmatprep.subr.mxu0 %v2980
    %v2982 = vand.u32 %v119, 4294901760
    %v2983 = vsub.f32 %v119, %v2982
    %v2984 = vand.u32 %v2983, 4294901760
    %v2985 = vsub.f32 %v2983, %v2984
    %v2986 = vand.u32 %v2985, 4294901760
    %2987 = vmatpush1.msra.mxu0 %v2986
    %v2988 = vand.u32 %v128, 4294901760
    %v2989 = vsub.f32 %v128, %v2988
    %v2990 = vand.u32 %v2989, 4294901760
    %v2991 = vsub.f32 %v2989, %v2990
    %v2992 = vand.u32 %v2991, 4294901760
    %2993 = vmatprep.subr.mxu0 %v2992
    %v2994 = vand.u32 %v127, 4294901760
    %v2995 = vsub.f32 %v127, %v2994
    %v2996 = vand.u32 %v2995, 4294901760
    %v2997 = vsub.f32 %v2995, %v2996
    %v2998 = vand.u32 %v2997, 4294901760
    %2999 = vmatpush1.msra.mxu0 %v2998
    %v3000 = vand.u32 %v136, 4294901760
    %v3001 = vsub.f32 %v136, %v3000
    %v3002 = vand.u32 %v3001, 4294901760
    %v3003 = vsub.f32 %v3001, %v3002
    %v3004 = vand.u32 %v3003, 4294901760
    %3005 = vmatprep.subr.mxu0 %v3004
    %v3006 = vand.u32 %v135, 4294901760
    %v3007 = vsub.f32 %v135, %v3006
    %v3008 = vand.u32 %v3007, 4294901760
    %v3009 = vsub.f32 %v3007, %v3008
    %v3010 = vand.u32 %v3009, 4294901760
    %3011 = vmatpush1.msra.mxu0 %v3010
    %v3012 = vand.u32 %v144, 4294901760
    %v3013 = vsub.f32 %v144, %v3012
    %v3014 = vand.u32 %v3013, 4294901760
    %v3015 = vsub.f32 %v3013, %v3014
    %v3016 = vand.u32 %v3015, 4294901760
    %3017 = vmatprep.subr.mxu0 %v3016
    %v3018 = vand.u32 %v143, 4294901760
    %v3019 = vsub.f32 %v143, %v3018
    %v3020 = vand.u32 %v3019, 4294901760
    %v3021 = vsub.f32 %v3019, %v3020
    %v3022 = vand.u32 %v3021, 4294901760
    %3023 = vmatpush1.msra.mxu0 %v3022
    %v3024 = vand.u32 %v152, 4294901760
    %v3025 = vsub.f32 %v152, %v3024
    %v3026 = vand.u32 %v3025, 4294901760
    %v3027 = vsub.f32 %v3025, %v3026
    %v3028 = vand.u32 %v3027, 4294901760
    %3029 = vmatprep.subr.mxu0 %v3028
    %v3030 = vand.u32 %v151, 4294901760
    %v3031 = vsub.f32 %v151, %v3030
    %v3032 = vand.u32 %v3031, 4294901760
    %v3033 = vsub.f32 %v3031, %v3032
    %v3034 = vand.u32 %v3033, 4294901760
    %3035 = vmatpush1.msra.mxu0 %v3034
    %v3036 = vand.u32 %v160, 4294901760
    %v3037 = vsub.f32 %v160, %v3036
    %v3038 = vand.u32 %v3037, 4294901760
    %v3039 = vsub.f32 %v3037, %v3038
    %v3040 = vand.u32 %v3039, 4294901760
    %3041 = vmatprep.subr.mxu0 %v3040
    %v3042 = vand.u32 %v159, 4294901760
    %v3043 = vsub.f32 %v159, %v3042
    %v3044 = vand.u32 %v3043, 4294901760
    %v3045 = vsub.f32 %v3043, %v3044
    %v3046 = vand.u32 %v3045, 4294901760
    %3047 = vmatpush1.msra.mxu0 %v3046
    %v3048 = vand.u32 %v168, 4294901760
    %v3049 = vsub.f32 %v168, %v3048
    %v3050 = vand.u32 %v3049, 4294901760
    %v3051 = vsub.f32 %v3049, %v3050
    %v3052 = vand.u32 %v3051, 4294901760
    %3053 = vmatprep.subr.mxu0 %v3052
    %v3054 = vand.u32 %v167, 4294901760
    %v3055 = vsub.f32 %v167, %v3054
    %v3056 = vand.u32 %v3055, 4294901760
    %v3057 = vsub.f32 %v3055, %v3056
    %v3058 = vand.u32 %v3057, 4294901760
    %3059 = vmatpush1.msra.mxu0 %v3058
    %v3060 = vand.u32 %v176, 4294901760
    %v3061 = vsub.f32 %v176, %v3060
    %v3062 = vand.u32 %v3061, 4294901760
    %v3063 = vsub.f32 %v3061, %v3062
    %v3064 = vand.u32 %v3063, 4294901760
    %3065 = vmatprep.subr.mxu0 %v3064
    %v3066 = vand.u32 %v175, 4294901760
    %v3067 = vsub.f32 %v175, %v3066
    %v3068 = vand.u32 %v3067, 4294901760
    %v3069 = vsub.f32 %v3067, %v3068
    %v3070 = vand.u32 %v3069, 4294901760
    %3071 = vmatpush1.msra.mxu0 %v3070
    %v3072 = vand.u32 %v184, 4294901760
    %v3073 = vsub.f32 %v184, %v3072
    %v3074 = vand.u32 %v3073, 4294901760
    %v3075 = vsub.f32 %v3073, %v3074
    %v3076 = vand.u32 %v3075, 4294901760
    %3077 = vmatprep.subr.mxu0 %v3076
    %v3078 = vand.u32 %v183, 4294901760
    %v3079 = vsub.f32 %v183, %v3078
    %v3080 = vand.u32 %v3079, 4294901760
    %v3081 = vsub.f32 %v3079, %v3080
    %v3082 = vand.u32 %v3081, 4294901760
    %3083 = vmatpush1.msra.mxu0 %v3082
    %v3084 = vand.u32 %v192, 4294901760
    %v3085 = vsub.f32 %v192, %v3084
    %v3086 = vand.u32 %v3085, 4294901760
    %v3087 = vsub.f32 %v3085, %v3086
    %v3088 = vand.u32 %v3087, 4294901760
    %3089 = vmatprep.subr.mxu0 %v3088
    %v3090 = vand.u32 %v191, 4294901760
    %v3091 = vsub.f32 %v191, %v3090
    %v3092 = vand.u32 %v3091, 4294901760
    %v3093 = vsub.f32 %v3091, %v3092
    %v3094 = vand.u32 %v3093, 4294901760
    %3095 = vmatpush1.msra.mxu0 %v3094
    %v3096 = vand.u32 %v200, 4294901760
    %v3097 = vsub.f32 %v200, %v3096
    %v3098 = vand.u32 %v3097, 4294901760
    %v3099 = vsub.f32 %v3097, %v3098
    %v3100 = vand.u32 %v3099, 4294901760
    %3101 = vmatprep.subr.mxu0 %v3100
    %v3102 = vand.u32 %v199, 4294901760
    %v3103 = vsub.f32 %v199, %v3102
    %v3104 = vand.u32 %v3103, 4294901760
    %v3105 = vsub.f32 %v3103, %v3104
    %v3106 = vand.u32 %v3105, 4294901760
    %3107 = vmatpush1.msra.mxu0 %v3106
    %3108 = vmatprep.subr.mxu0 0.0
    %3109 = vmatpush1.msra.mxu0 0.0
    %3110 = vmatprep.subr.mxu0 0.0
    %3111 = vmatpush1.msra.mxu0 0.0
    %3112 = vmatprep.subr.mxu0 0.0
    %3113 = vmatpush1.msra.mxu0 0.0
    %3114 = vmatprep.subr.mxu0 0.0
    %3115 = vmatpush1.msra.mxu0 0.0
    %3116 = vmatprep.subr.mxu0 0.0
    %3117 = vmatpush1.msra.mxu0 0.0
    %3118 = vmatprep.subr.mxu0 0.0
    %3119 = vmatpush1.msra.mxu0 0.0
    %3120 = vmatprep.subr.mxu0 0.0
    %3121 = vmatpush1.msra.mxu0 0.0
    %3122 = vmatprep.subr.mxu0 0.0
    %3123 = vmatpush1.msra.mxu0 0.0
    %3124 = vmatprep.subr.mxu0 0.0
    %3125 = vmatpush1.msra.mxu0 0.0
    %3126 = vmatprep.subr.mxu0 0.0
    %3127 = vmatpush1.msra.mxu0 0.0
    %3128 = vmatprep.subr.mxu0 0.0
    %3129 = vmatpush1.msra.mxu0 0.0
    %3130 = vmatprep.subr.mxu0 0.0
    %3131 = vmatpush1.msra.mxu0 0.0
    %3132 = vmatprep.subr.mxu0 0.0
    %3133 = vmatpush1.msra.mxu0 0.0
    %3134 = vmatprep.subr.mxu0 0.0
    %3135 = vmatpush1.msra.mxu0 0.0
    %3136 = vmatprep.subr.mxu0 0.0
    %3137 = vmatpush1.msra.mxu0 0.0
    %3138 = vmatprep.subr.mxu0 0.0
    %3139 = vmatpush1.msra.mxu0 0.0
    %3140 = vmatprep.mubr.f32.mxu0 0.0
    %v3141 = vand.u32 %v72, 4294901760
    %3142 = vmatmul.mubr.f32.gmra.mrb[0].mxu0 %v3141
    %v3143 = vpop.f32.mrb[0].mxu0
    %v3144 = vadd.f32 %v2912, %v3143
    %v3145 = vpop.f32.mrb[0].mxu0
    %v3146 = vadd.f32 %v2914, %v3145
    %3147 = vdwg.mxu0
    %v3148 = vand.u32 %v80, 4294901760
    %v3149 = vsub.f32 %v80, %v3148
    %3150 = vmatprep.subr.mxu0 %v3149
    %v3151 = vand.u32 %v79, 4294901760
    %v3152 = vsub.f32 %v79, %v3151
    %3153 = vmatpush1.msra.mxu0 %v3152
    %v3154 = vand.u32 %v88, 4294901760
    %v3155 = vsub.f32 %v88, %v3154
    %3156 = vmatprep.subr.mxu0 %v3155
    %v3157 = vand.u32 %v87, 4294901760
    %v3158 = vsub.f32 %v87, %v3157
    %3159 = vmatpush1.msra.mxu0 %v3158
    %v3160 = vand.u32 %v96, 4294901760
    %v3161 = vsub.f32 %v96, %v3160
    %3162 = vmatprep.subr.mxu0 %v3161
    %v3163 = vand.u32 %v95, 4294901760
    %v3164 = vsub.f32 %v95, %v3163
    %3165 = vmatpush1.msra.mxu0 %v3164
    %v3166 = vand.u32 %v104, 4294901760
    %v3167 = vsub.f32 %v104, %v3166
    %3168 = vmatprep.subr.mxu0 %v3167
    %v3169 = vand.u32 %v103, 4294901760
    %v3170 = vsub.f32 %v103, %v3169
    %3171 = vmatpush1.msra.mxu0 %v3170
    %v3172 = vand.u32 %v112, 4294901760
    %v3173 = vsub.f32 %v112, %v3172
    %3174 = vmatprep.subr.mxu0 %v3173
    %v3175 = vand.u32 %v111, 4294901760
    %v3176 = vsub.f32 %v111, %v3175
    %3177 = vmatpush1.msra.mxu0 %v3176
    %v3178 = vand.u32 %v120, 4294901760
    %v3179 = vsub.f32 %v120, %v3178
    %3180 = vmatprep.subr.mxu0 %v3179
    %v3181 = vand.u32 %v119, 4294901760
    %v3182 = vsub.f32 %v119, %v3181
    %3183 = vmatpush1.msra.mxu0 %v3182
    %v3184 = vand.u32 %v128, 4294901760
    %v3185 = vsub.f32 %v128, %v3184
    %3186 = vmatprep.subr.mxu0 %v3185
    %v3187 = vand.u32 %v127, 4294901760
    %v3188 = vsub.f32 %v127, %v3187
    %3189 = vmatpush1.msra.mxu0 %v3188
    %v3190 = vand.u32 %v136, 4294901760
    %v3191 = vsub.f32 %v136, %v3190
    %3192 = vmatprep.subr.mxu0 %v3191
    %v3193 = vand.u32 %v135, 4294901760
    %v3194 = vsub.f32 %v135, %v3193
    %3195 = vmatpush1.msra.mxu0 %v3194
    %v3196 = vand.u32 %v144, 4294901760
    %v3197 = vsub.f32 %v144, %v3196
    %3198 = vmatprep.subr.mxu0 %v3197
    %v3199 = vand.u32 %v143, 4294901760
    %v3200 = vsub.f32 %v143, %v3199
    %3201 = vmatpush1.msra.mxu0 %v3200
    %v3202 = vand.u32 %v152, 4294901760
    %v3203 = vsub.f32 %v152, %v3202
    %3204 = vmatprep.subr.mxu0 %v3203
    %v3205 = vand.u32 %v151, 4294901760
    %v3206 = vsub.f32 %v151, %v3205
    %3207 = vmatpush1.msra.mxu0 %v3206
    %v3208 = vand.u32 %v160, 4294901760
    %v3209 = vsub.f32 %v160, %v3208
    %3210 = vmatprep.subr.mxu0 %v3209
    %v3211 = vand.u32 %v159, 4294901760
    %v3212 = vsub.f32 %v159, %v3211
    %3213 = vmatpush1.msra.mxu0 %v3212
    %v3214 = vand.u32 %v168, 4294901760
    %v3215 = vsub.f32 %v168, %v3214
    %3216 = vmatprep.subr.mxu0 %v3215
    %v3217 = vand.u32 %v167, 4294901760
    %v3218 = vsub.f32 %v167, %v3217
    %3219 = vmatpush1.msra.mxu0 %v3218
    %v3220 = vand.u32 %v176, 4294901760
    %v3221 = vsub.f32 %v176, %v3220
    %3222 = vmatprep.subr.mxu0 %v3221
    %v3223 = vand.u32 %v175, 4294901760
    %v3224 = vsub.f32 %v175, %v3223
    %3225 = vmatpush1.msra.mxu0 %v3224
    %v3226 = vand.u32 %v184, 4294901760
    %v3227 = vsub.f32 %v184, %v3226
    %3228 = vmatprep.subr.mxu0 %v3227
    %v3229 = vand.u32 %v183, 4294901760
    %v3230 = vsub.f32 %v183, %v3229
    %3231 = vmatpush1.msra.mxu0 %v3230
    %v3232 = vand.u32 %v192, 4294901760
    %v3233 = vsub.f32 %v192, %v3232
    %3234 = vmatprep.subr.mxu0 %v3233
    %v3235 = vand.u32 %v191, 4294901760
    %v3236 = vsub.f32 %v191, %v3235
    %3237 = vmatpush1.msra.mxu0 %v3236
    %v3238 = vand.u32 %v200, 4294901760
    %v3239 = vsub.f32 %v200, %v3238
    %3240 = vmatprep.subr.mxu0 %v3239
    %v3241 = vand.u32 %v199, 4294901760
    %v3242 = vsub.f32 %v199, %v3241
    %3243 = vmatpush1.msra.mxu0 %v3242
    %3244 = vmatprep.subr.mxu0 0.0
    %3245 = vmatpush1.msra.mxu0 0.0
    %3246 = vmatprep.subr.mxu0 0.0
    %3247 = vmatpush1.msra.mxu0 0.0
    %3248 = vmatprep.subr.mxu0 0.0
    %3249 = vmatpush1.msra.mxu0 0.0
    %3250 = vmatprep.subr.mxu0 0.0
    %3251 = vmatpush1.msra.mxu0 0.0
    %3252 = vmatprep.subr.mxu0 0.0
    %3253 = vmatpush1.msra.mxu0 0.0
    %3254 = vmatprep.subr.mxu0 0.0
    %3255 = vmatpush1.msra.mxu0 0.0
    %3256 = vmatprep.subr.mxu0 0.0
    %3257 = vmatpush1.msra.mxu0 0.0
    %3258 = vmatprep.subr.mxu0 0.0
    %3259 = vmatpush1.msra.mxu0 0.0
    %3260 = vmatprep.subr.mxu0 0.0
    %3261 = vmatpush1.msra.mxu0 0.0
    %3262 = vmatprep.subr.mxu0 0.0
    %3263 = vmatpush1.msra.mxu0 0.0
    %3264 = vmatprep.subr.mxu0 0.0
    %3265 = vmatpush1.msra.mxu0 0.0
    %3266 = vmatprep.subr.mxu0 0.0
    %3267 = vmatpush1.msra.mxu0 0.0
    %3268 = vmatprep.subr.mxu0 0.0
    %3269 = vmatpush1.msra.mxu0 0.0
    %3270 = vmatprep.subr.mxu0 0.0
    %3271 = vmatpush1.msra.mxu0 0.0
    %3272 = vmatprep.subr.mxu0 0.0
    %3273 = vmatpush1.msra.mxu0 0.0
    %3274 = vmatprep.subr.mxu0 0.0
    %3275 = vmatpush1.msra.mxu0 0.0
    %3276 = vmatprep.mubr.f32.mxu0 0.0
    %v3277 = vand.u32 %v72, 4294901760
    %v3278 = vsub.f32 %v72, %v3277
    %3279 = vmatmul.mubr.f32.gmra.mrb[0].mxu0 %v3278
    %v3280 = vpop.f32.mrb[0].mxu0
    %v3281 = vadd.f32 %v3144, %v3280
    %v3282 = vpop.f32.mrb[0].mxu0
    %v3283 = vadd.f32 %v3146, %v3282
    %3284 = vdwg.mxu0
    %v3285 = vand.u32 %v80, 4294901760
    %3286 = vmatprep.subr.mxu0 %v3285
    %v3287 = vand.u32 %v79, 4294901760
    %3288 = vmatpush1.msra.mxu0 %v3287
    %v3289 = vand.u32 %v88, 4294901760
    %3290 = vmatprep.subr.mxu0 %v3289
    %v3291 = vand.u32 %v87, 4294901760
    %3292 = vmatpush1.msra.mxu0 %v3291
    %v3293 = vand.u32 %v96, 4294901760
    %3294 = vmatprep.subr.mxu0 %v3293
    %v3295 = vand.u32 %v95, 4294901760
    %3296 = vmatpush1.msra.mxu0 %v3295
    %v3297 = vand.u32 %v104, 4294901760
    %3298 = vmatprep.subr.mxu0 %v3297
    %v3299 = vand.u32 %v103, 4294901760
    %3300 = vmatpush1.msra.mxu0 %v3299
    %v3301 = vand.u32 %v112, 4294901760
    %3302 = vmatprep.subr.mxu0 %v3301
    %v3303 = vand.u32 %v111, 4294901760
    %3304 = vmatpush1.msra.mxu0 %v3303
    %v3305 = vand.u32 %v120, 4294901760
    %3306 = vmatprep.subr.mxu0 %v3305
    %v3307 = vand.u32 %v119, 4294901760
    %3308 = vmatpush1.msra.mxu0 %v3307
    %v3309 = vand.u32 %v128, 4294901760
    %3310 = vmatprep.subr.mxu0 %v3309
    %v3311 = vand.u32 %v127, 4294901760
    %3312 = vmatpush1.msra.mxu0 %v3311
    %v3313 = vand.u32 %v136, 4294901760
    %3314 = vmatprep.subr.mxu0 %v3313
    %v3315 = vand.u32 %v135, 4294901760
    %3316 = vmatpush1.msra.mxu0 %v3315
    %v3317 = vand.u32 %v144, 4294901760
    %3318 = vmatprep.subr.mxu0 %v3317
    %v3319 = vand.u32 %v143, 4294901760
    %3320 = vmatpush1.msra.mxu0 %v3319
    %v3321 = vand.u32 %v152, 4294901760
    %3322 = vmatprep.subr.mxu0 %v3321
    %v3323 = vand.u32 %v151, 4294901760
    %3324 = vmatpush1.msra.mxu0 %v3323
    %v3325 = vand.u32 %v160, 4294901760
    %3326 = vmatprep.subr.mxu0 %v3325
    %v3327 = vand.u32 %v159, 4294901760
    %3328 = vmatpush1.msra.mxu0 %v3327
    %v3329 = vand.u32 %v168, 4294901760
    %3330 = vmatprep.subr.mxu0 %v3329
    %v3331 = vand.u32 %v167, 4294901760
    %3332 = vmatpush1.msra.mxu0 %v3331
    %v3333 = vand.u32 %v176, 4294901760
    %3334 = vmatprep.subr.mxu0 %v3333
    %v3335 = vand.u32 %v175, 4294901760
    %3336 = vmatpush1.msra.mxu0 %v3335
    %v3337 = vand.u32 %v184, 4294901760
    %3338 = vmatprep.subr.mxu0 %v3337
    %v3339 = vand.u32 %v183, 4294901760
    %3340 = vmatpush1.msra.mxu0 %v3339
    %v3341 = vand.u32 %v192, 4294901760
    %3342 = vmatprep.subr.mxu0 %v3341
    %v3343 = vand.u32 %v191, 4294901760
    %3344 = vmatpush1.msra.mxu0 %v3343
    %v3345 = vand.u32 %v200, 4294901760
    %3346 = vmatprep.subr.mxu0 %v3345
    %v3347 = vand.u32 %v199, 4294901760
    %3348 = vmatpush1.msra.mxu0 %v3347
    %3349 = vmatprep.subr.mxu0 0.0
    %3350 = vmatpush1.msra.mxu0 0.0
    %3351 = vmatprep.subr.mxu0 0.0
    %3352 = vmatpush1.msra.mxu0 0.0
    %3353 = vmatprep.subr.mxu0 0.0
    %3354 = vmatpush1.msra.mxu0 0.0
    %3355 = vmatprep.subr.mxu0 0.0
    %3356 = vmatpush1.msra.mxu0 0.0
    %3357 = vmatprep.subr.mxu0 0.0
    %3358 = vmatpush1.msra.mxu0 0.0
    %3359 = vmatprep.subr.mxu0 0.0
    %3360 = vmatpush1.msra.mxu0 0.0
    %3361 = vmatprep.subr.mxu0 0.0
    %3362 = vmatpush1.msra.mxu0 0.0
    %3363 = vmatprep.subr.mxu0 0.0
    %3364 = vmatpush1.msra.mxu0 0.0
    %3365 = vmatprep.subr.mxu0 0.0
    %3366 = vmatpush1.msra.mxu0 0.0
    %3367 = vmatprep.subr.mxu0 0.0
    %3368 = vmatpush1.msra.mxu0 0.0
    %3369 = vmatprep.subr.mxu0 0.0
    %3370 = vmatpush1.msra.mxu0 0.0
    %3371 = vmatprep.subr.mxu0 0.0
    %3372 = vmatpush1.msra.mxu0 0.0
    %3373 = vmatprep.subr.mxu0 0.0
    %3374 = vmatpush1.msra.mxu0 0.0
    %3375 = vmatprep.subr.mxu0 0.0
    %3376 = vmatpush1.msra.mxu0 0.0
    %3377 = vmatprep.subr.mxu0 0.0
    %3378 = vmatpush1.msra.mxu0 0.0
    %3379 = vmatprep.subr.mxu0 0.0
    %3380 = vmatpush1.msra.mxu0 0.0
    %3381 = vmatprep.mubr.f32.mxu0 0.0
    %v3382 = vand.u32 %v72, 4294901760
    %v3383 = vsub.f32 %v72, %v3382
    %v3384 = vand.u32 %v3383, 4294901760
    %3385 = vmatmul.mubr.f32.gmra.mrb[0].mxu0 %v3384
    %v3386 = vpop.f32.mrb[0].mxu0
    %v3387 = vadd.f32 %v3281, %v3386
    %v3388 = vpop.f32.mrb[0].mxu0
    %v3389 = vadd.f32 %v3283, %v3388
    %3390 = vdwg.mxu0
    %v3391 = vand.u32 %v80, 4294901760
    %v3392 = vsub.f32 %v80, %v3391
    %v3393 = vand.u32 %v3392, 4294901760
    %3394 = vmatprep.subr.mxu0 %v3393
    %v3395 = vand.u32 %v79, 4294901760
    %v3396 = vsub.f32 %v79, %v3395
    %v3397 = vand.u32 %v3396, 4294901760
    %3398 = vmatpush1.msra.mxu0 %v3397
    %v3399 = vand.u32 %v88, 4294901760
    %v3400 = vsub.f32 %v88, %v3399
    %v3401 = vand.u32 %v3400, 4294901760
    %3402 = vmatprep.subr.mxu0 %v3401
    %v3403 = vand.u32 %v87, 4294901760
    %v3404 = vsub.f32 %v87, %v3403
    %v3405 = vand.u32 %v3404, 4294901760
    %3406 = vmatpush1.msra.mxu0 %v3405
    %v3407 = vand.u32 %v96, 4294901760
    %v3408 = vsub.f32 %v96, %v3407
    %v3409 = vand.u32 %v3408, 4294901760
    %3410 = vmatprep.subr.mxu0 %v3409
    %v3411 = vand.u32 %v95, 4294901760
    %v3412 = vsub.f32 %v95, %v3411
    %v3413 = vand.u32 %v3412, 4294901760
    %3414 = vmatpush1.msra.mxu0 %v3413
    %v3415 = vand.u32 %v104, 4294901760
    %v3416 = vsub.f32 %v104, %v3415
    %v3417 = vand.u32 %v3416, 4294901760
    %3418 = vmatprep.subr.mxu0 %v3417
    %v3419 = vand.u32 %v103, 4294901760
    %v3420 = vsub.f32 %v103, %v3419
    %v3421 = vand.u32 %v3420, 4294901760
    %3422 = vmatpush1.msra.mxu0 %v3421
    %v3423 = vand.u32 %v112, 4294901760
    %v3424 = vsub.f32 %v112, %v3423
    %v3425 = vand.u32 %v3424, 4294901760
    %3426 = vmatprep.subr.mxu0 %v3425
    %v3427 = vand.u32 %v111, 4294901760
    %v3428 = vsub.f32 %v111, %v3427
    %v3429 = vand.u32 %v3428, 4294901760
    %3430 = vmatpush1.msra.mxu0 %v3429
    %v3431 = vand.u32 %v120, 4294901760
    %v3432 = vsub.f32 %v120, %v3431
    %v3433 = vand.u32 %v3432, 4294901760
    %3434 = vmatprep.subr.mxu0 %v3433
    %v3435 = vand.u32 %v119, 4294901760
    %v3436 = vsub.f32 %v119, %v3435
    %v3437 = vand.u32 %v3436, 4294901760
    %3438 = vmatpush1.msra.mxu0 %v3437
    %v3439 = vand.u32 %v128, 4294901760
    %v3440 = vsub.f32 %v128, %v3439
    %v3441 = vand.u32 %v3440, 4294901760
    %3442 = vmatprep.subr.mxu0 %v3441
    %v3443 = vand.u32 %v127, 4294901760
    %v3444 = vsub.f32 %v127, %v3443
    %v3445 = vand.u32 %v3444, 4294901760
    %3446 = vmatpush1.msra.mxu0 %v3445
    %v3447 = vand.u32 %v136, 4294901760
    %v3448 = vsub.f32 %v136, %v3447
    %v3449 = vand.u32 %v3448, 4294901760
    %3450 = vmatprep.subr.mxu0 %v3449
    %v3451 = vand.u32 %v135, 4294901760
    %v3452 = vsub.f32 %v135, %v3451
    %v3453 = vand.u32 %v3452, 4294901760
    %3454 = vmatpush1.msra.mxu0 %v3453
    %v3455 = vand.u32 %v144, 4294901760
    %v3456 = vsub.f32 %v144, %v3455
    %v3457 = vand.u32 %v3456, 4294901760
    %3458 = vmatprep.subr.mxu0 %v3457
    %v3459 = vand.u32 %v143, 4294901760
    %v3460 = vsub.f32 %v143, %v3459
    %v3461 = vand.u32 %v3460, 4294901760
    %3462 = vmatpush1.msra.mxu0 %v3461
    %v3463 = vand.u32 %v152, 4294901760
    %v3464 = vsub.f32 %v152, %v3463
    %v3465 = vand.u32 %v3464, 4294901760
    %3466 = vmatprep.subr.mxu0 %v3465
    %v3467 = vand.u32 %v151, 4294901760
    %v3468 = vsub.f32 %v151, %v3467
    %v3469 = vand.u32 %v3468, 4294901760
    %3470 = vmatpush1.msra.mxu0 %v3469
    %v3471 = vand.u32 %v160, 4294901760
    %v3472 = vsub.f32 %v160, %v3471
    %v3473 = vand.u32 %v3472, 4294901760
    %3474 = vmatprep.subr.mxu0 %v3473
    %v3475 = vand.u32 %v159, 4294901760
    %v3476 = vsub.f32 %v159, %v3475
    %v3477 = vand.u32 %v3476, 4294901760
    %3478 = vmatpush1.msra.mxu0 %v3477
    %v3479 = vand.u32 %v168, 4294901760
    %v3480 = vsub.f32 %v168, %v3479
    %v3481 = vand.u32 %v3480, 4294901760
    %3482 = vmatprep.subr.mxu0 %v3481
    %v3483 = vand.u32 %v167, 4294901760
    %v3484 = vsub.f32 %v167, %v3483
    %v3485 = vand.u32 %v3484, 4294901760
    %3486 = vmatpush1.msra.mxu0 %v3485
    %v3487 = vand.u32 %v176, 4294901760
    %v3488 = vsub.f32 %v176, %v3487
    %v3489 = vand.u32 %v3488, 4294901760
    %3490 = vmatprep.subr.mxu0 %v3489
    %v3491 = vand.u32 %v175, 4294901760
    %v3492 = vsub.f32 %v175, %v3491
    %v3493 = vand.u32 %v3492, 4294901760
    %3494 = vmatpush1.msra.mxu0 %v3493
    %v3495 = vand.u32 %v184, 4294901760
    %v3496 = vsub.f32 %v184, %v3495
    %v3497 = vand.u32 %v3496, 4294901760
    %3498 = vmatprep.subr.mxu0 %v3497
    %v3499 = vand.u32 %v183, 4294901760
    %v3500 = vsub.f32 %v183, %v3499
    %v3501 = vand.u32 %v3500, 4294901760
    %3502 = vmatpush1.msra.mxu0 %v3501
    %v3503 = vand.u32 %v192, 4294901760
    %v3504 = vsub.f32 %v192, %v3503
    %v3505 = vand.u32 %v3504, 4294901760
    %3506 = vmatprep.subr.mxu0 %v3505
    %v3507 = vand.u32 %v191, 4294901760
    %v3508 = vsub.f32 %v191, %v3507
    %v3509 = vand.u32 %v3508, 4294901760
    %3510 = vmatpush1.msra.mxu0 %v3509
    %v3511 = vand.u32 %v200, 4294901760
    %v3512 = vsub.f32 %v200, %v3511
    %v3513 = vand.u32 %v3512, 4294901760
    %3514 = vmatprep.subr.mxu0 %v3513
    %v3515 = vand.u32 %v199, 4294901760
    %v3516 = vsub.f32 %v199, %v3515
    %v3517 = vand.u32 %v3516, 4294901760
    %3518 = vmatpush1.msra.mxu0 %v3517
    %3519 = vmatprep.subr.mxu0 0.0
    %3520 = vmatpush1.msra.mxu0 0.0
    %3521 = vmatprep.subr.mxu0 0.0
    %3522 = vmatpush1.msra.mxu0 0.0
    %3523 = vmatprep.subr.mxu0 0.0
    %3524 = vmatpush1.msra.mxu0 0.0
    %3525 = vmatprep.subr.mxu0 0.0
    %3526 = vmatpush1.msra.mxu0 0.0
    %3527 = vmatprep.subr.mxu0 0.0
    %3528 = vmatpush1.msra.mxu0 0.0
    %3529 = vmatprep.subr.mxu0 0.0
    %3530 = vmatpush1.msra.mxu0 0.0
    %3531 = vmatprep.subr.mxu0 0.0
    %3532 = vmatpush1.msra.mxu0 0.0
    %3533 = vmatprep.subr.mxu0 0.0
    %3534 = vmatpush1.msra.mxu0 0.0
    %3535 = vmatprep.subr.mxu0 0.0
    %3536 = vmatpush1.msra.mxu0 0.0
    %3537 = vmatprep.subr.mxu0 0.0
    %3538 = vmatpush1.msra.mxu0 0.0
    %3539 = vmatprep.subr.mxu0 0.0
    %3540 = vmatpush1.msra.mxu0 0.0
    %3541 = vmatprep.subr.mxu0 0.0
    %3542 = vmatpush1.msra.mxu0 0.0
    %3543 = vmatprep.subr.mxu0 0.0
    %3544 = vmatpush1.msra.mxu0 0.0
    %3545 = vmatprep.subr.mxu0 0.0
    %3546 = vmatpush1.msra.mxu0 0.0
    %3547 = vmatprep.subr.mxu0 0.0
    %3548 = vmatpush1.msra.mxu0 0.0
    %3549 = vmatprep.subr.mxu0 0.0
    %3550 = vmatpush1.msra.mxu0 0.0
    %3551 = vmatprep.mubr.f32.mxu0 0.0
    %v3552 = vand.u32 %v72, 4294901760
    %3553 = vmatmul.mubr.f32.gmra.mrb[0].mxu0 %v3552
    %v3554 = vpop.f32.mrb[0].mxu0
    %v3555 = vadd.f32 %v3387, %v3554
    %v3556 = vpop.f32.mrb[0].mxu0
    %v3557 = vadd.f32 %v3389, %v3556
    %3558 = vdwg.mxu0
    %v3559 = vand.u32 %v80, 4294901760
    %3560 = vmatprep.subr.mxu0 %v3559
    %v3561 = vand.u32 %v79, 4294901760
    %3562 = vmatpush1.msra.mxu0 %v3561
    %v3563 = vand.u32 %v88, 4294901760
    %3564 = vmatprep.subr.mxu0 %v3563
    %v3565 = vand.u32 %v87, 4294901760
    %3566 = vmatpush1.msra.mxu0 %v3565
    %v3567 = vand.u32 %v96, 4294901760
    %3568 = vmatprep.subr.mxu0 %v3567
    %v3569 = vand.u32 %v95, 4294901760
    %3570 = vmatpush1.msra.mxu0 %v3569
    %v3571 = vand.u32 %v104, 4294901760
    %3572 = vmatprep.subr.mxu0 %v3571
    %v3573 = vand.u32 %v103, 4294901760
    %3574 = vmatpush1.msra.mxu0 %v3573
    %v3575 = vand.u32 %v112, 4294901760
    %3576 = vmatprep.subr.mxu0 %v3575
    %v3577 = vand.u32 %v111, 4294901760
    %3578 = vmatpush1.msra.mxu0 %v3577
    %v3579 = vand.u32 %v120, 4294901760
    %3580 = vmatprep.subr.mxu0 %v3579
    %v3581 = vand.u32 %v119, 4294901760
    %3582 = vmatpush1.msra.mxu0 %v3581
    %v3583 = vand.u32 %v128, 4294901760
    %3584 = vmatprep.subr.mxu0 %v3583
    %v3585 = vand.u32 %v127, 4294901760
    %3586 = vmatpush1.msra.mxu0 %v3585
    %v3587 = vand.u32 %v136, 4294901760
    %3588 = vmatprep.subr.mxu0 %v3587
    %v3589 = vand.u32 %v135, 4294901760
    %3590 = vmatpush1.msra.mxu0 %v3589
    %v3591 = vand.u32 %v144, 4294901760
    %3592 = vmatprep.subr.mxu0 %v3591
    %v3593 = vand.u32 %v143, 4294901760
    %3594 = vmatpush1.msra.mxu0 %v3593
    %v3595 = vand.u32 %v152, 4294901760
    %3596 = vmatprep.subr.mxu0 %v3595
    %v3597 = vand.u32 %v151, 4294901760
    %3598 = vmatpush1.msra.mxu0 %v3597
    %v3599 = vand.u32 %v160, 4294901760
    %3600 = vmatprep.subr.mxu0 %v3599
    %v3601 = vand.u32 %v159, 4294901760
    %3602 = vmatpush1.msra.mxu0 %v3601
    %v3603 = vand.u32 %v168, 4294901760
    %3604 = vmatprep.subr.mxu0 %v3603
    %v3605 = vand.u32 %v167, 4294901760
    %3606 = vmatpush1.msra.mxu0 %v3605
    %v3607 = vand.u32 %v176, 4294901760
    %3608 = vmatprep.subr.mxu0 %v3607
    %v3609 = vand.u32 %v175, 4294901760
    %3610 = vmatpush1.msra.mxu0 %v3609
    %v3611 = vand.u32 %v184, 4294901760
    %3612 = vmatprep.subr.mxu0 %v3611
    %v3613 = vand.u32 %v183, 4294901760
    %3614 = vmatpush1.msra.mxu0 %v3613
    %v3615 = vand.u32 %v192, 4294901760
    %3616 = vmatprep.subr.mxu0 %v3615
    %v3617 = vand.u32 %v191, 4294901760
    %3618 = vmatpush1.msra.mxu0 %v3617
    %v3619 = vand.u32 %v200, 4294901760
    %3620 = vmatprep.subr.mxu0 %v3619
    %v3621 = vand.u32 %v199, 4294901760
    %3622 = vmatpush1.msra.mxu0 %v3621
    %3623 = vmatprep.subr.mxu0 0.0
    %3624 = vmatpush1.msra.mxu0 0.0
    %3625 = vmatprep.subr.mxu0 0.0
    %3626 = vmatpush1.msra.mxu0 0.0
    %3627 = vmatprep.subr.mxu0 0.0
    %3628 = vmatpush1.msra.mxu0 0.0
    %3629 = vmatprep.subr.mxu0 0.0
    %3630 = vmatpush1.msra.mxu0 0.0
    %3631 = vmatprep.subr.mxu0 0.0
    %3632 = vmatpush1.msra.mxu0 0.0
    %3633 = vmatprep.subr.mxu0 0.0
    %3634 = vmatpush1.msra.mxu0 0.0
    %3635 = vmatprep.subr.mxu0 0.0
    %3636 = vmatpush1.msra.mxu0 0.0
    %3637 = vmatprep.subr.mxu0 0.0
    %3638 = vmatpush1.msra.mxu0 0.0
    %3639 = vmatprep.subr.mxu0 0.0
    %3640 = vmatpush1.msra.mxu0 0.0
    %3641 = vmatprep.subr.mxu0 0.0
    %3642 = vmatpush1.msra.mxu0 0.0
    %3643 = vmatprep.subr.mxu0 0.0
    %3644 = vmatpush1.msra.mxu0 0.0
    %3645 = vmatprep.subr.mxu0 0.0
    %3646 = vmatpush1.msra.mxu0 0.0
    %3647 = vmatprep.subr.mxu0 0.0
    %3648 = vmatpush1.msra.mxu0 0.0
    %3649 = vmatprep.subr.mxu0 0.0
    %3650 = vmatpush1.msra.mxu0 0.0
    %3651 = vmatprep.subr.mxu0 0.0
    %3652 = vmatpush1.msra.mxu0 0.0
    %3653 = vmatprep.subr.mxu0 0.0
    %3654 = vmatpush1.msra.mxu0 0.0
    %3655 = vmatprep.mubr.f32.mxu0 0.0
    %v3656 = vand.u32 %v72, 4294901760
    %3657 = vmatmul.mubr.f32.gmra.mrb[0].mxu0 %v3656
    %v3658 = vpop.f32.mrb[0].mxu0
    %v3659 = vadd.f32 %v3555, %v3658
    %v3660 = vpop.f32.mrb[0].mxu0
    %v3661 = vadd.f32 %v3557, %v3660
    %3662 = vdwg.mxu0
    %v3663 = vtanh.pop %v1094
    %v3664 = vtanh.pop %v1096
    %v3665 = vtanh.pop %v1949
    %v3666 = vtanh.pop %v1951
    %v3667 = vtanh.pop %v2804
    %v3668 = vtanh.pop %v2806
    %v3669 = vtanh.pop %v3659
    %v3670 = vtanh.pop %v3661
    %v3671 = vld [vmem:[#allocation8] sm:$0xff]
    %v3672 = vld [vmem:[#allocation8 + $0x8] sm:$0xff]
    %v3673 = vld [vmem:[#allocation8 + $0x10] sm:$0xff]
    %v3674 = vld [vmem:[#allocation8 + $0x18] sm:$0xff]
    %v3675 = vld [vmem:[#allocation8 + $0x20] sm:$0xff]
    %v3676 = vld [vmem:[#allocation8 + $0x28] sm:$0xff]
    %v3677 = vld [vmem:[#allocation8 + $0x30] sm:$0xff]
    %v3678 = vld [vmem:[#allocation8 + $0x38] sm:$0xff]
    %v3679 = vld [vmem:[#allocation8 + $0x40] sm:$0xff]
    %v3680 = vld [vmem:[#allocation8 + $0x48] sm:$0xff]
    %v3681 = vld [vmem:[#allocation8 + $0x50] sm:$0xff]
    %v3682 = vld [vmem:[#allocation8 + $0x58] sm:$0xff]
    %v3683 = vld [vmem:[#allocation8 + $0x60] sm:$0xff]
    %v3684 = vld [vmem:[#allocation8 + $0x68] sm:$0xff]
    %v3685 = vld [vmem:[#allocation8 + $0x70] sm:$0xff]
    %v3686 = vld [vmem:[#allocation8 + $0x78] sm:$0xff]
    %v3687 = vld [vmem:[#allocation8 + $0x80] sm:$0xff]
    %v3688 = vld [vmem:[#allocation8 + $0x88] sm:$0xff]
    %v3689 = vld [vmem:[#allocation8 + $0x90] sm:$0xff]
    %v3690 = vld [vmem:[#allocation8 + $0x98] sm:$0xff]
    %v3691 = vld [vmem:[#allocation8 + $0xa0] sm:$0xff]
    %v3692 = vld [vmem:[#allocation8 + $0xa8] sm:$0xff]
    %v3693 = vld [vmem:[#allocation8 + $0xb0] sm:$0xff]
    %v3694 = vld [vmem:[#allocation8 + $0xb8] sm:$0xff]
    %v3695 = vld [vmem:[#allocation8 + $0xc0] sm:$0xff]
    %v3696 = vld [vmem:[#allocation8 + $0xc8] sm:$0xff]
    %v3697 = vld [vmem:[#allocation8 + $0xd0] sm:$0xff]
    %v3698 = vld [vmem:[#allocation8 + $0xd8] sm:$0xff]
    %v3699 = vld [vmem:[#allocation8 + $0xe0] sm:$0xff]
    %v3700 = vld [vmem:[#allocation8 + $0xe8] sm:$0xff]
    %v3701 = vld [vmem:[#allocation8 + $0xf0] sm:$0xff]
    %v3702 = vld [vmem:[#allocation8 + $0xf8] sm:$0xff]
    %v3703 = vld [vmem:[#allocation8 + $0x100] sm:$0xff]
    %v3704 = vld [vmem:[#allocation8 + $0x108] sm:$0xff]
    %v3705 = vld [vmem:[#allocation8 + $0x110] sm:$0xff]
    %v3706 = vld [vmem:[#allocation8 + $0x118] sm:$0xff]
    %v3707 = vld [vmem:[#allocation8 + $0x120] sm:$0xff]
    %v3708 = vld [vmem:[#allocation8 + $0x128] sm:$0xff]
    %v3709 = vld [vmem:[#allocation8 + $0x130] sm:$0xff]
    %v3710 = vld [vmem:[#allocation8 + $0x138] sm:$0xff]
    %v3711 = vld [vmem:[#allocation8 + $0x140] sm:$0xff]
    %v3712 = vld [vmem:[#allocation8 + $0x148] sm:$0xff]
    %v3713 = vld [vmem:[#allocation8 + $0x150] sm:$0xff]
    %v3714 = vld [vmem:[#allocation8 + $0x158] sm:$0xff]
    %v3715 = vld [vmem:[#allocation8 + $0x160] sm:$0xff]
    %v3716 = vld [vmem:[#allocation8 + $0x168] sm:$0xff]
    %v3717 = vld [vmem:[#allocation8 + $0x170] sm:$0xff]
    %v3718 = vld [vmem:[#allocation8 + $0x178] sm:$0xff]
    %v3719 = vld [vmem:[#allocation8 + $0x180] sm:$0xff]
    %v3720 = vld [vmem:[#allocation8 + $0x188] sm:$0xff]
    %v3721 = vld [vmem:[#allocation8 + $0x190] sm:$0xff]
    %v3722 = vld [vmem:[#allocation8 + $0x198] sm:$0xff]
    %v3723 = vld [vmem:[#allocation8 + $0x1a0] sm:$0xff]
    %v3724 = vld [vmem:[#allocation8 + $0x1a8] sm:$0xff]
    %v3725 = vld [vmem:[#allocation8 + $0x1b0] sm:$0xff]
    %v3726 = vld [vmem:[#allocation8 + $0x1b8] sm:$0xff]
    %v3727 = vld [vmem:[#allocation8 + $0x1c0] sm:$0xff]
    %v3728 = vld [vmem:[#allocation8 + $0x1c8] sm:$0xff]
    %v3729 = vld [vmem:[#allocation8 + $0x1d0] sm:$0xff]
    %v3730 = vld [vmem:[#allocation8 + $0x1d8] sm:$0xff]
    %v3731 = vld [vmem:[#allocation8 + $0x1e0] sm:$0xff]
    %v3732 = vld [vmem:[#allocation8 + $0x1e8] sm:$0xff]
    %v3733 = vld [vmem:[#allocation8 + $0x1f0] sm:$0xff]
    %v3734 = vld [vmem:[#allocation8 + $0x1f8] sm:$0xff]
    %v3735 = vld [vmem:[#allocation8 + $0x200] sm:$0xff]
    %v3736 = vld [vmem:[#allocation8 + $0x208] sm:$0xff]
    %v3737 = vld [vmem:[#allocation8 + $0x210] sm:$0xff]
    %v3738 = vld [vmem:[#allocation8 + $0x218] sm:$0xff]
    %v3739 = vld [vmem:[#allocation8 + $0x220] sm:$0xff]
    %v3740 = vld [vmem:[#allocation8 + $0x228] sm:$0xff]
    %v3741 = vld [vmem:[#allocation8 + $0x230] sm:$0xff]
    %v3742 = vld [vmem:[#allocation8 + $0x238] sm:$0xff]
    %v3743 = vld [vmem:[#allocation8 + $0x240] sm:$0xff]
    %v3744 = vld [vmem:[#allocation8 + $0x248] sm:$0xff]
    %v3745 = vld [vmem:[#allocation8 + $0x250] sm:$0xff]
    %v3746 = vld [vmem:[#allocation8 + $0x258] sm:$0xff]
    %v3747 = vld [vmem:[#allocation8 + $0x260] sm:$0xff]
    %v3748 = vld [vmem:[#allocation8 + $0x268] sm:$0xff]
    %v3749 = vld [vmem:[#allocation8 + $0x270] sm:$0xff]
    %v3750 = vld [vmem:[#allocation8 + $0x278] sm:$0xff]
    %v3751 = vld [vmem:[#allocation8 + $0x280] sm:$0xff]
    %v3752 = vld [vmem:[#allocation8 + $0x288] sm:$0xff]
    %v3753 = vld [vmem:[#allocation8 + $0x290] sm:$0xff]
    %v3754 = vld [vmem:[#allocation8 + $0x298] sm:$0xff]
    %v3755 = vld [vmem:[#allocation8 + $0x2a0] sm:$0xff]
    %v3756 = vld [vmem:[#allocation8 + $0x2a8] sm:$0xff]
    %v3757 = vld [vmem:[#allocation8 + $0x2b0] sm:$0xff]
    %v3758 = vld [vmem:[#allocation8 + $0x2b8] sm:$0xff]
    %v3759 = vld [vmem:[#allocation8 + $0x2c0] sm:$0xff]
    %v3760 = vld [vmem:[#allocation8 + $0x2c8] sm:$0xff]
    %v3761 = vld [vmem:[#allocation8 + $0x2d0] sm:$0xff]
    %v3762 = vld [vmem:[#allocation8 + $0x2d8] sm:$0xff]
    %v3763 = vld [vmem:[#allocation8 + $0x2e0] sm:$0xff]
    %v3764 = vld [vmem:[#allocation8 + $0x2e8] sm:$0xff]
    %v3765 = vld [vmem:[#allocation8 + $0x2f0] sm:$0xff]
    %v3766 = vld [vmem:[#allocation8 + $0x2f8] sm:$0xff]
    %v3767 = vld [vmem:[#allocation8 + $0x300] sm:$0xff]
    %v3768 = vld [vmem:[#allocation8 + $0x308] sm:$0xff]
    %v3769 = vld [vmem:[#allocation8 + $0x310] sm:$0xff]
    %v3770 = vld [vmem:[#allocation8 + $0x318] sm:$0xff]
    %v3771 = vld [vmem:[#allocation8 + $0x320] sm:$0xff]
    %v3772 = vld [vmem:[#allocation8 + $0x328] sm:$0xff]
    %v3773 = vld [vmem:[#allocation8 + $0x330] sm:$0xff]
    %v3774 = vld [vmem:[#allocation8 + $0x338] sm:$0xff]
    %v3775 = vld [vmem:[#allocation8 + $0x340] sm:$0xff]
    %v3776 = vld [vmem:[#allocation8 + $0x348] sm:$0xff]
    %v3777 = vld [vmem:[#allocation8 + $0x350] sm:$0xff]
    %v3778 = vld [vmem:[#allocation8 + $0x358] sm:$0xff]
    %v3779 = vld [vmem:[#allocation8 + $0x360] sm:$0xff]
    %v3780 = vld [vmem:[#allocation8 + $0x368] sm:$0xff]
    %v3781 = vld [vmem:[#allocation8 + $0x370] sm:$0xff]
    %v3782 = vld [vmem:[#allocation8 + $0x378] sm:$0xff]
    %v3783 = vld [vmem:[#allocation8 + $0x380] sm:$0xff]
    %v3784 = vld [vmem:[#allocation8 + $0x388] sm:$0xff]
    %v3785 = vld [vmem:[#allocation8 + $0x390] sm:$0xff]
    %v3786 = vld [vmem:[#allocation8 + $0x398] sm:$0xff]
    %v3787 = vld [vmem:[#allocation8 + $0x3a0] sm:$0xff]
    %v3788 = vld [vmem:[#allocation8 + $0x3a8] sm:$0xff]
    %v3789 = vld [vmem:[#allocation8 + $0x3b0] sm:$0xff]
    %v3790 = vld [vmem:[#allocation8 + $0x3b8] sm:$0xff]
    %v3791 = vld [vmem:[#allocation8 + $0x3c0] sm:$0xff]
    %v3792 = vld [vmem:[#allocation8 + $0x3c8] sm:$0xff]
    %v3793 = vld [vmem:[#allocation8 + $0x3d0] sm:$0xff]
    %v3794 = vld [vmem:[#allocation8 + $0x3d8] sm:$0xff]
    %v3795 = vld [vmem:[#allocation8 + $0x3e0] sm:$0xff]
    %v3796 = vld [vmem:[#allocation8 + $0x3e8] sm:$0xff]
    %v3797 = vld [vmem:[#allocation8 + $0x3f0] sm:$0xff]
    %v3798 = vld [vmem:[#allocation8 + $0x3f8] sm:$0xff]
    %v3799 = vld [vmem:[%s4] sm:$0x1]
    %v3801 = vlaneseq
    %v3802 = vshrl.u32 %v3801, 7
    %v3803 = vsub.s32 0, %v3802
    %v3804 = vrot.slane %v3799, %v3803
    %3806 = vmatprep.subr.mxu0 0.0
    %v3807 = vand.u32 %v3671, 4294901760
    %3808 = vmatpush1.msra.mxu0 %v3807
    %3809 = vmatprep.subr.mxu0 0.0
    %v3810 = vand.u32 %v3672, 4294901760
    %3811 = vmatpush1.msra.mxu0 %v3810
    %3812 = vmatprep.subr.mxu0 0.0
    %v3813 = vand.u32 %v3673, 4294901760
    %3814 = vmatpush1.msra.mxu0 %v3813
    %3815 = vmatprep.subr.mxu0 0.0
    %v3816 = vand.u32 %v3674, 4294901760
    %3817 = vmatpush1.msra.mxu0 %v3816
    %3818 = vmatprep.subr.mxu0 0.0
    %v3819 = vand.u32 %v3675, 4294901760
    %3820 = vmatpush1.msra.mxu0 %v3819
    %3821 = vmatprep.subr.mxu0 0.0
    %v3822 = vand.u32 %v3676, 4294901760
    %3823 = vmatpush1.msra.mxu0 %v3822
    %3824 = vmatprep.subr.mxu0 0.0
    %v3825 = vand.u32 %v3677, 4294901760
    %3826 = vmatpush1.msra.mxu0 %v3825
    %3827 = vmatprep.subr.mxu0 0.0
    %v3828 = vand.u32 %v3678, 4294901760
    %3829 = vmatpush1.msra.mxu0 %v3828
    %3830 = vmatprep.subr.mxu0 0.0
    %v3831 = vand.u32 %v3679, 4294901760
    %3832 = vmatpush1.msra.mxu0 %v3831
    %3833 = vmatprep.subr.mxu0 0.0
    %v3834 = vand.u32 %v3680, 4294901760
    %3835 = vmatpush1.msra.mxu0 %v3834
    %3836 = vmatprep.subr.mxu0 0.0
    %v3837 = vand.u32 %v3681, 4294901760
    %3838 = vmatpush1.msra.mxu0 %v3837
    %3839 = vmatprep.subr.mxu0 0.0
    %v3840 = vand.u32 %v3682, 4294901760
    %3841 = vmatpush1.msra.mxu0 %v3840
    %3842 = vmatprep.subr.mxu0 0.0
    %v3843 = vand.u32 %v3683, 4294901760
    %3844 = vmatpush1.msra.mxu0 %v3843
    %3845 = vmatprep.subr.mxu0 0.0
    %v3846 = vand.u32 %v3684, 4294901760
    %3847 = vmatpush1.msra.mxu0 %v3846
    %3848 = vmatprep.subr.mxu0 0.0
    %v3849 = vand.u32 %v3685, 4294901760
    %3850 = vmatpush1.msra.mxu0 %v3849
    %3851 = vmatprep.subr.mxu0 0.0
    %v3852 = vand.u32 %v3686, 4294901760
    %3853 = vmatpush1.msra.mxu0 %v3852
    %3854 = vmatprep.subr.mxu0 0.0
    %v3855 = vand.u32 %v3687, 4294901760
    %3856 = vmatpush1.msra.mxu0 %v3855
    %3857 = vmatprep.subr.mxu0 0.0
    %v3858 = vand.u32 %v3688, 4294901760
    %3859 = vmatpush1.msra.mxu0 %v3858
    %3860 = vmatprep.subr.mxu0 0.0
    %v3861 = vand.u32 %v3689, 4294901760
    %3862 = vmatpush1.msra.mxu0 %v3861
    %3863 = vmatprep.subr.mxu0 0.0
    %v3864 = vand.u32 %v3690, 4294901760
    %3865 = vmatpush1.msra.mxu0 %v3864
    %3866 = vmatprep.subr.mxu0 0.0
    %v3867 = vand.u32 %v3691, 4294901760
    %3868 = vmatpush1.msra.mxu0 %v3867
    %3869 = vmatprep.subr.mxu0 0.0
    %v3870 = vand.u32 %v3692, 4294901760
    %3871 = vmatpush1.msra.mxu0 %v3870
    %3872 = vmatprep.subr.mxu0 0.0
    %v3873 = vand.u32 %v3693, 4294901760
    %3874 = vmatpush1.msra.mxu0 %v3873
    %3875 = vmatprep.subr.mxu0 0.0
    %v3876 = vand.u32 %v3694, 4294901760
    %3877 = vmatpush1.msra.mxu0 %v3876
    %3878 = vmatprep.subr.mxu0 0.0
    %v3879 = vand.u32 %v3695, 4294901760
    %3880 = vmatpush1.msra.mxu0 %v3879
    %3881 = vmatprep.subr.mxu0 0.0
    %v3882 = vand.u32 %v3696, 4294901760
    %3883 = vmatpush1.msra.mxu0 %v3882
    %3884 = vmatprep.subr.mxu0 0.0
    %v3885 = vand.u32 %v3697, 4294901760
    %3886 = vmatpush1.msra.mxu0 %v3885
    %3887 = vmatprep.subr.mxu0 0.0
    %v3888 = vand.u32 %v3698, 4294901760
    %3889 = vmatpush1.msra.mxu0 %v3888
    %3890 = vmatprep.subr.mxu0 0.0
    %v3891 = vand.u32 %v3699, 4294901760
    %3892 = vmatpush1.msra.mxu0 %v3891
    %3893 = vmatprep.subr.mxu0 0.0
    %v3894 = vand.u32 %v3700, 4294901760
    %3895 = vmatpush1.msra.mxu0 %v3894
    %3896 = vmatprep.subr.mxu0 0.0
    %v3897 = vand.u32 %v3701, 4294901760
    %3898 = vmatpush1.msra.mxu0 %v3897
    %3899 = vmatprep.subr.mxu0 0.0
    %v3900 = vand.u32 %v3702, 4294901760
    %3901 = vmatpush1.msra.mxu0 %v3900
    %v3902 = vand.u32 %v3664, 4294901760
    %v3903 = vsub.f32 %v3664, %v3902
    %v3904 = vand.u32 %v3903, 4294901760
    %v3905 = vsub.f32 %v3903, %v3904
    %v3906 = vand.u32 %v3905, 4294901760
    %3907 = vmatprep.mubr.f32.mxu0 %v3906
    %v3908 = vand.u32 %v3663, 4294901760
    %v3909 = vsub.f32 %v3663, %v3908
    %v3910 = vand.u32 %v3909, 4294901760
    %v3911 = vsub.f32 %v3909, %v3910
    %v3912 = vand.u32 %v3911, 4294901760
    %3913 = vmatmul.mubr.f32.gmra.mrb[0].mxu0 %v3912
    %v3914 = vpop.f32.mrb[0].mxu0
    %v3915 = vadd.f32 %v3804, %v3914
    %v3916 = vpop.f32.mrb[0].mxu0
    %3917 = vdwg.mxu0
    %3918 = vmatprep.subr.mxu0 0.0
    %v3919 = vand.u32 %v3671, 4294901760
    %v3920 = vsub.f32 %v3671, %v3919
    %v3921 = vand.u32 %v3920, 4294901760
    %v3922 = vsub.f32 %v3920, %v3921
    %v3923 = vand.u32 %v3922, 4294901760
    %3924 = vmatpush1.msra.mxu0 %v3923
    %3925 = vmatprep.subr.mxu0 0.0
    %v3926 = vand.u32 %v3672, 4294901760
    %v3927 = vsub.f32 %v3672, %v3926
    %v3928 = vand.u32 %v3927, 4294901760
    %v3929 = vsub.f32 %v3927, %v3928
    %v3930 = vand.u32 %v3929, 4294901760
    %3931 = vmatpush1.msra.mxu0 %v3930
    %3932 = vmatprep.subr.mxu0 0.0
    %v3933 = vand.u32 %v3673, 4294901760
    %v3934 = vsub.f32 %v3673, %v3933
    %v3935 = vand.u32 %v3934, 4294901760
    %v3936 = vsub.f32 %v3934, %v3935
    %v3937 = vand.u32 %v3936, 4294901760
    %3938 = vmatpush1.msra.mxu0 %v3937
    %3939 = vmatprep.subr.mxu0 0.0
    %v3940 = vand.u32 %v3674, 4294901760
    %v3941 = vsub.f32 %v3674, %v3940
    %v3942 = vand.u32 %v3941, 4294901760
    %v3943 = vsub.f32 %v3941, %v3942
    %v3944 = vand.u32 %v3943, 4294901760
    %3945 = vmatpush1.msra.mxu0 %v3944
    %3946 = vmatprep.subr.mxu0 0.0
    %v3947 = vand.u32 %v3675, 4294901760
    %v3948 = vsub.f32 %v3675, %v3947
    %v3949 = vand.u32 %v3948, 4294901760
    %v3950 = vsub.f32 %v3948, %v3949
    %v3951 = vand.u32 %v3950, 4294901760
    %3952 = vmatpush1.msra.mxu0 %v3951
    %3953 = vmatprep.subr.mxu0 0.0
    %v3954 = vand.u32 %v3676, 4294901760
    %v3955 = vsub.f32 %v3676, %v3954
    %v3956 = vand.u32 %v3955, 4294901760
    %v3957 = vsub.f32 %v3955, %v3956
    %v3958 = vand.u32 %v3957, 4294901760
    %3959 = vmatpush1.msra.mxu0 %v3958
    %3960 = vmatprep.subr.mxu0 0.0
    %v3961 = vand.u32 %v3677, 4294901760
    %v3962 = vsub.f32 %v3677, %v3961
    %v3963 = vand.u32 %v3962, 4294901760
    %v3964 = vsub.f32 %v3962, %v3963
    %v3965 = vand.u32 %v3964, 4294901760
    %3966 = vmatpush1.msra.mxu0 %v3965
    %3967 = vmatprep.subr.mxu0 0.0
    %v3968 = vand.u32 %v3678, 4294901760
    %v3969 = vsub.f32 %v3678, %v3968
    %v3970 = vand.u32 %v3969, 4294901760
    %v3971 = vsub.f32 %v3969, %v3970
    %v3972 = vand.u32 %v3971, 4294901760
    %3973 = vmatpush1.msra.mxu0 %v3972
    %3974 = vmatprep.subr.mxu0 0.0
    %v3975 = vand.u32 %v3679, 4294901760
    %v3976 = vsub.f32 %v3679, %v3975
    %v3977 = vand.u32 %v3976, 4294901760
    %v3978 = vsub.f32 %v3976, %v3977
    %v3979 = vand.u32 %v3978, 4294901760
    %3980 = vmatpush1.msra.mxu0 %v3979
    %3981 = vmatprep.subr.mxu0 0.0
    %v3982 = vand.u32 %v3680, 4294901760
    %v3983 = vsub.f32 %v3680, %v3982
    %v3984 = vand.u32 %v3983, 4294901760
    %v3985 = vsub.f32 %v3983, %v3984
    %v3986 = vand.u32 %v3985, 4294901760
    %3987 = vmatpush1.msra.mxu0 %v3986
    %3988 = vmatprep.subr.mxu0 0.0
    %v3989 = vand.u32 %v3681, 4294901760
    %v3990 = vsub.f32 %v3681, %v3989
    %v3991 = vand.u32 %v3990, 4294901760
    %v3992 = vsub.f32 %v3990, %v3991
    %v3993 = vand.u32 %v3992, 4294901760
    %3994 = vmatpush1.msra.mxu0 %v3993
    %3995 = vmatprep.subr.mxu0 0.0
    %v3996 = vand.u32 %v3682, 4294901760
    %v3997 = vsub.f32 %v3682, %v3996
    %v3998 = vand.u32 %v3997, 4294901760
    %v3999 = vsub.f32 %v3997, %v3998
    %v4000 = vand.u32 %v3999, 4294901760
    %4001 = vmatpush1.msra.mxu0 %v4000
    %4002 = vmatprep.subr.mxu0 0.0
    %v4003 = vand.u32 %v3683, 4294901760
    %v4004 = vsub.f32 %v3683, %v4003
    %v4005 = vand.u32 %v4004, 4294901760
    %v4006 = vsub.f32 %v4004, %v4005
    %v4007 = vand.u32 %v4006, 4294901760
    %4008 = vmatpush1.msra.mxu0 %v4007
    %4009 = vmatprep.subr.mxu0 0.0
    %v4010 = vand.u32 %v3684, 4294901760
    %v4011 = vsub.f32 %v3684, %v4010
    %v4012 = vand.u32 %v4011, 4294901760
    %v4013 = vsub.f32 %v4011, %v4012
    %v4014 = vand.u32 %v4013, 4294901760
    %4015 = vmatpush1.msra.mxu0 %v4014
    %4016 = vmatprep.subr.mxu0 0.0
    %v4017 = vand.u32 %v3685, 4294901760
    %v4018 = vsub.f32 %v3685, %v4017
    %v4019 = vand.u32 %v4018, 4294901760
    %v4020 = vsub.f32 %v4018, %v4019
    %v4021 = vand.u32 %v4020, 4294901760
    %4022 = vmatpush1.msra.mxu0 %v4021
    %4023 = vmatprep.subr.mxu0 0.0
    %v4024 = vand.u32 %v3686, 4294901760
    %v4025 = vsub.f32 %v3686, %v4024
    %v4026 = vand.u32 %v4025, 4294901760
    %v4027 = vsub.f32 %v4025, %v4026
    %v4028 = vand.u32 %v4027, 4294901760
    %4029 = vmatpush1.msra.mxu0 %v4028
    %4030 = vmatprep.subr.mxu0 0.0
    %v4031 = vand.u32 %v3687, 4294901760
    %v4032 = vsub.f32 %v3687, %v4031
    %v4033 = vand.u32 %v4032, 4294901760
    %v4034 = vsub.f32 %v4032, %v4033
    %v4035 = vand.u32 %v4034, 4294901760
    %4036 = vmatpush1.msra.mxu0 %v4035
    %4037 = vmatprep.subr.mxu0 0.0
    %v4038 = vand.u32 %v3688, 4294901760
    %v4039 = vsub.f32 %v3688, %v4038
    %v4040 = vand.u32 %v4039, 4294901760
    %v4041 = vsub.f32 %v4039, %v4040
    %v4042 = vand.u32 %v4041, 4294901760
    %4043 = vmatpush1.msra.mxu0 %v4042
    %4044 = vmatprep.subr.mxu0 0.0
    %v4045 = vand.u32 %v3689, 4294901760
    %v4046 = vsub.f32 %v3689, %v4045
    %v4047 = vand.u32 %v4046, 4294901760
    %v4048 = vsub.f32 %v4046, %v4047
    %v4049 = vand.u32 %v4048, 4294901760
    %4050 = vmatpush1.msra.mxu0 %v4049
    %4051 = vmatprep.subr.mxu0 0.0
    %v4052 = vand.u32 %v3690, 4294901760
    %v4053 = vsub.f32 %v3690, %v4052
    %v4054 = vand.u32 %v4053, 4294901760
    %v4055 = vsub.f32 %v4053, %v4054
    %v4056 = vand.u32 %v4055, 4294901760
    %4057 = vmatpush1.msra.mxu0 %v4056
    %4058 = vmatprep.subr.mxu0 0.0
    %v4059 = vand.u32 %v3691, 4294901760
    %v4060 = vsub.f32 %v3691, %v4059
    %v4061 = vand.u32 %v4060, 4294901760
    %v4062 = vsub.f32 %v4060, %v4061
    %v4063 = vand.u32 %v4062, 4294901760
    %4064 = vmatpush1.msra.mxu0 %v4063
    %4065 = vmatprep.subr.mxu0 0.0
    %v4066 = vand.u32 %v3692, 4294901760
    %v4067 = vsub.f32 %v3692, %v4066
    %v4068 = vand.u32 %v4067, 4294901760
    %v4069 = vsub.f32 %v4067, %v4068
    %v4070 = vand.u32 %v4069, 4294901760
    %4071 = vmatpush1.msra.mxu0 %v4070
    %4072 = vmatprep.subr.mxu0 0.0
    %v4073 = vand.u32 %v3693, 4294901760
    %v4074 = vsub.f32 %v3693, %v4073
    %v4075 = vand.u32 %v4074, 4294901760
    %v4076 = vsub.f32 %v4074, %v4075
    %v4077 = vand.u32 %v4076, 4294901760
    %4078 = vmatpush1.msra.mxu0 %v4077
    %4079 = vmatprep.subr.mxu0 0.0
    %v4080 = vand.u32 %v3694, 4294901760
    %v4081 = vsub.f32 %v3694, %v4080
    %v4082 = vand.u32 %v4081, 4294901760
    %v4083 = vsub.f32 %v4081, %v4082
    %v4084 = vand.u32 %v4083, 4294901760
    %4085 = vmatpush1.msra.mxu0 %v4084
    %4086 = vmatprep.subr.mxu0 0.0
    %v4087 = vand.u32 %v3695, 4294901760
    %v4088 = vsub.f32 %v3695, %v4087
    %v4089 = vand.u32 %v4088, 4294901760
    %v4090 = vsub.f32 %v4088, %v4089
    %v4091 = vand.u32 %v4090, 4294901760
    %4092 = vmatpush1.msra.mxu0 %v4091
    %4093 = vmatprep.subr.mxu0 0.0
    %v4094 = vand.u32 %v3696, 4294901760
    %v4095 = vsub.f32 %v3696, %v4094
    %v4096 = vand.u32 %v4095, 4294901760
    %v4097 = vsub.f32 %v4095, %v4096
    %v4098 = vand.u32 %v4097, 4294901760
    %4099 = vmatpush1.msra.mxu0 %v4098
    %4100 = vmatprep.subr.mxu0 0.0
    %v4101 = vand.u32 %v3697, 4294901760
    %v4102 = vsub.f32 %v3697, %v4101
    %v4103 = vand.u32 %v4102, 4294901760
    %v4104 = vsub.f32 %v4102, %v4103
    %v4105 = vand.u32 %v4104, 4294901760
    %4106 = vmatpush1.msra.mxu0 %v4105
    %4107 = vmatprep.subr.mxu0 0.0
    %v4108 = vand.u32 %v3698, 4294901760
    %v4109 = vsub.f32 %v3698, %v4108
    %v4110 = vand.u32 %v4109, 4294901760
    %v4111 = vsub.f32 %v4109, %v4110
    %v4112 = vand.u32 %v4111, 4294901760
    %4113 = vmatpush1.msra.mxu0 %v4112
    %4114 = vmatprep.subr.mxu0 0.0
    %v4115 = vand.u32 %v3699, 4294901760
    %v4116 = vsub.f32 %v3699, %v4115
    %v4117 = vand.u32 %v4116, 4294901760
    %v4118 = vsub.f32 %v4116, %v4117
    %v4119 = vand.u32 %v4118, 4294901760
    %4120 = vmatpush1.msra.mxu0 %v4119
    %4121 = vmatprep.subr.mxu0 0.0
    %v4122 = vand.u32 %v3700, 4294901760
    %v4123 = vsub.f32 %v3700, %v4122
    %v4124 = vand.u32 %v4123, 4294901760
    %v4125 = vsub.f32 %v4123, %v4124
    %v4126 = vand.u32 %v4125, 4294901760
    %4127 = vmatpush1.msra.mxu0 %v4126
    %4128 = vmatprep.subr.mxu0 0.0
    %v4129 = vand.u32 %v3701, 4294901760
    %v4130 = vsub.f32 %v3701, %v4129
    %v4131 = vand.u32 %v4130, 4294901760
    %v4132 = vsub.f32 %v4130, %v4131
    %v4133 = vand.u32 %v4132, 4294901760
    %4134 = vmatpush1.msra.mxu0 %v4133
    %4135 = vmatprep.subr.mxu0 0.0
    %v4136 = vand.u32 %v3702, 4294901760
    %v4137 = vsub.f32 %v3702, %v4136
    %v4138 = vand.u32 %v4137, 4294901760
    %v4139 = vsub.f32 %v4137, %v4138
    %v4140 = vand.u32 %v4139, 4294901760
    %4141 = vmatpush1.msra.mxu0 %v4140
    %v4142 = vand.u32 %v3664, 4294901760
    %4143 = vmatprep.mubr.f32.mxu0 %v4142
    %v4144 = vand.u32 %v3663, 4294901760
    %4145 = vmatmul.mubr.f32.gmra.mrb[0].mxu0 %v4144
    %v4146 = vpop.f32.mrb[0].mxu0
    %v4147 = vadd.f32 %v3915, %v4146
    %v4148 = vpop.f32.mrb[0].mxu0
    %4149 = vdwg.mxu0
    %4150 = vmatprep.subr.mxu0 0.0
    %v4151 = vand.u32 %v3671, 4294901760
    %v4152 = vsub.f32 %v3671, %v4151
    %4153 = vmatpush1.msra.mxu0 %v4152
    %4154 = vmatprep.subr.mxu0 0.0
    %v4155 = vand.u32 %v3672, 4294901760
    %v4156 = vsub.f32 %v3672, %v4155
    %4157 = vmatpush1.msra.mxu0 %v4156
    %4158 = vmatprep.subr.mxu0 0.0
    %v4159 = vand.u32 %v3673, 4294901760
    %v4160 = vsub.f32 %v3673, %v4159
    %4161 = vmatpush1.msra.mxu0 %v4160
    %4162 = vmatprep.subr.mxu0 0.0
    %v4163 = vand.u32 %v3674, 4294901760
    %v4164 = vsub.f32 %v3674, %v4163
    %4165 = vmatpush1.msra.mxu0 %v4164
    %4166 = vmatprep.subr.mxu0 0.0
    %v4167 = vand.u32 %v3675, 4294901760
    %v4168 = vsub.f32 %v3675, %v4167
    %4169 = vmatpush1.msra.mxu0 %v4168
    %4170 = vmatprep.subr.mxu0 0.0
    %v4171 = vand.u32 %v3676, 4294901760
    %v4172 = vsub.f32 %v3676, %v4171
    %4173 = vmatpush1.msra.mxu0 %v4172
    %4174 = vmatprep.subr.mxu0 0.0
    %v4175 = vand.u32 %v3677, 4294901760
    %v4176 = vsub.f32 %v3677, %v4175
    %4177 = vmatpush1.msra.mxu0 %v4176
    %4178 = vmatprep.subr.mxu0 0.0
    %v4179 = vand.u32 %v3678, 4294901760
    %v4180 = vsub.f32 %v3678, %v4179
    %4181 = vmatpush1.msra.mxu0 %v4180
    %4182 = vmatprep.subr.mxu0 0.0
    %v4183 = vand.u32 %v3679, 4294901760
    %v4184 = vsub.f32 %v3679, %v4183
    %4185 = vmatpush1.msra.mxu0 %v4184
    %4186 = vmatprep.subr.mxu0 0.0
    %v4187 = vand.u32 %v3680, 4294901760
    %v4188 = vsub.f32 %v3680, %v4187
    %4189 = vmatpush1.msra.mxu0 %v4188
    %4190 = vmatprep.subr.mxu0 0.0
    %v4191 = vand.u32 %v3681, 4294901760
    %v4192 = vsub.f32 %v3681, %v4191
    %4193 = vmatpush1.msra.mxu0 %v4192
    %4194 = vmatprep.subr.mxu0 0.0
    %v4195 = vand.u32 %v3682, 4294901760
    %v4196 = vsub.f32 %v3682, %v4195
    %4197 = vmatpush1.msra.mxu0 %v4196
    %4198 = vmatprep.subr.mxu0 0.0
    %v4199 = vand.u32 %v3683, 4294901760
    %v4200 = vsub.f32 %v3683, %v4199
    %4201 = vmatpush1.msra.mxu0 %v4200
    %4202 = vmatprep.subr.mxu0 0.0
    %v4203 = vand.u32 %v3684, 4294901760
    %v4204 = vsub.f32 %v3684, %v4203
    %4205 = vmatpush1.msra.mxu0 %v4204
    %4206 = vmatprep.subr.mxu0 0.0
    %v4207 = vand.u32 %v3685, 4294901760
    %v4208 = vsub.f32 %v3685, %v4207
    %4209 = vmatpush1.msra.mxu0 %v4208
    %4210 = vmatprep.subr.mxu0 0.0
    %v4211 = vand.u32 %v3686, 4294901760
    %v4212 = vsub.f32 %v3686, %v4211
    %4213 = vmatpush1.msra.mxu0 %v4212
    %4214 = vmatprep.subr.mxu0 0.0
    %v4215 = vand.u32 %v3687, 4294901760
    %v4216 = vsub.f32 %v3687, %v4215
    %4217 = vmatpush1.msra.mxu0 %v4216
    %4218 = vmatprep.subr.mxu0 0.0
    %v4219 = vand.u32 %v3688, 4294901760
    %v4220 = vsub.f32 %v3688, %v4219
    %4221 = vmatpush1.msra.mxu0 %v4220
    %4222 = vmatprep.subr.mxu0 0.0
    %v4223 = vand.u32 %v3689, 4294901760
    %v4224 = vsub.f32 %v3689, %v4223
    %4225 = vmatpush1.msra.mxu0 %v4224
    %4226 = vmatprep.subr.mxu0 0.0
    %v4227 = vand.u32 %v3690, 4294901760
    %v4228 = vsub.f32 %v3690, %v4227
    %4229 = vmatpush1.msra.mxu0 %v4228
    %4230 = vmatprep.subr.mxu0 0.0
    %v4231 = vand.u32 %v3691, 4294901760
    %v4232 = vsub.f32 %v3691, %v4231
    %4233 = vmatpush1.msra.mxu0 %v4232
    %4234 = vmatprep.subr.mxu0 0.0
    %v4235 = vand.u32 %v3692, 4294901760
    %v4236 = vsub.f32 %v3692, %v4235
    %4237 = vmatpush1.msra.mxu0 %v4236
    %4238 = vmatprep.subr.mxu0 0.0
    %v4239 = vand.u32 %v3693, 4294901760
    %v4240 = vsub.f32 %v3693, %v4239
    %4241 = vmatpush1.msra.mxu0 %v4240
    %4242 = vmatprep.subr.mxu0 0.0
    %v4243 = vand.u32 %v3694, 4294901760
    %v4244 = vsub.f32 %v3694, %v4243
    %4245 = vmatpush1.msra.mxu0 %v4244
    %4246 = vmatprep.subr.mxu0 0.0
    %v4247 = vand.u32 %v3695, 4294901760
    %v4248 = vsub.f32 %v3695, %v4247
    %4249 = vmatpush1.msra.mxu0 %v4248
    %4250 = vmatprep.subr.mxu0 0.0
    %v4251 = vand.u32 %v3696, 4294901760
    %v4252 = vsub.f32 %v3696, %v4251
    %4253 = vmatpush1.msra.mxu0 %v4252
    %4254 = vmatprep.subr.mxu0 0.0
    %v4255 = vand.u32 %v3697, 4294901760
    %v4256 = vsub.f32 %v3697, %v4255
    %4257 = vmatpush1.msra.mxu0 %v4256
    %4258 = vmatprep.subr.mxu0 0.0
    %v4259 = vand.u32 %v3698, 4294901760
    %v4260 = vsub.f32 %v3698, %v4259
    %4261 = vmatpush1.msra.mxu0 %v4260
    %4262 = vmatprep.subr.mxu0 0.0
    %v4263 = vand.u32 %v3699, 4294901760
    %v4264 = vsub.f32 %v3699, %v4263
    %4265 = vmatpush1.msra.mxu0 %v4264
    %4266 = vmatprep.subr.mxu0 0.0
    %v4267 = vand.u32 %v3700, 4294901760
    %v4268 = vsub.f32 %v3700, %v4267
    %4269 = vmatpush1.msra.mxu0 %v4268
    %4270 = vmatprep.subr.mxu0 0.0
    %v4271 = vand.u32 %v3701, 4294901760
    %v4272 = vsub.f32 %v3701, %v4271
    %4273 = vmatpush1.msra.mxu0 %v4272
    %4274 = vmatprep.subr.mxu0 0.0
    %v4275 = vand.u32 %v3702, 4294901760
    %v4276 = vsub.f32 %v3702, %v4275
    %4277 = vmatpush1.msra.mxu0 %v4276
    %v4278 = vand.u32 %v3664, 4294901760
    %v4279 = vsub.f32 %v3664, %v4278
    %4280 = vmatprep.mubr.f32.mxu0 %v4279
    %v4281 = vand.u32 %v3663, 4294901760
    %v4282 = vsub.f32 %v3663, %v4281
    %4283 = vmatmul.mubr.f32.gmra.mrb[0].mxu0 %v4282
    %v4284 = vpop.f32.mrb[0].mxu0
    %v4285 = vadd.f32 %v4147, %v4284
    %v4286 = vpop.f32.mrb[0].mxu0
    %4287 = vdwg.mxu0
    %4288 = vmatprep.subr.mxu0 0.0
    %v4289 = vand.u32 %v3671, 4294901760
    %4290 = vmatpush1.msra.mxu0 %v4289
    %4291 = vmatprep.subr.mxu0 0.0
    %v4292 = vand.u32 %v3672, 4294901760
    %4293 = vmatpush1.msra.mxu0 %v4292
    %4294 = vmatprep.subr.mxu0 0.0
    %v4295 = vand.u32 %v3673, 4294901760
    %4296 = vmatpush1.msra.mxu0 %v4295
    %4297 = vmatprep.subr.mxu0 0.0
    %v4298 = vand.u32 %v3674, 4294901760
    %4299 = vmatpush1.msra.mxu0 %v4298
    %4300 = vmatprep.subr.mxu0 0.0
    %v4301 = vand.u32 %v3675, 4294901760
    %4302 = vmatpush1.msra.mxu0 %v4301
    %4303 = vmatprep.subr.mxu0 0.0
    %v4304 = vand.u32 %v3676, 4294901760
    %4305 = vmatpush1.msra.mxu0 %v4304
    %4306 = vmatprep.subr.mxu0 0.0
    %v4307 = vand.u32 %v3677, 4294901760
    %4308 = vmatpush1.msra.mxu0 %v4307
    %4309 = vmatprep.subr.mxu0 0.0
    %v4310 = vand.u32 %v3678, 4294901760
    %4311 = vmatpush1.msra.mxu0 %v4310
    %4312 = vmatprep.subr.mxu0 0.0
    %v4313 = vand.u32 %v3679, 4294901760
    %4314 = vmatpush1.msra.mxu0 %v4313
    %4315 = vmatprep.subr.mxu0 0.0
    %v4316 = vand.u32 %v3680, 4294901760
    %4317 = vmatpush1.msra.mxu0 %v4316
    %4318 = vmatprep.subr.mxu0 0.0
    %v4319 = vand.u32 %v3681, 4294901760
    %4320 = vmatpush1.msra.mxu0 %v4319
    %4321 = vmatprep.subr.mxu0 0.0
    %v4322 = vand.u32 %v3682, 4294901760
    %4323 = vmatpush1.msra.mxu0 %v4322
    %4324 = vmatprep.subr.mxu0 0.0
    %v4325 = vand.u32 %v3683, 4294901760
    %4326 = vmatpush1.msra.mxu0 %v4325
    %4327 = vmatprep.subr.mxu0 0.0
    %v4328 = vand.u32 %v3684, 4294901760
    %4329 = vmatpush1.msra.mxu0 %v4328
    %4330 = vmatprep.subr.mxu0 0.0
    %v4331 = vand.u32 %v3685, 4294901760
    %4332 = vmatpush1.msra.mxu0 %v4331
    %4333 = vmatprep.subr.mxu0 0.0
    %v4334 = vand.u32 %v3686, 4294901760
    %4335 = vmatpush1.msra.mxu0 %v4334
    %4336 = vmatprep.subr.mxu0 0.0
    %v4337 = vand.u32 %v3687, 4294901760
    %4338 = vmatpush1.msra.mxu0 %v4337
    %4339 = vmatprep.subr.mxu0 0.0
    %v4340 = vand.u32 %v3688, 4294901760
    %4341 = vmatpush1.msra.mxu0 %v4340
    %4342 = vmatprep.subr.mxu0 0.0
    %v4343 = vand.u32 %v3689, 4294901760
    %4344 = vmatpush1.msra.mxu0 %v4343
    %4345 = vmatprep.subr.mxu0 0.0
    %v4346 = vand.u32 %v3690, 4294901760
    %4347 = vmatpush1.msra.mxu0 %v4346
    %4348 = vmatprep.subr.mxu0 0.0
    %v4349 = vand.u32 %v3691, 4294901760
    %4350 = vmatpush1.msra.mxu0 %v4349
    %4351 = vmatprep.subr.mxu0 0.0
    %v4352 = vand.u32 %v3692, 4294901760
    %4353 = vmatpush1.msra.mxu0 %v4352
    %4354 = vmatprep.subr.mxu0 0.0
    %v4355 = vand.u32 %v3693, 4294901760
    %4356 = vmatpush1.msra.mxu0 %v4355
    %4357 = vmatprep.subr.mxu0 0.0
    %v4358 = vand.u32 %v3694, 4294901760
    %4359 = vmatpush1.msra.mxu0 %v4358
    %4360 = vmatprep.subr.mxu0 0.0
    %v4361 = vand.u32 %v3695, 4294901760
    %4362 = vmatpush1.msra.mxu0 %v4361
    %4363 = vmatprep.subr.mxu0 0.0
    %v4364 = vand.u32 %v3696, 4294901760
    %4365 = vmatpush1.msra.mxu0 %v4364
    %4366 = vmatprep.subr.mxu0 0.0
    %v4367 = vand.u32 %v3697, 4294901760
    %4368 = vmatpush1.msra.mxu0 %v4367
    %4369 = vmatprep.subr.mxu0 0.0
    %v4370 = vand.u32 %v3698, 4294901760
    %4371 = vmatpush1.msra.mxu0 %v4370
    %4372 = vmatprep.subr.mxu0 0.0
    %v4373 = vand.u32 %v3699, 4294901760
    %4374 = vmatpush1.msra.mxu0 %v4373
    %4375 = vmatprep.subr.mxu0 0.0
    %v4376 = vand.u32 %v3700, 4294901760
    %4377 = vmatpush1.msra.mxu0 %v4376
    %4378 = vmatprep.subr.mxu0 0.0
    %v4379 = vand.u32 %v3701, 4294901760
    %4380 = vmatpush1.msra.mxu0 %v4379
    %4381 = vmatprep.subr.mxu0 0.0
    %v4382 = vand.u32 %v3702, 4294901760
    %4383 = vmatpush1.msra.mxu0 %v4382
    %v4384 = vand.u32 %v3664, 4294901760
    %v4385 = vsub.f32 %v3664, %v4384
    %v4386 = vand.u32 %v4385, 4294901760
    %4387 = vmatprep.mubr.f32.mxu0 %v4386
    %v4388 = vand.u32 %v3663, 4294901760
    %v4389 = vsub.f32 %v3663, %v4388
    %v4390 = vand.u32 %v4389, 4294901760
    %4391 = vmatmul.mubr.f32.gmra.mrb[0].mxu0 %v4390
    %v4392 = vpop.f32.mrb[0].mxu0
    %v4393 = vadd.f32 %v4285, %v4392
    %v4394 = vpop.f32.mrb[0].mxu0
    %4395 = vdwg.mxu0
    %4396 = vmatprep.subr.mxu0 0.0
    %v4397 = vand.u32 %v3671, 4294901760
    %v4398 = vsub.f32 %v3671, %v4397
    %v4399 = vand.u32 %v4398, 4294901760
    %4400 = vmatpush1.msra.mxu0 %v4399
    %4401 = vmatprep.subr.mxu0 0.0
    %v4402 = vand.u32 %v3672, 4294901760
    %v4403 = vsub.f32 %v3672, %v4402
    %v4404 = vand.u32 %v4403, 4294901760
    %4405 = vmatpush1.msra.mxu0 %v4404
    %4406 = vmatprep.subr.mxu0 0.0
    %v4407 = vand.u32 %v3673, 4294901760
    %v4408 = vsub.f32 %v3673, %v4407
    %v4409 = vand.u32 %v4408, 4294901760
    %4410 = vmatpush1.msra.mxu0 %v4409
    %4411 = vmatprep.subr.mxu0 0.0
    %v4412 = vand.u32 %v3674, 4294901760
    %v4413 = vsub.f32 %v3674, %v4412
    %v4414 = vand.u32 %v4413, 4294901760
    %4415 = vmatpush1.msra.mxu0 %v4414
    %4416 = vmatprep.subr.mxu0 0.0
    %v4417 = vand.u32 %v3675, 4294901760
    %v4418 = vsub.f32 %v3675, %v4417
    %v4419 = vand.u32 %v4418, 4294901760
    %4420 = vmatpush1.msra.mxu0 %v4419
    %4421 = vmatprep.subr.mxu0 0.0
    %v4422 = vand.u32 %v3676, 4294901760
    %v4423 = vsub.f32 %v3676, %v4422
    %v4424 = vand.u32 %v4423, 4294901760
    %4425 = vmatpush1.msra.mxu0 %v4424
    %4426 = vmatprep.subr.mxu0 0.0
    %v4427 = vand.u32 %v3677, 4294901760
    %v4428 = vsub.f32 %v3677, %v4427
    %v4429 = vand.u32 %v4428, 4294901760
    %4430 = vmatpush1.msra.mxu0 %v4429
    %4431 = vmatprep.subr.mxu0 0.0
    %v4432 = vand.u32 %v3678, 4294901760
    %v4433 = vsub.f32 %v3678, %v4432
    %v4434 = vand.u32 %v4433, 4294901760
    %4435 = vmatpush1.msra.mxu0 %v4434
    %4436 = vmatprep.subr.mxu0 0.0
    %v4437 = vand.u32 %v3679, 4294901760
    %v4438 = vsub.f32 %v3679, %v4437
    %v4439 = vand.u32 %v4438, 4294901760
    %4440 = vmatpush1.msra.mxu0 %v4439
    %4441 = vmatprep.subr.mxu0 0.0
    %v4442 = vand.u32 %v3680, 4294901760
    %v4443 = vsub.f32 %v3680, %v4442
    %v4444 = vand.u32 %v4443, 4294901760
    %4445 = vmatpush1.msra.mxu0 %v4444
    %4446 = vmatprep.subr.mxu0 0.0
    %v4447 = vand.u32 %v3681, 4294901760
    %v4448 = vsub.f32 %v3681, %v4447
    %v4449 = vand.u32 %v4448, 4294901760
    %4450 = vmatpush1.msra.mxu0 %v4449
    %4451 = vmatprep.subr.mxu0 0.0
    %v4452 = vand.u32 %v3682, 4294901760
    %v4453 = vsub.f32 %v3682, %v4452
    %v4454 = vand.u32 %v4453, 4294901760
    %4455 = vmatpush1.msra.mxu0 %v4454
    %4456 = vmatprep.subr.mxu0 0.0
    %v4457 = vand.u32 %v3683, 4294901760
    %v4458 = vsub.f32 %v3683, %v4457
    %v4459 = vand.u32 %v4458, 4294901760
    %4460 = vmatpush1.msra.mxu0 %v4459
    %4461 = vmatprep.subr.mxu0 0.0
    %v4462 = vand.u32 %v3684, 4294901760
    %v4463 = vsub.f32 %v3684, %v4462
    %v4464 = vand.u32 %v4463, 4294901760
    %4465 = vmatpush1.msra.mxu0 %v4464
    %4466 = vmatprep.subr.mxu0 0.0
    %v4467 = vand.u32 %v3685, 4294901760
    %v4468 = vsub.f32 %v3685, %v4467
    %v4469 = vand.u32 %v4468, 4294901760
    %4470 = vmatpush1.msra.mxu0 %v4469
    %4471 = vmatprep.subr.mxu0 0.0
    %v4472 = vand.u32 %v3686, 4294901760
    %v4473 = vsub.f32 %v3686, %v4472
    %v4474 = vand.u32 %v4473, 4294901760
    %4475 = vmatpush1.msra.mxu0 %v4474
    %4476 = vmatprep.subr.mxu0 0.0
    %v4477 = vand.u32 %v3687, 4294901760
    %v4478 = vsub.f32 %v3687, %v4477
    %v4479 = vand.u32 %v4478, 4294901760
    %4480 = vmatpush1.msra.mxu0 %v4479
    %4481 = vmatprep.subr.mxu0 0.0
    %v4482 = vand.u32 %v3688, 4294901760
    %v4483 = vsub.f32 %v3688, %v4482
    %v4484 = vand.u32 %v4483, 4294901760
    %4485 = vmatpush1.msra.mxu0 %v4484
    %4486 = vmatprep.subr.mxu0 0.0
    %v4487 = vand.u32 %v3689, 4294901760
    %v4488 = vsub.f32 %v3689, %v4487
    %v4489 = vand.u32 %v4488, 4294901760
    %4490 = vmatpush1.msra.mxu0 %v4489
    %4491 = vmatprep.subr.mxu0 0.0
    %v4492 = vand.u32 %v3690, 4294901760
    %v4493 = vsub.f32 %v3690, %v4492
    %v4494 = vand.u32 %v4493, 4294901760
    %4495 = vmatpush1.msra.mxu0 %v4494
    %4496 = vmatprep.subr.mxu0 0.0
    %v4497 = vand.u32 %v3691, 4294901760
    %v4498 = vsub.f32 %v3691, %v4497
    %v4499 = vand.u32 %v4498, 4294901760
    %4500 = vmatpush1.msra.mxu0 %v4499
    %4501 = vmatprep.subr.mxu0 0.0
    %v4502 = vand.u32 %v3692, 4294901760
    %v4503 = vsub.f32 %v3692, %v4502
    %v4504 = vand.u32 %v4503, 4294901760
    %4505 = vmatpush1.msra.mxu0 %v4504
    %4506 = vmatprep.subr.mxu0 0.0
    %v4507 = vand.u32 %v3693, 4294901760
    %v4508 = vsub.f32 %v3693, %v4507
    %v4509 = vand.u32 %v4508, 4294901760
    %4510 = vmatpush1.msra.mxu0 %v4509
    %4511 = vmatprep.subr.mxu0 0.0
    %v4512 = vand.u32 %v3694, 4294901760
    %v4513 = vsub.f32 %v3694, %v4512
    %v4514 = vand.u32 %v4513, 4294901760
    %4515 = vmatpush1.msra.mxu0 %v4514
    %4516 = vmatprep.subr.mxu0 0.0
    %v4517 = vand.u32 %v3695, 4294901760
    %v4518 = vsub.f32 %v3695, %v4517
    %v4519 = vand.u32 %v4518, 4294901760
    %4520 = vmatpush1.msra.mxu0 %v4519
    %4521 = vmatprep.subr.mxu0 0.0
    %v4522 = vand.u32 %v3696, 4294901760
    %v4523 = vsub.f32 %v3696, %v4522
    %v4524 = vand.u32 %v4523, 4294901760
    %4525 = vmatpush1.msra.mxu0 %v4524
    %4526 = vmatprep.subr.mxu0 0.0
    %v4527 = vand.u32 %v3697, 4294901760
    %v4528 = vsub.f32 %v3697, %v4527
    %v4529 = vand.u32 %v4528, 4294901760
    %4530 = vmatpush1.msra.mxu0 %v4529
    %4531 = vmatprep.subr.mxu0 0.0
    %v4532 = vand.u32 %v3698, 4294901760
    %v4533 = vsub.f32 %v3698, %v4532
    %v4534 = vand.u32 %v4533, 4294901760
    %4535 = vmatpush1.msra.mxu0 %v4534
    %4536 = vmatprep.subr.mxu0 0.0
    %v4537 = vand.u32 %v3699, 4294901760
    %v4538 = vsub.f32 %v3699, %v4537
    %v4539 = vand.u32 %v4538, 4294901760
    %4540 = vmatpush1.msra.mxu0 %v4539
    %4541 = vmatprep.subr.mxu0 0.0
    %v4542 = vand.u32 %v3700, 4294901760
    %v4543 = vsub.f32 %v3700, %v4542
    %v4544 = vand.u32 %v4543, 4294901760
    %4545 = vmatpush1.msra.mxu0 %v4544
    %4546 = vmatprep.subr.mxu0 0.0
    %v4547 = vand.u32 %v3701, 4294901760
    %v4548 = vsub.f32 %v3701, %v4547
    %v4549 = vand.u32 %v4548, 4294901760
    %4550 = vmatpush1.msra.mxu0 %v4549
    %4551 = vmatprep.subr.mxu0 0.0
    %v4552 = vand.u32 %v3702, 4294901760
    %v4553 = vsub.f32 %v3702, %v4552
    %v4554 = vand.u32 %v4553, 4294901760
    %4555 = vmatpush1.msra.mxu0 %v4554
    %v4556 = vand.u32 %v3664, 4294901760
    %4557 = vmatprep.mubr.f32.mxu0 %v4556
    %v4558 = vand.u32 %v3663, 4294901760
    %4559 = vmatmul.mubr.f32.gmra.mrb[0].mxu0 %v4558
    %v4560 = vpop.f32.mrb[0].mxu0
    %v4561 = vadd.f32 %v4393, %v4560
    %v4562 = vpop.f32.mrb[0].mxu0
    %4563 = vdwg.mxu0
    %4564 = vmatprep.subr.mxu0 0.0
    %v4565 = vand.u32 %v3671, 4294901760
    %4566 = vmatpush1.msra.mxu0 %v4565
    %4567 = vmatprep.subr.mxu0 0.0
    %v4568 = vand.u32 %v3672, 4294901760
    %4569 = vmatpush1.msra.mxu0 %v4568
    %4570 = vmatprep.subr.mxu0 0.0
    %v4571 = vand.u32 %v3673, 4294901760
    %4572 = vmatpush1.msra.mxu0 %v4571
    %4573 = vmatprep.subr.mxu0 0.0
    %v4574 = vand.u32 %v3674, 4294901760
    %4575 = vmatpush1.msra.mxu0 %v4574
    %4576 = vmatprep.subr.mxu0 0.0
    %v4577 = vand.u32 %v3675, 4294901760
    %4578 = vmatpush1.msra.mxu0 %v4577
    %4579 = vmatprep.subr.mxu0 0.0
    %v4580 = vand.u32 %v3676, 4294901760
    %4581 = vmatpush1.msra.mxu0 %v4580
    %4582 = vmatprep.subr.mxu0 0.0
    %v4583 = vand.u32 %v3677, 4294901760
    %4584 = vmatpush1.msra.mxu0 %v4583
    %4585 = vmatprep.subr.mxu0 0.0
    %v4586 = vand.u32 %v3678, 4294901760
    %4587 = vmatpush1.msra.mxu0 %v4586
    %4588 = vmatprep.subr.mxu0 0.0
    %v4589 = vand.u32 %v3679, 4294901760
    %4590 = vmatpush1.msra.mxu0 %v4589
    %4591 = vmatprep.subr.mxu0 0.0
    %v4592 = vand.u32 %v3680, 4294901760
    %4593 = vmatpush1.msra.mxu0 %v4592
    %4594 = vmatprep.subr.mxu0 0.0
    %v4595 = vand.u32 %v3681, 4294901760
    %4596 = vmatpush1.msra.mxu0 %v4595
    %4597 = vmatprep.subr.mxu0 0.0
    %v4598 = vand.u32 %v3682, 4294901760
    %4599 = vmatpush1.msra.mxu0 %v4598
    %4600 = vmatprep.subr.mxu0 0.0
    %v4601 = vand.u32 %v3683, 4294901760
    %4602 = vmatpush1.msra.mxu0 %v4601
    %4603 = vmatprep.subr.mxu0 0.0
    %v4604 = vand.u32 %v3684, 4294901760
    %4605 = vmatpush1.msra.mxu0 %v4604
    %4606 = vmatprep.subr.mxu0 0.0
    %v4607 = vand.u32 %v3685, 4294901760
    %4608 = vmatpush1.msra.mxu0 %v4607
    %4609 = vmatprep.subr.mxu0 0.0
    %v4610 = vand.u32 %v3686, 4294901760
    %4611 = vmatpush1.msra.mxu0 %v4610
    %4612 = vmatprep.subr.mxu0 0.0
    %v4613 = vand.u32 %v3687, 4294901760
    %4614 = vmatpush1.msra.mxu0 %v4613
    %4615 = vmatprep.subr.mxu0 0.0
    %v4616 = vand.u32 %v3688, 4294901760
    %4617 = vmatpush1.msra.mxu0 %v4616
    %4618 = vmatprep.subr.mxu0 0.0
    %v4619 = vand.u32 %v3689, 4294901760
    %4620 = vmatpush1.msra.mxu0 %v4619
    %4621 = vmatprep.subr.mxu0 0.0
    %v4622 = vand.u32 %v3690, 4294901760
    %4623 = vmatpush1.msra.mxu0 %v4622
    %4624 = vmatprep.subr.mxu0 0.0
    %v4625 = vand.u32 %v3691, 4294901760
    %4626 = vmatpush1.msra.mxu0 %v4625
    %4627 = vmatprep.subr.mxu0 0.0
    %v4628 = vand.u32 %v3692, 4294901760
    %4629 = vmatpush1.msra.mxu0 %v4628
    %4630 = vmatprep.subr.mxu0 0.0
    %v4631 = vand.u32 %v3693, 4294901760
    %4632 = vmatpush1.msra.mxu0 %v4631
    %4633 = vmatprep.subr.mxu0 0.0
    %v4634 = vand.u32 %v3694, 4294901760
    %4635 = vmatpush1.msra.mxu0 %v4634
    %4636 = vmatprep.subr.mxu0 0.0
    %v4637 = vand.u32 %v3695, 4294901760
    %4638 = vmatpush1.msra.mxu0 %v4637
    %4639 = vmatprep.subr.mxu0 0.0
    %v4640 = vand.u32 %v3696, 4294901760
    %4641 = vmatpush1.msra.mxu0 %v4640
    %4642 = vmatprep.subr.mxu0 0.0
    %v4643 = vand.u32 %v3697, 4294901760
    %4644 = vmatpush1.msra.mxu0 %v4643
    %4645 = vmatprep.subr.mxu0 0.0
    %v4646 = vand.u32 %v3698, 4294901760
    %4647 = vmatpush1.msra.mxu0 %v4646
    %4648 = vmatprep.subr.mxu0 0.0
    %v4649 = vand.u32 %v3699, 4294901760
    %4650 = vmatpush1.msra.mxu0 %v4649
    %4651 = vmatprep.subr.mxu0 0.0
    %v4652 = vand.u32 %v3700, 4294901760
    %4653 = vmatpush1.msra.mxu0 %v4652
    %4654 = vmatprep.subr.mxu0 0.0
    %v4655 = vand.u32 %v3701, 4294901760
    %4656 = vmatpush1.msra.mxu0 %v4655
    %4657 = vmatprep.subr.mxu0 0.0
    %v4658 = vand.u32 %v3702, 4294901760
    %4659 = vmatpush1.msra.mxu0 %v4658
    %v4660 = vand.u32 %v3664, 4294901760
    %4661 = vmatprep.mubr.f32.mxu0 %v4660
    %v4662 = vand.u32 %v3663, 4294901760
    %4663 = vmatmul.mubr.f32.gmra.mrb[0].mxu0 %v4662
    %v4664 = vpop.f32.mrb[0].mxu0
    %v4665 = vadd.f32 %v4561, %v4664
    %v4666 = vpop.f32.mrb[0].mxu0
    %4667 = vdwg.mxu0
    %4668 = vmatprep.subr.mxu0 0.0
    %v4669 = vand.u32 %v3703, 4294901760
    %4670 = vmatpush1.msra.mxu0 %v4669
    %4671 = vmatprep.subr.mxu0 0.0
    %v4672 = vand.u32 %v3704, 4294901760
    %4673 = vmatpush1.msra.mxu0 %v4672
    %4674 = vmatprep.subr.mxu0 0.0
    %v4675 = vand.u32 %v3705, 4294901760
    %4676 = vmatpush1.msra.mxu0 %v4675
    %4677 = vmatprep.subr.mxu0 0.0
    %v4678 = vand.u32 %v3706, 4294901760
    %4679 = vmatpush1.msra.mxu0 %v4678
    %4680 = vmatprep.subr.mxu0 0.0
    %v4681 = vand.u32 %v3707, 4294901760
    %4682 = vmatpush1.msra.mxu0 %v4681
    %4683 = vmatprep.subr.mxu0 0.0
    %v4684 = vand.u32 %v3708, 4294901760
    %4685 = vmatpush1.msra.mxu0 %v4684
    %4686 = vmatprep.subr.mxu0 0.0
    %v4687 = vand.u32 %v3709, 4294901760
    %4688 = vmatpush1.msra.mxu0 %v4687
    %4689 = vmatprep.subr.mxu0 0.0
    %v4690 = vand.u32 %v3710, 4294901760
    %4691 = vmatpush1.msra.mxu0 %v4690
    %4692 = vmatprep.subr.mxu0 0.0
    %v4693 = vand.u32 %v3711, 4294901760
    %4694 = vmatpush1.msra.mxu0 %v4693
    %4695 = vmatprep.subr.mxu0 0.0
    %v4696 = vand.u32 %v3712, 4294901760
    %4697 = vmatpush1.msra.mxu0 %v4696
    %4698 = vmatprep.subr.mxu0 0.0
    %v4699 = vand.u32 %v3713, 4294901760
    %4700 = vmatpush1.msra.mxu0 %v4699
    %4701 = vmatprep.subr.mxu0 0.0
    %v4702 = vand.u32 %v3714, 4294901760
    %4703 = vmatpush1.msra.mxu0 %v4702
    %4704 = vmatprep.subr.mxu0 0.0
    %v4705 = vand.u32 %v3715, 4294901760
    %4706 = vmatpush1.msra.mxu0 %v4705
    %4707 = vmatprep.subr.mxu0 0.0
    %v4708 = vand.u32 %v3716, 4294901760
    %4709 = vmatpush1.msra.mxu0 %v4708
    %4710 = vmatprep.subr.mxu0 0.0
    %v4711 = vand.u32 %v3717, 4294901760
    %4712 = vmatpush1.msra.mxu0 %v4711
    %4713 = vmatprep.subr.mxu0 0.0
    %v4714 = vand.u32 %v3718, 4294901760
    %4715 = vmatpush1.msra.mxu0 %v4714
    %4716 = vmatprep.subr.mxu0 0.0
    %v4717 = vand.u32 %v3719, 4294901760
    %4718 = vmatpush1.msra.mxu0 %v4717
    %4719 = vmatprep.subr.mxu0 0.0
    %v4720 = vand.u32 %v3720, 4294901760
    %4721 = vmatpush1.msra.mxu0 %v4720
    %4722 = vmatprep.subr.mxu0 0.0
    %v4723 = vand.u32 %v3721, 4294901760
    %4724 = vmatpush1.msra.mxu0 %v4723
    %4725 = vmatprep.subr.mxu0 0.0
    %v4726 = vand.u32 %v3722, 4294901760
    %4727 = vmatpush1.msra.mxu0 %v4726
    %4728 = vmatprep.subr.mxu0 0.0
    %v4729 = vand.u32 %v3723, 4294901760
    %4730 = vmatpush1.msra.mxu0 %v4729
    %4731 = vmatprep.subr.mxu0 0.0
    %v4732 = vand.u32 %v3724, 4294901760
    %4733 = vmatpush1.msra.mxu0 %v4732
    %4734 = vmatprep.subr.mxu0 0.0
    %v4735 = vand.u32 %v3725, 4294901760
    %4736 = vmatpush1.msra.mxu0 %v4735
    %4737 = vmatprep.subr.mxu0 0.0
    %v4738 = vand.u32 %v3726, 4294901760
    %4739 = vmatpush1.msra.mxu0 %v4738
    %4740 = vmatprep.subr.mxu0 0.0
    %v4741 = vand.u32 %v3727, 4294901760
    %4742 = vmatpush1.msra.mxu0 %v4741
    %4743 = vmatprep.subr.mxu0 0.0
    %v4744 = vand.u32 %v3728, 4294901760
    %4745 = vmatpush1.msra.mxu0 %v4744
    %4746 = vmatprep.subr.mxu0 0.0
    %v4747 = vand.u32 %v3729, 4294901760
    %4748 = vmatpush1.msra.mxu0 %v4747
    %4749 = vmatprep.subr.mxu0 0.0
    %v4750 = vand.u32 %v3730, 4294901760
    %4751 = vmatpush1.msra.mxu0 %v4750
    %4752 = vmatprep.subr.mxu0 0.0
    %v4753 = vand.u32 %v3731, 4294901760
    %4754 = vmatpush1.msra.mxu0 %v4753
    %4755 = vmatprep.subr.mxu0 0.0
    %v4756 = vand.u32 %v3732, 4294901760
    %4757 = vmatpush1.msra.mxu0 %v4756
    %4758 = vmatprep.subr.mxu0 0.0
    %v4759 = vand.u32 %v3733, 4294901760
    %4760 = vmatpush1.msra.mxu0 %v4759
    %4761 = vmatprep.subr.mxu0 0.0
    %v4762 = vand.u32 %v3734, 4294901760
    %4763 = vmatpush1.msra.mxu0 %v4762
    %v4764 = vand.u32 %v3666, 4294901760
    %v4765 = vsub.f32 %v3666, %v4764
    %v4766 = vand.u32 %v4765, 4294901760
    %v4767 = vsub.f32 %v4765, %v4766
    %v4768 = vand.u32 %v4767, 4294901760
    %4769 = vmatprep.mubr.f32.mxu0 %v4768
    %v4770 = vand.u32 %v3665, 4294901760
    %v4771 = vsub.f32 %v3665, %v4770
    %v4772 = vand.u32 %v4771, 4294901760
    %v4773 = vsub.f32 %v4771, %v4772
    %v4774 = vand.u32 %v4773, 4294901760
    %4775 = vmatmul.mubr.f32.gmra.mrb[0].mxu0 %v4774
    %v4776 = vpop.f32.mrb[0].mxu0
    %v4777 = vadd.f32 %v4665, %v4776
    %v4778 = vpop.f32.mrb[0].mxu0
    %4779 = vdwg.mxu0
    %4780 = vmatprep.subr.mxu0 0.0
    %v4781 = vand.u32 %v3703, 4294901760
    %v4782 = vsub.f32 %v3703, %v4781
    %v4783 = vand.u32 %v4782, 4294901760
    %v4784 = vsub.f32 %v4782, %v4783
    %v4785 = vand.u32 %v4784, 4294901760
    %4786 = vmatpush1.msra.mxu0 %v4785
    %4787 = vmatprep.subr.mxu0 0.0
    %v4788 = vand.u32 %v3704, 4294901760
    %v4789 = vsub.f32 %v3704, %v4788
    %v4790 = vand.u32 %v4789, 4294901760
    %v4791 = vsub.f32 %v4789, %v4790
    %v4792 = vand.u32 %v4791, 4294901760
    %4793 = vmatpush1.msra.mxu0 %v4792
    %4794 = vmatprep.subr.mxu0 0.0
    %v4795 = vand.u32 %v3705, 4294901760
    %v4796 = vsub.f32 %v3705, %v4795
    %v4797 = vand.u32 %v4796, 4294901760
    %v4798 = vsub.f32 %v4796, %v4797
    %v4799 = vand.u32 %v4798, 4294901760
    %4800 = vmatpush1.msra.mxu0 %v4799
    %4801 = vmatprep.subr.mxu0 0.0
    %v4802 = vand.u32 %v3706, 4294901760
    %v4803 = vsub.f32 %v3706, %v4802
    %v4804 = vand.u32 %v4803, 4294901760
    %v4805 = vsub.f32 %v4803, %v4804
    %v4806 = vand.u32 %v4805, 4294901760
    %4807 = vmatpush1.msra.mxu0 %v4806
    %4808 = vmatprep.subr.mxu0 0.0
    %v4809 = vand.u32 %v3707, 4294901760
    %v4810 = vsub.f32 %v3707, %v4809
    %v4811 = vand.u32 %v4810, 4294901760
    %v4812 = vsub.f32 %v4810, %v4811
    %v4813 = vand.u32 %v4812, 4294901760
    %4814 = vmatpush1.msra.mxu0 %v4813
    %4815 = vmatprep.subr.mxu0 0.0
    %v4816 = vand.u32 %v3708, 4294901760
    %v4817 = vsub.f32 %v3708, %v4816
    %v4818 = vand.u32 %v4817, 4294901760
    %v4819 = vsub.f32 %v4817, %v4818
    %v4820 = vand.u32 %v4819, 4294901760
    %4821 = vmatpush1.msra.mxu0 %v4820
    %4822 = vmatprep.subr.mxu0 0.0
    %v4823 = vand.u32 %v3709, 4294901760
    %v4824 = vsub.f32 %v3709, %v4823
    %v4825 = vand.u32 %v4824, 4294901760
    %v4826 = vsub.f32 %v4824, %v4825
    %v4827 = vand.u32 %v4826, 4294901760
    %4828 = vmatpush1.msra.mxu0 %v4827
    %4829 = vmatprep.subr.mxu0 0.0
    %v4830 = vand.u32 %v3710, 4294901760
    %v4831 = vsub.f32 %v3710, %v4830
    %v4832 = vand.u32 %v4831, 4294901760
    %v4833 = vsub.f32 %v4831, %v4832
    %v4834 = vand.u32 %v4833, 4294901760
    %4835 = vmatpush1.msra.mxu0 %v4834
    %4836 = vmatprep.subr.mxu0 0.0
    %v4837 = vand.u32 %v3711, 4294901760
    %v4838 = vsub.f32 %v3711, %v4837
    %v4839 = vand.u32 %v4838, 4294901760
    %v4840 = vsub.f32 %v4838, %v4839
    %v4841 = vand.u32 %v4840, 4294901760
    %4842 = vmatpush1.msra.mxu0 %v4841
    %4843 = vmatprep.subr.mxu0 0.0
    %v4844 = vand.u32 %v3712, 4294901760
    %v4845 = vsub.f32 %v3712, %v4844
    %v4846 = vand.u32 %v4845, 4294901760
    %v4847 = vsub.f32 %v4845, %v4846
    %v4848 = vand.u32 %v4847, 4294901760
    %4849 = vmatpush1.msra.mxu0 %v4848
    %4850 = vmatprep.subr.mxu0 0.0
    %v4851 = vand.u32 %v3713, 4294901760
    %v4852 = vsub.f32 %v3713, %v4851
    %v4853 = vand.u32 %v4852, 4294901760
    %v4854 = vsub.f32 %v4852, %v4853
    %v4855 = vand.u32 %v4854, 4294901760
    %4856 = vmatpush1.msra.mxu0 %v4855
    %4857 = vmatprep.subr.mxu0 0.0
    %v4858 = vand.u32 %v3714, 4294901760
    %v4859 = vsub.f32 %v3714, %v4858
    %v4860 = vand.u32 %v4859, 4294901760
    %v4861 = vsub.f32 %v4859, %v4860
    %v4862 = vand.u32 %v4861, 4294901760
    %4863 = vmatpush1.msra.mxu0 %v4862
    %4864 = vmatprep.subr.mxu0 0.0
    %v4865 = vand.u32 %v3715, 4294901760
    %v4866 = vsub.f32 %v3715, %v4865
    %v4867 = vand.u32 %v4866, 4294901760
    %v4868 = vsub.f32 %v4866, %v4867
    %v4869 = vand.u32 %v4868, 4294901760
    %4870 = vmatpush1.msra.mxu0 %v4869
    %4871 = vmatprep.subr.mxu0 0.0
    %v4872 = vand.u32 %v3716, 4294901760
    %v4873 = vsub.f32 %v3716, %v4872
    %v4874 = vand.u32 %v4873, 4294901760
    %v4875 = vsub.f32 %v4873, %v4874
    %v4876 = vand.u32 %v4875, 4294901760
    %4877 = vmatpush1.msra.mxu0 %v4876
    %4878 = vmatprep.subr.mxu0 0.0
    %v4879 = vand.u32 %v3717, 4294901760
    %v4880 = vsub.f32 %v3717, %v4879
    %v4881 = vand.u32 %v4880, 4294901760
    %v4882 = vsub.f32 %v4880, %v4881
    %v4883 = vand.u32 %v4882, 4294901760
    %4884 = vmatpush1.msra.mxu0 %v4883
    %4885 = vmatprep.subr.mxu0 0.0
    %v4886 = vand.u32 %v3718, 4294901760
    %v4887 = vsub.f32 %v3718, %v4886
    %v4888 = vand.u32 %v4887, 4294901760
    %v4889 = vsub.f32 %v4887, %v4888
    %v4890 = vand.u32 %v4889, 4294901760
    %4891 = vmatpush1.msra.mxu0 %v4890
    %4892 = vmatprep.subr.mxu0 0.0
    %v4893 = vand.u32 %v3719, 4294901760
    %v4894 = vsub.f32 %v3719, %v4893
    %v4895 = vand.u32 %v4894, 4294901760
    %v4896 = vsub.f32 %v4894, %v4895
    %v4897 = vand.u32 %v4896, 4294901760
    %4898 = vmatpush1.msra.mxu0 %v4897
    %4899 = vmatprep.subr.mxu0 0.0
    %v4900 = vand.u32 %v3720, 4294901760
    %v4901 = vsub.f32 %v3720, %v4900
    %v4902 = vand.u32 %v4901, 4294901760
    %v4903 = vsub.f32 %v4901, %v4902
    %v4904 = vand.u32 %v4903, 4294901760
    %4905 = vmatpush1.msra.mxu0 %v4904
    %4906 = vmatprep.subr.mxu0 0.0
    %v4907 = vand.u32 %v3721, 4294901760
    %v4908 = vsub.f32 %v3721, %v4907
    %v4909 = vand.u32 %v4908, 4294901760
    %v4910 = vsub.f32 %v4908, %v4909
    %v4911 = vand.u32 %v4910, 4294901760
    %4912 = vmatpush1.msra.mxu0 %v4911
    %4913 = vmatprep.subr.mxu0 0.0
    %v4914 = vand.u32 %v3722, 4294901760
    %v4915 = vsub.f32 %v3722, %v4914
    %v4916 = vand.u32 %v4915, 4294901760
    %v4917 = vsub.f32 %v4915, %v4916
    %v4918 = vand.u32 %v4917, 4294901760
    %4919 = vmatpush1.msra.mxu0 %v4918
    %4920 = vmatprep.subr.mxu0 0.0
    %v4921 = vand.u32 %v3723, 4294901760
    %v4922 = vsub.f32 %v3723, %v4921
    %v4923 = vand.u32 %v4922, 4294901760
    %v4924 = vsub.f32 %v4922, %v4923
    %v4925 = vand.u32 %v4924, 4294901760
    %4926 = vmatpush1.msra.mxu0 %v4925
    %4927 = vmatprep.subr.mxu0 0.0
    %v4928 = vand.u32 %v3724, 4294901760
    %v4929 = vsub.f32 %v3724, %v4928
    %v4930 = vand.u32 %v4929, 4294901760
    %v4931 = vsub.f32 %v4929, %v4930
    %v4932 = vand.u32 %v4931, 4294901760
    %4933 = vmatpush1.msra.mxu0 %v4932
    %4934 = vmatprep.subr.mxu0 0.0
    %v4935 = vand.u32 %v3725, 4294901760
    %v4936 = vsub.f32 %v3725, %v4935
    %v4937 = vand.u32 %v4936, 4294901760
    %v4938 = vsub.f32 %v4936, %v4937
    %v4939 = vand.u32 %v4938, 4294901760
    %4940 = vmatpush1.msra.mxu0 %v4939
    %4941 = vmatprep.subr.mxu0 0.0
    %v4942 = vand.u32 %v3726, 4294901760
    %v4943 = vsub.f32 %v3726, %v4942
    %v4944 = vand.u32 %v4943, 4294901760
    %v4945 = vsub.f32 %v4943, %v4944
    %v4946 = vand.u32 %v4945, 4294901760
    %4947 = vmatpush1.msra.mxu0 %v4946
    %4948 = vmatprep.subr.mxu0 0.0
    %v4949 = vand.u32 %v3727, 4294901760
    %v4950 = vsub.f32 %v3727, %v4949
    %v4951 = vand.u32 %v4950, 4294901760
    %v4952 = vsub.f32 %v4950, %v4951
    %v4953 = vand.u32 %v4952, 4294901760
    %4954 = vmatpush1.msra.mxu0 %v4953
    %4955 = vmatprep.subr.mxu0 0.0
    %v4956 = vand.u32 %v3728, 4294901760
    %v4957 = vsub.f32 %v3728, %v4956
    %v4958 = vand.u32 %v4957, 4294901760
    %v4959 = vsub.f32 %v4957, %v4958
    %v4960 = vand.u32 %v4959, 4294901760
    %4961 = vmatpush1.msra.mxu0 %v4960
    %4962 = vmatprep.subr.mxu0 0.0
    %v4963 = vand.u32 %v3729, 4294901760
    %v4964 = vsub.f32 %v3729, %v4963
    %v4965 = vand.u32 %v4964, 4294901760
    %v4966 = vsub.f32 %v4964, %v4965
    %v4967 = vand.u32 %v4966, 4294901760
    %4968 = vmatpush1.msra.mxu0 %v4967
    %4969 = vmatprep.subr.mxu0 0.0
    %v4970 = vand.u32 %v3730, 4294901760
    %v4971 = vsub.f32 %v3730, %v4970
    %v4972 = vand.u32 %v4971, 4294901760
    %v4973 = vsub.f32 %v4971, %v4972
    %v4974 = vand.u32 %v4973, 4294901760
    %4975 = vmatpush1.msra.mxu0 %v4974
    %4976 = vmatprep.subr.mxu0 0.0
    %v4977 = vand.u32 %v3731, 4294901760
    %v4978 = vsub.f32 %v3731, %v4977
    %v4979 = vand.u32 %v4978, 4294901760
    %v4980 = vsub.f32 %v4978, %v4979
    %v4981 = vand.u32 %v4980, 4294901760
    %4982 = vmatpush1.msra.mxu0 %v4981
    %4983 = vmatprep.subr.mxu0 0.0
    %v4984 = vand.u32 %v3732, 4294901760
    %v4985 = vsub.f32 %v3732, %v4984
    %v4986 = vand.u32 %v4985, 4294901760
    %v4987 = vsub.f32 %v4985, %v4986
    %v4988 = vand.u32 %v4987, 4294901760
    %4989 = vmatpush1.msra.mxu0 %v4988
    %4990 = vmatprep.subr.mxu0 0.0
    %v4991 = vand.u32 %v3733, 4294901760
    %v4992 = vsub.f32 %v3733, %v4991
    %v4993 = vand.u32 %v4992, 4294901760
    %v4994 = vsub.f32 %v4992, %v4993
    %v4995 = vand.u32 %v4994, 4294901760
    %4996 = vmatpush1.msra.mxu0 %v4995
    %4997 = vmatprep.subr.mxu0 0.0
    %v4998 = vand.u32 %v3734, 4294901760
    %v4999 = vsub.f32 %v3734, %v4998
    %v5000 = vand.u32 %v4999, 4294901760
    %v5001 = vsub.f32 %v4999, %v5000
    %v5002 = vand.u32 %v5001, 4294901760
    %5003 = vmatpush1.msra.mxu0 %v5002
    %v5004 = vand.u32 %v3666, 4294901760
    %5005 = vmatprep.mubr.f32.mxu0 %v5004
    %v5006 = vand.u32 %v3665, 4294901760
    %5007 = vmatmul.mubr.f32.gmra.mrb[0].mxu0 %v5006
    %v5008 = vpop.f32.mrb[0].mxu0
    %v5009 = vadd.f32 %v4777, %v5008
    %v5010 = vpop.f32.mrb[0].mxu0
    %5011 = vdwg.mxu0
    %5012 = vmatprep.subr.mxu0 0.0
    %v5013 = vand.u32 %v3703, 4294901760
    %v5014 = vsub.f32 %v3703, %v5013
    %5015 = vmatpush1.msra.mxu0 %v5014
    %5016 = vmatprep.subr.mxu0 0.0
    %v5017 = vand.u32 %v3704, 4294901760
    %v5018 = vsub.f32 %v3704, %v5017
    %5019 = vmatpush1.msra.mxu0 %v5018
    %5020 = vmatprep.subr.mxu0 0.0
    %v5021 = vand.u32 %v3705, 4294901760
    %v5022 = vsub.f32 %v3705, %v5021
    %5023 = vmatpush1.msra.mxu0 %v5022
    %5024 = vmatprep.subr.mxu0 0.0
    %v5025 = vand.u32 %v3706, 4294901760
    %v5026 = vsub.f32 %v3706, %v5025
    %5027 = vmatpush1.msra.mxu0 %v5026
    %5028 = vmatprep.subr.mxu0 0.0
    %v5029 = vand.u32 %v3707, 4294901760
    %v5030 = vsub.f32 %v3707, %v5029
    %5031 = vmatpush1.msra.mxu0 %v5030
    %5032 = vmatprep.subr.mxu0 0.0
    %v5033 = vand.u32 %v3708, 4294901760
    %v5034 = vsub.f32 %v3708, %v5033
    %5035 = vmatpush1.msra.mxu0 %v5034
    %5036 = vmatprep.subr.mxu0 0.0
    %v5037 = vand.u32 %v3709, 4294901760
    %v5038 = vsub.f32 %v3709, %v5037
    %5039 = vmatpush1.msra.mxu0 %v5038
    %5040 = vmatprep.subr.mxu0 0.0
    %v5041 = vand.u32 %v3710, 4294901760
    %v5042 = vsub.f32 %v3710, %v5041
    %5043 = vmatpush1.msra.mxu0 %v5042
    %5044 = vmatprep.subr.mxu0 0.0
    %v5045 = vand.u32 %v3711, 4294901760
    %v5046 = vsub.f32 %v3711, %v5045
    %5047 = vmatpush1.msra.mxu0 %v5046
    %5048 = vmatprep.subr.mxu0 0.0
    %v5049 = vand.u32 %v3712, 4294901760
    %v5050 = vsub.f32 %v3712, %v5049
    %5051 = vmatpush1.msra.mxu0 %v5050
    %5052 = vmatprep.subr.mxu0 0.0
    %v5053 = vand.u32 %v3713, 4294901760
    %v5054 = vsub.f32 %v3713, %v5053
    %5055 = vmatpush1.msra.mxu0 %v5054
    %5056 = vmatprep.subr.mxu0 0.0
    %v5057 = vand.u32 %v3714, 4294901760
    %v5058 = vsub.f32 %v3714, %v5057
    %5059 = vmatpush1.msra.mxu0 %v5058
    %5060 = vmatprep.subr.mxu0 0.0
    %v5061 = vand.u32 %v3715, 4294901760
    %v5062 = vsub.f32 %v3715, %v5061
    %5063 = vmatpush1.msra.mxu0 %v5062
    %5064 = vmatprep.subr.mxu0 0.0
    %v5065 = vand.u32 %v3716, 4294901760
    %v5066 = vsub.f32 %v3716, %v5065
    %5067 = vmatpush1.msra.mxu0 %v5066
    %5068 = vmatprep.subr.mxu0 0.0
    %v5069 = vand.u32 %v3717, 4294901760
    %v5070 = vsub.f32 %v3717, %v5069
    %5071 = vmatpush1.msra.mxu0 %v5070
    %5072 = vmatprep.subr.mxu0 0.0
    %v5073 = vand.u32 %v3718, 4294901760
    %v5074 = vsub.f32 %v3718, %v5073
    %5075 = vmatpush1.msra.mxu0 %v5074
    %5076 = vmatprep.subr.mxu0 0.0
    %v5077 = vand.u32 %v3719, 4294901760
    %v5078 = vsub.f32 %v3719, %v5077
    %5079 = vmatpush1.msra.mxu0 %v5078
    %5080 = vmatprep.subr.mxu0 0.0
    %v5081 = vand.u32 %v3720, 4294901760
    %v5082 = vsub.f32 %v3720, %v5081
    %5083 = vmatpush1.msra.mxu0 %v5082
    %5084 = vmatprep.subr.mxu0 0.0
    %v5085 = vand.u32 %v3721, 4294901760
    %v5086 = vsub.f32 %v3721, %v5085
    %5087 = vmatpush1.msra.mxu0 %v5086
    %5088 = vmatprep.subr.mxu0 0.0
    %v5089 = vand.u32 %v3722, 4294901760
    %v5090 = vsub.f32 %v3722, %v5089
    %5091 = vmatpush1.msra.mxu0 %v5090
    %5092 = vmatprep.subr.mxu0 0.0
    %v5093 = vand.u32 %v3723, 4294901760
    %v5094 = vsub.f32 %v3723, %v5093
    %5095 = vmatpush1.msra.mxu0 %v5094
    %5096 = vmatprep.subr.mxu0 0.0
    %v5097 = vand.u32 %v3724, 4294901760
    %v5098 = vsub.f32 %v3724, %v5097
    %5099 = vmatpush1.msra.mxu0 %v5098
    %5100 = vmatprep.subr.mxu0 0.0
    %v5101 = vand.u32 %v3725, 4294901760
    %v5102 = vsub.f32 %v3725, %v5101
    %5103 = vmatpush1.msra.mxu0 %v5102
    %5104 = vmatprep.subr.mxu0 0.0
    %v5105 = vand.u32 %v3726, 4294901760
    %v5106 = vsub.f32 %v3726, %v5105
    %5107 = vmatpush1.msra.mxu0 %v5106
    %5108 = vmatprep.subr.mxu0 0.0
    %v5109 = vand.u32 %v3727, 4294901760
    %v5110 = vsub.f32 %v3727, %v5109
    %5111 = vmatpush1.msra.mxu0 %v5110
    %5112 = vmatprep.subr.mxu0 0.0
    %v5113 = vand.u32 %v3728, 4294901760
    %v5114 = vsub.f32 %v3728, %v5113
    %5115 = vmatpush1.msra.mxu0 %v5114
    %5116 = vmatprep.subr.mxu0 0.0
    %v5117 = vand.u32 %v3729, 4294901760
    %v5118 = vsub.f32 %v3729, %v5117
    %5119 = vmatpush1.msra.mxu0 %v5118
    %5120 = vmatprep.subr.mxu0 0.0
    %v5121 = vand.u32 %v3730, 4294901760
    %v5122 = vsub.f32 %v3730, %v5121
    %5123 = vmatpush1.msra.mxu0 %v5122
    %5124 = vmatprep.subr.mxu0 0.0
    %v5125 = vand.u32 %v3731, 4294901760
    %v5126 = vsub.f32 %v3731, %v5125
    %5127 = vmatpush1.msra.mxu0 %v5126
    %5128 = vmatprep.subr.mxu0 0.0
    %v5129 = vand.u32 %v3732, 4294901760
    %v5130 = vsub.f32 %v3732, %v5129
    %5131 = vmatpush1.msra.mxu0 %v5130
    %5132 = vmatprep.subr.mxu0 0.0
    %v5133 = vand.u32 %v3733, 4294901760
    %v5134 = vsub.f32 %v3733, %v5133
    %5135 = vmatpush1.msra.mxu0 %v5134
    %5136 = vmatprep.subr.mxu0 0.0
    %v5137 = vand.u32 %v3734, 4294901760
    %v5138 = vsub.f32 %v3734, %v5137
    %5139 = vmatpush1.msra.mxu0 %v5138
    %v5140 = vand.u32 %v3666, 4294901760
    %v5141 = vsub.f32 %v3666, %v5140
    %5142 = vmatprep.mubr.f32.mxu0 %v5141
    %v5143 = vand.u32 %v3665, 4294901760
    %v5144 = vsub.f32 %v3665, %v5143
    %5145 = vmatmul.mubr.f32.gmra.mrb[0].mxu0 %v5144
    %v5146 = vpop.f32.mrb[0].mxu0
    %v5147 = vadd.f32 %v5009, %v5146
    %v5148 = vpop.f32.mrb[0].mxu0
    %5149 = vdwg.mxu0
    %5150 = vmatprep.subr.mxu0 0.0
    %v5151 = vand.u32 %v3703, 4294901760
    %5152 = vmatpush1.msra.mxu0 %v5151
    %5153 = vmatprep.subr.mxu0 0.0
    %v5154 = vand.u32 %v3704, 4294901760
    %5155 = vmatpush1.msra.mxu0 %v5154
    %5156 = vmatprep.subr.mxu0 0.0
    %v5157 = vand.u32 %v3705, 4294901760
    %5158 = vmatpush1.msra.mxu0 %v5157
    %5159 = vmatprep.subr.mxu0 0.0
    %v5160 = vand.u32 %v3706, 4294901760
    %5161 = vmatpush1.msra.mxu0 %v5160
    %5162 = vmatprep.subr.mxu0 0.0
    %v5163 = vand.u32 %v3707, 4294901760
    %5164 = vmatpush1.msra.mxu0 %v5163
    %5165 = vmatprep.subr.mxu0 0.0
    %v5166 = vand.u32 %v3708, 4294901760
    %5167 = vmatpush1.msra.mxu0 %v5166
    %5168 = vmatprep.subr.mxu0 0.0
    %v5169 = vand.u32 %v3709, 4294901760
    %5170 = vmatpush1.msra.mxu0 %v5169
    %5171 = vmatprep.subr.mxu0 0.0
    %v5172 = vand.u32 %v3710, 4294901760
    %5173 = vmatpush1.msra.mxu0 %v5172
    %5174 = vmatprep.subr.mxu0 0.0
    %v5175 = vand.u32 %v3711, 4294901760
    %5176 = vmatpush1.msra.mxu0 %v5175
    %5177 = vmatprep.subr.mxu0 0.0
    %v5178 = vand.u32 %v3712, 4294901760
    %5179 = vmatpush1.msra.mxu0 %v5178
    %5180 = vmatprep.subr.mxu0 0.0
    %v5181 = vand.u32 %v3713, 4294901760
    %5182 = vmatpush1.msra.mxu0 %v5181
    %5183 = vmatprep.subr.mxu0 0.0
    %v5184 = vand.u32 %v3714, 4294901760
    %5185 = vmatpush1.msra.mxu0 %v5184
    %5186 = vmatprep.subr.mxu0 0.0
    %v5187 = vand.u32 %v3715, 4294901760
    %5188 = vmatpush1.msra.mxu0 %v5187
    %5189 = vmatprep.subr.mxu0 0.0
    %v5190 = vand.u32 %v3716, 4294901760
    %5191 = vmatpush1.msra.mxu0 %v5190
    %5192 = vmatprep.subr.mxu0 0.0
    %v5193 = vand.u32 %v3717, 4294901760
    %5194 = vmatpush1.msra.mxu0 %v5193
    %5195 = vmatprep.subr.mxu0 0.0
    %v5196 = vand.u32 %v3718, 4294901760
    %5197 = vmatpush1.msra.mxu0 %v5196
    %5198 = vmatprep.subr.mxu0 0.0
    %v5199 = vand.u32 %v3719, 4294901760
    %5200 = vmatpush1.msra.mxu0 %v5199
    %5201 = vmatprep.subr.mxu0 0.0
    %v5202 = vand.u32 %v3720, 4294901760
    %5203 = vmatpush1.msra.mxu0 %v5202
    %5204 = vmatprep.subr.mxu0 0.0
    %v5205 = vand.u32 %v3721, 4294901760
    %5206 = vmatpush1.msra.mxu0 %v5205
    %5207 = vmatprep.subr.mxu0 0.0
    %v5208 = vand.u32 %v3722, 4294901760
    %5209 = vmatpush1.msra.mxu0 %v5208
    %5210 = vmatprep.subr.mxu0 0.0
    %v5211 = vand.u32 %v3723, 4294901760
    %5212 = vmatpush1.msra.mxu0 %v5211
    %5213 = vmatprep.subr.mxu0 0.0
    %v5214 = vand.u32 %v3724, 4294901760
    %5215 = vmatpush1.msra.mxu0 %v5214
    %5216 = vmatprep.subr.mxu0 0.0
    %v5217 = vand.u32 %v3725, 4294901760
    %5218 = vmatpush1.msra.mxu0 %v5217
    %5219 = vmatprep.subr.mxu0 0.0
    %v5220 = vand.u32 %v3726, 4294901760
    %5221 = vmatpush1.msra.mxu0 %v5220
    %5222 = vmatprep.subr.mxu0 0.0
    %v5223 = vand.u32 %v3727, 4294901760
    %5224 = vmatpush1.msra.mxu0 %v5223
    %5225 = vmatprep.subr.mxu0 0.0
    %v5226 = vand.u32 %v3728, 4294901760
    %5227 = vmatpush1.msra.mxu0 %v5226
    %5228 = vmatprep.subr.mxu0 0.0
    %v5229 = vand.u32 %v3729, 4294901760
    %5230 = vmatpush1.msra.mxu0 %v5229
    %5231 = vmatprep.subr.mxu0 0.0
    %v5232 = vand.u32 %v3730, 4294901760
    %5233 = vmatpush1.msra.mxu0 %v5232
    %5234 = vmatprep.subr.mxu0 0.0
    %v5235 = vand.u32 %v3731, 4294901760
    %5236 = vmatpush1.msra.mxu0 %v5235
    %5237 = vmatprep.subr.mxu0 0.0
    %v5238 = vand.u32 %v3732, 4294901760
    %5239 = vmatpush1.msra.mxu0 %v5238
    %5240 = vmatprep.subr.mxu0 0.0
    %v5241 = vand.u32 %v3733, 4294901760
    %5242 = vmatpush1.msra.mxu0 %v5241
    %5243 = vmatprep.subr.mxu0 0.0
    %v5244 = vand.u32 %v3734, 4294901760
    %5245 = vmatpush1.msra.mxu0 %v5244
    %v5246 = vand.u32 %v3666, 4294901760
    %v5247 = vsub.f32 %v3666, %v5246
    %v5248 = vand.u32 %v5247, 4294901760
    %5249 = vmatprep.mubr.f32.mxu0 %v5248
    %v5250 = vand.u32 %v3665, 4294901760
    %v5251 = vsub.f32 %v3665, %v5250
    %v5252 = vand.u32 %v5251, 4294901760
    %5253 = vmatmul.mubr.f32.gmra.mrb[0].mxu0 %v5252
    %v5254 = vpop.f32.mrb[0].mxu0
    %v5255 = vadd.f32 %v5147, %v5254
    %v5256 = vpop.f32.mrb[0].mxu0
    %5257 = vdwg.mxu0
    %5258 = vmatprep.subr.mxu0 0.0
    %v5259 = vand.u32 %v3703, 4294901760
    %v5260 = vsub.f32 %v3703, %v5259
    %v5261 = vand.u32 %v5260, 4294901760
    %5262 = vmatpush1.msra.mxu0 %v5261
    %5263 = vmatprep.subr.mxu0 0.0
    %v5264 = vand.u32 %v3704, 4294901760
    %v5265 = vsub.f32 %v3704, %v5264
    %v5266 = vand.u32 %v5265, 4294901760
    %5267 = vmatpush1.msra.mxu0 %v5266
    %5268 = vmatprep.subr.mxu0 0.0
    %v5269 = vand.u32 %v3705, 4294901760
    %v5270 = vsub.f32 %v3705, %v5269
    %v5271 = vand.u32 %v5270, 4294901760
    %5272 = vmatpush1.msra.mxu0 %v5271
    %5273 = vmatprep.subr.mxu0 0.0
    %v5274 = vand.u32 %v3706, 4294901760
    %v5275 = vsub.f32 %v3706, %v5274
    %v5276 = vand.u32 %v5275, 4294901760
    %5277 = vmatpush1.msra.mxu0 %v5276
    %5278 = vmatprep.subr.mxu0 0.0
    %v5279 = vand.u32 %v3707, 4294901760
    %v5280 = vsub.f32 %v3707, %v5279
    %v5281 = vand.u32 %v5280, 4294901760
    %5282 = vmatpush1.msra.mxu0 %v5281
    %5283 = vmatprep.subr.mxu0 0.0
    %v5284 = vand.u32 %v3708, 4294901760
    %v5285 = vsub.f32 %v3708, %v5284
    %v5286 = vand.u32 %v5285, 4294901760
    %5287 = vmatpush1.msra.mxu0 %v5286
    %5288 = vmatprep.subr.mxu0 0.0
    %v5289 = vand.u32 %v3709, 4294901760
    %v5290 = vsub.f32 %v3709, %v5289
    %v5291 = vand.u32 %v5290, 4294901760
    %5292 = vmatpush1.msra.mxu0 %v5291
    %5293 = vmatprep.subr.mxu0 0.0
    %v5294 = vand.u32 %v3710, 4294901760
    %v5295 = vsub.f32 %v3710, %v5294
    %v5296 = vand.u32 %v5295, 4294901760
    %5297 = vmatpush1.msra.mxu0 %v5296
    %5298 = vmatprep.subr.mxu0 0.0
    %v5299 = vand.u32 %v3711, 4294901760
    %v5300 = vsub.f32 %v3711, %v5299
    %v5301 = vand.u32 %v5300, 4294901760
    %5302 = vmatpush1.msra.mxu0 %v5301
    %5303 = vmatprep.subr.mxu0 0.0
    %v5304 = vand.u32 %v3712, 4294901760
    %v5305 = vsub.f32 %v3712, %v5304
    %v5306 = vand.u32 %v5305, 4294901760
    %5307 = vmatpush1.msra.mxu0 %v5306
    %5308 = vmatprep.subr.mxu0 0.0
    %v5309 = vand.u32 %v3713, 4294901760
    %v5310 = vsub.f32 %v3713, %v5309
    %v5311 = vand.u32 %v5310, 4294901760
    %5312 = vmatpush1.msra.mxu0 %v5311
    %5313 = vmatprep.subr.mxu0 0.0
    %v5314 = vand.u32 %v3714, 4294901760
    %v5315 = vsub.f32 %v3714, %v5314
    %v5316 = vand.u32 %v5315, 4294901760
    %5317 = vmatpush1.msra.mxu0 %v5316
    %5318 = vmatprep.subr.mxu0 0.0
    %v5319 = vand.u32 %v3715, 4294901760
    %v5320 = vsub.f32 %v3715, %v5319
    %v5321 = vand.u32 %v5320, 4294901760
    %5322 = vmatpush1.msra.mxu0 %v5321
    %5323 = vmatprep.subr.mxu0 0.0
    %v5324 = vand.u32 %v3716, 4294901760
    %v5325 = vsub.f32 %v3716, %v5324
    %v5326 = vand.u32 %v5325, 4294901760
    %5327 = vmatpush1.msra.mxu0 %v5326
    %5328 = vmatprep.subr.mxu0 0.0
    %v5329 = vand.u32 %v3717, 4294901760
    %v5330 = vsub.f32 %v3717, %v5329
    %v5331 = vand.u32 %v5330, 4294901760
    %5332 = vmatpush1.msra.mxu0 %v5331
    %5333 = vmatprep.subr.mxu0 0.0
    %v5334 = vand.u32 %v3718, 4294901760
    %v5335 = vsub.f32 %v3718, %v5334
    %v5336 = vand.u32 %v5335, 4294901760
    %5337 = vmatpush1.msra.mxu0 %v5336
    %5338 = vmatprep.subr.mxu0 0.0
    %v5339 = vand.u32 %v3719, 4294901760
    %v5340 = vsub.f32 %v3719, %v5339
    %v5341 = vand.u32 %v5340, 4294901760
    %5342 = vmatpush1.msra.mxu0 %v5341
    %5343 = vmatprep.subr.mxu0 0.0
    %v5344 = vand.u32 %v3720, 4294901760
    %v5345 = vsub.f32 %v3720, %v5344
    %v5346 = vand.u32 %v5345, 4294901760
    %5347 = vmatpush1.msra.mxu0 %v5346
    %5348 = vmatprep.subr.mxu0 0.0
    %v5349 = vand.u32 %v3721, 4294901760
    %v5350 = vsub.f32 %v3721, %v5349
    %v5351 = vand.u32 %v5350, 4294901760
    %5352 = vmatpush1.msra.mxu0 %v5351
    %5353 = vmatprep.subr.mxu0 0.0
    %v5354 = vand.u32 %v3722, 4294901760
    %v5355 = vsub.f32 %v3722, %v5354
    %v5356 = vand.u32 %v5355, 4294901760
    %5357 = vmatpush1.msra.mxu0 %v5356
    %5358 = vmatprep.subr.mxu0 0.0
    %v5359 = vand.u32 %v3723, 4294901760
    %v5360 = vsub.f32 %v3723, %v5359
    %v5361 = vand.u32 %v5360, 4294901760
    %5362 = vmatpush1.msra.mxu0 %v5361
    %5363 = vmatprep.subr.mxu0 0.0
    %v5364 = vand.u32 %v3724, 4294901760
    %v5365 = vsub.f32 %v3724, %v5364
    %v5366 = vand.u32 %v5365, 4294901760
    %5367 = vmatpush1.msra.mxu0 %v5366
    %5368 = vmatprep.subr.mxu0 0.0
    %v5369 = vand.u32 %v3725, 4294901760
    %v5370 = vsub.f32 %v3725, %v5369
    %v5371 = vand.u32 %v5370, 4294901760
    %5372 = vmatpush1.msra.mxu0 %v5371
    %5373 = vmatprep.subr.mxu0 0.0
    %v5374 = vand.u32 %v3726, 4294901760
    %v5375 = vsub.f32 %v3726, %v5374
    %v5376 = vand.u32 %v5375, 4294901760
    %5377 = vmatpush1.msra.mxu0 %v5376
    %5378 = vmatprep.subr.mxu0 0.0
    %v5379 = vand.u32 %v3727, 4294901760
    %v5380 = vsub.f32 %v3727, %v5379
    %v5381 = vand.u32 %v5380, 4294901760
    %5382 = vmatpush1.msra.mxu0 %v5381
    %5383 = vmatprep.subr.mxu0 0.0
    %v5384 = vand.u32 %v3728, 4294901760
    %v5385 = vsub.f32 %v3728, %v5384
    %v5386 = vand.u32 %v5385, 4294901760
    %5387 = vmatpush1.msra.mxu0 %v5386
    %5388 = vmatprep.subr.mxu0 0.0
    %v5389 = vand.u32 %v3729, 4294901760
    %v5390 = vsub.f32 %v3729, %v5389
    %v5391 = vand.u32 %v5390, 4294901760
    %5392 = vmatpush1.msra.mxu0 %v5391
    %5393 = vmatprep.subr.mxu0 0.0
    %v5394 = vand.u32 %v3730, 4294901760
    %v5395 = vsub.f32 %v3730, %v5394
    %v5396 = vand.u32 %v5395, 4294901760
    %5397 = vmatpush1.msra.mxu0 %v5396
    %5398 = vmatprep.subr.mxu0 0.0
    %v5399 = vand.u32 %v3731, 4294901760
    %v5400 = vsub.f32 %v3731, %v5399
    %v5401 = vand.u32 %v5400, 4294901760
    %5402 = vmatpush1.msra.mxu0 %v5401
    %5403 = vmatprep.subr.mxu0 0.0
    %v5404 = vand.u32 %v3732, 4294901760
    %v5405 = vsub.f32 %v3732, %v5404
    %v5406 = vand.u32 %v5405, 4294901760
    %5407 = vmatpush1.msra.mxu0 %v5406
    %5408 = vmatprep.subr.mxu0 0.0
    %v5409 = vand.u32 %v3733, 4294901760
    %v5410 = vsub.f32 %v3733, %v5409
    %v5411 = vand.u32 %v5410, 4294901760
    %5412 = vmatpush1.msra.mxu0 %v5411
    %5413 = vmatprep.subr.mxu0 0.0
    %v5414 = vand.u32 %v3734, 4294901760
    %v5415 = vsub.f32 %v3734, %v5414
    %v5416 = vand.u32 %v5415, 4294901760
    %5417 = vmatpush1.msra.mxu0 %v5416
    %v5418 = vand.u32 %v3666, 4294901760
    %5419 = vmatprep.mubr.f32.mxu0 %v5418
    %v5420 = vand.u32 %v3665, 4294901760
    %5421 = vmatmul.mubr.f32.gmra.mrb[0].mxu0 %v5420
    %v5422 = vpop.f32.mrb[0].mxu0
    %v5423 = vadd.f32 %v5255, %v5422
    %v5424 = vpop.f32.mrb[0].mxu0
    %5425 = vdwg.mxu0
    %5426 = vmatprep.subr.mxu0 0.0
    %v5427 = vand.u32 %v3703, 4294901760
    %5428 = vmatpush1.msra.mxu0 %v5427
    %5429 = vmatprep.subr.mxu0 0.0
    %v5430 = vand.u32 %v3704, 4294901760
    %5431 = vmatpush1.msra.mxu0 %v5430
    %5432 = vmatprep.subr.mxu0 0.0
    %v5433 = vand.u32 %v3705, 4294901760
    %5434 = vmatpush1.msra.mxu0 %v5433
    %5435 = vmatprep.subr.mxu0 0.0
    %v5436 = vand.u32 %v3706, 4294901760
    %5437 = vmatpush1.msra.mxu0 %v5436
    %5438 = vmatprep.subr.mxu0 0.0
    %v5439 = vand.u32 %v3707, 4294901760
    %5440 = vmatpush1.msra.mxu0 %v5439
    %5441 = vmatprep.subr.mxu0 0.0
    %v5442 = vand.u32 %v3708, 4294901760
    %5443 = vmatpush1.msra.mxu0 %v5442
    %5444 = vmatprep.subr.mxu0 0.0
    %v5445 = vand.u32 %v3709, 4294901760
    %5446 = vmatpush1.msra.mxu0 %v5445
    %5447 = vmatprep.subr.mxu0 0.0
    %v5448 = vand.u32 %v3710, 4294901760
    %5449 = vmatpush1.msra.mxu0 %v5448
    %5450 = vmatprep.subr.mxu0 0.0
    %v5451 = vand.u32 %v3711, 4294901760
    %5452 = vmatpush1.msra.mxu0 %v5451
    %5453 = vmatprep.subr.mxu0 0.0
    %v5454 = vand.u32 %v3712, 4294901760
    %5455 = vmatpush1.msra.mxu0 %v5454
    %5456 = vmatprep.subr.mxu0 0.0
    %v5457 = vand.u32 %v3713, 4294901760
    %5458 = vmatpush1.msra.mxu0 %v5457
    %5459 = vmatprep.subr.mxu0 0.0
    %v5460 = vand.u32 %v3714, 4294901760
    %5461 = vmatpush1.msra.mxu0 %v5460
    %5462 = vmatprep.subr.mxu0 0.0
    %v5463 = vand.u32 %v3715, 4294901760
    %5464 = vmatpush1.msra.mxu0 %v5463
    %5465 = vmatprep.subr.mxu0 0.0
    %v5466 = vand.u32 %v3716, 4294901760
    %5467 = vmatpush1.msra.mxu0 %v5466
    %5468 = vmatprep.subr.mxu0 0.0
    %v5469 = vand.u32 %v3717, 4294901760
    %5470 = vmatpush1.msra.mxu0 %v5469
    %5471 = vmatprep.subr.mxu0 0.0
    %v5472 = vand.u32 %v3718, 4294901760
    %5473 = vmatpush1.msra.mxu0 %v5472
    %5474 = vmatprep.subr.mxu0 0.0
    %v5475 = vand.u32 %v3719, 4294901760
    %5476 = vmatpush1.msra.mxu0 %v5475
    %5477 = vmatprep.subr.mxu0 0.0
    %v5478 = vand.u32 %v3720, 4294901760
    %5479 = vmatpush1.msra.mxu0 %v5478
    %5480 = vmatprep.subr.mxu0 0.0
    %v5481 = vand.u32 %v3721, 4294901760
    %5482 = vmatpush1.msra.mxu0 %v5481
    %5483 = vmatprep.subr.mxu0 0.0
    %v5484 = vand.u32 %v3722, 4294901760
    %5485 = vmatpush1.msra.mxu0 %v5484
    %5486 = vmatprep.subr.mxu0 0.0
    %v5487 = vand.u32 %v3723, 4294901760
    %5488 = vmatpush1.msra.mxu0 %v5487
    %5489 = vmatprep.subr.mxu0 0.0
    %v5490 = vand.u32 %v3724, 4294901760
    %5491 = vmatpush1.msra.mxu0 %v5490
    %5492 = vmatprep.subr.mxu0 0.0
    %v5493 = vand.u32 %v3725, 4294901760
    %5494 = vmatpush1.msra.mxu0 %v5493
    %5495 = vmatprep.subr.mxu0 0.0
    %v5496 = vand.u32 %v3726, 4294901760
    %5497 = vmatpush1.msra.mxu0 %v5496
    %5498 = vmatprep.subr.mxu0 0.0
    %v5499 = vand.u32 %v3727, 4294901760
    %5500 = vmatpush1.msra.mxu0 %v5499
    %5501 = vmatprep.subr.mxu0 0.0
    %v5502 = vand.u32 %v3728, 4294901760
    %5503 = vmatpush1.msra.mxu0 %v5502
    %5504 = vmatprep.subr.mxu0 0.0
    %v5505 = vand.u32 %v3729, 4294901760
    %5506 = vmatpush1.msra.mxu0 %v5505
    %5507 = vmatprep.subr.mxu0 0.0
    %v5508 = vand.u32 %v3730, 4294901760
    %5509 = vmatpush1.msra.mxu0 %v5508
    %5510 = vmatprep.subr.mxu0 0.0
    %v5511 = vand.u32 %v3731, 4294901760
    %5512 = vmatpush1.msra.mxu0 %v5511
    %5513 = vmatprep.subr.mxu0 0.0
    %v5514 = vand.u32 %v3732, 4294901760
    %5515 = vmatpush1.msra.mxu0 %v5514
    %5516 = vmatprep.subr.mxu0 0.0
    %v5517 = vand.u32 %v3733, 4294901760
    %5518 = vmatpush1.msra.mxu0 %v5517
    %5519 = vmatprep.subr.mxu0 0.0
    %v5520 = vand.u32 %v3734, 4294901760
    %5521 = vmatpush1.msra.mxu0 %v5520
    %v5522 = vand.u32 %v3666, 4294901760
    %5523 = vmatprep.mubr.f32.mxu0 %v5522
    %v5524 = vand.u32 %v3665, 4294901760
    %5525 = vmatmul.mubr.f32.gmra.mrb[0].mxu0 %v5524
    %v5526 = vpop.f32.mrb[0].mxu0
    %v5527 = vadd.f32 %v5423, %v5526
    %v5528 = vpop.f32.mrb[0].mxu0
    %5529 = vdwg.mxu0
    %5530 = vmatprep.subr.mxu0 0.0
    %v5531 = vand.u32 %v3735, 4294901760
    %5532 = vmatpush1.msra.mxu0 %v5531
    %5533 = vmatprep.subr.mxu0 0.0
    %v5534 = vand.u32 %v3736, 4294901760
    %5535 = vmatpush1.msra.mxu0 %v5534
    %5536 = vmatprep.subr.mxu0 0.0
    %v5537 = vand.u32 %v3737, 4294901760
    %5538 = vmatpush1.msra.mxu0 %v5537
    %5539 = vmatprep.subr.mxu0 0.0
    %v5540 = vand.u32 %v3738, 4294901760
    %5541 = vmatpush1.msra.mxu0 %v5540
    %5542 = vmatprep.subr.mxu0 0.0
    %v5543 = vand.u32 %v3739, 4294901760
    %5544 = vmatpush1.msra.mxu0 %v5543
    %5545 = vmatprep.subr.mxu0 0.0
    %v5546 = vand.u32 %v3740, 4294901760
    %5547 = vmatpush1.msra.mxu0 %v5546
    %5548 = vmatprep.subr.mxu0 0.0
    %v5549 = vand.u32 %v3741, 4294901760
    %5550 = vmatpush1.msra.mxu0 %v5549
    %5551 = vmatprep.subr.mxu0 0.0
    %v5552 = vand.u32 %v3742, 4294901760
    %5553 = vmatpush1.msra.mxu0 %v5552
    %5554 = vmatprep.subr.mxu0 0.0
    %v5555 = vand.u32 %v3743, 4294901760
    %5556 = vmatpush1.msra.mxu0 %v5555
    %5557 = vmatprep.subr.mxu0 0.0
    %v5558 = vand.u32 %v3744, 4294901760
    %5559 = vmatpush1.msra.mxu0 %v5558
    %5560 = vmatprep.subr.mxu0 0.0
    %v5561 = vand.u32 %v3745, 4294901760
    %5562 = vmatpush1.msra.mxu0 %v5561
    %5563 = vmatprep.subr.mxu0 0.0
    %v5564 = vand.u32 %v3746, 4294901760
    %5565 = vmatpush1.msra.mxu0 %v5564
    %5566 = vmatprep.subr.mxu0 0.0
    %v5567 = vand.u32 %v3747, 4294901760
    %5568 = vmatpush1.msra.mxu0 %v5567
    %5569 = vmatprep.subr.mxu0 0.0
    %v5570 = vand.u32 %v3748, 4294901760
    %5571 = vmatpush1.msra.mxu0 %v5570
    %5572 = vmatprep.subr.mxu0 0.0
    %v5573 = vand.u32 %v3749, 4294901760
    %5574 = vmatpush1.msra.mxu0 %v5573
    %5575 = vmatprep.subr.mxu0 0.0
    %v5576 = vand.u32 %v3750, 4294901760
    %5577 = vmatpush1.msra.mxu0 %v5576
    %5578 = vmatprep.subr.mxu0 0.0
    %v5579 = vand.u32 %v3751, 4294901760
    %5580 = vmatpush1.msra.mxu0 %v5579
    %5581 = vmatprep.subr.mxu0 0.0
    %v5582 = vand.u32 %v3752, 4294901760
    %5583 = vmatpush1.msra.mxu0 %v5582
    %5584 = vmatprep.subr.mxu0 0.0
    %v5585 = vand.u32 %v3753, 4294901760
    %5586 = vmatpush1.msra.mxu0 %v5585
    %5587 = vmatprep.subr.mxu0 0.0
    %v5588 = vand.u32 %v3754, 4294901760
    %5589 = vmatpush1.msra.mxu0 %v5588
    %5590 = vmatprep.subr.mxu0 0.0
    %v5591 = vand.u32 %v3755, 4294901760
    %5592 = vmatpush1.msra.mxu0 %v5591
    %5593 = vmatprep.subr.mxu0 0.0
    %v5594 = vand.u32 %v3756, 4294901760
    %5595 = vmatpush1.msra.mxu0 %v5594
    %5596 = vmatprep.subr.mxu0 0.0
    %v5597 = vand.u32 %v3757, 4294901760
    %5598 = vmatpush1.msra.mxu0 %v5597
    %5599 = vmatprep.subr.mxu0 0.0
    %v5600 = vand.u32 %v3758, 4294901760
    %5601 = vmatpush1.msra.mxu0 %v5600
    %5602 = vmatprep.subr.mxu0 0.0
    %v5603 = vand.u32 %v3759, 4294901760
    %5604 = vmatpush1.msra.mxu0 %v5603
    %5605 = vmatprep.subr.mxu0 0.0
    %v5606 = vand.u32 %v3760, 4294901760
    %5607 = vmatpush1.msra.mxu0 %v5606
    %5608 = vmatprep.subr.mxu0 0.0
    %v5609 = vand.u32 %v3761, 4294901760
    %5610 = vmatpush1.msra.mxu0 %v5609
    %5611 = vmatprep.subr.mxu0 0.0
    %v5612 = vand.u32 %v3762, 4294901760
    %5613 = vmatpush1.msra.mxu0 %v5612
    %5614 = vmatprep.subr.mxu0 0.0
    %v5615 = vand.u32 %v3763, 4294901760
    %5616 = vmatpush1.msra.mxu0 %v5615
    %5617 = vmatprep.subr.mxu0 0.0
    %v5618 = vand.u32 %v3764, 4294901760
    %5619 = vmatpush1.msra.mxu0 %v5618
    %5620 = vmatprep.subr.mxu0 0.0
    %v5621 = vand.u32 %v3765, 4294901760
    %5622 = vmatpush1.msra.mxu0 %v5621
    %5623 = vmatprep.subr.mxu0 0.0
    %v5624 = vand.u32 %v3766, 4294901760
    %5625 = vmatpush1.msra.mxu0 %v5624
    %v5626 = vand.u32 %v3668, 4294901760
    %v5627 = vsub.f32 %v3668, %v5626
    %v5628 = vand.u32 %v5627, 4294901760
    %v5629 = vsub.f32 %v5627, %v5628
    %v5630 = vand.u32 %v5629, 4294901760
    %5631 = vmatprep.mubr.f32.mxu0 %v5630
    %v5632 = vand.u32 %v3667, 4294901760
    %v5633 = vsub.f32 %v3667, %v5632
    %v5634 = vand.u32 %v5633, 4294901760
    %v5635 = vsub.f32 %v5633, %v5634
    %v5636 = vand.u32 %v5635, 4294901760
    %5637 = vmatmul.mubr.f32.gmra.mrb[0].mxu0 %v5636
    %v5638 = vpop.f32.mrb[0].mxu0
    %v5639 = vadd.f32 %v5527, %v5638
    %v5640 = vpop.f32.mrb[0].mxu0
    %5641 = vdwg.mxu0
    %5642 = vmatprep.subr.mxu0 0.0
    %v5643 = vand.u32 %v3735, 4294901760
    %v5644 = vsub.f32 %v3735, %v5643
    %v5645 = vand.u32 %v5644, 4294901760
    %v5646 = vsub.f32 %v5644, %v5645
    %v5647 = vand.u32 %v5646, 4294901760
    %5648 = vmatpush1.msra.mxu0 %v5647
    %5649 = vmatprep.subr.mxu0 0.0
    %v5650 = vand.u32 %v3736, 4294901760
    %v5651 = vsub.f32 %v3736, %v5650
    %v5652 = vand.u32 %v5651, 4294901760
    %v5653 = vsub.f32 %v5651, %v5652
    %v5654 = vand.u32 %v5653, 4294901760
    %5655 = vmatpush1.msra.mxu0 %v5654
    %5656 = vmatprep.subr.mxu0 0.0
    %v5657 = vand.u32 %v3737, 4294901760
    %v5658 = vsub.f32 %v3737, %v5657
    %v5659 = vand.u32 %v5658, 4294901760
    %v5660 = vsub.f32 %v5658, %v5659
    %v5661 = vand.u32 %v5660, 4294901760
    %5662 = vmatpush1.msra.mxu0 %v5661
    %5663 = vmatprep.subr.mxu0 0.0
    %v5664 = vand.u32 %v3738, 4294901760
    %v5665 = vsub.f32 %v3738, %v5664
    %v5666 = vand.u32 %v5665, 4294901760
    %v5667 = vsub.f32 %v5665, %v5666
    %v5668 = vand.u32 %v5667, 4294901760
    %5669 = vmatpush1.msra.mxu0 %v5668
    %5670 = vmatprep.subr.mxu0 0.0
    %v5671 = vand.u32 %v3739, 4294901760
    %v5672 = vsub.f32 %v3739, %v5671
    %v5673 = vand.u32 %v5672, 4294901760
    %v5674 = vsub.f32 %v5672, %v5673
    %v5675 = vand.u32 %v5674, 4294901760
    %5676 = vmatpush1.msra.mxu0 %v5675
    %5677 = vmatprep.subr.mxu0 0.0
    %v5678 = vand.u32 %v3740, 4294901760
    %v5679 = vsub.f32 %v3740, %v5678
    %v5680 = vand.u32 %v5679, 4294901760
    %v5681 = vsub.f32 %v5679, %v5680
    %v5682 = vand.u32 %v5681, 4294901760
    %5683 = vmatpush1.msra.mxu0 %v5682
    %5684 = vmatprep.subr.mxu0 0.0
    %v5685 = vand.u32 %v3741, 4294901760
    %v5686 = vsub.f32 %v3741, %v5685
    %v5687 = vand.u32 %v5686, 4294901760
    %v5688 = vsub.f32 %v5686, %v5687
    %v5689 = vand.u32 %v5688, 4294901760
    %5690 = vmatpush1.msra.mxu0 %v5689
    %5691 = vmatprep.subr.mxu0 0.0
    %v5692 = vand.u32 %v3742, 4294901760
    %v5693 = vsub.f32 %v3742, %v5692
    %v5694 = vand.u32 %v5693, 4294901760
    %v5695 = vsub.f32 %v5693, %v5694
    %v5696 = vand.u32 %v5695, 4294901760
    %5697 = vmatpush1.msra.mxu0 %v5696
    %5698 = vmatprep.subr.mxu0 0.0
    %v5699 = vand.u32 %v3743, 4294901760
    %v5700 = vsub.f32 %v3743, %v5699
    %v5701 = vand.u32 %v5700, 4294901760
    %v5702 = vsub.f32 %v5700, %v5701
    %v5703 = vand.u32 %v5702, 4294901760
    %5704 = vmatpush1.msra.mxu0 %v5703
    %5705 = vmatprep.subr.mxu0 0.0
    %v5706 = vand.u32 %v3744, 4294901760
    %v5707 = vsub.f32 %v3744, %v5706
    %v5708 = vand.u32 %v5707, 4294901760
    %v5709 = vsub.f32 %v5707, %v5708
    %v5710 = vand.u32 %v5709, 4294901760
    %5711 = vmatpush1.msra.mxu0 %v5710
    %5712 = vmatprep.subr.mxu0 0.0
    %v5713 = vand.u32 %v3745, 4294901760
    %v5714 = vsub.f32 %v3745, %v5713
    %v5715 = vand.u32 %v5714, 4294901760
    %v5716 = vsub.f32 %v5714, %v5715
    %v5717 = vand.u32 %v5716, 4294901760
    %5718 = vmatpush1.msra.mxu0 %v5717
    %5719 = vmatprep.subr.mxu0 0.0
    %v5720 = vand.u32 %v3746, 4294901760
    %v5721 = vsub.f32 %v3746, %v5720
    %v5722 = vand.u32 %v5721, 4294901760
    %v5723 = vsub.f32 %v5721, %v5722
    %v5724 = vand.u32 %v5723, 4294901760
    %5725 = vmatpush1.msra.mxu0 %v5724
    %5726 = vmatprep.subr.mxu0 0.0
    %v5727 = vand.u32 %v3747, 4294901760
    %v5728 = vsub.f32 %v3747, %v5727
    %v5729 = vand.u32 %v5728, 4294901760
    %v5730 = vsub.f32 %v5728, %v5729
    %v5731 = vand.u32 %v5730, 4294901760
    %5732 = vmatpush1.msra.mxu0 %v5731
    %5733 = vmatprep.subr.mxu0 0.0
    %v5734 = vand.u32 %v3748, 4294901760
    %v5735 = vsub.f32 %v3748, %v5734
    %v5736 = vand.u32 %v5735, 4294901760
    %v5737 = vsub.f32 %v5735, %v5736
    %v5738 = vand.u32 %v5737, 4294901760
    %5739 = vmatpush1.msra.mxu0 %v5738
    %5740 = vmatprep.subr.mxu0 0.0
    %v5741 = vand.u32 %v3749, 4294901760
    %v5742 = vsub.f32 %v3749, %v5741
    %v5743 = vand.u32 %v5742, 4294901760
    %v5744 = vsub.f32 %v5742, %v5743
    %v5745 = vand.u32 %v5744, 4294901760
    %5746 = vmatpush1.msra.mxu0 %v5745
    %5747 = vmatprep.subr.mxu0 0.0
    %v5748 = vand.u32 %v3750, 4294901760
    %v5749 = vsub.f32 %v3750, %v5748
    %v5750 = vand.u32 %v5749, 4294901760
    %v5751 = vsub.f32 %v5749, %v5750
    %v5752 = vand.u32 %v5751, 4294901760
    %5753 = vmatpush1.msra.mxu0 %v5752
    %5754 = vmatprep.subr.mxu0 0.0
    %v5755 = vand.u32 %v3751, 4294901760
    %v5756 = vsub.f32 %v3751, %v5755
    %v5757 = vand.u32 %v5756, 4294901760
    %v5758 = vsub.f32 %v5756, %v5757
    %v5759 = vand.u32 %v5758, 4294901760
    %5760 = vmatpush1.msra.mxu0 %v5759
    %5761 = vmatprep.subr.mxu0 0.0
    %v5762 = vand.u32 %v3752, 4294901760
    %v5763 = vsub.f32 %v3752, %v5762
    %v5764 = vand.u32 %v5763, 4294901760
    %v5765 = vsub.f32 %v5763, %v5764
    %v5766 = vand.u32 %v5765, 4294901760
    %5767 = vmatpush1.msra.mxu0 %v5766
    %5768 = vmatprep.subr.mxu0 0.0
    %v5769 = vand.u32 %v3753, 4294901760
    %v5770 = vsub.f32 %v3753, %v5769
    %v5771 = vand.u32 %v5770, 4294901760
    %v5772 = vsub.f32 %v5770, %v5771
    %v5773 = vand.u32 %v5772, 4294901760
    %5774 = vmatpush1.msra.mxu0 %v5773
    %5775 = vmatprep.subr.mxu0 0.0
    %v5776 = vand.u32 %v3754, 4294901760
    %v5777 = vsub.f32 %v3754, %v5776
    %v5778 = vand.u32 %v5777, 4294901760
    %v5779 = vsub.f32 %v5777, %v5778
    %v5780 = vand.u32 %v5779, 4294901760
    %5781 = vmatpush1.msra.mxu0 %v5780
    %5782 = vmatprep.subr.mxu0 0.0
    %v5783 = vand.u32 %v3755, 4294901760
    %v5784 = vsub.f32 %v3755, %v5783
    %v5785 = vand.u32 %v5784, 4294901760
    %v5786 = vsub.f32 %v5784, %v5785
    %v5787 = vand.u32 %v5786, 4294901760
    %5788 = vmatpush1.msra.mxu0 %v5787
    %5789 = vmatprep.subr.mxu0 0.0
    %v5790 = vand.u32 %v3756, 4294901760
    %v5791 = vsub.f32 %v3756, %v5790
    %v5792 = vand.u32 %v5791, 4294901760
    %v5793 = vsub.f32 %v5791, %v5792
    %v5794 = vand.u32 %v5793, 4294901760
    %5795 = vmatpush1.msra.mxu0 %v5794
    %5796 = vmatprep.subr.mxu0 0.0
    %v5797 = vand.u32 %v3757, 4294901760
    %v5798 = vsub.f32 %v3757, %v5797
    %v5799 = vand.u32 %v5798, 4294901760
    %v5800 = vsub.f32 %v5798, %v5799
    %v5801 = vand.u32 %v5800, 4294901760
    %5802 = vmatpush1.msra.mxu0 %v5801
    %5803 = vmatprep.subr.mxu0 0.0
    %v5804 = vand.u32 %v3758, 4294901760
    %v5805 = vsub.f32 %v3758, %v5804
    %v5806 = vand.u32 %v5805, 4294901760
    %v5807 = vsub.f32 %v5805, %v5806
    %v5808 = vand.u32 %v5807, 4294901760
    %5809 = vmatpush1.msra.mxu0 %v5808
    %5810 = vmatprep.subr.mxu0 0.0
    %v5811 = vand.u32 %v3759, 4294901760
    %v5812 = vsub.f32 %v3759, %v5811
    %v5813 = vand.u32 %v5812, 4294901760
    %v5814 = vsub.f32 %v5812, %v5813
    %v5815 = vand.u32 %v5814, 4294901760
    %5816 = vmatpush1.msra.mxu0 %v5815
    %5817 = vmatprep.subr.mxu0 0.0
    %v5818 = vand.u32 %v3760, 4294901760
    %v5819 = vsub.f32 %v3760, %v5818
    %v5820 = vand.u32 %v5819, 4294901760
    %v5821 = vsub.f32 %v5819, %v5820
    %v5822 = vand.u32 %v5821, 4294901760
    %5823 = vmatpush1.msra.mxu0 %v5822
    %5824 = vmatprep.subr.mxu0 0.0
    %v5825 = vand.u32 %v3761, 4294901760
    %v5826 = vsub.f32 %v3761, %v5825
    %v5827 = vand.u32 %v5826, 4294901760
    %v5828 = vsub.f32 %v5826, %v5827
    %v5829 = vand.u32 %v5828, 4294901760
    %5830 = vmatpush1.msra.mxu0 %v5829
    %5831 = vmatprep.subr.mxu0 0.0
    %v5832 = vand.u32 %v3762, 4294901760
    %v5833 = vsub.f32 %v3762, %v5832
    %v5834 = vand.u32 %v5833, 4294901760
    %v5835 = vsub.f32 %v5833, %v5834
    %v5836 = vand.u32 %v5835, 4294901760
    %5837 = vmatpush1.msra.mxu0 %v5836
    %5838 = vmatprep.subr.mxu0 0.0
    %v5839 = vand.u32 %v3763, 4294901760
    %v5840 = vsub.f32 %v3763, %v5839
    %v5841 = vand.u32 %v5840, 4294901760
    %v5842 = vsub.f32 %v5840, %v5841
    %v5843 = vand.u32 %v5842, 4294901760
    %5844 = vmatpush1.msra.mxu0 %v5843
    %5845 = vmatprep.subr.mxu0 0.0
    %v5846 = vand.u32 %v3764, 4294901760
    %v5847 = vsub.f32 %v3764, %v5846
    %v5848 = vand.u32 %v5847, 4294901760
    %v5849 = vsub.f32 %v5847, %v5848
    %v5850 = vand.u32 %v5849, 4294901760
    %5851 = vmatpush1.msra.mxu0 %v5850
    %5852 = vmatprep.subr.mxu0 0.0
    %v5853 = vand.u32 %v3765, 4294901760
    %v5854 = vsub.f32 %v3765, %v5853
    %v5855 = vand.u32 %v5854, 4294901760
    %v5856 = vsub.f32 %v5854, %v5855
    %v5857 = vand.u32 %v5856, 4294901760
    %5858 = vmatpush1.msra.mxu0 %v5857
    %5859 = vmatprep.subr.mxu0 0.0
    %v5860 = vand.u32 %v3766, 4294901760
    %v5861 = vsub.f32 %v3766, %v5860
    %v5862 = vand.u32 %v5861, 4294901760
    %v5863 = vsub.f32 %v5861, %v5862
    %v5864 = vand.u32 %v5863, 4294901760
    %5865 = vmatpush1.msra.mxu0 %v5864
    %v5866 = vand.u32 %v3668, 4294901760
    %5867 = vmatprep.mubr.f32.mxu0 %v5866
    %v5868 = vand.u32 %v3667, 4294901760
    %5869 = vmatmul.mubr.f32.gmra.mrb[0].mxu0 %v5868
    %v5870 = vpop.f32.mrb[0].mxu0
    %v5871 = vadd.f32 %v5639, %v5870
    %v5872 = vpop.f32.mrb[0].mxu0
    %5873 = vdwg.mxu0
    %5874 = vmatprep.subr.mxu0 0.0
    %v5875 = vand.u32 %v3735, 4294901760
    %v5876 = vsub.f32 %v3735, %v5875
    %5877 = vmatpush1.msra.mxu0 %v5876
    %5878 = vmatprep.subr.mxu0 0.0
    %v5879 = vand.u32 %v3736, 4294901760
    %v5880 = vsub.f32 %v3736, %v5879
    %5881 = vmatpush1.msra.mxu0 %v5880
    %5882 = vmatprep.subr.mxu0 0.0
    %v5883 = vand.u32 %v3737, 4294901760
    %v5884 = vsub.f32 %v3737, %v5883
    %5885 = vmatpush1.msra.mxu0 %v5884
    %5886 = vmatprep.subr.mxu0 0.0
    %v5887 = vand.u32 %v3738, 4294901760
    %v5888 = vsub.f32 %v3738, %v5887
    %5889 = vmatpush1.msra.mxu0 %v5888
    %5890 = vmatprep.subr.mxu0 0.0
    %v5891 = vand.u32 %v3739, 4294901760
    %v5892 = vsub.f32 %v3739, %v5891
    %5893 = vmatpush1.msra.mxu0 %v5892
    %5894 = vmatprep.subr.mxu0 0.0
    %v5895 = vand.u32 %v3740, 4294901760
    %v5896 = vsub.f32 %v3740, %v5895
    %5897 = vmatpush1.msra.mxu0 %v5896
    %5898 = vmatprep.subr.mxu0 0.0
    %v5899 = vand.u32 %v3741, 4294901760
    %v5900 = vsub.f32 %v3741, %v5899
    %5901 = vmatpush1.msra.mxu0 %v5900
    %5902 = vmatprep.subr.mxu0 0.0
    %v5903 = vand.u32 %v3742, 4294901760
    %v5904 = vsub.f32 %v3742, %v5903
    %5905 = vmatpush1.msra.mxu0 %v5904
    %5906 = vmatprep.subr.mxu0 0.0
    %v5907 = vand.u32 %v3743, 4294901760
    %v5908 = vsub.f32 %v3743, %v5907
    %5909 = vmatpush1.msra.mxu0 %v5908
    %5910 = vmatprep.subr.mxu0 0.0
    %v5911 = vand.u32 %v3744, 4294901760
    %v5912 = vsub.f32 %v3744, %v5911
    %5913 = vmatpush1.msra.mxu0 %v5912
    %5914 = vmatprep.subr.mxu0 0.0
    %v5915 = vand.u32 %v3745, 4294901760
    %v5916 = vsub.f32 %v3745, %v5915
    %5917 = vmatpush1.msra.mxu0 %v5916
    %5918 = vmatprep.subr.mxu0 0.0
    %v5919 = vand.u32 %v3746, 4294901760
    %v5920 = vsub.f32 %v3746, %v5919
    %5921 = vmatpush1.msra.mxu0 %v5920
    %5922 = vmatprep.subr.mxu0 0.0
    %v5923 = vand.u32 %v3747, 4294901760
    %v5924 = vsub.f32 %v3747, %v5923
    %5925 = vmatpush1.msra.mxu0 %v5924
    %5926 = vmatprep.subr.mxu0 0.0
    %v5927 = vand.u32 %v3748, 4294901760
    %v5928 = vsub.f32 %v3748, %v5927
    %5929 = vmatpush1.msra.mxu0 %v5928
    %5930 = vmatprep.subr.mxu0 0.0
    %v5931 = vand.u32 %v3749, 4294901760
    %v5932 = vsub.f32 %v3749, %v5931
    %5933 = vmatpush1.msra.mxu0 %v5932
    %5934 = vmatprep.subr.mxu0 0.0
    %v5935 = vand.u32 %v3750, 4294901760
    %v5936 = vsub.f32 %v3750, %v5935
    %5937 = vmatpush1.msra.mxu0 %v5936
    %5938 = vmatprep.subr.mxu0 0.0
    %v5939 = vand.u32 %v3751, 4294901760
    %v5940 = vsub.f32 %v3751, %v5939
    %5941 = vmatpush1.msra.mxu0 %v5940
    %5942 = vmatprep.subr.mxu0 0.0
    %v5943 = vand.u32 %v3752, 4294901760
    %v5944 = vsub.f32 %v3752, %v5943
    %5945 = vmatpush1.msra.mxu0 %v5944
    %5946 = vmatprep.subr.mxu0 0.0
    %v5947 = vand.u32 %v3753, 4294901760
    %v5948 = vsub.f32 %v3753, %v5947
    %5949 = vmatpush1.msra.mxu0 %v5948
    %5950 = vmatprep.subr.mxu0 0.0
    %v5951 = vand.u32 %v3754, 4294901760
    %v5952 = vsub.f32 %v3754, %v5951
    %5953 = vmatpush1.msra.mxu0 %v5952
    %5954 = vmatprep.subr.mxu0 0.0
    %v5955 = vand.u32 %v3755, 4294901760
    %v5956 = vsub.f32 %v3755, %v5955
    %5957 = vmatpush1.msra.mxu0 %v5956
    %5958 = vmatprep.subr.mxu0 0.0
    %v5959 = vand.u32 %v3756, 4294901760
    %v5960 = vsub.f32 %v3756, %v5959
    %5961 = vmatpush1.msra.mxu0 %v5960
    %5962 = vmatprep.subr.mxu0 0.0
    %v5963 = vand.u32 %v3757, 4294901760
    %v5964 = vsub.f32 %v3757, %v5963
    %5965 = vmatpush1.msra.mxu0 %v5964
    %5966 = vmatprep.subr.mxu0 0.0
    %v5967 = vand.u32 %v3758, 4294901760
    %v5968 = vsub.f32 %v3758, %v5967
    %5969 = vmatpush1.msra.mxu0 %v5968
    %5970 = vmatprep.subr.mxu0 0.0
    %v5971 = vand.u32 %v3759, 4294901760
    %v5972 = vsub.f32 %v3759, %v5971
    %5973 = vmatpush1.msra.mxu0 %v5972
    %5974 = vmatprep.subr.mxu0 0.0
    %v5975 = vand.u32 %v3760, 4294901760
    %v5976 = vsub.f32 %v3760, %v5975
    %5977 = vmatpush1.msra.mxu0 %v5976
    %5978 = vmatprep.subr.mxu0 0.0
    %v5979 = vand.u32 %v3761, 4294901760
    %v5980 = vsub.f32 %v3761, %v5979
    %5981 = vmatpush1.msra.mxu0 %v5980
    %5982 = vmatprep.subr.mxu0 0.0
    %v5983 = vand.u32 %v3762, 4294901760
    %v5984 = vsub.f32 %v3762, %v5983
    %5985 = vmatpush1.msra.mxu0 %v5984
    %5986 = vmatprep.subr.mxu0 0.0
    %v5987 = vand.u32 %v3763, 4294901760
    %v5988 = vsub.f32 %v3763, %v5987
    %5989 = vmatpush1.msra.mxu0 %v5988
    %5990 = vmatprep.subr.mxu0 0.0
    %v5991 = vand.u32 %v3764, 4294901760
    %v5992 = vsub.f32 %v3764, %v5991
    %5993 = vmatpush1.msra.mxu0 %v5992
    %5994 = vmatprep.subr.mxu0 0.0
    %v5995 = vand.u32 %v3765, 4294901760
    %v5996 = vsub.f32 %v3765, %v5995
    %5997 = vmatpush1.msra.mxu0 %v5996
    %5998 = vmatprep.subr.mxu0 0.0
    %v5999 = vand.u32 %v3766, 4294901760
    %v6000 = vsub.f32 %v3766, %v5999
    %6001 = vmatpush1.msra.mxu0 %v6000
    %v6002 = vand.u32 %v3668, 4294901760
    %v6003 = vsub.f32 %v3668, %v6002
    %6004 = vmatprep.mubr.f32.mxu0 %v6003
    %v6005 = vand.u32 %v3667, 4294901760
    %v6006 = vsub.f32 %v3667, %v6005
    %6007 = vmatmul.mubr.f32.gmra.mrb[0].mxu0 %v6006
    %v6008 = vpop.f32.mrb[0].mxu0
    %v6009 = vadd.f32 %v5871, %v6008
    %v6010 = vpop.f32.mrb[0].mxu0
    %6011 = vdwg.mxu0
    %6012 = vmatprep.subr.mxu0 0.0
    %v6013 = vand.u32 %v3735, 4294901760
    %6014 = vmatpush1.msra.mxu0 %v6013
    %6015 = vmatprep.subr.mxu0 0.0
    %v6016 = vand.u32 %v3736, 4294901760
    %6017 = vmatpush1.msra.mxu0 %v6016
    %6018 = vmatprep.subr.mxu0 0.0
    %v6019 = vand.u32 %v3737, 4294901760
    %6020 = vmatpush1.msra.mxu0 %v6019
    %6021 = vmatprep.subr.mxu0 0.0
    %v6022 = vand.u32 %v3738, 4294901760
    %6023 = vmatpush1.msra.mxu0 %v6022
    %6024 = vmatprep.subr.mxu0 0.0
    %v6025 = vand.u32 %v3739, 4294901760
    %6026 = vmatpush1.msra.mxu0 %v6025
    %6027 = vmatprep.subr.mxu0 0.0
    %v6028 = vand.u32 %v3740, 4294901760
    %6029 = vmatpush1.msra.mxu0 %v6028
    %6030 = vmatprep.subr.mxu0 0.0
    %v6031 = vand.u32 %v3741, 4294901760
    %6032 = vmatpush1.msra.mxu0 %v6031
    %6033 = vmatprep.subr.mxu0 0.0
    %v6034 = vand.u32 %v3742, 4294901760
    %6035 = vmatpush1.msra.mxu0 %v6034
    %6036 = vmatprep.subr.mxu0 0.0
    %v6037 = vand.u32 %v3743, 4294901760
    %6038 = vmatpush1.msra.mxu0 %v6037
    %6039 = vmatprep.subr.mxu0 0.0
    %v6040 = vand.u32 %v3744, 4294901760
    %6041 = vmatpush1.msra.mxu0 %v6040
    %6042 = vmatprep.subr.mxu0 0.0
    %v6043 = vand.u32 %v3745, 4294901760
    %6044 = vmatpush1.msra.mxu0 %v6043
    %6045 = vmatprep.subr.mxu0 0.0
    %v6046 = vand.u32 %v3746, 4294901760
    %6047 = vmatpush1.msra.mxu0 %v6046
    %6048 = vmatprep.subr.mxu0 0.0
    %v6049 = vand.u32 %v3747, 4294901760
    %6050 = vmatpush1.msra.mxu0 %v6049
    %6051 = vmatprep.subr.mxu0 0.0
    %v6052 = vand.u32 %v3748, 4294901760
    %6053 = vmatpush1.msra.mxu0 %v6052
    %6054 = vmatprep.subr.mxu0 0.0
    %v6055 = vand.u32 %v3749, 4294901760
    %6056 = vmatpush1.msra.mxu0 %v6055
    %6057 = vmatprep.subr.mxu0 0.0
    %v6058 = vand.u32 %v3750, 4294901760
    %6059 = vmatpush1.msra.mxu0 %v6058
    %6060 = vmatprep.subr.mxu0 0.0
    %v6061 = vand.u32 %v3751, 4294901760
    %6062 = vmatpush1.msra.mxu0 %v6061
    %6063 = vmatprep.subr.mxu0 0.0
    %v6064 = vand.u32 %v3752, 4294901760
    %6065 = vmatpush1.msra.mxu0 %v6064
    %6066 = vmatprep.subr.mxu0 0.0
    %v6067 = vand.u32 %v3753, 4294901760
    %6068 = vmatpush1.msra.mxu0 %v6067
    %6069 = vmatprep.subr.mxu0 0.0
    %v6070 = vand.u32 %v3754, 4294901760
    %6071 = vmatpush1.msra.mxu0 %v6070
    %6072 = vmatprep.subr.mxu0 0.0
    %v6073 = vand.u32 %v3755, 4294901760
    %6074 = vmatpush1.msra.mxu0 %v6073
    %6075 = vmatprep.subr.mxu0 0.0
    %v6076 = vand.u32 %v3756, 4294901760
    %6077 = vmatpush1.msra.mxu0 %v6076
    %6078 = vmatprep.subr.mxu0 0.0
    %v6079 = vand.u32 %v3757, 4294901760
    %6080 = vmatpush1.msra.mxu0 %v6079
    %6081 = vmatprep.subr.mxu0 0.0
    %v6082 = vand.u32 %v3758, 4294901760
    %6083 = vmatpush1.msra.mxu0 %v6082
    %6084 = vmatprep.subr.mxu0 0.0
    %v6085 = vand.u32 %v3759, 4294901760
    %6086 = vmatpush1.msra.mxu0 %v6085
    %6087 = vmatprep.subr.mxu0 0.0
    %v6088 = vand.u32 %v3760, 4294901760
    %6089 = vmatpush1.msra.mxu0 %v6088
    %6090 = vmatprep.subr.mxu0 0.0
    %v6091 = vand.u32 %v3761, 4294901760
    %6092 = vmatpush1.msra.mxu0 %v6091
    %6093 = vmatprep.subr.mxu0 0.0
    %v6094 = vand.u32 %v3762, 4294901760
    %6095 = vmatpush1.msra.mxu0 %v6094
    %6096 = vmatprep.subr.mxu0 0.0
    %v6097 = vand.u32 %v3763, 4294901760
    %6098 = vmatpush1.msra.mxu0 %v6097
    %6099 = vmatprep.subr.mxu0 0.0
    %v6100 = vand.u32 %v3764, 4294901760
    %6101 = vmatpush1.msra.mxu0 %v6100
    %6102 = vmatprep.subr.mxu0 0.0
    %v6103 = vand.u32 %v3765, 4294901760
    %6104 = vmatpush1.msra.mxu0 %v6103
    %6105 = vmatprep.subr.mxu0 0.0
    %v6106 = vand.u32 %v3766, 4294901760
    %6107 = vmatpush1.msra.mxu0 %v6106
    %v6108 = vand.u32 %v3668, 4294901760
    %v6109 = vsub.f32 %v3668, %v6108
    %v6110 = vand.u32 %v6109, 4294901760
    %6111 = vmatprep.mubr.f32.mxu0 %v6110
    %v6112 = vand.u32 %v3667, 4294901760
    %v6113 = vsub.f32 %v3667, %v6112
    %v6114 = vand.u32 %v6113, 4294901760
    %6115 = vmatmul.mubr.f32.gmra.mrb[0].mxu0 %v6114
    %v6116 = vpop.f32.mrb[0].mxu0
    %v6117 = vadd.f32 %v6009, %v6116
    %v6118 = vpop.f32.mrb[0].mxu0
    %6119 = vdwg.mxu0
    %6120 = vmatprep.subr.mxu0 0.0
    %v6121 = vand.u32 %v3735, 4294901760
    %v6122 = vsub.f32 %v3735, %v6121
    %v6123 = vand.u32 %v6122, 4294901760
    %6124 = vmatpush1.msra.mxu0 %v6123
    %6125 = vmatprep.subr.mxu0 0.0
    %v6126 = vand.u32 %v3736, 4294901760
    %v6127 = vsub.f32 %v3736, %v6126
    %v6128 = vand.u32 %v6127, 4294901760
    %6129 = vmatpush1.msra.mxu0 %v6128
    %6130 = vmatprep.subr.mxu0 0.0
    %v6131 = vand.u32 %v3737, 4294901760
    %v6132 = vsub.f32 %v3737, %v6131
    %v6133 = vand.u32 %v6132, 4294901760
    %6134 = vmatpush1.msra.mxu0 %v6133
    %6135 = vmatprep.subr.mxu0 0.0
    %v6136 = vand.u32 %v3738, 4294901760
    %v6137 = vsub.f32 %v3738, %v6136
    %v6138 = vand.u32 %v6137, 4294901760
    %6139 = vmatpush1.msra.mxu0 %v6138
    %6140 = vmatprep.subr.mxu0 0.0
    %v6141 = vand.u32 %v3739, 4294901760
    %v6142 = vsub.f32 %v3739, %v6141
    %v6143 = vand.u32 %v6142, 4294901760
    %6144 = vmatpush1.msra.mxu0 %v6143
    %6145 = vmatprep.subr.mxu0 0.0
    %v6146 = vand.u32 %v3740, 4294901760
    %v6147 = vsub.f32 %v3740, %v6146
    %v6148 = vand.u32 %v6147, 4294901760
    %6149 = vmatpush1.msra.mxu0 %v6148
    %6150 = vmatprep.subr.mxu0 0.0
    %v6151 = vand.u32 %v3741, 4294901760
    %v6152 = vsub.f32 %v3741, %v6151
    %v6153 = vand.u32 %v6152, 4294901760
    %6154 = vmatpush1.msra.mxu0 %v6153
    %6155 = vmatprep.subr.mxu0 0.0
    %v6156 = vand.u32 %v3742, 4294901760
    %v6157 = vsub.f32 %v3742, %v6156
    %v6158 = vand.u32 %v6157, 4294901760
    %6159 = vmatpush1.msra.mxu0 %v6158
    %6160 = vmatprep.subr.mxu0 0.0
    %v6161 = vand.u32 %v3743, 4294901760
    %v6162 = vsub.f32 %v3743, %v6161
    %v6163 = vand.u32 %v6162, 4294901760
    %6164 = vmatpush1.msra.mxu0 %v6163
    %6165 = vmatprep.subr.mxu0 0.0
    %v6166 = vand.u32 %v3744, 4294901760
    %v6167 = vsub.f32 %v3744, %v6166
    %v6168 = vand.u32 %v6167, 4294901760
    %6169 = vmatpush1.msra.mxu0 %v6168
    %6170 = vmatprep.subr.mxu0 0.0
    %v6171 = vand.u32 %v3745, 4294901760
    %v6172 = vsub.f32 %v3745, %v6171
    %v6173 = vand.u32 %v6172, 4294901760
    %6174 = vmatpush1.msra.mxu0 %v6173
    %6175 = vmatprep.subr.mxu0 0.0
    %v6176 = vand.u32 %v3746, 4294901760
    %v6177 = vsub.f32 %v3746, %v6176
    %v6178 = vand.u32 %v6177, 4294901760
    %6179 = vmatpush1.msra.mxu0 %v6178
    %6180 = vmatprep.subr.mxu0 0.0
    %v6181 = vand.u32 %v3747, 4294901760
    %v6182 = vsub.f32 %v3747, %v6181
    %v6183 = vand.u32 %v6182, 4294901760
    %6184 = vmatpush1.msra.mxu0 %v6183
    %6185 = vmatprep.subr.mxu0 0.0
    %v6186 = vand.u32 %v3748, 4294901760
    %v6187 = vsub.f32 %v3748, %v6186
    %v6188 = vand.u32 %v6187, 4294901760
    %6189 = vmatpush1.msra.mxu0 %v6188
    %6190 = vmatprep.subr.mxu0 0.0
    %v6191 = vand.u32 %v3749, 4294901760
    %v6192 = vsub.f32 %v3749, %v6191
    %v6193 = vand.u32 %v6192, 4294901760
    %6194 = vmatpush1.msra.mxu0 %v6193
    %6195 = vmatprep.subr.mxu0 0.0
    %v6196 = vand.u32 %v3750, 4294901760
    %v6197 = vsub.f32 %v3750, %v6196
    %v6198 = vand.u32 %v6197, 4294901760
    %6199 = vmatpush1.msra.mxu0 %v6198
    %6200 = vmatprep.subr.mxu0 0.0
    %v6201 = vand.u32 %v3751, 4294901760
    %v6202 = vsub.f32 %v3751, %v6201
    %v6203 = vand.u32 %v6202, 4294901760
    %6204 = vmatpush1.msra.mxu0 %v6203
    %6205 = vmatprep.subr.mxu0 0.0
    %v6206 = vand.u32 %v3752, 4294901760
    %v6207 = vsub.f32 %v3752, %v6206
    %v6208 = vand.u32 %v6207, 4294901760
    %6209 = vmatpush1.msra.mxu0 %v6208
    %6210 = vmatprep.subr.mxu0 0.0
    %v6211 = vand.u32 %v3753, 4294901760
    %v6212 = vsub.f32 %v3753, %v6211
    %v6213 = vand.u32 %v6212, 4294901760
    %6214 = vmatpush1.msra.mxu0 %v6213
    %6215 = vmatprep.subr.mxu0 0.0
    %v6216 = vand.u32 %v3754, 4294901760
    %v6217 = vsub.f32 %v3754, %v6216
    %v6218 = vand.u32 %v6217, 4294901760
    %6219 = vmatpush1.msra.mxu0 %v6218
    %6220 = vmatprep.subr.mxu0 0.0
    %v6221 = vand.u32 %v3755, 4294901760
    %v6222 = vsub.f32 %v3755, %v6221
    %v6223 = vand.u32 %v6222, 4294901760
    %6224 = vmatpush1.msra.mxu0 %v6223
    %6225 = vmatprep.subr.mxu0 0.0
    %v6226 = vand.u32 %v3756, 4294901760
    %v6227 = vsub.f32 %v3756, %v6226
    %v6228 = vand.u32 %v6227, 4294901760
    %6229 = vmatpush1.msra.mxu0 %v6228
    %6230 = vmatprep.subr.mxu0 0.0
    %v6231 = vand.u32 %v3757, 4294901760
    %v6232 = vsub.f32 %v3757, %v6231
    %v6233 = vand.u32 %v6232, 4294901760
    %6234 = vmatpush1.msra.mxu0 %v6233
    %6235 = vmatprep.subr.mxu0 0.0
    %v6236 = vand.u32 %v3758, 4294901760
    %v6237 = vsub.f32 %v3758, %v6236
    %v6238 = vand.u32 %v6237, 4294901760
    %6239 = vmatpush1.msra.mxu0 %v6238
    %6240 = vmatprep.subr.mxu0 0.0
    %v6241 = vand.u32 %v3759, 4294901760
    %v6242 = vsub.f32 %v3759, %v6241
    %v6243 = vand.u32 %v6242, 4294901760
    %6244 = vmatpush1.msra.mxu0 %v6243
    %6245 = vmatprep.subr.mxu0 0.0
    %v6246 = vand.u32 %v3760, 4294901760
    %v6247 = vsub.f32 %v3760, %v6246
    %v6248 = vand.u32 %v6247, 4294901760
    %6249 = vmatpush1.msra.mxu0 %v6248
    %6250 = vmatprep.subr.mxu0 0.0
    %v6251 = vand.u32 %v3761, 4294901760
    %v6252 = vsub.f32 %v3761, %v6251
    %v6253 = vand.u32 %v6252, 4294901760
    %6254 = vmatpush1.msra.mxu0 %v6253
    %6255 = vmatprep.subr.mxu0 0.0
    %v6256 = vand.u32 %v3762, 4294901760
    %v6257 = vsub.f32 %v3762, %v6256
    %v6258 = vand.u32 %v6257, 4294901760
    %6259 = vmatpush1.msra.mxu0 %v6258
    %6260 = vmatprep.subr.mxu0 0.0
    %v6261 = vand.u32 %v3763, 4294901760
    %v6262 = vsub.f32 %v3763, %v6261
    %v6263 = vand.u32 %v6262, 4294901760
    %6264 = vmatpush1.msra.mxu0 %v6263
    %6265 = vmatprep.subr.mxu0 0.0
    %v6266 = vand.u32 %v3764, 4294901760
    %v6267 = vsub.f32 %v3764, %v6266
    %v6268 = vand.u32 %v6267, 4294901760
    %6269 = vmatpush1.msra.mxu0 %v6268
    %6270 = vmatprep.subr.mxu0 0.0
    %v6271 = vand.u32 %v3765, 4294901760
    %v6272 = vsub.f32 %v3765, %v6271
    %v6273 = vand.u32 %v6272, 4294901760
    %6274 = vmatpush1.msra.mxu0 %v6273
    %6275 = vmatprep.subr.mxu0 0.0
    %v6276 = vand.u32 %v3766, 4294901760
    %v6277 = vsub.f32 %v3766, %v6276
    %v6278 = vand.u32 %v6277, 4294901760
    %6279 = vmatpush1.msra.mxu0 %v6278
    %v6280 = vand.u32 %v3668, 4294901760
    %6281 = vmatprep.mubr.f32.mxu0 %v6280
    %v6282 = vand.u32 %v3667, 4294901760
    %6283 = vmatmul.mubr.f32.gmra.mrb[0].mxu0 %v6282
    %v6284 = vpop.f32.mrb[0].mxu0
    %v6285 = vadd.f32 %v6117, %v6284
    %v6286 = vpop.f32.mrb[0].mxu0
    %6287 = vdwg.mxu0
    %6288 = vmatprep.subr.mxu0 0.0
    %v6289 = vand.u32 %v3735, 4294901760
    %6290 = vmatpush1.msra.mxu0 %v6289
    %6291 = vmatprep.subr.mxu0 0.0
    %v6292 = vand.u32 %v3736, 4294901760
    %6293 = vmatpush1.msra.mxu0 %v6292
    %6294 = vmatprep.subr.mxu0 0.0
    %v6295 = vand.u32 %v3737, 4294901760
    %6296 = vmatpush1.msra.mxu0 %v6295
    %6297 = vmatprep.subr.mxu0 0.0
    %v6298 = vand.u32 %v3738, 4294901760
    %6299 = vmatpush1.msra.mxu0 %v6298
    %6300 = vmatprep.subr.mxu0 0.0
    %v6301 = vand.u32 %v3739, 4294901760
    %6302 = vmatpush1.msra.mxu0 %v6301
    %6303 = vmatprep.subr.mxu0 0.0
    %v6304 = vand.u32 %v3740, 4294901760
    %6305 = vmatpush1.msra.mxu0 %v6304
    %6306 = vmatprep.subr.mxu0 0.0
    %v6307 = vand.u32 %v3741, 4294901760
    %6308 = vmatpush1.msra.mxu0 %v6307
    %6309 = vmatprep.subr.mxu0 0.0
    %v6310 = vand.u32 %v3742, 4294901760
    %6311 = vmatpush1.msra.mxu0 %v6310
    %6312 = vmatprep.subr.mxu0 0.0
    %v6313 = vand.u32 %v3743, 4294901760
    %6314 = vmatpush1.msra.mxu0 %v6313
    %6315 = vmatprep.subr.mxu0 0.0
    %v6316 = vand.u32 %v3744, 4294901760
    %6317 = vmatpush1.msra.mxu0 %v6316
    %6318 = vmatprep.subr.mxu0 0.0
    %v6319 = vand.u32 %v3745, 4294901760
    %6320 = vmatpush1.msra.mxu0 %v6319
    %6321 = vmatprep.subr.mxu0 0.0
    %v6322 = vand.u32 %v3746, 4294901760
    %6323 = vmatpush1.msra.mxu0 %v6322
    %6324 = vmatprep.subr.mxu0 0.0
    %v6325 = vand.u32 %v3747, 4294901760
    %6326 = vmatpush1.msra.mxu0 %v6325
    %6327 = vmatprep.subr.mxu0 0.0
    %v6328 = vand.u32 %v3748, 4294901760
    %6329 = vmatpush1.msra.mxu0 %v6328
    %6330 = vmatprep.subr.mxu0 0.0
    %v6331 = vand.u32 %v3749, 4294901760
    %6332 = vmatpush1.msra.mxu0 %v6331
    %6333 = vmatprep.subr.mxu0 0.0
    %v6334 = vand.u32 %v3750, 4294901760
    %6335 = vmatpush1.msra.mxu0 %v6334
    %6336 = vmatprep.subr.mxu0 0.0
    %v6337 = vand.u32 %v3751, 4294901760
    %6338 = vmatpush1.msra.mxu0 %v6337
    %6339 = vmatprep.subr.mxu0 0.0
    %v6340 = vand.u32 %v3752, 4294901760
    %6341 = vmatpush1.msra.mxu0 %v6340
    %6342 = vmatprep.subr.mxu0 0.0
    %v6343 = vand.u32 %v3753, 4294901760
    %6344 = vmatpush1.msra.mxu0 %v6343
    %6345 = vmatprep.subr.mxu0 0.0
    %v6346 = vand.u32 %v3754, 4294901760
    %6347 = vmatpush1.msra.mxu0 %v6346
    %6348 = vmatprep.subr.mxu0 0.0
    %v6349 = vand.u32 %v3755, 4294901760
    %6350 = vmatpush1.msra.mxu0 %v6349
    %6351 = vmatprep.subr.mxu0 0.0
    %v6352 = vand.u32 %v3756, 4294901760
    %6353 = vmatpush1.msra.mxu0 %v6352
    %6354 = vmatprep.subr.mxu0 0.0
    %v6355 = vand.u32 %v3757, 4294901760
    %6356 = vmatpush1.msra.mxu0 %v6355
    %6357 = vmatprep.subr.mxu0 0.0
    %v6358 = vand.u32 %v3758, 4294901760
    %6359 = vmatpush1.msra.mxu0 %v6358
    %6360 = vmatprep.subr.mxu0 0.0
    %v6361 = vand.u32 %v3759, 4294901760
    %6362 = vmatpush1.msra.mxu0 %v6361
    %6363 = vmatprep.subr.mxu0 0.0
    %v6364 = vand.u32 %v3760, 4294901760
    %6365 = vmatpush1.msra.mxu0 %v6364
    %6366 = vmatprep.subr.mxu0 0.0
    %v6367 = vand.u32 %v3761, 4294901760
    %6368 = vmatpush1.msra.mxu0 %v6367
    %6369 = vmatprep.subr.mxu0 0.0
    %v6370 = vand.u32 %v3762, 4294901760
    %6371 = vmatpush1.msra.mxu0 %v6370
    %6372 = vmatprep.subr.mxu0 0.0
    %v6373 = vand.u32 %v3763, 4294901760
    %6374 = vmatpush1.msra.mxu0 %v6373
    %6375 = vmatprep.subr.mxu0 0.0
    %v6376 = vand.u32 %v3764, 4294901760
    %6377 = vmatpush1.msra.mxu0 %v6376
    %6378 = vmatprep.subr.mxu0 0.0
    %v6379 = vand.u32 %v3765, 4294901760
    %6380 = vmatpush1.msra.mxu0 %v6379
    %6381 = vmatprep.subr.mxu0 0.0
    %v6382 = vand.u32 %v3766, 4294901760
    %6383 = vmatpush1.msra.mxu0 %v6382
    %v6384 = vand.u32 %v3668, 4294901760
    %6385 = vmatprep.mubr.f32.mxu0 %v6384
    %v6386 = vand.u32 %v3667, 4294901760
    %6387 = vmatmul.mubr.f32.gmra.mrb[0].mxu0 %v6386
    %v6388 = vpop.f32.mrb[0].mxu0
    %v6389 = vadd.f32 %v6285, %v6388
    %v6390 = vpop.f32.mrb[0].mxu0
    %6391 = vdwg.mxu0
    %6392 = vmatprep.subr.mxu0 0.0
    %v6393 = vand.u32 %v3767, 4294901760
    %6394 = vmatpush1.msra.mxu0 %v6393
    %6395 = vmatprep.subr.mxu0 0.0
    %v6396 = vand.u32 %v3768, 4294901760
    %6397 = vmatpush1.msra.mxu0 %v6396
    %6398 = vmatprep.subr.mxu0 0.0
    %v6399 = vand.u32 %v3769, 4294901760
    %6400 = vmatpush1.msra.mxu0 %v6399
    %6401 = vmatprep.subr.mxu0 0.0
    %v6402 = vand.u32 %v3770, 4294901760
    %6403 = vmatpush1.msra.mxu0 %v6402
    %6404 = vmatprep.subr.mxu0 0.0
    %v6405 = vand.u32 %v3771, 4294901760
    %6406 = vmatpush1.msra.mxu0 %v6405
    %6407 = vmatprep.subr.mxu0 0.0
    %v6408 = vand.u32 %v3772, 4294901760
    %6409 = vmatpush1.msra.mxu0 %v6408
    %6410 = vmatprep.subr.mxu0 0.0
    %v6411 = vand.u32 %v3773, 4294901760
    %6412 = vmatpush1.msra.mxu0 %v6411
    %6413 = vmatprep.subr.mxu0 0.0
    %v6414 = vand.u32 %v3774, 4294901760
    %6415 = vmatpush1.msra.mxu0 %v6414
    %6416 = vmatprep.subr.mxu0 0.0
    %v6417 = vand.u32 %v3775, 4294901760
    %6418 = vmatpush1.msra.mxu0 %v6417
    %6419 = vmatprep.subr.mxu0 0.0
    %v6420 = vand.u32 %v3776, 4294901760
    %6421 = vmatpush1.msra.mxu0 %v6420
    %6422 = vmatprep.subr.mxu0 0.0
    %v6423 = vand.u32 %v3777, 4294901760
    %6424 = vmatpush1.msra.mxu0 %v6423
    %6425 = vmatprep.subr.mxu0 0.0
    %v6426 = vand.u32 %v3778, 4294901760
    %6427 = vmatpush1.msra.mxu0 %v6426
    %6428 = vmatprep.subr.mxu0 0.0
    %v6429 = vand.u32 %v3779, 4294901760
    %6430 = vmatpush1.msra.mxu0 %v6429
    %6431 = vmatprep.subr.mxu0 0.0
    %v6432 = vand.u32 %v3780, 4294901760
    %6433 = vmatpush1.msra.mxu0 %v6432
    %6434 = vmatprep.subr.mxu0 0.0
    %v6435 = vand.u32 %v3781, 4294901760
    %6436 = vmatpush1.msra.mxu0 %v6435
    %6437 = vmatprep.subr.mxu0 0.0
    %v6438 = vand.u32 %v3782, 4294901760
    %6439 = vmatpush1.msra.mxu0 %v6438
    %6440 = vmatprep.subr.mxu0 0.0
    %v6441 = vand.u32 %v3783, 4294901760
    %6442 = vmatpush1.msra.mxu0 %v6441
    %6443 = vmatprep.subr.mxu0 0.0
    %v6444 = vand.u32 %v3784, 4294901760
    %6445 = vmatpush1.msra.mxu0 %v6444
    %6446 = vmatprep.subr.mxu0 0.0
    %v6447 = vand.u32 %v3785, 4294901760
    %6448 = vmatpush1.msra.mxu0 %v6447
    %6449 = vmatprep.subr.mxu0 0.0
    %v6450 = vand.u32 %v3786, 4294901760
    %6451 = vmatpush1.msra.mxu0 %v6450
    %6452 = vmatprep.subr.mxu0 0.0
    %v6453 = vand.u32 %v3787, 4294901760
    %6454 = vmatpush1.msra.mxu0 %v6453
    %6455 = vmatprep.subr.mxu0 0.0
    %v6456 = vand.u32 %v3788, 4294901760
    %6457 = vmatpush1.msra.mxu0 %v6456
    %6458 = vmatprep.subr.mxu0 0.0
    %v6459 = vand.u32 %v3789, 4294901760
    %6460 = vmatpush1.msra.mxu0 %v6459
    %6461 = vmatprep.subr.mxu0 0.0
    %v6462 = vand.u32 %v3790, 4294901760
    %6463 = vmatpush1.msra.mxu0 %v6462
    %6464 = vmatprep.subr.mxu0 0.0
    %v6465 = vand.u32 %v3791, 4294901760
    %6466 = vmatpush1.msra.mxu0 %v6465
    %6467 = vmatprep.subr.mxu0 0.0
    %v6468 = vand.u32 %v3792, 4294901760
    %6469 = vmatpush1.msra.mxu0 %v6468
    %6470 = vmatprep.subr.mxu0 0.0
    %v6471 = vand.u32 %v3793, 4294901760
    %6472 = vmatpush1.msra.mxu0 %v6471
    %6473 = vmatprep.subr.mxu0 0.0
    %v6474 = vand.u32 %v3794, 4294901760
    %6475 = vmatpush1.msra.mxu0 %v6474
    %6476 = vmatprep.subr.mxu0 0.0
    %v6477 = vand.u32 %v3795, 4294901760
    %6478 = vmatpush1.msra.mxu0 %v6477
    %6479 = vmatprep.subr.mxu0 0.0
    %v6480 = vand.u32 %v3796, 4294901760
    %6481 = vmatpush1.msra.mxu0 %v6480
    %6482 = vmatprep.subr.mxu0 0.0
    %v6483 = vand.u32 %v3797, 4294901760
    %6484 = vmatpush1.msra.mxu0 %v6483
    %6485 = vmatprep.subr.mxu0 0.0
    %v6486 = vand.u32 %v3798, 4294901760
    %6487 = vmatpush1.msra.mxu0 %v6486
    %v6488 = vand.u32 %v3670, 4294901760
    %v6489 = vsub.f32 %v3670, %v6488
    %v6490 = vand.u32 %v6489, 4294901760
    %v6491 = vsub.f32 %v6489, %v6490
    %v6492 = vand.u32 %v6491, 4294901760
    %6493 = vmatprep.mubr.f32.mxu0 %v6492
    %v6494 = vand.u32 %v3669, 4294901760
    %v6495 = vsub.f32 %v3669, %v6494
    %v6496 = vand.u32 %v6495, 4294901760
    %v6497 = vsub.f32 %v6495, %v6496
    %v6498 = vand.u32 %v6497, 4294901760
    %6499 = vmatmul.mubr.f32.gmra.mrb[0].mxu0 %v6498
    %v6500 = vpop.f32.mrb[0].mxu0
    %v6501 = vadd.f32 %v6389, %v6500
    %v6502 = vpop.f32.mrb[0].mxu0
    %6503 = vdwg.mxu0
    %6504 = vmatprep.subr.mxu0 0.0
    %v6505 = vand.u32 %v3767, 4294901760
    %v6506 = vsub.f32 %v3767, %v6505
    %v6507 = vand.u32 %v6506, 4294901760
    %v6508 = vsub.f32 %v6506, %v6507
    %v6509 = vand.u32 %v6508, 4294901760
    %6510 = vmatpush1.msra.mxu0 %v6509
    %6511 = vmatprep.subr.mxu0 0.0
    %v6512 = vand.u32 %v3768, 4294901760
    %v6513 = vsub.f32 %v3768, %v6512
    %v6514 = vand.u32 %v6513, 4294901760
    %v6515 = vsub.f32 %v6513, %v6514
    %v6516 = vand.u32 %v6515, 4294901760
    %6517 = vmatpush1.msra.mxu0 %v6516
    %6518 = vmatprep.subr.mxu0 0.0
    %v6519 = vand.u32 %v3769, 4294901760
    %v6520 = vsub.f32 %v3769, %v6519
    %v6521 = vand.u32 %v6520, 4294901760
    %v6522 = vsub.f32 %v6520, %v6521
    %v6523 = vand.u32 %v6522, 4294901760
    %6524 = vmatpush1.msra.mxu0 %v6523
    %6525 = vmatprep.subr.mxu0 0.0
    %v6526 = vand.u32 %v3770, 4294901760
    %v6527 = vsub.f32 %v3770, %v6526
    %v6528 = vand.u32 %v6527, 4294901760
    %v6529 = vsub.f32 %v6527, %v6528
    %v6530 = vand.u32 %v6529, 4294901760
    %6531 = vmatpush1.msra.mxu0 %v6530
    %6532 = vmatprep.subr.mxu0 0.0
    %v6533 = vand.u32 %v3771, 4294901760
    %v6534 = vsub.f32 %v3771, %v6533
    %v6535 = vand.u32 %v6534, 4294901760
    %v6536 = vsub.f32 %v6534, %v6535
    %v6537 = vand.u32 %v6536, 4294901760
    %6538 = vmatpush1.msra.mxu0 %v6537
    %6539 = vmatprep.subr.mxu0 0.0
    %v6540 = vand.u32 %v3772, 4294901760
    %v6541 = vsub.f32 %v3772, %v6540
    %v6542 = vand.u32 %v6541, 4294901760
    %v6543 = vsub.f32 %v6541, %v6542
    %v6544 = vand.u32 %v6543, 4294901760
    %6545 = vmatpush1.msra.mxu0 %v6544
    %6546 = vmatprep.subr.mxu0 0.0
    %v6547 = vand.u32 %v3773, 4294901760
    %v6548 = vsub.f32 %v3773, %v6547
    %v6549 = vand.u32 %v6548, 4294901760
    %v6550 = vsub.f32 %v6548, %v6549
    %v6551 = vand.u32 %v6550, 4294901760
    %6552 = vmatpush1.msra.mxu0 %v6551
    %6553 = vmatprep.subr.mxu0 0.0
    %v6554 = vand.u32 %v3774, 4294901760
    %v6555 = vsub.f32 %v3774, %v6554
    %v6556 = vand.u32 %v6555, 4294901760
    %v6557 = vsub.f32 %v6555, %v6556
    %v6558 = vand.u32 %v6557, 4294901760
    %6559 = vmatpush1.msra.mxu0 %v6558
    %6560 = vmatprep.subr.mxu0 0.0
    %v6561 = vand.u32 %v3775, 4294901760
    %v6562 = vsub.f32 %v3775, %v6561
    %v6563 = vand.u32 %v6562, 4294901760
    %v6564 = vsub.f32 %v6562, %v6563
    %v6565 = vand.u32 %v6564, 4294901760
    %6566 = vmatpush1.msra.mxu0 %v6565
    %6567 = vmatprep.subr.mxu0 0.0
    %v6568 = vand.u32 %v3776, 4294901760
    %v6569 = vsub.f32 %v3776, %v6568
    %v6570 = vand.u32 %v6569, 4294901760
    %v6571 = vsub.f32 %v6569, %v6570
    %v6572 = vand.u32 %v6571, 4294901760
    %6573 = vmatpush1.msra.mxu0 %v6572
    %6574 = vmatprep.subr.mxu0 0.0
    %v6575 = vand.u32 %v3777, 4294901760
    %v6576 = vsub.f32 %v3777, %v6575
    %v6577 = vand.u32 %v6576, 4294901760
    %v6578 = vsub.f32 %v6576, %v6577
    %v6579 = vand.u32 %v6578, 4294901760
    %6580 = vmatpush1.msra.mxu0 %v6579
    %6581 = vmatprep.subr.mxu0 0.0
    %v6582 = vand.u32 %v3778, 4294901760
    %v6583 = vsub.f32 %v3778, %v6582
    %v6584 = vand.u32 %v6583, 4294901760
    %v6585 = vsub.f32 %v6583, %v6584
    %v6586 = vand.u32 %v6585, 4294901760
    %6587 = vmatpush1.msra.mxu0 %v6586
    %6588 = vmatprep.subr.mxu0 0.0
    %v6589 = vand.u32 %v3779, 4294901760
    %v6590 = vsub.f32 %v3779, %v6589
    %v6591 = vand.u32 %v6590, 4294901760
    %v6592 = vsub.f32 %v6590, %v6591
    %v6593 = vand.u32 %v6592, 4294901760
    %6594 = vmatpush1.msra.mxu0 %v6593
    %6595 = vmatprep.subr.mxu0 0.0
    %v6596 = vand.u32 %v3780, 4294901760
    %v6597 = vsub.f32 %v3780, %v6596
    %v6598 = vand.u32 %v6597, 4294901760
    %v6599 = vsub.f32 %v6597, %v6598
    %v6600 = vand.u32 %v6599, 4294901760
    %6601 = vmatpush1.msra.mxu0 %v6600
    %6602 = vmatprep.subr.mxu0 0.0
    %v6603 = vand.u32 %v3781, 4294901760
    %v6604 = vsub.f32 %v3781, %v6603
    %v6605 = vand.u32 %v6604, 4294901760
    %v6606 = vsub.f32 %v6604, %v6605
    %v6607 = vand.u32 %v6606, 4294901760
    %6608 = vmatpush1.msra.mxu0 %v6607
    %6609 = vmatprep.subr.mxu0 0.0
    %v6610 = vand.u32 %v3782, 4294901760
    %v6611 = vsub.f32 %v3782, %v6610
    %v6612 = vand.u32 %v6611, 4294901760
    %v6613 = vsub.f32 %v6611, %v6612
    %v6614 = vand.u32 %v6613, 4294901760
    %6615 = vmatpush1.msra.mxu0 %v6614
    %6616 = vmatprep.subr.mxu0 0.0
    %v6617 = vand.u32 %v3783, 4294901760
    %v6618 = vsub.f32 %v3783, %v6617
    %v6619 = vand.u32 %v6618, 4294901760
    %v6620 = vsub.f32 %v6618, %v6619
    %v6621 = vand.u32 %v6620, 4294901760
    %6622 = vmatpush1.msra.mxu0 %v6621
    %6623 = vmatprep.subr.mxu0 0.0
    %v6624 = vand.u32 %v3784, 4294901760
    %v6625 = vsub.f32 %v3784, %v6624
    %v6626 = vand.u32 %v6625, 4294901760
    %v6627 = vsub.f32 %v6625, %v6626
    %v6628 = vand.u32 %v6627, 4294901760
    %6629 = vmatpush1.msra.mxu0 %v6628
    %6630 = vmatprep.subr.mxu0 0.0
    %v6631 = vand.u32 %v3785, 4294901760
    %v6632 = vsub.f32 %v3785, %v6631
    %v6633 = vand.u32 %v6632, 4294901760
    %v6634 = vsub.f32 %v6632, %v6633
    %v6635 = vand.u32 %v6634, 4294901760
    %6636 = vmatpush1.msra.mxu0 %v6635
    %6637 = vmatprep.subr.mxu0 0.0
    %v6638 = vand.u32 %v3786, 4294901760
    %v6639 = vsub.f32 %v3786, %v6638
    %v6640 = vand.u32 %v6639, 4294901760
    %v6641 = vsub.f32 %v6639, %v6640
    %v6642 = vand.u32 %v6641, 4294901760
    %6643 = vmatpush1.msra.mxu0 %v6642
    %6644 = vmatprep.subr.mxu0 0.0
    %v6645 = vand.u32 %v3787, 4294901760
    %v6646 = vsub.f32 %v3787, %v6645
    %v6647 = vand.u32 %v6646, 4294901760
    %v6648 = vsub.f32 %v6646, %v6647
    %v6649 = vand.u32 %v6648, 4294901760
    %6650 = vmatpush1.msra.mxu0 %v6649
    %6651 = vmatprep.subr.mxu0 0.0
    %v6652 = vand.u32 %v3788, 4294901760
    %v6653 = vsub.f32 %v3788, %v6652
    %v6654 = vand.u32 %v6653, 4294901760
    %v6655 = vsub.f32 %v6653, %v6654
    %v6656 = vand.u32 %v6655, 4294901760
    %6657 = vmatpush1.msra.mxu0 %v6656
    %6658 = vmatprep.subr.mxu0 0.0
    %v6659 = vand.u32 %v3789, 4294901760
    %v6660 = vsub.f32 %v3789, %v6659
    %v6661 = vand.u32 %v6660, 4294901760
    %v6662 = vsub.f32 %v6660, %v6661
    %v6663 = vand.u32 %v6662, 4294901760
    %6664 = vmatpush1.msra.mxu0 %v6663
    %6665 = vmatprep.subr.mxu0 0.0
    %v6666 = vand.u32 %v3790, 4294901760
    %v6667 = vsub.f32 %v3790, %v6666
    %v6668 = vand.u32 %v6667, 4294901760
    %v6669 = vsub.f32 %v6667, %v6668
    %v6670 = vand.u32 %v6669, 4294901760
    %6671 = vmatpush1.msra.mxu0 %v6670
    %6672 = vmatprep.subr.mxu0 0.0
    %v6673 = vand.u32 %v3791, 4294901760
    %v6674 = vsub.f32 %v3791, %v6673
    %v6675 = vand.u32 %v6674, 4294901760
    %v6676 = vsub.f32 %v6674, %v6675
    %v6677 = vand.u32 %v6676, 4294901760
    %6678 = vmatpush1.msra.mxu0 %v6677
    %6679 = vmatprep.subr.mxu0 0.0
    %v6680 = vand.u32 %v3792, 4294901760
    %v6681 = vsub.f32 %v3792, %v6680
    %v6682 = vand.u32 %v6681, 4294901760
    %v6683 = vsub.f32 %v6681, %v6682
    %v6684 = vand.u32 %v6683, 4294901760
    %6685 = vmatpush1.msra.mxu0 %v6684
    %6686 = vmatprep.subr.mxu0 0.0
    %v6687 = vand.u32 %v3793, 4294901760
    %v6688 = vsub.f32 %v3793, %v6687
    %v6689 = vand.u32 %v6688, 4294901760
    %v6690 = vsub.f32 %v6688, %v6689
    %v6691 = vand.u32 %v6690, 4294901760
    %6692 = vmatpush1.msra.mxu0 %v6691
    %6693 = vmatprep.subr.mxu0 0.0
    %v6694 = vand.u32 %v3794, 4294901760
    %v6695 = vsub.f32 %v3794, %v6694
    %v6696 = vand.u32 %v6695, 4294901760
    %v6697 = vsub.f32 %v6695, %v6696
    %v6698 = vand.u32 %v6697, 4294901760
    %6699 = vmatpush1.msra.mxu0 %v6698
    %6700 = vmatprep.subr.mxu0 0.0
    %v6701 = vand.u32 %v3795, 4294901760
    %v6702 = vsub.f32 %v3795, %v6701
    %v6703 = vand.u32 %v6702, 4294901760
    %v6704 = vsub.f32 %v6702, %v6703
    %v6705 = vand.u32 %v6704, 4294901760
    %6706 = vmatpush1.msra.mxu0 %v6705
    %6707 = vmatprep.subr.mxu0 0.0
    %v6708 = vand.u32 %v3796, 4294901760
    %v6709 = vsub.f32 %v3796, %v6708
    %v6710 = vand.u32 %v6709, 4294901760
    %v6711 = vsub.f32 %v6709, %v6710
    %v6712 = vand.u32 %v6711, 4294901760
    %6713 = vmatpush1.msra.mxu0 %v6712
    %6714 = vmatprep.subr.mxu0 0.0
    %v6715 = vand.u32 %v3797, 4294901760
    %v6716 = vsub.f32 %v3797, %v6715
    %v6717 = vand.u32 %v6716, 4294901760
    %v6718 = vsub.f32 %v6716, %v6717
    %v6719 = vand.u32 %v6718, 4294901760
    %6720 = vmatpush1.msra.mxu0 %v6719
    %6721 = vmatprep.subr.mxu0 0.0
    %v6722 = vand.u32 %v3798, 4294901760
    %v6723 = vsub.f32 %v3798, %v6722
    %v6724 = vand.u32 %v6723, 4294901760
    %v6725 = vsub.f32 %v6723, %v6724
    %v6726 = vand.u32 %v6725, 4294901760
    %6727 = vmatpush1.msra.mxu0 %v6726
    %v6728 = vand.u32 %v3670, 4294901760
    %6729 = vmatprep.mubr.f32.mxu0 %v6728
    %v6730 = vand.u32 %v3669, 4294901760
    %6731 = vmatmul.mubr.f32.gmra.mrb[0].mxu0 %v6730
    %v6732 = vpop.f32.mrb[0].mxu0
    %v6733 = vadd.f32 %v6501, %v6732
    %v6734 = vpop.f32.mrb[0].mxu0
    %6735 = vdwg.mxu0
    %6736 = vmatprep.subr.mxu0 0.0
    %v6737 = vand.u32 %v3767, 4294901760
    %v6738 = vsub.f32 %v3767, %v6737
    %6739 = vmatpush1.msra.mxu0 %v6738
    %6740 = vmatprep.subr.mxu0 0.0
    %v6741 = vand.u32 %v3768, 4294901760
    %v6742 = vsub.f32 %v3768, %v6741
    %6743 = vmatpush1.msra.mxu0 %v6742
    %6744 = vmatprep.subr.mxu0 0.0
    %v6745 = vand.u32 %v3769, 4294901760
    %v6746 = vsub.f32 %v3769, %v6745
    %6747 = vmatpush1.msra.mxu0 %v6746
    %6748 = vmatprep.subr.mxu0 0.0
    %v6749 = vand.u32 %v3770, 4294901760
    %v6750 = vsub.f32 %v3770, %v6749
    %6751 = vmatpush1.msra.mxu0 %v6750
    %6752 = vmatprep.subr.mxu0 0.0
    %v6753 = vand.u32 %v3771, 4294901760
    %v6754 = vsub.f32 %v3771, %v6753
    %6755 = vmatpush1.msra.mxu0 %v6754
    %6756 = vmatprep.subr.mxu0 0.0
    %v6757 = vand.u32 %v3772, 4294901760
    %v6758 = vsub.f32 %v3772, %v6757
    %6759 = vmatpush1.msra.mxu0 %v6758
    %6760 = vmatprep.subr.mxu0 0.0
    %v6761 = vand.u32 %v3773, 4294901760
    %v6762 = vsub.f32 %v3773, %v6761
    %6763 = vmatpush1.msra.mxu0 %v6762
    %6764 = vmatprep.subr.mxu0 0.0
    %v6765 = vand.u32 %v3774, 4294901760
    %v6766 = vsub.f32 %v3774, %v6765
    %6767 = vmatpush1.msra.mxu0 %v6766
    %6768 = vmatprep.subr.mxu0 0.0
    %v6769 = vand.u32 %v3775, 4294901760
    %v6770 = vsub.f32 %v3775, %v6769
    %6771 = vmatpush1.msra.mxu0 %v6770
    %6772 = vmatprep.subr.mxu0 0.0
    %v6773 = vand.u32 %v3776, 4294901760
    %v6774 = vsub.f32 %v3776, %v6773
    %6775 = vmatpush1.msra.mxu0 %v6774
    %6776 = vmatprep.subr.mxu0 0.0
    %v6777 = vand.u32 %v3777, 4294901760
    %v6778 = vsub.f32 %v3777, %v6777
    %6779 = vmatpush1.msra.mxu0 %v6778
    %6780 = vmatprep.subr.mxu0 0.0
    %v6781 = vand.u32 %v3778, 4294901760
    %v6782 = vsub.f32 %v3778, %v6781
    %6783 = vmatpush1.msra.mxu0 %v6782
    %6784 = vmatprep.subr.mxu0 0.0
    %v6785 = vand.u32 %v3779, 4294901760
    %v6786 = vsub.f32 %v3779, %v6785
    %6787 = vmatpush1.msra.mxu0 %v6786
    %6788 = vmatprep.subr.mxu0 0.0
    %v6789 = vand.u32 %v3780, 4294901760
    %v6790 = vsub.f32 %v3780, %v6789
    %6791 = vmatpush1.msra.mxu0 %v6790
    %6792 = vmatprep.subr.mxu0 0.0
    %v6793 = vand.u32 %v3781, 4294901760
    %v6794 = vsub.f32 %v3781, %v6793
    %6795 = vmatpush1.msra.mxu0 %v6794
    %6796 = vmatprep.subr.mxu0 0.0
    %v6797 = vand.u32 %v3782, 4294901760
    %v6798 = vsub.f32 %v3782, %v6797
    %6799 = vmatpush1.msra.mxu0 %v6798
    %6800 = vmatprep.subr.mxu0 0.0
    %v6801 = vand.u32 %v3783, 4294901760
    %v6802 = vsub.f32 %v3783, %v6801
    %6803 = vmatpush1.msra.mxu0 %v6802
    %6804 = vmatprep.subr.mxu0 0.0
    %v6805 = vand.u32 %v3784, 4294901760
    %v6806 = vsub.f32 %v3784, %v6805
    %6807 = vmatpush1.msra.mxu0 %v6806
    %6808 = vmatprep.subr.mxu0 0.0
    %v6809 = vand.u32 %v3785, 4294901760
    %v6810 = vsub.f32 %v3785, %v6809
    %6811 = vmatpush1.msra.mxu0 %v6810
    %6812 = vmatprep.subr.mxu0 0.0
    %v6813 = vand.u32 %v3786, 4294901760
    %v6814 = vsub.f32 %v3786, %v6813
    %6815 = vmatpush1.msra.mxu0 %v6814
    %6816 = vmatprep.subr.mxu0 0.0
    %v6817 = vand.u32 %v3787, 4294901760
    %v6818 = vsub.f32 %v3787, %v6817
    %6819 = vmatpush1.msra.mxu0 %v6818
    %6820 = vmatprep.subr.mxu0 0.0
    %v6821 = vand.u32 %v3788, 4294901760
    %v6822 = vsub.f32 %v3788, %v6821
    %6823 = vmatpush1.msra.mxu0 %v6822
    %6824 = vmatprep.subr.mxu0 0.0
    %v6825 = vand.u32 %v3789, 4294901760
    %v6826 = vsub.f32 %v3789, %v6825
    %6827 = vmatpush1.msra.mxu0 %v6826
    %6828 = vmatprep.subr.mxu0 0.0
    %v6829 = vand.u32 %v3790, 4294901760
    %v6830 = vsub.f32 %v3790, %v6829
    %6831 = vmatpush1.msra.mxu0 %v6830
    %6832 = vmatprep.subr.mxu0 0.0
    %v6833 = vand.u32 %v3791, 4294901760
    %v6834 = vsub.f32 %v3791, %v6833
    %6835 = vmatpush1.msra.mxu0 %v6834
    %6836 = vmatprep.subr.mxu0 0.0
    %v6837 = vand.u32 %v3792, 4294901760
    %v6838 = vsub.f32 %v3792, %v6837
    %6839 = vmatpush1.msra.mxu0 %v6838
    %6840 = vmatprep.subr.mxu0 0.0
    %v6841 = vand.u32 %v3793, 4294901760
    %v6842 = vsub.f32 %v3793, %v6841
    %6843 = vmatpush1.msra.mxu0 %v6842
    %6844 = vmatprep.subr.mxu0 0.0
    %v6845 = vand.u32 %v3794, 4294901760
    %v6846 = vsub.f32 %v3794, %v6845
    %6847 = vmatpush1.msra.mxu0 %v6846
    %6848 = vmatprep.subr.mxu0 0.0
    %v6849 = vand.u32 %v3795, 4294901760
    %v6850 = vsub.f32 %v3795, %v6849
    %6851 = vmatpush1.msra.mxu0 %v6850
    %6852 = vmatprep.subr.mxu0 0.0
    %v6853 = vand.u32 %v3796, 4294901760
    %v6854 = vsub.f32 %v3796, %v6853
    %6855 = vmatpush1.msra.mxu0 %v6854
    %6856 = vmatprep.subr.mxu0 0.0
    %v6857 = vand.u32 %v3797, 4294901760
    %v6858 = vsub.f32 %v3797, %v6857
    %6859 = vmatpush1.msra.mxu0 %v6858
    %6860 = vmatprep.subr.mxu0 0.0
    %v6861 = vand.u32 %v3798, 4294901760
    %v6862 = vsub.f32 %v3798, %v6861
    %6863 = vmatpush1.msra.mxu0 %v6862
    %v6864 = vand.u32 %v3670, 4294901760
    %v6865 = vsub.f32 %v3670, %v6864
    %6866 = vmatprep.mubr.f32.mxu0 %v6865
    %v6867 = vand.u32 %v3669, 4294901760
    %v6868 = vsub.f32 %v3669, %v6867
    %6869 = vmatmul.mubr.f32.gmra.mrb[0].mxu0 %v6868
    %v6870 = vpop.f32.mrb[0].mxu0
    %v6871 = vadd.f32 %v6733, %v6870
    %v6872 = vpop.f32.mrb[0].mxu0
    %6873 = vdwg.mxu0
    %6874 = vmatprep.subr.mxu0 0.0
    %v6875 = vand.u32 %v3767, 4294901760
    %6876 = vmatpush1.msra.mxu0 %v6875
    %6877 = vmatprep.subr.mxu0 0.0
    %v6878 = vand.u32 %v3768, 4294901760
    %6879 = vmatpush1.msra.mxu0 %v6878
    %6880 = vmatprep.subr.mxu0 0.0
    %v6881 = vand.u32 %v3769, 4294901760
    %6882 = vmatpush1.msra.mxu0 %v6881
    %6883 = vmatprep.subr.mxu0 0.0
    %v6884 = vand.u32 %v3770, 4294901760
    %6885 = vmatpush1.msra.mxu0 %v6884
    %6886 = vmatprep.subr.mxu0 0.0
    %v6887 = vand.u32 %v3771, 4294901760
    %6888 = vmatpush1.msra.mxu0 %v6887
    %6889 = vmatprep.subr.mxu0 0.0
    %v6890 = vand.u32 %v3772, 4294901760
    %6891 = vmatpush1.msra.mxu0 %v6890
    %6892 = vmatprep.subr.mxu0 0.0
    %v6893 = vand.u32 %v3773, 4294901760
    %6894 = vmatpush1.msra.mxu0 %v6893
    %6895 = vmatprep.subr.mxu0 0.0
    %v6896 = vand.u32 %v3774, 4294901760
    %6897 = vmatpush1.msra.mxu0 %v6896
    %6898 = vmatprep.subr.mxu0 0.0
    %v6899 = vand.u32 %v3775, 4294901760
    %6900 = vmatpush1.msra.mxu0 %v6899
    %6901 = vmatprep.subr.mxu0 0.0
    %v6902 = vand.u32 %v3776, 4294901760
    %6903 = vmatpush1.msra.mxu0 %v6902
    %6904 = vmatprep.subr.mxu0 0.0
    %v6905 = vand.u32 %v3777, 4294901760
    %6906 = vmatpush1.msra.mxu0 %v6905
    %6907 = vmatprep.subr.mxu0 0.0
    %v6908 = vand.u32 %v3778, 4294901760
    %6909 = vmatpush1.msra.mxu0 %v6908
    %6910 = vmatprep.subr.mxu0 0.0
    %v6911 = vand.u32 %v3779, 4294901760
    %6912 = vmatpush1.msra.mxu0 %v6911
    %6913 = vmatprep.subr.mxu0 0.0
    %v6914 = vand.u32 %v3780, 4294901760
    %6915 = vmatpush1.msra.mxu0 %v6914
    %6916 = vmatprep.subr.mxu0 0.0
    %v6917 = vand.u32 %v3781, 4294901760
    %6918 = vmatpush1.msra.mxu0 %v6917
    %6919 = vmatprep.subr.mxu0 0.0
    %v6920 = vand.u32 %v3782, 4294901760
    %6921 = vmatpush1.msra.mxu0 %v6920
    %6922 = vmatprep.subr.mxu0 0.0
    %v6923 = vand.u32 %v3783, 4294901760
    %6924 = vmatpush1.msra.mxu0 %v6923
    %6925 = vmatprep.subr.mxu0 0.0
    %v6926 = vand.u32 %v3784, 4294901760
    %6927 = vmatpush1.msra.mxu0 %v6926
    %6928 = vmatprep.subr.mxu0 0.0
    %v6929 = vand.u32 %v3785, 4294901760
    %6930 = vmatpush1.msra.mxu0 %v6929
    %6931 = vmatprep.subr.mxu0 0.0
    %v6932 = vand.u32 %v3786, 4294901760
    %6933 = vmatpush1.msra.mxu0 %v6932
    %6934 = vmatprep.subr.mxu0 0.0
    %v6935 = vand.u32 %v3787, 4294901760
    %6936 = vmatpush1.msra.mxu0 %v6935
    %6937 = vmatprep.subr.mxu0 0.0
    %v6938 = vand.u32 %v3788, 4294901760
    %6939 = vmatpush1.msra.mxu0 %v6938
    %6940 = vmatprep.subr.mxu0 0.0
    %v6941 = vand.u32 %v3789, 4294901760
    %6942 = vmatpush1.msra.mxu0 %v6941
    %6943 = vmatprep.subr.mxu0 0.0
    %v6944 = vand.u32 %v3790, 4294901760
    %6945 = vmatpush1.msra.mxu0 %v6944
    %6946 = vmatprep.subr.mxu0 0.0
    %v6947 = vand.u32 %v3791, 4294901760
    %6948 = vmatpush1.msra.mxu0 %v6947
    %6949 = vmatprep.subr.mxu0 0.0
    %v6950 = vand.u32 %v3792, 4294901760
    %6951 = vmatpush1.msra.mxu0 %v6950
    %6952 = vmatprep.subr.mxu0 0.0
    %v6953 = vand.u32 %v3793, 4294901760
    %6954 = vmatpush1.msra.mxu0 %v6953
    %6955 = vmatprep.subr.mxu0 0.0
    %v6956 = vand.u32 %v3794, 4294901760
    %6957 = vmatpush1.msra.mxu0 %v6956
    %6958 = vmatprep.subr.mxu0 0.0
    %v6959 = vand.u32 %v3795, 4294901760
    %6960 = vmatpush1.msra.mxu0 %v6959
    %6961 = vmatprep.subr.mxu0 0.0
    %v6962 = vand.u32 %v3796, 4294901760
    %6963 = vmatpush1.msra.mxu0 %v6962
    %6964 = vmatprep.subr.mxu0 0.0
    %v6965 = vand.u32 %v3797, 4294901760
    %6966 = vmatpush1.msra.mxu0 %v6965
    %6967 = vmatprep.subr.mxu0 0.0
    %v6968 = vand.u32 %v3798, 4294901760
    %6969 = vmatpush1.msra.mxu0 %v6968
    %v6970 = vand.u32 %v3670, 4294901760
    %v6971 = vsub.f32 %v3670, %v6970
    %v6972 = vand.u32 %v6971, 4294901760
    %6973 = vmatprep.mubr.f32.mxu0 %v6972
    %v6974 = vand.u32 %v3669, 4294901760
    %v6975 = vsub.f32 %v3669, %v6974
    %v6976 = vand.u32 %v6975, 4294901760
    %6977 = vmatmul.mubr.f32.gmra.mrb[0].mxu0 %v6976
    %v6978 = vpop.f32.mrb[0].mxu0
    %v6979 = vadd.f32 %v6871, %v6978
    %v6980 = vpop.f32.mrb[0].mxu0
    %6981 = vdwg.mxu0
    %6982 = vmatprep.subr.mxu0 0.0
    %v6983 = vand.u32 %v3767, 4294901760
    %v6984 = vsub.f32 %v3767, %v6983
    %v6985 = vand.u32 %v6984, 4294901760
    %6986 = vmatpush1.msra.mxu0 %v6985
    %6987 = vmatprep.subr.mxu0 0.0
    %v6988 = vand.u32 %v3768, 4294901760
    %v6989 = vsub.f32 %v3768, %v6988
    %v6990 = vand.u32 %v6989, 4294901760
    %6991 = vmatpush1.msra.mxu0 %v6990
    %6992 = vmatprep.subr.mxu0 0.0
    %v6993 = vand.u32 %v3769, 4294901760
    %v6994 = vsub.f32 %v3769, %v6993
    %v6995 = vand.u32 %v6994, 4294901760
    %6996 = vmatpush1.msra.mxu0 %v6995
    %6997 = vmatprep.subr.mxu0 0.0
    %v6998 = vand.u32 %v3770, 4294901760
    %v6999 = vsub.f32 %v3770, %v6998
    %v7000 = vand.u32 %v6999, 4294901760
    %7001 = vmatpush1.msra.mxu0 %v7000
    %7002 = vmatprep.subr.mxu0 0.0
    %v7003 = vand.u32 %v3771, 4294901760
    %v7004 = vsub.f32 %v3771, %v7003
    %v7005 = vand.u32 %v7004, 4294901760
    %7006 = vmatpush1.msra.mxu0 %v7005
    %7007 = vmatprep.subr.mxu0 0.0
    %v7008 = vand.u32 %v3772, 4294901760
    %v7009 = vsub.f32 %v3772, %v7008
    %v7010 = vand.u32 %v7009, 4294901760
    %7011 = vmatpush1.msra.mxu0 %v7010
    %7012 = vmatprep.subr.mxu0 0.0
    %v7013 = vand.u32 %v3773, 4294901760
    %v7014 = vsub.f32 %v3773, %v7013
    %v7015 = vand.u32 %v7014, 4294901760
    %7016 = vmatpush1.msra.mxu0 %v7015
    %7017 = vmatprep.subr.mxu0 0.0
    %v7018 = vand.u32 %v3774, 4294901760
    %v7019 = vsub.f32 %v3774, %v7018
    %v7020 = vand.u32 %v7019, 4294901760
    %7021 = vmatpush1.msra.mxu0 %v7020
    %7022 = vmatprep.subr.mxu0 0.0
    %v7023 = vand.u32 %v3775, 4294901760
    %v7024 = vsub.f32 %v3775, %v7023
    %v7025 = vand.u32 %v7024, 4294901760
    %7026 = vmatpush1.msra.mxu0 %v7025
    %7027 = vmatprep.subr.mxu0 0.0
    %v7028 = vand.u32 %v3776, 4294901760
    %v7029 = vsub.f32 %v3776, %v7028
    %v7030 = vand.u32 %v7029, 4294901760
    %7031 = vmatpush1.msra.mxu0 %v7030
    %7032 = vmatprep.subr.mxu0 0.0
    %v7033 = vand.u32 %v3777, 4294901760
    %v7034 = vsub.f32 %v3777, %v7033
    %v7035 = vand.u32 %v7034, 4294901760
    %7036 = vmatpush1.msra.mxu0 %v7035
    %7037 = vmatprep.subr.mxu0 0.0
    %v7038 = vand.u32 %v3778, 4294901760
    %v7039 = vsub.f32 %v3778, %v7038
    %v7040 = vand.u32 %v7039, 4294901760
    %7041 = vmatpush1.msra.mxu0 %v7040
    %7042 = vmatprep.subr.mxu0 0.0
    %v7043 = vand.u32 %v3779, 4294901760
    %v7044 = vsub.f32 %v3779, %v7043
    %v7045 = vand.u32 %v7044, 4294901760
    %7046 = vmatpush1.msra.mxu0 %v7045
    %7047 = vmatprep.subr.mxu0 0.0
    %v7048 = vand.u32 %v3780, 4294901760
    %v7049 = vsub.f32 %v3780, %v7048
    %v7050 = vand.u32 %v7049, 4294901760
    %7051 = vmatpush1.msra.mxu0 %v7050
    %7052 = vmatprep.subr.mxu0 0.0
    %v7053 = vand.u32 %v3781, 4294901760
    %v7054 = vsub.f32 %v3781, %v7053
    %v7055 = vand.u32 %v7054, 4294901760
    %7056 = vmatpush1.msra.mxu0 %v7055
    %7057 = vmatprep.subr.mxu0 0.0
    %v7058 = vand.u32 %v3782, 4294901760
    %v7059 = vsub.f32 %v3782, %v7058
    %v7060 = vand.u32 %v7059, 4294901760
    %7061 = vmatpush1.msra.mxu0 %v7060
    %7062 = vmatprep.subr.mxu0 0.0
    %v7063 = vand.u32 %v3783, 4294901760
    %v7064 = vsub.f32 %v3783, %v7063
    %v7065 = vand.u32 %v7064, 4294901760
    %7066 = vmatpush1.msra.mxu0 %v7065
    %7067 = vmatprep.subr.mxu0 0.0
    %v7068 = vand.u32 %v3784, 4294901760
    %v7069 = vsub.f32 %v3784, %v7068
    %v7070 = vand.u32 %v7069, 4294901760
    %7071 = vmatpush1.msra.mxu0 %v7070
    %7072 = vmatprep.subr.mxu0 0.0
    %v7073 = vand.u32 %v3785, 4294901760
    %v7074 = vsub.f32 %v3785, %v7073
    %v7075 = vand.u32 %v7074, 4294901760
    %7076 = vmatpush1.msra.mxu0 %v7075
    %7077 = vmatprep.subr.mxu0 0.0
    %v7078 = vand.u32 %v3786, 4294901760
    %v7079 = vsub.f32 %v3786, %v7078
    %v7080 = vand.u32 %v7079, 4294901760
    %7081 = vmatpush1.msra.mxu0 %v7080
    %7082 = vmatprep.subr.mxu0 0.0
    %v7083 = vand.u32 %v3787, 4294901760
    %v7084 = vsub.f32 %v3787, %v7083
    %v7085 = vand.u32 %v7084, 4294901760
    %7086 = vmatpush1.msra.mxu0 %v7085
    %7087 = vmatprep.subr.mxu0 0.0
    %v7088 = vand.u32 %v3788, 4294901760
    %v7089 = vsub.f32 %v3788, %v7088
    %v7090 = vand.u32 %v7089, 4294901760
    %7091 = vmatpush1.msra.mxu0 %v7090
    %7092 = vmatprep.subr.mxu0 0.0
    %v7093 = vand.u32 %v3789, 4294901760
    %v7094 = vsub.f32 %v3789, %v7093
    %v7095 = vand.u32 %v7094, 4294901760
    %7096 = vmatpush1.msra.mxu0 %v7095
    %7097 = vmatprep.subr.mxu0 0.0
    %v7098 = vand.u32 %v3790, 4294901760
    %v7099 = vsub.f32 %v3790, %v7098
    %v7100 = vand.u32 %v7099, 4294901760
    %7101 = vmatpush1.msra.mxu0 %v7100
    %7102 = vmatprep.subr.mxu0 0.0
    %v7103 = vand.u32 %v3791, 4294901760
    %v7104 = vsub.f32 %v3791, %v7103
    %v7105 = vand.u32 %v7104, 4294901760
    %7106 = vmatpush1.msra.mxu0 %v7105
    %7107 = vmatprep.subr.mxu0 0.0
    %v7108 = vand.u32 %v3792, 4294901760
    %v7109 = vsub.f32 %v3792, %v7108
    %v7110 = vand.u32 %v7109, 4294901760
    %7111 = vmatpush1.msra.mxu0 %v7110
    %7112 = vmatprep.subr.mxu0 0.0
    %v7113 = vand.u32 %v3793, 4294901760
    %v7114 = vsub.f32 %v3793, %v7113
    %v7115 = vand.u32 %v7114, 4294901760
    %7116 = vmatpush1.msra.mxu0 %v7115
    %7117 = vmatprep.subr.mxu0 0.0
    %v7118 = vand.u32 %v3794, 4294901760
    %v7119 = vsub.f32 %v3794, %v7118
    %v7120 = vand.u32 %v7119, 4294901760
    %7121 = vmatpush1.msra.mxu0 %v7120
    %7122 = vmatprep.subr.mxu0 0.0
    %v7123 = vand.u32 %v3795, 4294901760
    %v7124 = vsub.f32 %v3795, %v7123
    %v7125 = vand.u32 %v7124, 4294901760
    %7126 = vmatpush1.msra.mxu0 %v7125
    %7127 = vmatprep.subr.mxu0 0.0
    %v7128 = vand.u32 %v3796, 4294901760
    %v7129 = vsub.f32 %v3796, %v7128
    %v7130 = vand.u32 %v7129, 4294901760
    %7131 = vmatpush1.msra.mxu0 %v7130
    %7132 = vmatprep.subr.mxu0 0.0
    %v7133 = vand.u32 %v3797, 4294901760
    %v7134 = vsub.f32 %v3797, %v7133
    %v7135 = vand.u32 %v7134, 4294901760
    %7136 = vmatpush1.msra.mxu0 %v7135
    %7137 = vmatprep.subr.mxu0 0.0
    %v7138 = vand.u32 %v3798, 4294901760
    %v7139 = vsub.f32 %v3798, %v7138
    %v7140 = vand.u32 %v7139, 4294901760
    %7141 = vmatpush1.msra.mxu0 %v7140
    %v7142 = vand.u32 %v3670, 4294901760
    %7143 = vmatprep.mubr.f32.mxu0 %v7142
    %v7144 = vand.u32 %v3669, 4294901760
    %7145 = vmatmul.mubr.f32.gmra.mrb[0].mxu0 %v7144
    %v7146 = vpop.f32.mrb[0].mxu0
    %v7147 = vadd.f32 %v6979, %v7146
    %v7148 = vpop.f32.mrb[0].mxu0
    %7149 = vdwg.mxu0
    %7150 = vmatprep.subr.mxu0 0.0
    %v7151 = vand.u32 %v3767, 4294901760
    %7152 = vmatpush1.msra.mxu0 %v7151
    %7153 = vmatprep.subr.mxu0 0.0
    %v7154 = vand.u32 %v3768, 4294901760
    %7155 = vmatpush1.msra.mxu0 %v7154
    %7156 = vmatprep.subr.mxu0 0.0
    %v7157 = vand.u32 %v3769, 4294901760
    %7158 = vmatpush1.msra.mxu0 %v7157
    %7159 = vmatprep.subr.mxu0 0.0
    %v7160 = vand.u32 %v3770, 4294901760
    %7161 = vmatpush1.msra.mxu0 %v7160
    %7162 = vmatprep.subr.mxu0 0.0
    %v7163 = vand.u32 %v3771, 4294901760
    %7164 = vmatpush1.msra.mxu0 %v7163
    %7165 = vmatprep.subr.mxu0 0.0
    %v7166 = vand.u32 %v3772, 4294901760
    %7167 = vmatpush1.msra.mxu0 %v7166
    %7168 = vmatprep.subr.mxu0 0.0
    %v7169 = vand.u32 %v3773, 4294901760
    %7170 = vmatpush1.msra.mxu0 %v7169
    %7171 = vmatprep.subr.mxu0 0.0
    %v7172 = vand.u32 %v3774, 4294901760
    %7173 = vmatpush1.msra.mxu0 %v7172
    %7174 = vmatprep.subr.mxu0 0.0
    %v7175 = vand.u32 %v3775, 4294901760
    %7176 = vmatpush1.msra.mxu0 %v7175
    %7177 = vmatprep.subr.mxu0 0.0
    %v7178 = vand.u32 %v3776, 4294901760
    %7179 = vmatpush1.msra.mxu0 %v7178
    %7180 = vmatprep.subr.mxu0 0.0
    %v7181 = vand.u32 %v3777, 4294901760
    %7182 = vmatpush1.msra.mxu0 %v7181
    %7183 = vmatprep.subr.mxu0 0.0
    %v7184 = vand.u32 %v3778, 4294901760
    %7185 = vmatpush1.msra.mxu0 %v7184
    %7186 = vmatprep.subr.mxu0 0.0
    %v7187 = vand.u32 %v3779, 4294901760
    %7188 = vmatpush1.msra.mxu0 %v7187
    %7189 = vmatprep.subr.mxu0 0.0
    %v7190 = vand.u32 %v3780, 4294901760
    %7191 = vmatpush1.msra.mxu0 %v7190
    %7192 = vmatprep.subr.mxu0 0.0
    %v7193 = vand.u32 %v3781, 4294901760
    %7194 = vmatpush1.msra.mxu0 %v7193
    %7195 = vmatprep.subr.mxu0 0.0
    %v7196 = vand.u32 %v3782, 4294901760
    %7197 = vmatpush1.msra.mxu0 %v7196
    %7198 = vmatprep.subr.mxu0 0.0
    %v7199 = vand.u32 %v3783, 4294901760
    %7200 = vmatpush1.msra.mxu0 %v7199
    %7201 = vmatprep.subr.mxu0 0.0
    %v7202 = vand.u32 %v3784, 4294901760
    %7203 = vmatpush1.msra.mxu0 %v7202
    %7204 = vmatprep.subr.mxu0 0.0
    %v7205 = vand.u32 %v3785, 4294901760
    %7206 = vmatpush1.msra.mxu0 %v7205
    %7207 = vmatprep.subr.mxu0 0.0
    %v7208 = vand.u32 %v3786, 4294901760
    %7209 = vmatpush1.msra.mxu0 %v7208
    %7210 = vmatprep.subr.mxu0 0.0
    %v7211 = vand.u32 %v3787, 4294901760
    %7212 = vmatpush1.msra.mxu0 %v7211
    %7213 = vmatprep.subr.mxu0 0.0
    %v7214 = vand.u32 %v3788, 4294901760
    %7215 = vmatpush1.msra.mxu0 %v7214
    %7216 = vmatprep.subr.mxu0 0.0
    %v7217 = vand.u32 %v3789, 4294901760
    %7218 = vmatpush1.msra.mxu0 %v7217
    %7219 = vmatprep.subr.mxu0 0.0
    %v7220 = vand.u32 %v3790, 4294901760
    %7221 = vmatpush1.msra.mxu0 %v7220
    %7222 = vmatprep.subr.mxu0 0.0
    %v7223 = vand.u32 %v3791, 4294901760
    %7224 = vmatpush1.msra.mxu0 %v7223
    %7225 = vmatprep.subr.mxu0 0.0
    %v7226 = vand.u32 %v3792, 4294901760
    %7227 = vmatpush1.msra.mxu0 %v7226
    %7228 = vmatprep.subr.mxu0 0.0
    %v7229 = vand.u32 %v3793, 4294901760
    %7230 = vmatpush1.msra.mxu0 %v7229
    %7231 = vmatprep.subr.mxu0 0.0
    %v7232 = vand.u32 %v3794, 4294901760
    %7233 = vmatpush1.msra.mxu0 %v7232
    %7234 = vmatprep.subr.mxu0 0.0
    %v7235 = vand.u32 %v3795, 4294901760
    %7236 = vmatpush1.msra.mxu0 %v7235
    %7237 = vmatprep.subr.mxu0 0.0
    %v7238 = vand.u32 %v3796, 4294901760
    %7239 = vmatpush1.msra.mxu0 %v7238
    %7240 = vmatprep.subr.mxu0 0.0
    %v7241 = vand.u32 %v3797, 4294901760
    %7242 = vmatpush1.msra.mxu0 %v7241
    %7243 = vmatprep.subr.mxu0 0.0
    %v7244 = vand.u32 %v3798, 4294901760
    %7245 = vmatpush1.msra.mxu0 %v7244
    %v7246 = vand.u32 %v3670, 4294901760
    %7247 = vmatprep.mubr.f32.mxu0 %v7246
    %v7248 = vand.u32 %v3669, 4294901760
    %7249 = vmatmul.mubr.f32.gmra.mrb[0].mxu0 %v7248
    %v7250 = vpop.f32.mrb[0].mxu0
    %v7251 = vadd.f32 %v7147, %v7250
    %v7252 = vpop.f32.mrb[0].mxu0
    %7253 = vdwg.mxu0
    %7254 = vst [vmem:[#allocation10] sm:$0xff] %v7251
    // Predicated region
    $region38: #{tpu_custom_call.1} parent=1 // pred_check
      _
    $region39: #{tpu_custom_call.1} parent=1 // pred_check_branch
      %7256 = sbr.rel (0) target = $region41
    $region40: #{tpu_custom_call.1} parent=1 // pred_region
      %s7258 = ssub.s32 128, 128
      %7259 = vsyncadd [#allocation4], %s7258
      %s7261 = sshll.u32 [#allocation10], 4
      %s7262 = int_to_ptr.vmem [resolvable:$true] %s7261
      %7264 = dma.vmem_to_hbm [thread:$0]  %s7262, 128, %s5, [#allocation4]
    $region41: #{tpu_custom_call.1} parent=1 // pred_fallthru
      _
    // Predicated region
    $region42: #{tpu_custom_call.1} parent=1 // pred_check
      _
    $region43: #{tpu_custom_call.1} parent=1 // pred_check_branch
      %7266 = sbr.rel (0) target = $region45
    $region44: #{tpu_custom_call.1} parent=1 // pred_region
      %7267 = dma.done [#allocation4], 128
    $region45: #{tpu_custom_call.1} parent=1 // pred_fallthru
      _
    %7268 = vsyncpa [#allocation3], 1
    %7269 = vsyncpa [#allocation6], 1
    %7270 = vsyncpa [#allocation9], 1
    %7271 = vsyncpa [#allocation4], 1

</llo_original>
